<compile_context>
chip_gen: v6e
topology: v6e:2x2x1
jax: 0.10.0
libtpu: 0.0.40
codegen_flags: <defaults>
</compile_context>

<pallas_src>
import jax
import jax.numpy as jnp
import numpy as np
from jax.experimental import pallas as pl
from jax.experimental.pallas import tpu as pltpu


def _make_fused_kernel(NB, Hin, Win, KH, KW, C1):
    """Fused conv1+relu+conv2+relu kernel for a batch block of NB samples."""
    H1, W1 = Hin - KH + 1, Win - KW + 1      # conv1 output spatial (12, 12)
    H2, W2 = H1 - KH + 1, W1 - KW + 1        # conv2 output spatial (8, 8)
    taps = [(kh, kw) for kh in range(KH) for kw in range(KW)]

    def kernel(x_ref, w1_ref, b1_ref, w2_ref, b2_ref, o_ref):
        # x_ref : (NB, Hin, Win, 1)   channel-last, lane dim = 1 (no lane slicing needed)
        # w1_ref: (KH*KW, C1)         tap-major rows, channels on lanes
        # b1_ref: (1, C1)
        # w2_ref: (KH*KW, C1)         w2[t, c] = conv2 weight for tap t, in-channel c (Cout=1)
        # b2_ref: (1, 1)
        # o_ref : (NB, H2, W2)
        x = x_ref[...]

        # ---- conv1 + ReLU: 25 per-tap broadcast FMAs (Cin = 1) ----
        y = None
        for t, (kh, kw) in enumerate(taps):
            contrib = x[:, kh:kh + H1, kw:kw + W1, :] * w1_ref[t]   # (NB,H1,W1,1)*(C1,)
            y = contrib if y is None else y + contrib               # (NB,H1,W1,C1)
        y = jnp.maximum(y + b1_ref[...], 0.0)                       # intermediate stays on-chip

        # ---- conv2 + ReLU: per-tap channel partials, single channel reduce (Cout = 1) ----
        acc = None
        for t, (kh, kw) in enumerate(taps):
            contrib = y[:, kh:kh + H2, kw:kw + W2, :] * w2_ref[t]   # (NB,H2,W2,C1)
            acc = contrib if acc is None else acc + contrib
        z = jnp.sum(acc, axis=-1) + b2_ref[...]                     # (NB,H2,W2) + (1,1)
        o_ref[...] = jnp.maximum(z, 0.0)

    return kernel, (H2, W2)


def model_forward(x_nchw, params):
    """PyTorch-equivalent forward: relu(conv2(relu(conv1(x)))). x is NCHW with Cin=1."""
    w1, b1, w2, b2 = params
    N, Cin, Hin, Win = x_nchw.shape
    KH, KW, Cin_w, C1 = w1.shape
    assert Cin == 1 and Cin_w == 1

    # Whole (small) batch in one grid step; for large batches divisible by 8, shard
    # 8-sample blocks across a parallel grid axis (helps v7x's 2 TensorCores).
    NB = 8 if (N > 8 and N % 8 == 0) else N
    grid = (N // NB,)

    kernel, (H2, W2) = _make_fused_kernel(NB, Hin, Win, KH, KW, C1)

    # Cin == 1 -> NCHW to channel-last is a pure reshape (no transpose dispatch).
    x4 = x_nchw.reshape(N, Hin, Win, 1).astype(jnp.float32)
    w1f = w1.reshape(KH * KW, C1).astype(jnp.float32)        # (25, 30)
    b1f = b1.reshape(1, C1).astype(jnp.float32)              # (1, 30)
    w2f = w2.reshape(KH * KW, C1).astype(jnp.float32)        # (25, 30): [tap, cin], Cout=1
    b2f = b2.reshape(1, 1).astype(jnp.float32)               # (1, 1)

    out = pl.pallas_call(
        kernel,
        out_shape=jax.ShapeDtypeStruct((N, H2, W2), jnp.float32),
        grid=grid,
        in_specs=[
            pl.BlockSpec((NB, Hin, Win, 1), lambda i: (i, 0, 0, 0)),
            pl.BlockSpec((KH * KW, C1), lambda i: (0, 0)),
            pl.BlockSpec((1, C1), lambda i: (0, 0)),
            pl.BlockSpec((KH * KW, C1), lambda i: (0, 0)),
            pl.BlockSpec((1, 1), lambda i: (0, 0)),
        ],
        out_specs=pl.BlockSpec((NB, H2, W2), lambda i: (i, 0, 0)),
        compiler_params=pltpu.CompilerParams(dimension_semantics=("parallel",)),
    )(x4, w1f, b1f, w2f, b2f)

    return out.reshape(N, 1, H2, W2)


model_forward_jit = jax.jit(model_forward)


def init_params(key):
    k1, k2, k3, k4 = jax.random.split(key, 4)
    # conv1: Conv2d(1, 30, 5) -> HWIO (5, 5, 1, 30)
    fan1 = 1 * 5 * 5
    w1 = jax.random.uniform(k1, (5, 5, 1, 30), jnp.float32,
                            -1.0 / np.sqrt(fan1), 1.0 / np.sqrt(fan1))
    b1 = jax.random.uniform(k2, (30,), jnp.float32,
                            -1.0 / np.sqrt(fan1), 1.0 / np.sqrt(fan1))
    # conv2: Conv2d(30, 1, 5) -> HWIO (5, 5, 30, 1)
    fan2 = 30 * 5 * 5
    w2 = jax.random.uniform(k3, (5, 5, 30, 1), jnp.float32,
                            -1.0 / np.sqrt(fan2), 1.0 / np.sqrt(fan2))
    b2 = jax.random.uniform(k4, (1,), jnp.float32,
                            -1.0 / np.sqrt(fan2), 1.0 / np.sqrt(fan2))
    return w1, b1, w2, b2


def _reference_forward(x_nchw, params):
    """Pure-JAX reference (lax.conv, cross-correlation like PyTorch) for correctness."""
    w1, b1, w2, b2 = params
    dn = jax.lax.conv_dimension_numbers(x_nchw.shape, w1.shape, ("NCHW", "HWIO", "NCHW"))
    y = jax.lax.conv_general_dilated(x_nchw, w1, (1, 1), "VALID", dimension_numbers=dn)
    y = jnp.maximum(y + b1.reshape(1, -1, 1, 1), 0.0)
    dn2 = jax.lax.conv_dimension_numbers(y.shape, w2.shape, ("NCHW", "HWIO", "NCHW"))
    z = jax.lax.conv_general_dilated(y, w2, (1, 1), "VALID", dimension_numbers=dn2)
    return jnp.maximum(z + b2.reshape(1, -1, 1, 1), 0.0)


if __name__ == "__main__":
    key = jax.random.PRNGKey(0)
    kx, kp = jax.random.split(key)
    # Input consistent with the module: 1 input channel, 16x16 spatial, batch 2.
    x = jax.random.normal(kx, (2, 1, 16, 16), jnp.float32)
    params = init_params(kp)

    out = jax.block_until_ready(model_forward_jit(x, params))
    ref = jax.block_until_ready(_reference_forward(x, params))

    assert out.shape == (2, 1, 8, 8), out.shape
    assert np.allclose(np.asarray(out), np.asarray(ref), atol=1e-4, rtol=1e-4)
    print("KERNEL_OK")
</pallas_src>

<mosaic_0001>
module attributes {stable_mosaic.version = 11 : i64} {
  func.func @kernel(%arg0: i32, %arg1: memref<2x16x16x1xf32, #tpu.memory_space<vmem>>, %arg2: memref<25x30xf32, #tpu.memory_space<vmem>>, %arg3: memref<1x30xf32, #tpu.memory_space<vmem>>, %arg4: memref<25x30xf32, #tpu.memory_space<vmem>>, %arg5: memref<1x1xf32, #tpu.memory_space<vmem>>, %arg6: memref<2x8x8xf32, #tpu.memory_space<vmem>>) attributes {dimension_semantics = [#tpu.dimension_semantics<parallel>], iteration_bounds = array<i64: 1>, scalar_prefetch = 0 : i64, scratch_operands = 0 : i64, tpu.core_type = #tpu.core_type<tc>, window_params = [{transform_indices = @transform_0, window_bounds = array<i64: 2, 16, 16, 1>}, {pipeline_mode = #tpu.pipeline_mode<synchronous>, transform_indices = @transform_1, window_bounds = array<i64: 25, 30>}, {pipeline_mode = #tpu.pipeline_mode<synchronous>, transform_indices = @transform_2, window_bounds = array<i64: 1, 30>}, {pipeline_mode = #tpu.pipeline_mode<synchronous>, transform_indices = @transform_3, window_bounds = array<i64: 25, 30>}, {pipeline_mode = #tpu.pipeline_mode<synchronous>, transform_indices = @transform_4, window_bounds = array<i64: 1, 1>}, {transform_indices = @transform_5, window_bounds = array<i64: 2, 8, 8>}]} {
    %c0 = arith.constant 0 : index
    %c0_0 = arith.constant 0 : index
    %c0_1 = arith.constant 0 : index
    %c0_2 = arith.constant 0 : index
    %0 = vector.load %arg1[%c0, %c0_0, %c0_1, %c0_2] : memref<2x16x16x1xf32, #tpu.memory_space<vmem>>, vector<2x16x16x1xf32>
    %1 = vector.extract_strided_slice %0 {offsets = [0, 0, 0, 0], sizes = [2, 12, 12, 1], strides = [1, 1, 1, 1]} : vector<2x16x16x1xf32> to vector<2x12x12x1xf32>
    %c0_3 = arith.constant 0 : index
    %c0_4 = arith.constant 0 : index
    %2 = vector.load %arg2[%c0_3, %c0_4] : memref<25x30xf32, #tpu.memory_space<vmem>>, vector<1x30xf32>
    %3 = vector.shape_cast %2 : vector<1x30xf32> to vector<30xf32>
    %4 = vector.shape_cast %3 : vector<30xf32> to vector<1x1x1x30xf32>
    %5 = vector.broadcast %1 : vector<2x12x12x1xf32> to vector<2x12x12x30xf32>
    %6 = vector.broadcast %4 : vector<1x1x1x30xf32> to vector<2x12x12x30xf32>
    %7 = arith.mulf %5, %6 : vector<2x12x12x30xf32>
    %8 = vector.extract_strided_slice %0 {offsets = [0, 0, 1, 0], sizes = [2, 12, 12, 1], strides = [1, 1, 1, 1]} : vector<2x16x16x1xf32> to vector<2x12x12x1xf32>
    %c1 = arith.constant 1 : index
    %c0_5 = arith.constant 0 : index
    %9 = vector.load %arg2[%c1, %c0_5] : memref<25x30xf32, #tpu.memory_space<vmem>>, vector<1x30xf32>
    %10 = vector.shape_cast %9 : vector<1x30xf32> to vector<30xf32>
    %11 = vector.shape_cast %10 : vector<30xf32> to vector<1x1x1x30xf32>
    %12 = vector.broadcast %8 : vector<2x12x12x1xf32> to vector<2x12x12x30xf32>
    %13 = vector.broadcast %11 : vector<1x1x1x30xf32> to vector<2x12x12x30xf32>
    %14 = arith.mulf %12, %13 : vector<2x12x12x30xf32>
    %15 = arith.addf %7, %14 : vector<2x12x12x30xf32>
    %16 = vector.extract_strided_slice %0 {offsets = [0, 0, 2, 0], sizes = [2, 12, 12, 1], strides = [1, 1, 1, 1]} : vector<2x16x16x1xf32> to vector<2x12x12x1xf32>
    %c2 = arith.constant 2 : index
    %c0_6 = arith.constant 0 : index
    %17 = vector.load %arg2[%c2, %c0_6] : memref<25x30xf32, #tpu.memory_space<vmem>>, vector<1x30xf32>
    %18 = vector.shape_cast %17 : vector<1x30xf32> to vector<30xf32>
    %19 = vector.shape_cast %18 : vector<30xf32> to vector<1x1x1x30xf32>
    %20 = vector.broadcast %16 : vector<2x12x12x1xf32> to vector<2x12x12x30xf32>
    %21 = vector.broadcast %19 : vector<1x1x1x30xf32> to vector<2x12x12x30xf32>
    %22 = arith.mulf %20, %21 : vector<2x12x12x30xf32>
    %23 = arith.addf %15, %22 : vector<2x12x12x30xf32>
    %24 = vector.extract_strided_slice %0 {offsets = [0, 0, 3, 0], sizes = [2, 12, 12, 1], strides = [1, 1, 1, 1]} : vector<2x16x16x1xf32> to vector<2x12x12x1xf32>
    %c3 = arith.constant 3 : index
    %c0_7 = arith.constant 0 : index
    %25 = vector.load %arg2[%c3, %c0_7] : memref<25x30xf32, #tpu.memory_space<vmem>>, vector<1x30xf32>
    %26 = vector.shape_cast %25 : vector<1x30xf32> to vector<30xf32>
    %27 = vector.shape_cast %26 : vector<30xf32> to vector<1x1x1x30xf32>
    %28 = vector.broadcast %24 : vector<2x12x12x1xf32> to vector<2x12x12x30xf32>
    %29 = vector.broadcast %27 : vector<1x1x1x30xf32> to vector<2x12x12x30xf32>
    %30 = arith.mulf %28, %29 : vector<2x12x12x30xf32>
    %31 = arith.addf %23, %30 : vector<2x12x12x30xf32>
    %32 = vector.extract_strided_slice %0 {offsets = [0, 0, 4, 0], sizes = [2, 12, 12, 1], strides = [1, 1, 1, 1]} : vector<2x16x16x1xf32> to vector<2x12x12x1xf32>
    %c4 = arith.constant 4 : index
    %c0_8 = arith.constant 0 : index
    %33 = vector.load %arg2[%c4, %c0_8] : memref<25x30xf32, #tpu.memory_space<vmem>>, vector<1x30xf32>
    %34 = vector.shape_cast %33 : vector<1x30xf32> to vector<30xf32>
    %35 = vector.shape_cast %34 : vector<30xf32> to vector<1x1x1x30xf32>
    %36 = vector.broadcast %32 : vector<2x12x12x1xf32> to vector<2x12x12x30xf32>
    %37 = vector.broadcast %35 : vector<1x1x1x30xf32> to vector<2x12x12x30xf32>
    %38 = arith.mulf %36, %37 : vector<2x12x12x30xf32>
    %39 = arith.addf %31, %38 : vector<2x12x12x30xf32>
    %40 = vector.extract_strided_slice %0 {offsets = [0, 1, 0, 0], sizes = [2, 12, 12, 1], strides = [1, 1, 1, 1]} : vector<2x16x16x1xf32> to vector<2x12x12x1xf32>
    %c5 = arith.constant 5 : index
    %c0_9 = arith.constant 0 : index
    %41 = vector.load %arg2[%c5, %c0_9] : memref<25x30xf32, #tpu.memory_space<vmem>>, vector<1x30xf32>
    %42 = vector.shape_cast %41 : vector<1x30xf32> to vector<30xf32>
    %43 = vector.shape_cast %42 : vector<30xf32> to vector<1x1x1x30xf32>
    %44 = vector.broadcast %40 : vector<2x12x12x1xf32> to vector<2x12x12x30xf32>
    %45 = vector.broadcast %43 : vector<1x1x1x30xf32> to vector<2x12x12x30xf32>
    %46 = arith.mulf %44, %45 : vector<2x12x12x30xf32>
    %47 = arith.addf %39, %46 : vector<2x12x12x30xf32>
    %48 = vector.extract_strided_slice %0 {offsets = [0, 1, 1, 0], sizes = [2, 12, 12, 1], strides = [1, 1, 1, 1]} : vector<2x16x16x1xf32> to vector<2x12x12x1xf32>
    %c6 = arith.constant 6 : index
    %c0_10 = arith.constant 0 : index
    %49 = vector.load %arg2[%c6, %c0_10] : memref<25x30xf32, #tpu.memory_space<vmem>>, vector<1x30xf32>
    %50 = vector.shape_cast %49 : vector<1x30xf32> to vector<30xf32>
    %51 = vector.shape_cast %50 : vector<30xf32> to vector<1x1x1x30xf32>
    %52 = vector.broadcast %48 : vector<2x12x12x1xf32> to vector<2x12x12x30xf32>
    %53 = vector.broadcast %51 : vector<1x1x1x30xf32> to vector<2x12x12x30xf32>
    %54 = arith.mulf %52, %53 : vector<2x12x12x30xf32>
    %55 = arith.addf %47, %54 : vector<2x12x12x30xf32>
    %56 = vector.extract_strided_slice %0 {offsets = [0, 1, 2, 0], sizes = [2, 12, 12, 1], strides = [1, 1, 1, 1]} : vector<2x16x16x1xf32> to vector<2x12x12x1xf32>
    %c7 = arith.constant 7 : index
    %c0_11 = arith.constant 0 : index
    %57 = vector.load %arg2[%c7, %c0_11] : memref<25x30xf32, #tpu.memory_space<vmem>>, vector<1x30xf32>
    %58 = vector.shape_cast %57 : vector<1x30xf32> to vector<30xf32>
    %59 = vector.shape_cast %58 : vector<30xf32> to vector<1x1x1x30xf32>
    %60 = vector.broadcast %56 : vector<2x12x12x1xf32> to vector<2x12x12x30xf32>
    %61 = vector.broadcast %59 : vector<1x1x1x30xf32> to vector<2x12x12x30xf32>
    %62 = arith.mulf %60, %61 : vector<2x12x12x30xf32>
    %63 = arith.addf %55, %62 : vector<2x12x12x30xf32>
    %64 = vector.extract_strided_slice %0 {offsets = [0, 1, 3, 0], sizes = [2, 12, 12, 1], strides = [1, 1, 1, 1]} : vector<2x16x16x1xf32> to vector<2x12x12x1xf32>
    %c8 = arith.constant 8 : index
    %c0_12 = arith.constant 0 : index
    %65 = vector.load %arg2[%c8, %c0_12] : memref<25x30xf32, #tpu.memory_space<vmem>>, vector<1x30xf32>
    %66 = vector.shape_cast %65 : vector<1x30xf32> to vector<30xf32>
    %67 = vector.shape_cast %66 : vector<30xf32> to vector<1x1x1x30xf32>
    %68 = vector.broadcast %64 : vector<2x12x12x1xf32> to vector<2x12x12x30xf32>
    %69 = vector.broadcast %67 : vector<1x1x1x30xf32> to vector<2x12x12x30xf32>
    %70 = arith.mulf %68, %69 : vector<2x12x12x30xf32>
    %71 = arith.addf %63, %70 : vector<2x12x12x30xf32>
    %72 = vector.extract_strided_slice %0 {offsets = [0, 1, 4, 0], sizes = [2, 12, 12, 1], strides = [1, 1, 1, 1]} : vector<2x16x16x1xf32> to vector<2x12x12x1xf32>
    %c9 = arith.constant 9 : index
    %c0_13 = arith.constant 0 : index
    %73 = vector.load %arg2[%c9, %c0_13] : memref<25x30xf32, #tpu.memory_space<vmem>>, vector<1x30xf32>
    %74 = vector.shape_cast %73 : vector<1x30xf32> to vector<30xf32>
    %75 = vector.shape_cast %74 : vector<30xf32> to vector<1x1x1x30xf32>
    %76 = vector.broadcast %72 : vector<2x12x12x1xf32> to vector<2x12x12x30xf32>
    %77 = vector.broadcast %75 : vector<1x1x1x30xf32> to vector<2x12x12x30xf32>
    %78 = arith.mulf %76, %77 : vector<2x12x12x30xf32>
    %79 = arith.addf %71, %78 : vector<2x12x12x30xf32>
    %80 = vector.extract_strided_slice %0 {offsets = [0, 2, 0, 0], sizes = [2, 12, 12, 1], strides = [1, 1, 1, 1]} : vector<2x16x16x1xf32> to vector<2x12x12x1xf32>
    %c10 = arith.constant 10 : index
    %c0_14 = arith.constant 0 : index
    %81 = vector.load %arg2[%c10, %c0_14] : memref<25x30xf32, #tpu.memory_space<vmem>>, vector<1x30xf32>
    %82 = vector.shape_cast %81 : vector<1x30xf32> to vector<30xf32>
    %83 = vector.shape_cast %82 : vector<30xf32> to vector<1x1x1x30xf32>
    %84 = vector.broadcast %80 : vector<2x12x12x1xf32> to vector<2x12x12x30xf32>
    %85 = vector.broadcast %83 : vector<1x1x1x30xf32> to vector<2x12x12x30xf32>
    %86 = arith.mulf %84, %85 : vector<2x12x12x30xf32>
    %87 = arith.addf %79, %86 : vector<2x12x12x30xf32>
    %88 = vector.extract_strided_slice %0 {offsets = [0, 2, 1, 0], sizes = [2, 12, 12, 1], strides = [1, 1, 1, 1]} : vector<2x16x16x1xf32> to vector<2x12x12x1xf32>
    %c11 = arith.constant 11 : index
    %c0_15 = arith.constant 0 : index
    %89 = vector.load %arg2[%c11, %c0_15] : memref<25x30xf32, #tpu.memory_space<vmem>>, vector<1x30xf32>
    %90 = vector.shape_cast %89 : vector<1x30xf32> to vector<30xf32>
    %91 = vector.shape_cast %90 : vector<30xf32> to vector<1x1x1x30xf32>
    %92 = vector.broadcast %88 : vector<2x12x12x1xf32> to vector<2x12x12x30xf32>
    %93 = vector.broadcast %91 : vector<1x1x1x30xf32> to vector<2x12x12x30xf32>
    %94 = arith.mulf %92, %93 : vector<2x12x12x30xf32>
    %95 = arith.addf %87, %94 : vector<2x12x12x30xf32>
    %96 = vector.extract_strided_slice %0 {offsets = [0, 2, 2, 0], sizes = [2, 12, 12, 1], strides = [1, 1, 1, 1]} : vector<2x16x16x1xf32> to vector<2x12x12x1xf32>
    %c12 = arith.constant 12 : index
    %c0_16 = arith.constant 0 : index
    %97 = vector.load %arg2[%c12, %c0_16] : memref<25x30xf32, #tpu.memory_space<vmem>>, vector<1x30xf32>
    %98 = vector.shape_cast %97 : vector<1x30xf32> to vector<30xf32>
    %99 = vector.shape_cast %98 : vector<30xf32> to vector<1x1x1x30xf32>
    %100 = vector.broadcast %96 : vector<2x12x12x1xf32> to vector<2x12x12x30xf32>
    %101 = vector.broadcast %99 : vector<1x1x1x30xf32> to vector<2x12x12x30xf32>
    %102 = arith.mulf %100, %101 : vector<2x12x12x30xf32>
    %103 = arith.addf %95, %102 : vector<2x12x12x30xf32>
    %104 = vector.extract_strided_slice %0 {offsets = [0, 2, 3, 0], sizes = [2, 12, 12, 1], strides = [1, 1, 1, 1]} : vector<2x16x16x1xf32> to vector<2x12x12x1xf32>
    %c13 = arith.constant 13 : index
    %c0_17 = arith.constant 0 : index
    %105 = vector.load %arg2[%c13, %c0_17] : memref<25x30xf32, #tpu.memory_space<vmem>>, vector<1x30xf32>
    %106 = vector.shape_cast %105 : vector<1x30xf32> to vector<30xf32>
    %107 = vector.shape_cast %106 : vector<30xf32> to vector<1x1x1x30xf32>
    %108 = vector.broadcast %104 : vector<2x12x12x1xf32> to vector<2x12x12x30xf32>
    %109 = vector.broadcast %107 : vector<1x1x1x30xf32> to vector<2x12x12x30xf32>
    %110 = arith.mulf %108, %109 : vector<2x12x12x30xf32>
    %111 = arith.addf %103, %110 : vector<2x12x12x30xf32>
    %112 = vector.extract_strided_slice %0 {offsets = [0, 2, 4, 0], sizes = [2, 12, 12, 1], strides = [1, 1, 1, 1]} : vector<2x16x16x1xf32> to vector<2x12x12x1xf32>
    %c14 = arith.constant 14 : index
    %c0_18 = arith.constant 0 : index
    %113 = vector.load %arg2[%c14, %c0_18] : memref<25x30xf32, #tpu.memory_space<vmem>>, vector<1x30xf32>
    %114 = vector.shape_cast %113 : vector<1x30xf32> to vector<30xf32>
    %115 = vector.shape_cast %114 : vector<30xf32> to vector<1x1x1x30xf32>
    %116 = vector.broadcast %112 : vector<2x12x12x1xf32> to vector<2x12x12x30xf32>
    %117 = vector.broadcast %115 : vector<1x1x1x30xf32> to vector<2x12x12x30xf32>
    %118 = arith.mulf %116, %117 : vector<2x12x12x30xf32>
    %119 = arith.addf %111, %118 : vector<2x12x12x30xf32>
    %120 = vector.extract_strided_slice %0 {offsets = [0, 3, 0, 0], sizes = [2, 12, 12, 1], strides = [1, 1, 1, 1]} : vector<2x16x16x1xf32> to vector<2x12x12x1xf32>
    %c15 = arith.constant 15 : index
    %c0_19 = arith.constant 0 : index
    %121 = vector.load %arg2[%c15, %c0_19] : memref<25x30xf32, #tpu.memory_space<vmem>>, vector<1x30xf32>
    %122 = vector.shape_cast %121 : vector<1x30xf32> to vector<30xf32>
    %123 = vector.shape_cast %122 : vector<30xf32> to vector<1x1x1x30xf32>
    %124 = vector.broadcast %120 : vector<2x12x12x1xf32> to vector<2x12x12x30xf32>
    %125 = vector.broadcast %123 : vector<1x1x1x30xf32> to vector<2x12x12x30xf32>
    %126 = arith.mulf %124, %125 : vector<2x12x12x30xf32>
    %127 = arith.addf %119, %126 : vector<2x12x12x30xf32>
    %128 = vector.extract_strided_slice %0 {offsets = [0, 3, 1, 0], sizes = [2, 12, 12, 1], strides = [1, 1, 1, 1]} : vector<2x16x16x1xf32> to vector<2x12x12x1xf32>
    %c16 = arith.constant 16 : index
    %c0_20 = arith.constant 0 : index
    %129 = vector.load %arg2[%c16, %c0_20] : memref<25x30xf32, #tpu.memory_space<vmem>>, vector<1x30xf32>
    %130 = vector.shape_cast %129 : vector<1x30xf32> to vector<30xf32>
    %131 = vector.shape_cast %130 : vector<30xf32> to vector<1x1x1x30xf32>
    %132 = vector.broadcast %128 : vector<2x12x12x1xf32> to vector<2x12x12x30xf32>
    %133 = vector.broadcast %131 : vector<1x1x1x30xf32> to vector<2x12x12x30xf32>
    %134 = arith.mulf %132, %133 : vector<2x12x12x30xf32>
    %135 = arith.addf %127, %134 : vector<2x12x12x30xf32>
    %136 = vector.extract_strided_slice %0 {offsets = [0, 3, 2, 0], sizes = [2, 12, 12, 1], strides = [1, 1, 1, 1]} : vector<2x16x16x1xf32> to vector<2x12x12x1xf32>
    %c17 = arith.constant 17 : index
    %c0_21 = arith.constant 0 : index
    %137 = vector.load %arg2[%c17, %c0_21] : memref<25x30xf32, #tpu.memory_space<vmem>>, vector<1x30xf32>
    %138 = vector.shape_cast %137 : vector<1x30xf32> to vector<30xf32>
    %139 = vector.shape_cast %138 : vector<30xf32> to vector<1x1x1x30xf32>
    %140 = vector.broadcast %136 : vector<2x12x12x1xf32> to vector<2x12x12x30xf32>
    %141 = vector.broadcast %139 : vector<1x1x1x30xf32> to vector<2x12x12x30xf32>
    %142 = arith.mulf %140, %141 : vector<2x12x12x30xf32>
    %143 = arith.addf %135, %142 : vector<2x12x12x30xf32>
    %144 = vector.extract_strided_slice %0 {offsets = [0, 3, 3, 0], sizes = [2, 12, 12, 1], strides = [1, 1, 1, 1]} : vector<2x16x16x1xf32> to vector<2x12x12x1xf32>
    %c18 = arith.constant 18 : index
    %c0_22 = arith.constant 0 : index
    %145 = vector.load %arg2[%c18, %c0_22] : memref<25x30xf32, #tpu.memory_space<vmem>>, vector<1x30xf32>
    %146 = vector.shape_cast %145 : vector<1x30xf32> to vector<30xf32>
    %147 = vector.shape_cast %146 : vector<30xf32> to vector<1x1x1x30xf32>
    %148 = vector.broadcast %144 : vector<2x12x12x1xf32> to vector<2x12x12x30xf32>
    %149 = vector.broadcast %147 : vector<1x1x1x30xf32> to vector<2x12x12x30xf32>
    %150 = arith.mulf %148, %149 : vector<2x12x12x30xf32>
    %151 = arith.addf %143, %150 : vector<2x12x12x30xf32>
    %152 = vector.extract_strided_slice %0 {offsets = [0, 3, 4, 0], sizes = [2, 12, 12, 1], strides = [1, 1, 1, 1]} : vector<2x16x16x1xf32> to vector<2x12x12x1xf32>
    %c19 = arith.constant 19 : index
    %c0_23 = arith.constant 0 : index
    %153 = vector.load %arg2[%c19, %c0_23] : memref<25x30xf32, #tpu.memory_space<vmem>>, vector<1x30xf32>
    %154 = vector.shape_cast %153 : vector<1x30xf32> to vector<30xf32>
    %155 = vector.shape_cast %154 : vector<30xf32> to vector<1x1x1x30xf32>
    %156 = vector.broadcast %152 : vector<2x12x12x1xf32> to vector<2x12x12x30xf32>
    %157 = vector.broadcast %155 : vector<1x1x1x30xf32> to vector<2x12x12x30xf32>
    %158 = arith.mulf %156, %157 : vector<2x12x12x30xf32>
    %159 = arith.addf %151, %158 : vector<2x12x12x30xf32>
    %160 = vector.extract_strided_slice %0 {offsets = [0, 4, 0, 0], sizes = [2, 12, 12, 1], strides = [1, 1, 1, 1]} : vector<2x16x16x1xf32> to vector<2x12x12x1xf32>
    %c20 = arith.constant 20 : index
    %c0_24 = arith.constant 0 : index
    %161 = vector.load %arg2[%c20, %c0_24] : memref<25x30xf32, #tpu.memory_space<vmem>>, vector<1x30xf32>
    %162 = vector.shape_cast %161 : vector<1x30xf32> to vector<30xf32>
    %163 = vector.shape_cast %162 : vector<30xf32> to vector<1x1x1x30xf32>
    %164 = vector.broadcast %160 : vector<2x12x12x1xf32> to vector<2x12x12x30xf32>
    %165 = vector.broadcast %163 : vector<1x1x1x30xf32> to vector<2x12x12x30xf32>
    %166 = arith.mulf %164, %165 : vector<2x12x12x30xf32>
    %167 = arith.addf %159, %166 : vector<2x12x12x30xf32>
    %168 = vector.extract_strided_slice %0 {offsets = [0, 4, 1, 0], sizes = [2, 12, 12, 1], strides = [1, 1, 1, 1]} : vector<2x16x16x1xf32> to vector<2x12x12x1xf32>
    %c21 = arith.constant 21 : index
    %c0_25 = arith.constant 0 : index
    %169 = vector.load %arg2[%c21, %c0_25] : memref<25x30xf32, #tpu.memory_space<vmem>>, vector<1x30xf32>
    %170 = vector.shape_cast %169 : vector<1x30xf32> to vector<30xf32>
    %171 = vector.shape_cast %170 : vector<30xf32> to vector<1x1x1x30xf32>
    %172 = vector.broadcast %168 : vector<2x12x12x1xf32> to vector<2x12x12x30xf32>
    %173 = vector.broadcast %171 : vector<1x1x1x30xf32> to vector<2x12x12x30xf32>
    %174 = arith.mulf %172, %173 : vector<2x12x12x30xf32>
    %175 = arith.addf %167, %174 : vector<2x12x12x30xf32>
    %176 = vector.extract_strided_slice %0 {offsets = [0, 4, 2, 0], sizes = [2, 12, 12, 1], strides = [1, 1, 1, 1]} : vector<2x16x16x1xf32> to vector<2x12x12x1xf32>
    %c22 = arith.constant 22 : index
    %c0_26 = arith.constant 0 : index
    %177 = vector.load %arg2[%c22, %c0_26] : memref<25x30xf32, #tpu.memory_space<vmem>>, vector<1x30xf32>
    %178 = vector.shape_cast %177 : vector<1x30xf32> to vector<30xf32>
    %179 = vector.shape_cast %178 : vector<30xf32> to vector<1x1x1x30xf32>
    %180 = vector.broadcast %176 : vector<2x12x12x1xf32> to vector<2x12x12x30xf32>
    %181 = vector.broadcast %179 : vector<1x1x1x30xf32> to vector<2x12x12x30xf32>
    %182 = arith.mulf %180, %181 : vector<2x12x12x30xf32>
    %183 = arith.addf %175, %182 : vector<2x12x12x30xf32>
    %184 = vector.extract_strided_slice %0 {offsets = [0, 4, 3, 0], sizes = [2, 12, 12, 1], strides = [1, 1, 1, 1]} : vector<2x16x16x1xf32> to vector<2x12x12x1xf32>
    %c23 = arith.constant 23 : index
    %c0_27 = arith.constant 0 : index
    %185 = vector.load %arg2[%c23, %c0_27] : memref<25x30xf32, #tpu.memory_space<vmem>>, vector<1x30xf32>
    %186 = vector.shape_cast %185 : vector<1x30xf32> to vector<30xf32>
    %187 = vector.shape_cast %186 : vector<30xf32> to vector<1x1x1x30xf32>
    %188 = vector.broadcast %184 : vector<2x12x12x1xf32> to vector<2x12x12x30xf32>
    %189 = vector.broadcast %187 : vector<1x1x1x30xf32> to vector<2x12x12x30xf32>
    %190 = arith.mulf %188, %189 : vector<2x12x12x30xf32>
    %191 = arith.addf %183, %190 : vector<2x12x12x30xf32>
    %192 = vector.extract_strided_slice %0 {offsets = [0, 4, 4, 0], sizes = [2, 12, 12, 1], strides = [1, 1, 1, 1]} : vector<2x16x16x1xf32> to vector<2x12x12x1xf32>
    %c24 = arith.constant 24 : index
    %c0_28 = arith.constant 0 : index
    %193 = vector.load %arg2[%c24, %c0_28] : memref<25x30xf32, #tpu.memory_space<vmem>>, vector<1x30xf32>
    %194 = vector.shape_cast %193 : vector<1x30xf32> to vector<30xf32>
    %195 = vector.shape_cast %194 : vector<30xf32> to vector<1x1x1x30xf32>
    %196 = vector.broadcast %192 : vector<2x12x12x1xf32> to vector<2x12x12x30xf32>
    %197 = vector.broadcast %195 : vector<1x1x1x30xf32> to vector<2x12x12x30xf32>
    %198 = arith.mulf %196, %197 : vector<2x12x12x30xf32>
    %199 = arith.addf %191, %198 : vector<2x12x12x30xf32>
    %c0_29 = arith.constant 0 : index
    %c0_30 = arith.constant 0 : index
    %200 = vector.load %arg3[%c0_29, %c0_30] : memref<1x30xf32, #tpu.memory_space<vmem>>, vector<1x30xf32>
    %201 = vector.shape_cast %200 : vector<1x30xf32> to vector<1x1x1x30xf32>
    %202 = vector.broadcast %201 : vector<1x1x1x30xf32> to vector<2x12x12x30xf32>
    %203 = arith.addf %199, %202 : vector<2x12x12x30xf32>
    %cst = arith.constant 0.000000e+00 : f32
    %204 = vector.broadcast %cst : f32 to vector<2x12x12x30xf32>
    %205 = arith.maximumf %203, %204 : vector<2x12x12x30xf32>
    %206 = vector.extract_strided_slice %205 {offsets = [0, 0, 0, 0], sizes = [2, 8, 8, 30], strides = [1, 1, 1, 1]} : vector<2x12x12x30xf32> to vector<2x8x8x30xf32>
    %c0_31 = arith.constant 0 : index
    %c0_32 = arith.constant 0 : index
    %207 = vector.load %arg4[%c0_31, %c0_32] : memref<25x30xf32, #tpu.memory_space<vmem>>, vector<1x30xf32>
    %208 = vector.shape_cast %207 : vector<1x30xf32> to vector<30xf32>
    %209 = vector.shape_cast %208 : vector<30xf32> to vector<1x1x1x30xf32>
    %210 = vector.broadcast %209 : vector<1x1x1x30xf32> to vector<2x8x8x30xf32>
    %211 = arith.mulf %206, %210 : vector<2x8x8x30xf32>
    %212 = vector.extract_strided_slice %205 {offsets = [0, 0, 1, 0], sizes = [2, 8, 8, 30], strides = [1, 1, 1, 1]} : vector<2x12x12x30xf32> to vector<2x8x8x30xf32>
    %c1_33 = arith.constant 1 : index
    %c0_34 = arith.constant 0 : index
    %213 = vector.load %arg4[%c1_33, %c0_34] : memref<25x30xf32, #tpu.memory_space<vmem>>, vector<1x30xf32>
    %214 = vector.shape_cast %213 : vector<1x30xf32> to vector<30xf32>
    %215 = vector.shape_cast %214 : vector<30xf32> to vector<1x1x1x30xf32>
    %216 = vector.broadcast %215 : vector<1x1x1x30xf32> to vector<2x8x8x30xf32>
    %217 = arith.mulf %212, %216 : vector<2x8x8x30xf32>
    %218 = arith.addf %211, %217 : vector<2x8x8x30xf32>
    %219 = vector.extract_strided_slice %205 {offsets = [0, 0, 2, 0], sizes = [2, 8, 8, 30], strides = [1, 1, 1, 1]} : vector<2x12x12x30xf32> to vector<2x8x8x30xf32>
    %c2_35 = arith.constant 2 : index
    %c0_36 = arith.constant 0 : index
    %220 = vector.load %arg4[%c2_35, %c0_36] : memref<25x30xf32, #tpu.memory_space<vmem>>, vector<1x30xf32>
    %221 = vector.shape_cast %220 : vector<1x30xf32> to vector<30xf32>
    %222 = vector.shape_cast %221 : vector<30xf32> to vector<1x1x1x30xf32>
    %223 = vector.broadcast %222 : vector<1x1x1x30xf32> to vector<2x8x8x30xf32>
    %224 = arith.mulf %219, %223 : vector<2x8x8x30xf32>
    %225 = arith.addf %218, %224 : vector<2x8x8x30xf32>
    %226 = vector.extract_strided_slice %205 {offsets = [0, 0, 3, 0], sizes = [2, 8, 8, 30], strides = [1, 1, 1, 1]} : vector<2x12x12x30xf32> to vector<2x8x8x30xf32>
    %c3_37 = arith.constant 3 : index
    %c0_38 = arith.constant 0 : index
    %227 = vector.load %arg4[%c3_37, %c0_38] : memref<25x30xf32, #tpu.memory_space<vmem>>, vector<1x30xf32>
    %228 = vector.shape_cast %227 : vector<1x30xf32> to vector<30xf32>
    %229 = vector.shape_cast %228 : vector<30xf32> to vector<1x1x1x30xf32>
    %230 = vector.broadcast %229 : vector<1x1x1x30xf32> to vector<2x8x8x30xf32>
    %231 = arith.mulf %226, %230 : vector<2x8x8x30xf32>
    %232 = arith.addf %225, %231 : vector<2x8x8x30xf32>
    %233 = vector.extract_strided_slice %205 {offsets = [0, 0, 4, 0], sizes = [2, 8, 8, 30], strides = [1, 1, 1, 1]} : vector<2x12x12x30xf32> to vector<2x8x8x30xf32>
    %c4_39 = arith.constant 4 : index
    %c0_40 = arith.constant 0 : index
    %234 = vector.load %arg4[%c4_39, %c0_40] : memref<25x30xf32, #tpu.memory_space<vmem>>, vector<1x30xf32>
    %235 = vector.shape_cast %234 : vector<1x30xf32> to vector<30xf32>
    %236 = vector.shape_cast %235 : vector<30xf32> to vector<1x1x1x30xf32>
    %237 = vector.broadcast %236 : vector<1x1x1x30xf32> to vector<2x8x8x30xf32>
    %238 = arith.mulf %233, %237 : vector<2x8x8x30xf32>
    %239 = arith.addf %232, %238 : vector<2x8x8x30xf32>
    %240 = vector.extract_strided_slice %205 {offsets = [0, 1, 0, 0], sizes = [2, 8, 8, 30], strides = [1, 1, 1, 1]} : vector<2x12x12x30xf32> to vector<2x8x8x30xf32>
    %c5_41 = arith.constant 5 : index
    %c0_42 = arith.constant 0 : index
    %241 = vector.load %arg4[%c5_41, %c0_42] : memref<25x30xf32, #tpu.memory_space<vmem>>, vector<1x30xf32>
    %242 = vector.shape_cast %241 : vector<1x30xf32> to vector<30xf32>
    %243 = vector.shape_cast %242 : vector<30xf32> to vector<1x1x1x30xf32>
    %244 = vector.broadcast %243 : vector<1x1x1x30xf32> to vector<2x8x8x30xf32>
    %245 = arith.mulf %240, %244 : vector<2x8x8x30xf32>
    %246 = arith.addf %239, %245 : vector<2x8x8x30xf32>
    %247 = vector.extract_strided_slice %205 {offsets = [0, 1, 1, 0], sizes = [2, 8, 8, 30], strides = [1, 1, 1, 1]} : vector<2x12x12x30xf32> to vector<2x8x8x30xf32>
    %c6_43 = arith.constant 6 : index
    %c0_44 = arith.constant 0 : index
    %248 = vector.load %arg4[%c6_43, %c0_44] : memref<25x30xf32, #tpu.memory_space<vmem>>, vector<1x30xf32>
    %249 = vector.shape_cast %248 : vector<1x30xf32> to vector<30xf32>
    %250 = vector.shape_cast %249 : vector<30xf32> to vector<1x1x1x30xf32>
    %251 = vector.broadcast %250 : vector<1x1x1x30xf32> to vector<2x8x8x30xf32>
    %252 = arith.mulf %247, %251 : vector<2x8x8x30xf32>
    %253 = arith.addf %246, %252 : vector<2x8x8x30xf32>
    %254 = vector.extract_strided_slice %205 {offsets = [0, 1, 2, 0], sizes = [2, 8, 8, 30], strides = [1, 1, 1, 1]} : vector<2x12x12x30xf32> to vector<2x8x8x30xf32>
    %c7_45 = arith.constant 7 : index
    %c0_46 = arith.constant 0 : index
    %255 = vector.load %arg4[%c7_45, %c0_46] : memref<25x30xf32, #tpu.memory_space<vmem>>, vector<1x30xf32>
    %256 = vector.shape_cast %255 : vector<1x30xf32> to vector<30xf32>
    %257 = vector.shape_cast %256 : vector<30xf32> to vector<1x1x1x30xf32>
    %258 = vector.broadcast %257 : vector<1x1x1x30xf32> to vector<2x8x8x30xf32>
    %259 = arith.mulf %254, %258 : vector<2x8x8x30xf32>
    %260 = arith.addf %253, %259 : vector<2x8x8x30xf32>
    %261 = vector.extract_strided_slice %205 {offsets = [0, 1, 3, 0], sizes = [2, 8, 8, 30], strides = [1, 1, 1, 1]} : vector<2x12x12x30xf32> to vector<2x8x8x30xf32>
    %c8_47 = arith.constant 8 : index
    %c0_48 = arith.constant 0 : index
    %262 = vector.load %arg4[%c8_47, %c0_48] : memref<25x30xf32, #tpu.memory_space<vmem>>, vector<1x30xf32>
    %263 = vector.shape_cast %262 : vector<1x30xf32> to vector<30xf32>
    %264 = vector.shape_cast %263 : vector<30xf32> to vector<1x1x1x30xf32>
    %265 = vector.broadcast %264 : vector<1x1x1x30xf32> to vector<2x8x8x30xf32>
    %266 = arith.mulf %261, %265 : vector<2x8x8x30xf32>
    %267 = arith.addf %260, %266 : vector<2x8x8x30xf32>
    %268 = vector.extract_strided_slice %205 {offsets = [0, 1, 4, 0], sizes = [2, 8, 8, 30], strides = [1, 1, 1, 1]} : vector<2x12x12x30xf32> to vector<2x8x8x30xf32>
    %c9_49 = arith.constant 9 : index
    %c0_50 = arith.constant 0 : index
    %269 = vector.load %arg4[%c9_49, %c0_50] : memref<25x30xf32, #tpu.memory_space<vmem>>, vector<1x30xf32>
    %270 = vector.shape_cast %269 : vector<1x30xf32> to vector<30xf32>
    %271 = vector.shape_cast %270 : vector<30xf32> to vector<1x1x1x30xf32>
    %272 = vector.broadcast %271 : vector<1x1x1x30xf32> to vector<2x8x8x30xf32>
    %273 = arith.mulf %268, %272 : vector<2x8x8x30xf32>
    %274 = arith.addf %267, %273 : vector<2x8x8x30xf32>
    %275 = vector.extract_strided_slice %205 {offsets = [0, 2, 0, 0], sizes = [2, 8, 8, 30], strides = [1, 1, 1, 1]} : vector<2x12x12x30xf32> to vector<2x8x8x30xf32>
    %c10_51 = arith.constant 10 : index
    %c0_52 = arith.constant 0 : index
    %276 = vector.load %arg4[%c10_51, %c0_52] : memref<25x30xf32, #tpu.memory_space<vmem>>, vector<1x30xf32>
    %277 = vector.shape_cast %276 : vector<1x30xf32> to vector<30xf32>
    %278 = vector.shape_cast %277 : vector<30xf32> to vector<1x1x1x30xf32>
    %279 = vector.broadcast %278 : vector<1x1x1x30xf32> to vector<2x8x8x30xf32>
    %280 = arith.mulf %275, %279 : vector<2x8x8x30xf32>
    %281 = arith.addf %274, %280 : vector<2x8x8x30xf32>
    %282 = vector.extract_strided_slice %205 {offsets = [0, 2, 1, 0], sizes = [2, 8, 8, 30], strides = [1, 1, 1, 1]} : vector<2x12x12x30xf32> to vector<2x8x8x30xf32>
    %c11_53 = arith.constant 11 : index
    %c0_54 = arith.constant 0 : index
    %283 = vector.load %arg4[%c11_53, %c0_54] : memref<25x30xf32, #tpu.memory_space<vmem>>, vector<1x30xf32>
    %284 = vector.shape_cast %283 : vector<1x30xf32> to vector<30xf32>
    %285 = vector.shape_cast %284 : vector<30xf32> to vector<1x1x1x30xf32>
    %286 = vector.broadcast %285 : vector<1x1x1x30xf32> to vector<2x8x8x30xf32>
    %287 = arith.mulf %282, %286 : vector<2x8x8x30xf32>
    %288 = arith.addf %281, %287 : vector<2x8x8x30xf32>
    %289 = vector.extract_strided_slice %205 {offsets = [0, 2, 2, 0], sizes = [2, 8, 8, 30], strides = [1, 1, 1, 1]} : vector<2x12x12x30xf32> to vector<2x8x8x30xf32>
    %c12_55 = arith.constant 12 : index
    %c0_56 = arith.constant 0 : index
    %290 = vector.load %arg4[%c12_55, %c0_56] : memref<25x30xf32, #tpu.memory_space<vmem>>, vector<1x30xf32>
    %291 = vector.shape_cast %290 : vector<1x30xf32> to vector<30xf32>
    %292 = vector.shape_cast %291 : vector<30xf32> to vector<1x1x1x30xf32>
    %293 = vector.broadcast %292 : vector<1x1x1x30xf32> to vector<2x8x8x30xf32>
    %294 = arith.mulf %289, %293 : vector<2x8x8x30xf32>
    %295 = arith.addf %288, %294 : vector<2x8x8x30xf32>
    %296 = vector.extract_strided_slice %205 {offsets = [0, 2, 3, 0], sizes = [2, 8, 8, 30], strides = [1, 1, 1, 1]} : vector<2x12x12x30xf32> to vector<2x8x8x30xf32>
    %c13_57 = arith.constant 13 : index
    %c0_58 = arith.constant 0 : index
    %297 = vector.load %arg4[%c13_57, %c0_58] : memref<25x30xf32, #tpu.memory_space<vmem>>, vector<1x30xf32>
    %298 = vector.shape_cast %297 : vector<1x30xf32> to vector<30xf32>
    %299 = vector.shape_cast %298 : vector<30xf32> to vector<1x1x1x30xf32>
    %300 = vector.broadcast %299 : vector<1x1x1x30xf32> to vector<2x8x8x30xf32>
    %301 = arith.mulf %296, %300 : vector<2x8x8x30xf32>
    %302 = arith.addf %295, %301 : vector<2x8x8x30xf32>
    %303 = vector.extract_strided_slice %205 {offsets = [0, 2, 4, 0], sizes = [2, 8, 8, 30], strides = [1, 1, 1, 1]} : vector<2x12x12x30xf32> to vector<2x8x8x30xf32>
    %c14_59 = arith.constant 14 : index
    %c0_60 = arith.constant 0 : index
    %304 = vector.load %arg4[%c14_59, %c0_60] : memref<25x30xf32, #tpu.memory_space<vmem>>, vector<1x30xf32>
    %305 = vector.shape_cast %304 : vector<1x30xf32> to vector<30xf32>
    %306 = vector.shape_cast %305 : vector<30xf32> to vector<1x1x1x30xf32>
    %307 = vector.broadcast %306 : vector<1x1x1x30xf32> to vector<2x8x8x30xf32>
    %308 = arith.mulf %303, %307 : vector<2x8x8x30xf32>
    %309 = arith.addf %302, %308 : vector<2x8x8x30xf32>
    %310 = vector.extract_strided_slice %205 {offsets = [0, 3, 0, 0], sizes = [2, 8, 8, 30], strides = [1, 1, 1, 1]} : vector<2x12x12x30xf32> to vector<2x8x8x30xf32>
    %c15_61 = arith.constant 15 : index
    %c0_62 = arith.constant 0 : index
    %311 = vector.load %arg4[%c15_61, %c0_62] : memref<25x30xf32, #tpu.memory_space<vmem>>, vector<1x30xf32>
    %312 = vector.shape_cast %311 : vector<1x30xf32> to vector<30xf32>
    %313 = vector.shape_cast %312 : vector<30xf32> to vector<1x1x1x30xf32>
    %314 = vector.broadcast %313 : vector<1x1x1x30xf32> to vector<2x8x8x30xf32>
    %315 = arith.mulf %310, %314 : vector<2x8x8x30xf32>
    %316 = arith.addf %309, %315 : vector<2x8x8x30xf32>
    %317 = vector.extract_strided_slice %205 {offsets = [0, 3, 1, 0], sizes = [2, 8, 8, 30], strides = [1, 1, 1, 1]} : vector<2x12x12x30xf32> to vector<2x8x8x30xf32>
    %c16_63 = arith.constant 16 : index
    %c0_64 = arith.constant 0 : index
    %318 = vector.load %arg4[%c16_63, %c0_64] : memref<25x30xf32, #tpu.memory_space<vmem>>, vector<1x30xf32>
    %319 = vector.shape_cast %318 : vector<1x30xf32> to vector<30xf32>
    %320 = vector.shape_cast %319 : vector<30xf32> to vector<1x1x1x30xf32>
    %321 = vector.broadcast %320 : vector<1x1x1x30xf32> to vector<2x8x8x30xf32>
    %322 = arith.mulf %317, %321 : vector<2x8x8x30xf32>
    %323 = arith.addf %316, %322 : vector<2x8x8x30xf32>
    %324 = vector.extract_strided_slice %205 {offsets = [0, 3, 2, 0], sizes = [2, 8, 8, 30], strides = [1, 1, 1, 1]} : vector<2x12x12x30xf32> to vector<2x8x8x30xf32>
    %c17_65 = arith.constant 17 : index
    %c0_66 = arith.constant 0 : index
    %325 = vector.load %arg4[%c17_65, %c0_66] : memref<25x30xf32, #tpu.memory_space<vmem>>, vector<1x30xf32>
    %326 = vector.shape_cast %325 : vector<1x30xf32> to vector<30xf32>
    %327 = vector.shape_cast %326 : vector<30xf32> to vector<1x1x1x30xf32>
    %328 = vector.broadcast %327 : vector<1x1x1x30xf32> to vector<2x8x8x30xf32>
    %329 = arith.mulf %324, %328 : vector<2x8x8x30xf32>
    %330 = arith.addf %323, %329 : vector<2x8x8x30xf32>
    %331 = vector.extract_strided_slice %205 {offsets = [0, 3, 3, 0], sizes = [2, 8, 8, 30], strides = [1, 1, 1, 1]} : vector<2x12x12x30xf32> to vector<2x8x8x30xf32>
    %c18_67 = arith.constant 18 : index
    %c0_68 = arith.constant 0 : index
    %332 = vector.load %arg4[%c18_67, %c0_68] : memref<25x30xf32, #tpu.memory_space<vmem>>, vector<1x30xf32>
    %333 = vector.shape_cast %332 : vector<1x30xf32> to vector<30xf32>
    %334 = vector.shape_cast %333 : vector<30xf32> to vector<1x1x1x30xf32>
    %335 = vector.broadcast %334 : vector<1x1x1x30xf32> to vector<2x8x8x30xf32>
    %336 = arith.mulf %331, %335 : vector<2x8x8x30xf32>
    %337 = arith.addf %330, %336 : vector<2x8x8x30xf32>
    %338 = vector.extract_strided_slice %205 {offsets = [0, 3, 4, 0], sizes = [2, 8, 8, 30], strides = [1, 1, 1, 1]} : vector<2x12x12x30xf32> to vector<2x8x8x30xf32>
    %c19_69 = arith.constant 19 : index
    %c0_70 = arith.constant 0 : index
    %339 = vector.load %arg4[%c19_69, %c0_70] : memref<25x30xf32, #tpu.memory_space<vmem>>, vector<1x30xf32>
    %340 = vector.shape_cast %339 : vector<1x30xf32> to vector<30xf32>
    %341 = vector.shape_cast %340 : vector<30xf32> to vector<1x1x1x30xf32>
    %342 = vector.broadcast %341 : vector<1x1x1x30xf32> to vector<2x8x8x30xf32>
    %343 = arith.mulf %338, %342 : vector<2x8x8x30xf32>
    %344 = arith.addf %337, %343 : vector<2x8x8x30xf32>
    %345 = vector.extract_strided_slice %205 {offsets = [0, 4, 0, 0], sizes = [2, 8, 8, 30], strides = [1, 1, 1, 1]} : vector<2x12x12x30xf32> to vector<2x8x8x30xf32>
    %c20_71 = arith.constant 20 : index
    %c0_72 = arith.constant 0 : index
    %346 = vector.load %arg4[%c20_71, %c0_72] : memref<25x30xf32, #tpu.memory_space<vmem>>, vector<1x30xf32>
    %347 = vector.shape_cast %346 : vector<1x30xf32> to vector<30xf32>
    %348 = vector.shape_cast %347 : vector<30xf32> to vector<1x1x1x30xf32>
    %349 = vector.broadcast %348 : vector<1x1x1x30xf32> to vector<2x8x8x30xf32>
    %350 = arith.mulf %345, %349 : vector<2x8x8x30xf32>
    %351 = arith.addf %344, %350 : vector<2x8x8x30xf32>
    %352 = vector.extract_strided_slice %205 {offsets = [0, 4, 1, 0], sizes = [2, 8, 8, 30], strides = [1, 1, 1, 1]} : vector<2x12x12x30xf32> to vector<2x8x8x30xf32>
    %c21_73 = arith.constant 21 : index
    %c0_74 = arith.constant 0 : index
    %353 = vector.load %arg4[%c21_73, %c0_74] : memref<25x30xf32, #tpu.memory_space<vmem>>, vector<1x30xf32>
    %354 = vector.shape_cast %353 : vector<1x30xf32> to vector<30xf32>
    %355 = vector.shape_cast %354 : vector<30xf32> to vector<1x1x1x30xf32>
    %356 = vector.broadcast %355 : vector<1x1x1x30xf32> to vector<2x8x8x30xf32>
    %357 = arith.mulf %352, %356 : vector<2x8x8x30xf32>
    %358 = arith.addf %351, %357 : vector<2x8x8x30xf32>
    %359 = vector.extract_strided_slice %205 {offsets = [0, 4, 2, 0], sizes = [2, 8, 8, 30], strides = [1, 1, 1, 1]} : vector<2x12x12x30xf32> to vector<2x8x8x30xf32>
    %c22_75 = arith.constant 22 : index
    %c0_76 = arith.constant 0 : index
    %360 = vector.load %arg4[%c22_75, %c0_76] : memref<25x30xf32, #tpu.memory_space<vmem>>, vector<1x30xf32>
    %361 = vector.shape_cast %360 : vector<1x30xf32> to vector<30xf32>
    %362 = vector.shape_cast %361 : vector<30xf32> to vector<1x1x1x30xf32>
    %363 = vector.broadcast %362 : vector<1x1x1x30xf32> to vector<2x8x8x30xf32>
    %364 = arith.mulf %359, %363 : vector<2x8x8x30xf32>
    %365 = arith.addf %358, %364 : vector<2x8x8x30xf32>
    %366 = vector.extract_strided_slice %205 {offsets = [0, 4, 3, 0], sizes = [2, 8, 8, 30], strides = [1, 1, 1, 1]} : vector<2x12x12x30xf32> to vector<2x8x8x30xf32>
    %c23_77 = arith.constant 23 : index
    %c0_78 = arith.constant 0 : index
    %367 = vector.load %arg4[%c23_77, %c0_78] : memref<25x30xf32, #tpu.memory_space<vmem>>, vector<1x30xf32>
    %368 = vector.shape_cast %367 : vector<1x30xf32> to vector<30xf32>
    %369 = vector.shape_cast %368 : vector<30xf32> to vector<1x1x1x30xf32>
    %370 = vector.broadcast %369 : vector<1x1x1x30xf32> to vector<2x8x8x30xf32>
    %371 = arith.mulf %366, %370 : vector<2x8x8x30xf32>
    %372 = arith.addf %365, %371 : vector<2x8x8x30xf32>
    %373 = vector.extract_strided_slice %205 {offsets = [0, 4, 4, 0], sizes = [2, 8, 8, 30], strides = [1, 1, 1, 1]} : vector<2x12x12x30xf32> to vector<2x8x8x30xf32>
    %c24_79 = arith.constant 24 : index
    %c0_80 = arith.constant 0 : index
    %374 = vector.load %arg4[%c24_79, %c0_80] : memref<25x30xf32, #tpu.memory_space<vmem>>, vector<1x30xf32>
    %375 = vector.shape_cast %374 : vector<1x30xf32> to vector<30xf32>
    %376 = vector.shape_cast %375 : vector<30xf32> to vector<1x1x1x30xf32>
    %377 = vector.broadcast %376 : vector<1x1x1x30xf32> to vector<2x8x8x30xf32>
    %378 = arith.mulf %373, %377 : vector<2x8x8x30xf32>
    %379 = arith.addf %372, %378 : vector<2x8x8x30xf32>
    %cst_81 = arith.constant dense<0.000000e+00> : vector<2x8x8xf32>
    %380 = vector.multi_reduction <add>, %379, %cst_81 [3] : vector<2x8x8x30xf32> to vector<2x8x8xf32>
    %c0_82 = arith.constant 0 : index
    %c0_83 = arith.constant 0 : index
    %381 = vector.load %arg5[%c0_82, %c0_83] : memref<1x1xf32, #tpu.memory_space<vmem>>, vector<1x1xf32>
    %382 = vector.shape_cast %381 : vector<1x1xf32> to vector<1x1x1xf32>
    %383 = vector.broadcast %382 : vector<1x1x1xf32> to vector<2x8x8xf32>
    %384 = arith.addf %380, %383 : vector<2x8x8xf32>
    %cst_84 = arith.constant 0.000000e+00 : f32
    %385 = vector.broadcast %cst_84 : f32 to vector<2x8x8xf32>
    %386 = arith.maximumf %384, %385 : vector<2x8x8xf32>
    %c0_85 = arith.constant 0 : index
    %c0_86 = arith.constant 0 : index
    %c0_87 = arith.constant 0 : index
    %387 = vector.load %arg6[%c0_85, %c0_86, %c0_87] : memref<2x8x8xf32, #tpu.memory_space<vmem>>, vector<2x8x8xf32>
    tpu.vector_store %arg6[%c0_85, %c0_86, %c0_87], %386 {strides = array<i32>} : memref<2x8x8xf32, #tpu.memory_space<vmem>>, vector<2x8x8xf32>,
    return
  }
  func.func @transform_0(%arg0: i32) -> (i32, i32, i32, i32) {
    %c0_i32 = arith.constant 0 : i32
    %c0_i32_0 = arith.constant 0 : i32
    %c0_i32_1 = arith.constant 0 : i32
    %c0_i32_2 = arith.constant 0 : i32
    return %arg0, %c0_i32, %c0_i32_0, %c0_i32_1 : i32, i32, i32, i32
  }
  func.func @transform_1(%arg0: i32) -> (i32, i32) {
    %c0_i32 = arith.constant 0 : i32
    %c0_i32_0 = arith.constant 0 : i32
    %c0_i32_1 = arith.constant 0 : i32
    return %c0_i32, %c0_i32_0 : i32, i32
  }
  func.func @transform_2(%arg0: i32) -> (i32, i32) {
    %c0_i32 = arith.constant 0 : i32
    %c0_i32_0 = arith.constant 0 : i32
    %c0_i32_1 = arith.constant 0 : i32
    return %c0_i32, %c0_i32_0 : i32, i32
  }
  func.func @transform_3(%arg0: i32) -> (i32, i32) {
    %c0_i32 = arith.constant 0 : i32
    %c0_i32_0 = arith.constant 0 : i32
    %c0_i32_1 = arith.constant 0 : i32
    return %c0_i32, %c0_i32_0 : i32, i32
  }
  func.func @transform_4(%arg0: i32) -> (i32, i32) {
    %c0_i32 = arith.constant 0 : i32
    %c0_i32_0 = arith.constant 0 : i32
    %c0_i32_1 = arith.constant 0 : i32
    return %c0_i32, %c0_i32_0 : i32, i32
  }
  func.func @transform_5(%arg0: i32) -> (i32, i32, i32) {
    %c0_i32 = arith.constant 0 : i32
    %c0_i32_0 = arith.constant 0 : i32
    %c0_i32_1 = arith.constant 0 : i32
    return %arg0, %c0_i32, %c0_i32_0 : i32, i32, i32
  }
}

</mosaic_0001>

<llo_original>
// kernel: model_forward.1
$region0: #{model_forward.1}
  #allocation0 [shape = 'u32[]', space=smem, size = 0x4, offset = 0x4, fixed_abs, tag = 'smem constant byte address 0x4 - core index']
  #allocation1 [shape = 'u32[144,128]{1,0:T(1,128)}', space=vmem, size = 0x12000, scoped, tag = 'internal scratch']
  #allocation2 [shape = 'f32[1,1]{1,0:T(1,128)S(1)}', space=vmem, size = 0x200, scoped, tag = 'scoped memory for model_forward.1']
  %s0 = inlined_call_operand.vmem [shape: f32[2,16,16,1], index: 0, kind: input, shape index: {}]
  %s1 = inlined_call_operand.vmem [shape: f32[25,30], index: 1, kind: input, shape index: {}]
  %s2 = inlined_call_operand.vmem [shape: f32[1,30], index: 2, kind: input, shape index: {}]
  %s3 = inlined_call_operand.vmem [shape: f32[25,30], index: 3, kind: input, shape index: {}]
  %s4 = inlined_call_operand.<no memory space> [shape: f32[1,1], index: 4, kind: input, shape index: {}]
  %s5 = inlined_call_operand.hbm [shape: f32[2,8,8], index: 5, kind: output, shape index: {}]
  %s6 = sld [smem:[#allocation0]]
  $region30: #{model_forward.1} parent=0
    _
  %s8 = ssub.s32 1, %s6
  %s9 = scalar_select 0, %s8, %s6
  %v10 = vstv %s4
  %11 = vst [vmem:[#allocation2] sm:$0x1] %v10
  $region1: #{model_forward.1} parent=0
    #allocation3 [shape = 'u8[8192]{0}', space=vmem, size = 0x2000, scoped, tag = 'output window, operand 0, single buffered']
    #allocation4 [shape = 's32[1]{0}', space=sflag, size = 0x4, scoped, tag = 'scoped memory for model_forward.1']
    %12 = vsyncpa [#allocation4], 0
    // Predicated region
    $region2: #{model_forward.1} parent=1 // pred_check
      _
    $region3: #{model_forward.1} parent=1 // pred_check_branch
      %14 = sbr.rel (0) target = $region5
    $region4: #{model_forward.1} parent=1 // pred_region
      _
    $region5: #{model_forward.1} parent=1 // pred_fallthru
      _
    // Predicated region
    $region6: #{model_forward.1} parent=1 // pred_check
      _
    $region7: #{model_forward.1} parent=1 // pred_check_branch
      %16 = sbr.rel (0) target = $region9
    $region8: #{model_forward.1} parent=1 // pred_region
      _
    $region9: #{model_forward.1} parent=1 // pred_fallthru
      _
    // Predicated region
    $region10: #{model_forward.1} parent=1 // pred_check
      _
    $region11: #{model_forward.1} parent=1 // pred_check_branch
      %18 = sbr.rel (0) target = $region13
    $region12: #{model_forward.1} parent=1 // pred_region
      _
    $region13: #{model_forward.1} parent=1 // pred_fallthru
      _
    // Predicated region
    $region14: #{model_forward.1} parent=1 // pred_check
      _
    $region15: #{model_forward.1} parent=1 // pred_check_branch
      %20 = sbr.rel (0) target = $region17
    $region16: #{model_forward.1} parent=1 // pred_region
      _
    $region17: #{model_forward.1} parent=1 // pred_fallthru
      _
    // Predicated region
    $region18: #{model_forward.1} parent=1 // pred_check
      _
    $region19: #{model_forward.1} parent=1 // pred_check_branch
      %22 = sbr.rel (0) target = $region21
    $region20: #{model_forward.1} parent=1 // pred_region
      _
    $region21: #{model_forward.1} parent=1 // pred_fallthru
      _
    %v23 = vld [vmem:[%s0] sm:$0xff]
    %v24 = vld [vmem:[%s0 + $0x8] sm:$0xff]
    %v25 = vld [vmem:[%s0 + $0x10] sm:$0xff]
    %v26 = vld [vmem:[%s0 + $0x18] sm:$0xff]
    %v27 = vld [vmem:[%s0 + $0x20] sm:$0xff]
    %v28 = vld [vmem:[%s0 + $0x28] sm:$0xff]
    %v29 = vld [vmem:[%s0 + $0x30] sm:$0xff]
    %v30 = vld [vmem:[%s0 + $0x38] sm:$0xff]
    %v31 = vld [vmem:[%s0 + $0x40] sm:$0xff]
    %v32 = vld [vmem:[%s0 + $0x48] sm:$0xff]
    %v33 = vld [vmem:[%s0 + $0x50] sm:$0xff]
    %v34 = vld [vmem:[%s0 + $0x58] sm:$0xff]
    %v35 = vld [vmem:[%s0 + $0x60] sm:$0xff]
    %v36 = vld [vmem:[%s0 + $0x68] sm:$0xff]
    %v37 = vld [vmem:[%s0 + $0x70] sm:$0xff]
    %v38 = vld [vmem:[%s0 + $0x78] sm:$0xff]
    %v39 = vld [vmem:[%s0 + $0x80] sm:$0xff]
    %v40 = vld [vmem:[%s0 + $0x88] sm:$0xff]
    %v41 = vld [vmem:[%s0 + $0x90] sm:$0xff]
    %v42 = vld [vmem:[%s0 + $0x98] sm:$0xff]
    %v43 = vld [vmem:[%s0 + $0xa0] sm:$0xff]
    %v44 = vld [vmem:[%s0 + $0xa8] sm:$0xff]
    %v45 = vld [vmem:[%s0 + $0xb0] sm:$0xff]
    %v46 = vld [vmem:[%s0 + $0xb8] sm:$0xff]
    %v47 = vld [vmem:[%s0 + $0xc0] sm:$0xff]
    %v48 = vld [vmem:[%s0 + $0xc8] sm:$0xff]
    %v49 = vld [vmem:[%s0 + $0xd0] sm:$0xff]
    %v50 = vld [vmem:[%s0 + $0xd8] sm:$0xff]
    %v51 = vld [vmem:[%s0 + $0xe0] sm:$0xff]
    %v52 = vld [vmem:[%s0 + $0xe8] sm:$0xff]
    %v53 = vld [vmem:[%s0 + $0xf0] sm:$0xff]
    %v54 = vld [vmem:[%s0 + $0xf8] sm:$0xff]
    %v55 = vld [vmem:[%s0 + $0x100] sm:$0xff]
    %v56 = vld [vmem:[%s0 + $0x108] sm:$0xff]
    %v57 = vld [vmem:[%s0 + $0x110] sm:$0xff]
    %v58 = vld [vmem:[%s0 + $0x118] sm:$0xff]
    %v59 = vld [vmem:[%s0 + $0x120] sm:$0xff]
    %v60 = vld [vmem:[%s0 + $0x128] sm:$0xff]
    %v61 = vld [vmem:[%s0 + $0x130] sm:$0xff]
    %v62 = vld [vmem:[%s0 + $0x138] sm:$0xff]
    %v63 = vld [vmem:[%s0 + $0x140] sm:$0xff]
    %v64 = vld [vmem:[%s0 + $0x148] sm:$0xff]
    %v65 = vld [vmem:[%s0 + $0x150] sm:$0xff]
    %v66 = vld [vmem:[%s0 + $0x158] sm:$0xff]
    %v67 = vld [vmem:[%s0 + $0x160] sm:$0xff]
    %v68 = vld [vmem:[%s0 + $0x168] sm:$0xff]
    %v69 = vld [vmem:[%s0 + $0x170] sm:$0xff]
    %v70 = vld [vmem:[%s0 + $0x178] sm:$0xff]
    %v71 = vld [vmem:[%s0 + $0x180] sm:$0xff]
    %v72 = vld [vmem:[%s0 + $0x188] sm:$0xff]
    %v73 = vld [vmem:[%s0 + $0x190] sm:$0xff]
    %v74 = vld [vmem:[%s0 + $0x198] sm:$0xff]
    %v75 = vld [vmem:[%s0 + $0x1a0] sm:$0xff]
    %v76 = vld [vmem:[%s0 + $0x1a8] sm:$0xff]
    %v77 = vld [vmem:[%s0 + $0x1b0] sm:$0xff]
    %v78 = vld [vmem:[%s0 + $0x1b8] sm:$0xff]
    %v79 = vld [vmem:[%s0 + $0x1c0] sm:$0xff]
    %v80 = vld [vmem:[%s0 + $0x1c8] sm:$0xff]
    %v81 = vld [vmem:[%s0 + $0x1d0] sm:$0xff]
    %v82 = vld [vmem:[%s0 + $0x1d8] sm:$0xff]
    %v83 = vld [vmem:[%s0 + $0x1e0] sm:$0xff]
    %v84 = vld [vmem:[%s0 + $0x1e8] sm:$0xff]
    %v85 = vld [vmem:[%s0 + $0x1f0] sm:$0xff]
    %v86 = vld [vmem:[%s0 + $0x1f8] sm:$0xff]
    %v87 = vld [vmem:[%s1] sm:$0x1]
    %89 = vset.pattern.permute.xlu0 0
    %90 = vperm.xlu0 %89, %v23
    %v91 = vpop.permute.xlu0 %90
    %94 = vset.pattern.permute.xlu0 0
    %95 = vperm.xlu0 %94, %v24
    %v96 = vpop.permute.xlu0 %95
    %99 = vset.pattern.permute.xlu0 0
    %100 = vperm.xlu0 %99, %v25
    %v101 = vpop.permute.xlu0 %100
    %104 = vset.pattern.permute.xlu0 0
    %105 = vperm.xlu0 %104, %v26
    %v106 = vpop.permute.xlu0 %105
    %109 = vset.pattern.permute.xlu0 0
    %110 = vperm.xlu0 %109, %v27
    %v111 = vpop.permute.xlu0 %110
    %114 = vset.pattern.permute.xlu0 0
    %115 = vperm.xlu0 %114, %v28
    %v116 = vpop.permute.xlu0 %115
    %119 = vset.pattern.permute.xlu0 0
    %120 = vperm.xlu0 %119, %v29
    %v121 = vpop.permute.xlu0 %120
    %124 = vset.pattern.permute.xlu0 0
    %125 = vperm.xlu0 %124, %v30
    %v126 = vpop.permute.xlu0 %125
    %129 = vset.pattern.permute.xlu0 0
    %130 = vperm.xlu0 %129, %v31
    %v131 = vpop.permute.xlu0 %130
    %134 = vset.pattern.permute.xlu0 0
    %135 = vperm.xlu0 %134, %v32
    %v136 = vpop.permute.xlu0 %135
    %139 = vset.pattern.permute.xlu0 0
    %140 = vperm.xlu0 %139, %v33
    %v141 = vpop.permute.xlu0 %140
    %144 = vset.pattern.permute.xlu0 0
    %145 = vperm.xlu0 %144, %v34
    %v146 = vpop.permute.xlu0 %145
    %149 = vset.pattern.permute.xlu0 0
    %150 = vperm.xlu0 %149, %v35
    %v151 = vpop.permute.xlu0 %150
    %154 = vset.pattern.permute.xlu0 0
    %155 = vperm.xlu0 %154, %v36
    %v156 = vpop.permute.xlu0 %155
    %159 = vset.pattern.permute.xlu0 0
    %160 = vperm.xlu0 %159, %v37
    %v161 = vpop.permute.xlu0 %160
    %164 = vset.pattern.permute.xlu0 0
    %165 = vperm.xlu0 %164, %v38
    %v166 = vpop.permute.xlu0 %165
    %169 = vset.pattern.permute.xlu0 0
    %170 = vperm.xlu0 %169, %v39
    %v171 = vpop.permute.xlu0 %170
    %174 = vset.pattern.permute.xlu0 0
    %175 = vperm.xlu0 %174, %v40
    %v176 = vpop.permute.xlu0 %175
    %179 = vset.pattern.permute.xlu0 0
    %180 = vperm.xlu0 %179, %v41
    %v181 = vpop.permute.xlu0 %180
    %184 = vset.pattern.permute.xlu0 0
    %185 = vperm.xlu0 %184, %v42
    %v186 = vpop.permute.xlu0 %185
    %189 = vset.pattern.permute.xlu0 0
    %190 = vperm.xlu0 %189, %v43
    %v191 = vpop.permute.xlu0 %190
    %194 = vset.pattern.permute.xlu0 0
    %195 = vperm.xlu0 %194, %v44
    %v196 = vpop.permute.xlu0 %195
    %199 = vset.pattern.permute.xlu0 0
    %200 = vperm.xlu0 %199, %v45
    %v201 = vpop.permute.xlu0 %200
    %204 = vset.pattern.permute.xlu0 0
    %205 = vperm.xlu0 %204, %v46
    %v206 = vpop.permute.xlu0 %205
    %209 = vset.pattern.permute.xlu0 0
    %210 = vperm.xlu0 %209, %v55
    %v211 = vpop.permute.xlu0 %210
    %214 = vset.pattern.permute.xlu0 0
    %215 = vperm.xlu0 %214, %v56
    %v216 = vpop.permute.xlu0 %215
    %219 = vset.pattern.permute.xlu0 0
    %220 = vperm.xlu0 %219, %v57
    %v221 = vpop.permute.xlu0 %220
    %224 = vset.pattern.permute.xlu0 0
    %225 = vperm.xlu0 %224, %v58
    %v226 = vpop.permute.xlu0 %225
    %229 = vset.pattern.permute.xlu0 0
    %230 = vperm.xlu0 %229, %v59
    %v231 = vpop.permute.xlu0 %230
    %234 = vset.pattern.permute.xlu0 0
    %235 = vperm.xlu0 %234, %v60
    %v236 = vpop.permute.xlu0 %235
    %239 = vset.pattern.permute.xlu0 0
    %240 = vperm.xlu0 %239, %v61
    %v241 = vpop.permute.xlu0 %240
    %244 = vset.pattern.permute.xlu0 0
    %245 = vperm.xlu0 %244, %v62
    %v246 = vpop.permute.xlu0 %245
    %249 = vset.pattern.permute.xlu0 0
    %250 = vperm.xlu0 %249, %v63
    %v251 = vpop.permute.xlu0 %250
    %254 = vset.pattern.permute.xlu0 0
    %255 = vperm.xlu0 %254, %v64
    %v256 = vpop.permute.xlu0 %255
    %259 = vset.pattern.permute.xlu0 0
    %260 = vperm.xlu0 %259, %v65
    %v261 = vpop.permute.xlu0 %260
    %264 = vset.pattern.permute.xlu0 0
    %265 = vperm.xlu0 %264, %v66
    %v266 = vpop.permute.xlu0 %265
    %269 = vset.pattern.permute.xlu0 0
    %270 = vperm.xlu0 %269, %v67
    %v271 = vpop.permute.xlu0 %270
    %274 = vset.pattern.permute.xlu0 0
    %275 = vperm.xlu0 %274, %v68
    %v276 = vpop.permute.xlu0 %275
    %279 = vset.pattern.permute.xlu0 0
    %280 = vperm.xlu0 %279, %v69
    %v281 = vpop.permute.xlu0 %280
    %284 = vset.pattern.permute.xlu0 0
    %285 = vperm.xlu0 %284, %v70
    %v286 = vpop.permute.xlu0 %285
    %289 = vset.pattern.permute.xlu0 0
    %290 = vperm.xlu0 %289, %v71
    %v291 = vpop.permute.xlu0 %290
    %294 = vset.pattern.permute.xlu0 0
    %295 = vperm.xlu0 %294, %v72
    %v296 = vpop.permute.xlu0 %295
    %299 = vset.pattern.permute.xlu0 0
    %300 = vperm.xlu0 %299, %v73
    %v301 = vpop.permute.xlu0 %300
    %304 = vset.pattern.permute.xlu0 0
    %305 = vperm.xlu0 %304, %v74
    %v306 = vpop.permute.xlu0 %305
    %309 = vset.pattern.permute.xlu0 0
    %310 = vperm.xlu0 %309, %v75
    %v311 = vpop.permute.xlu0 %310
    %314 = vset.pattern.permute.xlu0 0
    %315 = vperm.xlu0 %314, %v76
    %v316 = vpop.permute.xlu0 %315
    %319 = vset.pattern.permute.xlu0 0
    %320 = vperm.xlu0 %319, %v77
    %v321 = vpop.permute.xlu0 %320
    %324 = vset.pattern.permute.xlu0 0
    %325 = vperm.xlu0 %324, %v78
    %v326 = vpop.permute.xlu0 %325
    %v328 = vlaneseq
    %v329 = vshrl.u32 %v328, 7
    %v330 = vsub.s32 0, %v329
    %v331 = vrot.slane %v87, %v330
    %v332 = vmul.f32 %v91, %v331
    %v333 = vmul.f32 %v96, %v331
    %v334 = vmul.f32 %v101, %v331
    %v335 = vmul.f32 %v106, %v331
    %v336 = vmul.f32 %v111, %v331
    %v337 = vmul.f32 %v116, %v331
    %v338 = vmul.f32 %v121, %v331
    %v339 = vmul.f32 %v126, %v331
    %v340 = vmul.f32 %v131, %v331
    %v341 = vmul.f32 %v136, %v331
    %v342 = vmul.f32 %v141, %v331
    %v343 = vmul.f32 %v146, %v331
    %v344 = vmul.f32 %v151, %v331
    %v345 = vmul.f32 %v156, %v331
    %v346 = vmul.f32 %v161, %v331
    %v347 = vmul.f32 %v166, %v331
    %v348 = vmul.f32 %v171, %v331
    %v349 = vmul.f32 %v176, %v331
    %v350 = vmul.f32 %v181, %v331
    %v351 = vmul.f32 %v186, %v331
    %v352 = vmul.f32 %v191, %v331
    %v353 = vmul.f32 %v196, %v331
    %v354 = vmul.f32 %v201, %v331
    %v355 = vmul.f32 %v206, %v331
    %v356 = vmul.f32 %v211, %v331
    %v357 = vmul.f32 %v216, %v331
    %v358 = vmul.f32 %v221, %v331
    %v359 = vmul.f32 %v226, %v331
    %v360 = vmul.f32 %v231, %v331
    %v361 = vmul.f32 %v236, %v331
    %v362 = vmul.f32 %v241, %v331
    %v363 = vmul.f32 %v246, %v331
    %v364 = vmul.f32 %v251, %v331
    %v365 = vmul.f32 %v256, %v331
    %v366 = vmul.f32 %v261, %v331
    %v367 = vmul.f32 %v266, %v331
    %v368 = vmul.f32 %v271, %v331
    %v369 = vmul.f32 %v276, %v331
    %v370 = vmul.f32 %v281, %v331
    %v371 = vmul.f32 %v286, %v331
    %v372 = vmul.f32 %v291, %v331
    %v373 = vmul.f32 %v296, %v331
    %v374 = vmul.f32 %v301, %v331
    %v375 = vmul.f32 %v306, %v331
    %v376 = vmul.f32 %v311, %v331
    %v377 = vmul.f32 %v316, %v331
    %v378 = vmul.f32 %v321, %v331
    %v379 = vmul.f32 %v326, %v331
    %v380 = vld [vmem:[%s1 + $0x1] sm:$0x1]
    %v381 = vlaneseq
    %v382 = vshrl.u32 %v381, 7
    %v383 = vsub.s32 0, %v382
    %v384 = vrot.slane %v380, %v383
    %v385 = vmul.f32 %v91, %v384
    %v386 = vmul.f32 %v96, %v384
    %v387 = vmul.f32 %v101, %v384
    %v388 = vmul.f32 %v106, %v384
    %v389 = vmul.f32 %v111, %v384
    %v390 = vmul.f32 %v116, %v384
    %v391 = vmul.f32 %v121, %v384
    %v392 = vmul.f32 %v126, %v384
    %v393 = vmul.f32 %v131, %v384
    %v394 = vmul.f32 %v136, %v384
    %v395 = vmul.f32 %v141, %v384
    %v396 = vmul.f32 %v146, %v384
    %v397 = vmul.f32 %v151, %v384
    %v398 = vmul.f32 %v156, %v384
    %v399 = vmul.f32 %v161, %v384
    %v400 = vmul.f32 %v166, %v384
    %v401 = vmul.f32 %v171, %v384
    %v402 = vmul.f32 %v176, %v384
    %v403 = vmul.f32 %v181, %v384
    %v404 = vmul.f32 %v186, %v384
    %v405 = vmul.f32 %v191, %v384
    %v406 = vmul.f32 %v196, %v384
    %v407 = vmul.f32 %v201, %v384
    %v408 = vmul.f32 %v206, %v384
    %v409 = vmul.f32 %v211, %v384
    %v410 = vmul.f32 %v216, %v384
    %v411 = vmul.f32 %v221, %v384
    %v412 = vmul.f32 %v226, %v384
    %v413 = vmul.f32 %v231, %v384
    %v414 = vmul.f32 %v236, %v384
    %v415 = vmul.f32 %v241, %v384
    %v416 = vmul.f32 %v246, %v384
    %v417 = vmul.f32 %v251, %v384
    %v418 = vmul.f32 %v256, %v384
    %v419 = vmul.f32 %v261, %v384
    %v420 = vmul.f32 %v266, %v384
    %v421 = vmul.f32 %v271, %v384
    %v422 = vmul.f32 %v276, %v384
    %v423 = vmul.f32 %v281, %v384
    %v424 = vmul.f32 %v286, %v384
    %v425 = vmul.f32 %v291, %v384
    %v426 = vmul.f32 %v296, %v384
    %v427 = vmul.f32 %v301, %v384
    %v428 = vmul.f32 %v306, %v384
    %v429 = vmul.f32 %v311, %v384
    %v430 = vmul.f32 %v316, %v384
    %v431 = vmul.f32 %v321, %v384
    %v432 = vmul.f32 %v326, %v384
    %vm481 = vcmask 1046528
    %v482 = vrot.slane %v385, 1
    %v483 = vrot.slane %v386, 1
    %v484 = vsel %vm481, %v482, %v483
    %v485 = vrot.slane %v387, 1
    %v486 = vrot.slane %v388, 1
    %v487 = vsel %vm481, %v485, %v486
    %v488 = vrot.slane %v389, 1
    %v489 = vrot.slane %v390, 1
    %v490 = vsel %vm481, %v488, %v489
    %v491 = vrot.slane %v391, 1
    %v492 = vrot.slane %v392, 1
    %v493 = vsel %vm481, %v491, %v492
    %v494 = vrot.slane %v393, 1
    %v495 = vrot.slane %v394, 1
    %v496 = vsel %vm481, %v494, %v495
    %v497 = vrot.slane %v395, 1
    %v498 = vrot.slane %v396, 1
    %v499 = vsel %vm481, %v497, %v498
    %v500 = vrot.slane %v397, 1
    %v501 = vrot.slane %v398, 1
    %v502 = vsel %vm481, %v500, %v501
    %v503 = vrot.slane %v399, 1
    %v504 = vrot.slane %v400, 1
    %v505 = vsel %vm481, %v503, %v504
    %v506 = vrot.slane %v401, 1
    %v507 = vrot.slane %v402, 1
    %v508 = vsel %vm481, %v506, %v507
    %v509 = vrot.slane %v403, 1
    %v510 = vrot.slane %v404, 1
    %v511 = vsel %vm481, %v509, %v510
    %v512 = vrot.slane %v405, 1
    %v513 = vrot.slane %v406, 1
    %v514 = vsel %vm481, %v512, %v513
    %v515 = vrot.slane %v407, 1
    %v516 = vrot.slane %v408, 1
    %v517 = vsel %vm481, %v515, %v516
    %v518 = vrot.slane %v409, 1
    %v519 = vrot.slane %v410, 1
    %v520 = vsel %vm481, %v518, %v519
    %v521 = vrot.slane %v411, 1
    %v522 = vrot.slane %v412, 1
    %v523 = vsel %vm481, %v521, %v522
    %v524 = vrot.slane %v413, 1
    %v525 = vrot.slane %v414, 1
    %v526 = vsel %vm481, %v524, %v525
    %v527 = vrot.slane %v415, 1
    %v528 = vrot.slane %v416, 1
    %v529 = vsel %vm481, %v527, %v528
    %v530 = vrot.slane %v417, 1
    %v531 = vrot.slane %v418, 1
    %v532 = vsel %vm481, %v530, %v531
    %v533 = vrot.slane %v419, 1
    %v534 = vrot.slane %v420, 1
    %v535 = vsel %vm481, %v533, %v534
    %v536 = vrot.slane %v421, 1
    %v537 = vrot.slane %v422, 1
    %v538 = vsel %vm481, %v536, %v537
    %v539 = vrot.slane %v423, 1
    %v540 = vrot.slane %v424, 1
    %v541 = vsel %vm481, %v539, %v540
    %v542 = vrot.slane %v425, 1
    %v543 = vrot.slane %v426, 1
    %v544 = vsel %vm481, %v542, %v543
    %v545 = vrot.slane %v427, 1
    %v546 = vrot.slane %v428, 1
    %v547 = vsel %vm481, %v545, %v546
    %v548 = vrot.slane %v429, 1
    %v549 = vrot.slane %v430, 1
    %v550 = vsel %vm481, %v548, %v549
    %v551 = vrot.slane %v431, 1
    %v552 = vrot.slane %v432, 1
    %v553 = vsel %vm481, %v551, %v552
    %v602 = vadd.f32 %v332, %v484
    %v603 = vadd.f32 %v333, %v483
    %v604 = vadd.f32 %v334, %v487
    %v605 = vadd.f32 %v335, %v486
    %v606 = vadd.f32 %v336, %v490
    %v607 = vadd.f32 %v337, %v489
    %v608 = vadd.f32 %v338, %v493
    %v609 = vadd.f32 %v339, %v492
    %v610 = vadd.f32 %v340, %v496
    %v611 = vadd.f32 %v341, %v495
    %v612 = vadd.f32 %v342, %v499
    %v613 = vadd.f32 %v343, %v498
    %v614 = vadd.f32 %v344, %v502
    %v615 = vadd.f32 %v345, %v501
    %v616 = vadd.f32 %v346, %v505
    %v617 = vadd.f32 %v347, %v504
    %v618 = vadd.f32 %v348, %v508
    %v619 = vadd.f32 %v349, %v507
    %v620 = vadd.f32 %v350, %v511
    %v621 = vadd.f32 %v351, %v510
    %v622 = vadd.f32 %v352, %v514
    %v623 = vadd.f32 %v353, %v513
    %v624 = vadd.f32 %v354, %v517
    %v625 = vadd.f32 %v355, %v516
    %v626 = vadd.f32 %v356, %v520
    %v627 = vadd.f32 %v357, %v519
    %v628 = vadd.f32 %v358, %v523
    %v629 = vadd.f32 %v359, %v522
    %v630 = vadd.f32 %v360, %v526
    %v631 = vadd.f32 %v361, %v525
    %v632 = vadd.f32 %v362, %v529
    %v633 = vadd.f32 %v363, %v528
    %v634 = vadd.f32 %v364, %v532
    %v635 = vadd.f32 %v365, %v531
    %v636 = vadd.f32 %v366, %v535
    %v637 = vadd.f32 %v367, %v534
    %v638 = vadd.f32 %v368, %v538
    %v639 = vadd.f32 %v369, %v537
    %v640 = vadd.f32 %v370, %v541
    %v641 = vadd.f32 %v371, %v540
    %v642 = vadd.f32 %v372, %v544
    %v643 = vadd.f32 %v373, %v543
    %v644 = vadd.f32 %v374, %v547
    %v645 = vadd.f32 %v375, %v546
    %v646 = vadd.f32 %v376, %v550
    %v647 = vadd.f32 %v377, %v549
    %v648 = vadd.f32 %v378, %v553
    %v649 = vadd.f32 %v379, %v552
    %v650 = vld [vmem:[%s1 + $0x2] sm:$0x1]
    %v651 = vlaneseq
    %v652 = vshrl.u32 %v651, 7
    %v653 = vsub.s32 0, %v652
    %v654 = vrot.slane %v650, %v653
    %v655 = vmul.f32 %v91, %v654
    %v656 = vmul.f32 %v96, %v654
    %v657 = vmul.f32 %v101, %v654
    %v658 = vmul.f32 %v106, %v654
    %v659 = vmul.f32 %v111, %v654
    %v660 = vmul.f32 %v116, %v654
    %v661 = vmul.f32 %v121, %v654
    %v662 = vmul.f32 %v126, %v654
    %v663 = vmul.f32 %v131, %v654
    %v664 = vmul.f32 %v136, %v654
    %v665 = vmul.f32 %v141, %v654
    %v666 = vmul.f32 %v146, %v654
    %v667 = vmul.f32 %v151, %v654
    %v668 = vmul.f32 %v156, %v654
    %v669 = vmul.f32 %v161, %v654
    %v670 = vmul.f32 %v166, %v654
    %v671 = vmul.f32 %v171, %v654
    %v672 = vmul.f32 %v176, %v654
    %v673 = vmul.f32 %v181, %v654
    %v674 = vmul.f32 %v186, %v654
    %v675 = vmul.f32 %v191, %v654
    %v676 = vmul.f32 %v196, %v654
    %v677 = vmul.f32 %v201, %v654
    %v678 = vmul.f32 %v206, %v654
    %v679 = vmul.f32 %v211, %v654
    %v680 = vmul.f32 %v216, %v654
    %v681 = vmul.f32 %v221, %v654
    %v682 = vmul.f32 %v226, %v654
    %v683 = vmul.f32 %v231, %v654
    %v684 = vmul.f32 %v236, %v654
    %v685 = vmul.f32 %v241, %v654
    %v686 = vmul.f32 %v246, %v654
    %v687 = vmul.f32 %v251, %v654
    %v688 = vmul.f32 %v256, %v654
    %v689 = vmul.f32 %v261, %v654
    %v690 = vmul.f32 %v266, %v654
    %v691 = vmul.f32 %v271, %v654
    %v692 = vmul.f32 %v276, %v654
    %v693 = vmul.f32 %v281, %v654
    %v694 = vmul.f32 %v286, %v654
    %v695 = vmul.f32 %v291, %v654
    %v696 = vmul.f32 %v296, %v654
    %v697 = vmul.f32 %v301, %v654
    %v698 = vmul.f32 %v306, %v654
    %v699 = vmul.f32 %v311, %v654
    %v700 = vmul.f32 %v316, %v654
    %v701 = vmul.f32 %v321, %v654
    %v702 = vmul.f32 %v326, %v654
    %vm751 = vcmask 1045504
    %v752 = vrot.slane %v655, 2
    %v753 = vrot.slane %v656, 2
    %v754 = vsel %vm751, %v752, %v753
    %v755 = vrot.slane %v657, 2
    %v756 = vrot.slane %v658, 2
    %v757 = vsel %vm751, %v755, %v756
    %v758 = vrot.slane %v659, 2
    %v759 = vrot.slane %v660, 2
    %v760 = vsel %vm751, %v758, %v759
    %v761 = vrot.slane %v661, 2
    %v762 = vrot.slane %v662, 2
    %v763 = vsel %vm751, %v761, %v762
    %v764 = vrot.slane %v663, 2
    %v765 = vrot.slane %v664, 2
    %v766 = vsel %vm751, %v764, %v765
    %v767 = vrot.slane %v665, 2
    %v768 = vrot.slane %v666, 2
    %v769 = vsel %vm751, %v767, %v768
    %v770 = vrot.slane %v667, 2
    %v771 = vrot.slane %v668, 2
    %v772 = vsel %vm751, %v770, %v771
    %v773 = vrot.slane %v669, 2
    %v774 = vrot.slane %v670, 2
    %v775 = vsel %vm751, %v773, %v774
    %v776 = vrot.slane %v671, 2
    %v777 = vrot.slane %v672, 2
    %v778 = vsel %vm751, %v776, %v777
    %v779 = vrot.slane %v673, 2
    %v780 = vrot.slane %v674, 2
    %v781 = vsel %vm751, %v779, %v780
    %v782 = vrot.slane %v675, 2
    %v783 = vrot.slane %v676, 2
    %v784 = vsel %vm751, %v782, %v783
    %v785 = vrot.slane %v677, 2
    %v786 = vrot.slane %v678, 2
    %v787 = vsel %vm751, %v785, %v786
    %v788 = vrot.slane %v679, 2
    %v789 = vrot.slane %v680, 2
    %v790 = vsel %vm751, %v788, %v789
    %v791 = vrot.slane %v681, 2
    %v792 = vrot.slane %v682, 2
    %v793 = vsel %vm751, %v791, %v792
    %v794 = vrot.slane %v683, 2
    %v795 = vrot.slane %v684, 2
    %v796 = vsel %vm751, %v794, %v795
    %v797 = vrot.slane %v685, 2
    %v798 = vrot.slane %v686, 2
    %v799 = vsel %vm751, %v797, %v798
    %v800 = vrot.slane %v687, 2
    %v801 = vrot.slane %v688, 2
    %v802 = vsel %vm751, %v800, %v801
    %v803 = vrot.slane %v689, 2
    %v804 = vrot.slane %v690, 2
    %v805 = vsel %vm751, %v803, %v804
    %v806 = vrot.slane %v691, 2
    %v807 = vrot.slane %v692, 2
    %v808 = vsel %vm751, %v806, %v807
    %v809 = vrot.slane %v693, 2
    %v810 = vrot.slane %v694, 2
    %v811 = vsel %vm751, %v809, %v810
    %v812 = vrot.slane %v695, 2
    %v813 = vrot.slane %v696, 2
    %v814 = vsel %vm751, %v812, %v813
    %v815 = vrot.slane %v697, 2
    %v816 = vrot.slane %v698, 2
    %v817 = vsel %vm751, %v815, %v816
    %v818 = vrot.slane %v699, 2
    %v819 = vrot.slane %v700, 2
    %v820 = vsel %vm751, %v818, %v819
    %v821 = vrot.slane %v701, 2
    %v822 = vrot.slane %v702, 2
    %v823 = vsel %vm751, %v821, %v822
    %v872 = vadd.f32 %v602, %v754
    %v873 = vadd.f32 %v603, %v753
    %v874 = vadd.f32 %v604, %v757
    %v875 = vadd.f32 %v605, %v756
    %v876 = vadd.f32 %v606, %v760
    %v877 = vadd.f32 %v607, %v759
    %v878 = vadd.f32 %v608, %v763
    %v879 = vadd.f32 %v609, %v762
    %v880 = vadd.f32 %v610, %v766
    %v881 = vadd.f32 %v611, %v765
    %v882 = vadd.f32 %v612, %v769
    %v883 = vadd.f32 %v613, %v768
    %v884 = vadd.f32 %v614, %v772
    %v885 = vadd.f32 %v615, %v771
    %v886 = vadd.f32 %v616, %v775
    %v887 = vadd.f32 %v617, %v774
    %v888 = vadd.f32 %v618, %v778
    %v889 = vadd.f32 %v619, %v777
    %v890 = vadd.f32 %v620, %v781
    %v891 = vadd.f32 %v621, %v780
    %v892 = vadd.f32 %v622, %v784
    %v893 = vadd.f32 %v623, %v783
    %v894 = vadd.f32 %v624, %v787
    %v895 = vadd.f32 %v625, %v786
    %v896 = vadd.f32 %v626, %v790
    %v897 = vadd.f32 %v627, %v789
    %v898 = vadd.f32 %v628, %v793
    %v899 = vadd.f32 %v629, %v792
    %v900 = vadd.f32 %v630, %v796
    %v901 = vadd.f32 %v631, %v795
    %v902 = vadd.f32 %v632, %v799
    %v903 = vadd.f32 %v633, %v798
    %v904 = vadd.f32 %v634, %v802
    %v905 = vadd.f32 %v635, %v801
    %v906 = vadd.f32 %v636, %v805
    %v907 = vadd.f32 %v637, %v804
    %v908 = vadd.f32 %v638, %v808
    %v909 = vadd.f32 %v639, %v807
    %v910 = vadd.f32 %v640, %v811
    %v911 = vadd.f32 %v641, %v810
    %v912 = vadd.f32 %v642, %v814
    %v913 = vadd.f32 %v643, %v813
    %v914 = vadd.f32 %v644, %v817
    %v915 = vadd.f32 %v645, %v816
    %v916 = vadd.f32 %v646, %v820
    %v917 = vadd.f32 %v647, %v819
    %v918 = vadd.f32 %v648, %v823
    %v919 = vadd.f32 %v649, %v822
    %v920 = vld [vmem:[%s1 + $0x3] sm:$0x1]
    %v921 = vlaneseq
    %v922 = vshrl.u32 %v921, 7
    %v923 = vsub.s32 0, %v922
    %v924 = vrot.slane %v920, %v923
    %v925 = vmul.f32 %v91, %v924
    %v926 = vmul.f32 %v96, %v924
    %v927 = vmul.f32 %v101, %v924
    %v928 = vmul.f32 %v106, %v924
    %v929 = vmul.f32 %v111, %v924
    %v930 = vmul.f32 %v116, %v924
    %v931 = vmul.f32 %v121, %v924
    %v932 = vmul.f32 %v126, %v924
    %v933 = vmul.f32 %v131, %v924
    %v934 = vmul.f32 %v136, %v924
    %v935 = vmul.f32 %v141, %v924
    %v936 = vmul.f32 %v146, %v924
    %v937 = vmul.f32 %v151, %v924
    %v938 = vmul.f32 %v156, %v924
    %v939 = vmul.f32 %v161, %v924
    %v940 = vmul.f32 %v166, %v924
    %v941 = vmul.f32 %v171, %v924
    %v942 = vmul.f32 %v176, %v924
    %v943 = vmul.f32 %v181, %v924
    %v944 = vmul.f32 %v186, %v924
    %v945 = vmul.f32 %v191, %v924
    %v946 = vmul.f32 %v196, %v924
    %v947 = vmul.f32 %v201, %v924
    %v948 = vmul.f32 %v206, %v924
    %v949 = vmul.f32 %v211, %v924
    %v950 = vmul.f32 %v216, %v924
    %v951 = vmul.f32 %v221, %v924
    %v952 = vmul.f32 %v226, %v924
    %v953 = vmul.f32 %v231, %v924
    %v954 = vmul.f32 %v236, %v924
    %v955 = vmul.f32 %v241, %v924
    %v956 = vmul.f32 %v246, %v924
    %v957 = vmul.f32 %v251, %v924
    %v958 = vmul.f32 %v256, %v924
    %v959 = vmul.f32 %v261, %v924
    %v960 = vmul.f32 %v266, %v924
    %v961 = vmul.f32 %v271, %v924
    %v962 = vmul.f32 %v276, %v924
    %v963 = vmul.f32 %v281, %v924
    %v964 = vmul.f32 %v286, %v924
    %v965 = vmul.f32 %v291, %v924
    %v966 = vmul.f32 %v296, %v924
    %v967 = vmul.f32 %v301, %v924
    %v968 = vmul.f32 %v306, %v924
    %v969 = vmul.f32 %v311, %v924
    %v970 = vmul.f32 %v316, %v924
    %v971 = vmul.f32 %v321, %v924
    %v972 = vmul.f32 %v326, %v924
    %vm1021 = vcmask 1044480
    %v1022 = vrot.slane %v925, 3
    %v1023 = vrot.slane %v926, 3
    %v1024 = vsel %vm1021, %v1022, %v1023
    %v1025 = vrot.slane %v927, 3
    %v1026 = vrot.slane %v928, 3
    %v1027 = vsel %vm1021, %v1025, %v1026
    %v1028 = vrot.slane %v929, 3
    %v1029 = vrot.slane %v930, 3
    %v1030 = vsel %vm1021, %v1028, %v1029
    %v1031 = vrot.slane %v931, 3
    %v1032 = vrot.slane %v932, 3
    %v1033 = vsel %vm1021, %v1031, %v1032
    %v1034 = vrot.slane %v933, 3
    %v1035 = vrot.slane %v934, 3
    %v1036 = vsel %vm1021, %v1034, %v1035
    %v1037 = vrot.slane %v935, 3
    %v1038 = vrot.slane %v936, 3
    %v1039 = vsel %vm1021, %v1037, %v1038
    %v1040 = vrot.slane %v937, 3
    %v1041 = vrot.slane %v938, 3
    %v1042 = vsel %vm1021, %v1040, %v1041
    %v1043 = vrot.slane %v939, 3
    %v1044 = vrot.slane %v940, 3
    %v1045 = vsel %vm1021, %v1043, %v1044
    %v1046 = vrot.slane %v941, 3
    %v1047 = vrot.slane %v942, 3
    %v1048 = vsel %vm1021, %v1046, %v1047
    %v1049 = vrot.slane %v943, 3
    %v1050 = vrot.slane %v944, 3
    %v1051 = vsel %vm1021, %v1049, %v1050
    %v1052 = vrot.slane %v945, 3
    %v1053 = vrot.slane %v946, 3
    %v1054 = vsel %vm1021, %v1052, %v1053
    %v1055 = vrot.slane %v947, 3
    %v1056 = vrot.slane %v948, 3
    %v1057 = vsel %vm1021, %v1055, %v1056
    %v1058 = vrot.slane %v949, 3
    %v1059 = vrot.slane %v950, 3
    %v1060 = vsel %vm1021, %v1058, %v1059
    %v1061 = vrot.slane %v951, 3
    %v1062 = vrot.slane %v952, 3
    %v1063 = vsel %vm1021, %v1061, %v1062
    %v1064 = vrot.slane %v953, 3
    %v1065 = vrot.slane %v954, 3
    %v1066 = vsel %vm1021, %v1064, %v1065
    %v1067 = vrot.slane %v955, 3
    %v1068 = vrot.slane %v956, 3
    %v1069 = vsel %vm1021, %v1067, %v1068
    %v1070 = vrot.slane %v957, 3
    %v1071 = vrot.slane %v958, 3
    %v1072 = vsel %vm1021, %v1070, %v1071
    %v1073 = vrot.slane %v959, 3
    %v1074 = vrot.slane %v960, 3
    %v1075 = vsel %vm1021, %v1073, %v1074
    %v1076 = vrot.slane %v961, 3
    %v1077 = vrot.slane %v962, 3
    %v1078 = vsel %vm1021, %v1076, %v1077
    %v1079 = vrot.slane %v963, 3
    %v1080 = vrot.slane %v964, 3
    %v1081 = vsel %vm1021, %v1079, %v1080
    %v1082 = vrot.slane %v965, 3
    %v1083 = vrot.slane %v966, 3
    %v1084 = vsel %vm1021, %v1082, %v1083
    %v1085 = vrot.slane %v967, 3
    %v1086 = vrot.slane %v968, 3
    %v1087 = vsel %vm1021, %v1085, %v1086
    %v1088 = vrot.slane %v969, 3
    %v1089 = vrot.slane %v970, 3
    %v1090 = vsel %vm1021, %v1088, %v1089
    %v1091 = vrot.slane %v971, 3
    %v1092 = vrot.slane %v972, 3
    %v1093 = vsel %vm1021, %v1091, %v1092
    %v1142 = vadd.f32 %v872, %v1024
    %v1143 = vadd.f32 %v873, %v1023
    %v1144 = vadd.f32 %v874, %v1027
    %v1145 = vadd.f32 %v875, %v1026
    %v1146 = vadd.f32 %v876, %v1030
    %v1147 = vadd.f32 %v877, %v1029
    %v1148 = vadd.f32 %v878, %v1033
    %v1149 = vadd.f32 %v879, %v1032
    %v1150 = vadd.f32 %v880, %v1036
    %v1151 = vadd.f32 %v881, %v1035
    %v1152 = vadd.f32 %v882, %v1039
    %v1153 = vadd.f32 %v883, %v1038
    %v1154 = vadd.f32 %v884, %v1042
    %v1155 = vadd.f32 %v885, %v1041
    %v1156 = vadd.f32 %v886, %v1045
    %v1157 = vadd.f32 %v887, %v1044
    %v1158 = vadd.f32 %v888, %v1048
    %v1159 = vadd.f32 %v889, %v1047
    %v1160 = vadd.f32 %v890, %v1051
    %v1161 = vadd.f32 %v891, %v1050
    %v1162 = vadd.f32 %v892, %v1054
    %v1163 = vadd.f32 %v893, %v1053
    %v1164 = vadd.f32 %v894, %v1057
    %v1165 = vadd.f32 %v895, %v1056
    %v1166 = vadd.f32 %v896, %v1060
    %v1167 = vadd.f32 %v897, %v1059
    %v1168 = vadd.f32 %v898, %v1063
    %v1169 = vadd.f32 %v899, %v1062
    %v1170 = vadd.f32 %v900, %v1066
    %v1171 = vadd.f32 %v901, %v1065
    %v1172 = vadd.f32 %v902, %v1069
    %v1173 = vadd.f32 %v903, %v1068
    %v1174 = vadd.f32 %v904, %v1072
    %v1175 = vadd.f32 %v905, %v1071
    %v1176 = vadd.f32 %v906, %v1075
    %v1177 = vadd.f32 %v907, %v1074
    %v1178 = vadd.f32 %v908, %v1078
    %v1179 = vadd.f32 %v909, %v1077
    %v1180 = vadd.f32 %v910, %v1081
    %v1181 = vadd.f32 %v911, %v1080
    %v1182 = vadd.f32 %v912, %v1084
    %v1183 = vadd.f32 %v913, %v1083
    %v1184 = vadd.f32 %v914, %v1087
    %v1185 = vadd.f32 %v915, %v1086
    %v1186 = vadd.f32 %v916, %v1090
    %v1187 = vadd.f32 %v917, %v1089
    %v1188 = vadd.f32 %v918, %v1093
    %v1189 = vadd.f32 %v919, %v1092
    %v1190 = vld [vmem:[%s1 + $0x4] sm:$0x1]
    %v1191 = vlaneseq
    %v1192 = vshrl.u32 %v1191, 7
    %v1193 = vsub.s32 0, %v1192
    %v1194 = vrot.slane %v1190, %v1193
    %v1195 = vmul.f32 %v91, %v1194
    %v1196 = vmul.f32 %v96, %v1194
    %v1197 = vmul.f32 %v101, %v1194
    %v1198 = vmul.f32 %v106, %v1194
    %v1199 = vmul.f32 %v111, %v1194
    %v1200 = vmul.f32 %v116, %v1194
    %v1201 = vmul.f32 %v121, %v1194
    %v1202 = vmul.f32 %v126, %v1194
    %v1203 = vmul.f32 %v131, %v1194
    %v1204 = vmul.f32 %v136, %v1194
    %v1205 = vmul.f32 %v141, %v1194
    %v1206 = vmul.f32 %v146, %v1194
    %v1207 = vmul.f32 %v151, %v1194
    %v1208 = vmul.f32 %v156, %v1194
    %v1209 = vmul.f32 %v161, %v1194
    %v1210 = vmul.f32 %v166, %v1194
    %v1211 = vmul.f32 %v171, %v1194
    %v1212 = vmul.f32 %v176, %v1194
    %v1213 = vmul.f32 %v181, %v1194
    %v1214 = vmul.f32 %v186, %v1194
    %v1215 = vmul.f32 %v191, %v1194
    %v1216 = vmul.f32 %v196, %v1194
    %v1217 = vmul.f32 %v201, %v1194
    %v1218 = vmul.f32 %v206, %v1194
    %v1219 = vmul.f32 %v211, %v1194
    %v1220 = vmul.f32 %v216, %v1194
    %v1221 = vmul.f32 %v221, %v1194
    %v1222 = vmul.f32 %v226, %v1194
    %v1223 = vmul.f32 %v231, %v1194
    %v1224 = vmul.f32 %v236, %v1194
    %v1225 = vmul.f32 %v241, %v1194
    %v1226 = vmul.f32 %v246, %v1194
    %v1227 = vmul.f32 %v251, %v1194
    %v1228 = vmul.f32 %v256, %v1194
    %v1229 = vmul.f32 %v261, %v1194
    %v1230 = vmul.f32 %v266, %v1194
    %v1231 = vmul.f32 %v271, %v1194
    %v1232 = vmul.f32 %v276, %v1194
    %v1233 = vmul.f32 %v281, %v1194
    %v1234 = vmul.f32 %v286, %v1194
    %v1235 = vmul.f32 %v291, %v1194
    %v1236 = vmul.f32 %v296, %v1194
    %v1237 = vmul.f32 %v301, %v1194
    %v1238 = vmul.f32 %v306, %v1194
    %v1239 = vmul.f32 %v311, %v1194
    %v1240 = vmul.f32 %v316, %v1194
    %v1241 = vmul.f32 %v321, %v1194
    %v1242 = vmul.f32 %v326, %v1194
    %vm1291 = vcmask 1043456
    %v1292 = vrot.slane %v1195, 4
    %v1293 = vrot.slane %v1196, 4
    %v1294 = vsel %vm1291, %v1292, %v1293
    %v1295 = vrot.slane %v1197, 4
    %v1296 = vrot.slane %v1198, 4
    %v1297 = vsel %vm1291, %v1295, %v1296
    %v1298 = vrot.slane %v1199, 4
    %v1299 = vrot.slane %v1200, 4
    %v1300 = vsel %vm1291, %v1298, %v1299
    %v1301 = vrot.slane %v1201, 4
    %v1302 = vrot.slane %v1202, 4
    %v1303 = vsel %vm1291, %v1301, %v1302
    %v1304 = vrot.slane %v1203, 4
    %v1305 = vrot.slane %v1204, 4
    %v1306 = vsel %vm1291, %v1304, %v1305
    %v1307 = vrot.slane %v1205, 4
    %v1308 = vrot.slane %v1206, 4
    %v1309 = vsel %vm1291, %v1307, %v1308
    %v1310 = vrot.slane %v1207, 4
    %v1311 = vrot.slane %v1208, 4
    %v1312 = vsel %vm1291, %v1310, %v1311
    %v1313 = vrot.slane %v1209, 4
    %v1314 = vrot.slane %v1210, 4
    %v1315 = vsel %vm1291, %v1313, %v1314
    %v1316 = vrot.slane %v1211, 4
    %v1317 = vrot.slane %v1212, 4
    %v1318 = vsel %vm1291, %v1316, %v1317
    %v1319 = vrot.slane %v1213, 4
    %v1320 = vrot.slane %v1214, 4
    %v1321 = vsel %vm1291, %v1319, %v1320
    %v1322 = vrot.slane %v1215, 4
    %v1323 = vrot.slane %v1216, 4
    %v1324 = vsel %vm1291, %v1322, %v1323
    %v1325 = vrot.slane %v1217, 4
    %v1326 = vrot.slane %v1218, 4
    %v1327 = vsel %vm1291, %v1325, %v1326
    %v1328 = vrot.slane %v1219, 4
    %v1329 = vrot.slane %v1220, 4
    %v1330 = vsel %vm1291, %v1328, %v1329
    %v1331 = vrot.slane %v1221, 4
    %v1332 = vrot.slane %v1222, 4
    %v1333 = vsel %vm1291, %v1331, %v1332
    %v1334 = vrot.slane %v1223, 4
    %v1335 = vrot.slane %v1224, 4
    %v1336 = vsel %vm1291, %v1334, %v1335
    %v1337 = vrot.slane %v1225, 4
    %v1338 = vrot.slane %v1226, 4
    %v1339 = vsel %vm1291, %v1337, %v1338
    %v1340 = vrot.slane %v1227, 4
    %v1341 = vrot.slane %v1228, 4
    %v1342 = vsel %vm1291, %v1340, %v1341
    %v1343 = vrot.slane %v1229, 4
    %v1344 = vrot.slane %v1230, 4
    %v1345 = vsel %vm1291, %v1343, %v1344
    %v1346 = vrot.slane %v1231, 4
    %v1347 = vrot.slane %v1232, 4
    %v1348 = vsel %vm1291, %v1346, %v1347
    %v1349 = vrot.slane %v1233, 4
    %v1350 = vrot.slane %v1234, 4
    %v1351 = vsel %vm1291, %v1349, %v1350
    %v1352 = vrot.slane %v1235, 4
    %v1353 = vrot.slane %v1236, 4
    %v1354 = vsel %vm1291, %v1352, %v1353
    %v1355 = vrot.slane %v1237, 4
    %v1356 = vrot.slane %v1238, 4
    %v1357 = vsel %vm1291, %v1355, %v1356
    %v1358 = vrot.slane %v1239, 4
    %v1359 = vrot.slane %v1240, 4
    %v1360 = vsel %vm1291, %v1358, %v1359
    %v1361 = vrot.slane %v1241, 4
    %v1362 = vrot.slane %v1242, 4
    %v1363 = vsel %vm1291, %v1361, %v1362
    %v1412 = vadd.f32 %v1142, %v1294
    %v1413 = vadd.f32 %v1143, %v1293
    %v1414 = vadd.f32 %v1144, %v1297
    %v1415 = vadd.f32 %v1145, %v1296
    %v1416 = vadd.f32 %v1146, %v1300
    %v1417 = vadd.f32 %v1147, %v1299
    %v1418 = vadd.f32 %v1148, %v1303
    %v1419 = vadd.f32 %v1149, %v1302
    %v1420 = vadd.f32 %v1150, %v1306
    %v1421 = vadd.f32 %v1151, %v1305
    %v1422 = vadd.f32 %v1152, %v1309
    %v1423 = vadd.f32 %v1153, %v1308
    %v1424 = vadd.f32 %v1154, %v1312
    %v1425 = vadd.f32 %v1155, %v1311
    %v1426 = vadd.f32 %v1156, %v1315
    %v1427 = vadd.f32 %v1157, %v1314
    %v1428 = vadd.f32 %v1158, %v1318
    %v1429 = vadd.f32 %v1159, %v1317
    %v1430 = vadd.f32 %v1160, %v1321
    %v1431 = vadd.f32 %v1161, %v1320
    %v1432 = vadd.f32 %v1162, %v1324
    %v1433 = vadd.f32 %v1163, %v1323
    %v1434 = vadd.f32 %v1164, %v1327
    %v1435 = vadd.f32 %v1165, %v1326
    %v1436 = vadd.f32 %v1166, %v1330
    %v1437 = vadd.f32 %v1167, %v1329
    %v1438 = vadd.f32 %v1168, %v1333
    %v1439 = vadd.f32 %v1169, %v1332
    %v1440 = vadd.f32 %v1170, %v1336
    %v1441 = vadd.f32 %v1171, %v1335
    %v1442 = vadd.f32 %v1172, %v1339
    %v1443 = vadd.f32 %v1173, %v1338
    %v1444 = vadd.f32 %v1174, %v1342
    %v1445 = vadd.f32 %v1175, %v1341
    %v1446 = vadd.f32 %v1176, %v1345
    %v1447 = vadd.f32 %v1177, %v1344
    %v1448 = vadd.f32 %v1178, %v1348
    %v1449 = vadd.f32 %v1179, %v1347
    %v1450 = vadd.f32 %v1180, %v1351
    %v1451 = vadd.f32 %v1181, %v1350
    %v1452 = vadd.f32 %v1182, %v1354
    %v1453 = vadd.f32 %v1183, %v1353
    %v1454 = vadd.f32 %v1184, %v1357
    %v1455 = vadd.f32 %v1185, %v1356
    %v1456 = vadd.f32 %v1186, %v1360
    %v1457 = vadd.f32 %v1187, %v1359
    %v1458 = vadd.f32 %v1188, %v1363
    %v1459 = vadd.f32 %v1189, %v1362
    %v1460 = vld [vmem:[%s1 + $0x5] sm:$0x1]
    %1462 = vset.pattern.permute.xlu0 0
    %1463 = vperm.xlu0 %1462, %v47
    %v1464 = vpop.permute.xlu0 %1463
    %1467 = vset.pattern.permute.xlu0 0
    %1468 = vperm.xlu0 %1467, %v48
    %v1469 = vpop.permute.xlu0 %1468
    %1472 = vset.pattern.permute.xlu0 0
    %1473 = vperm.xlu0 %1472, %v79
    %v1474 = vpop.permute.xlu0 %1473
    %1477 = vset.pattern.permute.xlu0 0
    %1478 = vperm.xlu0 %1477, %v80
    %v1479 = vpop.permute.xlu0 %1478
    %v1481 = vlaneseq
    %v1482 = vshrl.u32 %v1481, 7
    %v1483 = vsub.s32 0, %v1482
    %v1484 = vrot.slane %v1460, %v1483
    %v1485 = vmul.f32 %v101, %v1484
    %v1486 = vmul.f32 %v106, %v1484
    %v1487 = vmul.f32 %v111, %v1484
    %v1488 = vmul.f32 %v116, %v1484
    %v1489 = vmul.f32 %v121, %v1484
    %v1490 = vmul.f32 %v126, %v1484
    %v1491 = vmul.f32 %v131, %v1484
    %v1492 = vmul.f32 %v136, %v1484
    %v1493 = vmul.f32 %v141, %v1484
    %v1494 = vmul.f32 %v146, %v1484
    %v1495 = vmul.f32 %v151, %v1484
    %v1496 = vmul.f32 %v156, %v1484
    %v1497 = vmul.f32 %v161, %v1484
    %v1498 = vmul.f32 %v166, %v1484
    %v1499 = vmul.f32 %v171, %v1484
    %v1500 = vmul.f32 %v176, %v1484
    %v1501 = vmul.f32 %v181, %v1484
    %v1502 = vmul.f32 %v186, %v1484
    %v1503 = vmul.f32 %v191, %v1484
    %v1504 = vmul.f32 %v196, %v1484
    %v1505 = vmul.f32 %v201, %v1484
    %v1506 = vmul.f32 %v206, %v1484
    %v1507 = vmul.f32 %v1464, %v1484
    %v1508 = vmul.f32 %v1469, %v1484
    %v1509 = vmul.f32 %v221, %v1484
    %v1510 = vmul.f32 %v226, %v1484
    %v1511 = vmul.f32 %v231, %v1484
    %v1512 = vmul.f32 %v236, %v1484
    %v1513 = vmul.f32 %v241, %v1484
    %v1514 = vmul.f32 %v246, %v1484
    %v1515 = vmul.f32 %v251, %v1484
    %v1516 = vmul.f32 %v256, %v1484
    %v1517 = vmul.f32 %v261, %v1484
    %v1518 = vmul.f32 %v266, %v1484
    %v1519 = vmul.f32 %v271, %v1484
    %v1520 = vmul.f32 %v276, %v1484
    %v1521 = vmul.f32 %v281, %v1484
    %v1522 = vmul.f32 %v286, %v1484
    %v1523 = vmul.f32 %v291, %v1484
    %v1524 = vmul.f32 %v296, %v1484
    %v1525 = vmul.f32 %v301, %v1484
    %v1526 = vmul.f32 %v306, %v1484
    %v1527 = vmul.f32 %v311, %v1484
    %v1528 = vmul.f32 %v316, %v1484
    %v1529 = vmul.f32 %v321, %v1484
    %v1530 = vmul.f32 %v326, %v1484
    %v1531 = vmul.f32 %v1474, %v1484
    %v1532 = vmul.f32 %v1479, %v1484
    %v1533 = vadd.f32 %v1412, %v1485
    %v1534 = vadd.f32 %v1413, %v1486
    %v1535 = vadd.f32 %v1414, %v1487
    %v1536 = vadd.f32 %v1415, %v1488
    %v1537 = vadd.f32 %v1416, %v1489
    %v1538 = vadd.f32 %v1417, %v1490
    %v1539 = vadd.f32 %v1418, %v1491
    %v1540 = vadd.f32 %v1419, %v1492
    %v1541 = vadd.f32 %v1420, %v1493
    %v1542 = vadd.f32 %v1421, %v1494
    %v1543 = vadd.f32 %v1422, %v1495
    %v1544 = vadd.f32 %v1423, %v1496
    %v1545 = vadd.f32 %v1424, %v1497
    %v1546 = vadd.f32 %v1425, %v1498
    %v1547 = vadd.f32 %v1426, %v1499
    %v1548 = vadd.f32 %v1427, %v1500
    %v1549 = vadd.f32 %v1428, %v1501
    %v1550 = vadd.f32 %v1429, %v1502
    %v1551 = vadd.f32 %v1430, %v1503
    %v1552 = vadd.f32 %v1431, %v1504
    %v1553 = vadd.f32 %v1432, %v1505
    %v1554 = vadd.f32 %v1433, %v1506
    %v1555 = vadd.f32 %v1434, %v1507
    %v1556 = vadd.f32 %v1435, %v1508
    %v1557 = vadd.f32 %v1436, %v1509
    %v1558 = vadd.f32 %v1437, %v1510
    %v1559 = vadd.f32 %v1438, %v1511
    %v1560 = vadd.f32 %v1439, %v1512
    %v1561 = vadd.f32 %v1440, %v1513
    %v1562 = vadd.f32 %v1441, %v1514
    %v1563 = vadd.f32 %v1442, %v1515
    %v1564 = vadd.f32 %v1443, %v1516
    %v1565 = vadd.f32 %v1444, %v1517
    %v1566 = vadd.f32 %v1445, %v1518
    %v1567 = vadd.f32 %v1446, %v1519
    %v1568 = vadd.f32 %v1447, %v1520
    %v1569 = vadd.f32 %v1448, %v1521
    %v1570 = vadd.f32 %v1449, %v1522
    %v1571 = vadd.f32 %v1450, %v1523
    %v1572 = vadd.f32 %v1451, %v1524
    %v1573 = vadd.f32 %v1452, %v1525
    %v1574 = vadd.f32 %v1453, %v1526
    %v1575 = vadd.f32 %v1454, %v1527
    %v1576 = vadd.f32 %v1455, %v1528
    %v1577 = vadd.f32 %v1456, %v1529
    %v1578 = vadd.f32 %v1457, %v1530
    %v1579 = vadd.f32 %v1458, %v1531
    %v1580 = vadd.f32 %v1459, %v1532
    %v1581 = vld [vmem:[%s1 + $0x6] sm:$0x1]
    %v1582 = vlaneseq
    %v1583 = vshrl.u32 %v1582, 7
    %v1584 = vsub.s32 0, %v1583
    %v1585 = vrot.slane %v1581, %v1584
    %v1586 = vmul.f32 %v101, %v1585
    %v1587 = vmul.f32 %v106, %v1585
    %v1588 = vmul.f32 %v111, %v1585
    %v1589 = vmul.f32 %v116, %v1585
    %v1590 = vmul.f32 %v121, %v1585
    %v1591 = vmul.f32 %v126, %v1585
    %v1592 = vmul.f32 %v131, %v1585
    %v1593 = vmul.f32 %v136, %v1585
    %v1594 = vmul.f32 %v141, %v1585
    %v1595 = vmul.f32 %v146, %v1585
    %v1596 = vmul.f32 %v151, %v1585
    %v1597 = vmul.f32 %v156, %v1585
    %v1598 = vmul.f32 %v161, %v1585
    %v1599 = vmul.f32 %v166, %v1585
    %v1600 = vmul.f32 %v171, %v1585
    %v1601 = vmul.f32 %v176, %v1585
    %v1602 = vmul.f32 %v181, %v1585
    %v1603 = vmul.f32 %v186, %v1585
    %v1604 = vmul.f32 %v191, %v1585
    %v1605 = vmul.f32 %v196, %v1585
    %v1606 = vmul.f32 %v201, %v1585
    %v1607 = vmul.f32 %v206, %v1585
    %v1608 = vmul.f32 %v1464, %v1585
    %v1609 = vmul.f32 %v1469, %v1585
    %v1610 = vmul.f32 %v221, %v1585
    %v1611 = vmul.f32 %v226, %v1585
    %v1612 = vmul.f32 %v231, %v1585
    %v1613 = vmul.f32 %v236, %v1585
    %v1614 = vmul.f32 %v241, %v1585
    %v1615 = vmul.f32 %v246, %v1585
    %v1616 = vmul.f32 %v251, %v1585
    %v1617 = vmul.f32 %v256, %v1585
    %v1618 = vmul.f32 %v261, %v1585
    %v1619 = vmul.f32 %v266, %v1585
    %v1620 = vmul.f32 %v271, %v1585
    %v1621 = vmul.f32 %v276, %v1585
    %v1622 = vmul.f32 %v281, %v1585
    %v1623 = vmul.f32 %v286, %v1585
    %v1624 = vmul.f32 %v291, %v1585
    %v1625 = vmul.f32 %v296, %v1585
    %v1626 = vmul.f32 %v301, %v1585
    %v1627 = vmul.f32 %v306, %v1585
    %v1628 = vmul.f32 %v311, %v1585
    %v1629 = vmul.f32 %v316, %v1585
    %v1630 = vmul.f32 %v321, %v1585
    %v1631 = vmul.f32 %v326, %v1585
    %v1632 = vmul.f32 %v1474, %v1585
    %v1633 = vmul.f32 %v1479, %v1585
    %v1682 = vrot.slane %v1586, 1
    %v1683 = vrot.slane %v1587, 1
    %v1684 = vsel %vm481, %v1682, %v1683
    %v1685 = vrot.slane %v1588, 1
    %v1686 = vrot.slane %v1589, 1
    %v1687 = vsel %vm481, %v1685, %v1686
    %v1688 = vrot.slane %v1590, 1
    %v1689 = vrot.slane %v1591, 1
    %v1690 = vsel %vm481, %v1688, %v1689
    %v1691 = vrot.slane %v1592, 1
    %v1692 = vrot.slane %v1593, 1
    %v1693 = vsel %vm481, %v1691, %v1692
    %v1694 = vrot.slane %v1594, 1
    %v1695 = vrot.slane %v1595, 1
    %v1696 = vsel %vm481, %v1694, %v1695
    %v1697 = vrot.slane %v1596, 1
    %v1698 = vrot.slane %v1597, 1
    %v1699 = vsel %vm481, %v1697, %v1698
    %v1700 = vrot.slane %v1598, 1
    %v1701 = vrot.slane %v1599, 1
    %v1702 = vsel %vm481, %v1700, %v1701
    %v1703 = vrot.slane %v1600, 1
    %v1704 = vrot.slane %v1601, 1
    %v1705 = vsel %vm481, %v1703, %v1704
    %v1706 = vrot.slane %v1602, 1
    %v1707 = vrot.slane %v1603, 1
    %v1708 = vsel %vm481, %v1706, %v1707
    %v1709 = vrot.slane %v1604, 1
    %v1710 = vrot.slane %v1605, 1
    %v1711 = vsel %vm481, %v1709, %v1710
    %v1712 = vrot.slane %v1606, 1
    %v1713 = vrot.slane %v1607, 1
    %v1714 = vsel %vm481, %v1712, %v1713
    %v1715 = vrot.slane %v1608, 1
    %v1716 = vrot.slane %v1609, 1
    %v1717 = vsel %vm481, %v1715, %v1716
    %v1718 = vrot.slane %v1610, 1
    %v1719 = vrot.slane %v1611, 1
    %v1720 = vsel %vm481, %v1718, %v1719
    %v1721 = vrot.slane %v1612, 1
    %v1722 = vrot.slane %v1613, 1
    %v1723 = vsel %vm481, %v1721, %v1722
    %v1724 = vrot.slane %v1614, 1
    %v1725 = vrot.slane %v1615, 1
    %v1726 = vsel %vm481, %v1724, %v1725
    %v1727 = vrot.slane %v1616, 1
    %v1728 = vrot.slane %v1617, 1
    %v1729 = vsel %vm481, %v1727, %v1728
    %v1730 = vrot.slane %v1618, 1
    %v1731 = vrot.slane %v1619, 1
    %v1732 = vsel %vm481, %v1730, %v1731
    %v1733 = vrot.slane %v1620, 1
    %v1734 = vrot.slane %v1621, 1
    %v1735 = vsel %vm481, %v1733, %v1734
    %v1736 = vrot.slane %v1622, 1
    %v1737 = vrot.slane %v1623, 1
    %v1738 = vsel %vm481, %v1736, %v1737
    %v1739 = vrot.slane %v1624, 1
    %v1740 = vrot.slane %v1625, 1
    %v1741 = vsel %vm481, %v1739, %v1740
    %v1742 = vrot.slane %v1626, 1
    %v1743 = vrot.slane %v1627, 1
    %v1744 = vsel %vm481, %v1742, %v1743
    %v1745 = vrot.slane %v1628, 1
    %v1746 = vrot.slane %v1629, 1
    %v1747 = vsel %vm481, %v1745, %v1746
    %v1748 = vrot.slane %v1630, 1
    %v1749 = vrot.slane %v1631, 1
    %v1750 = vsel %vm481, %v1748, %v1749
    %v1751 = vrot.slane %v1632, 1
    %v1752 = vrot.slane %v1633, 1
    %v1753 = vsel %vm481, %v1751, %v1752
    %v1802 = vadd.f32 %v1533, %v1684
    %v1803 = vadd.f32 %v1534, %v1683
    %v1804 = vadd.f32 %v1535, %v1687
    %v1805 = vadd.f32 %v1536, %v1686
    %v1806 = vadd.f32 %v1537, %v1690
    %v1807 = vadd.f32 %v1538, %v1689
    %v1808 = vadd.f32 %v1539, %v1693
    %v1809 = vadd.f32 %v1540, %v1692
    %v1810 = vadd.f32 %v1541, %v1696
    %v1811 = vadd.f32 %v1542, %v1695
    %v1812 = vadd.f32 %v1543, %v1699
    %v1813 = vadd.f32 %v1544, %v1698
    %v1814 = vadd.f32 %v1545, %v1702
    %v1815 = vadd.f32 %v1546, %v1701
    %v1816 = vadd.f32 %v1547, %v1705
    %v1817 = vadd.f32 %v1548, %v1704
    %v1818 = vadd.f32 %v1549, %v1708
    %v1819 = vadd.f32 %v1550, %v1707
    %v1820 = vadd.f32 %v1551, %v1711
    %v1821 = vadd.f32 %v1552, %v1710
    %v1822 = vadd.f32 %v1553, %v1714
    %v1823 = vadd.f32 %v1554, %v1713
    %v1824 = vadd.f32 %v1555, %v1717
    %v1825 = vadd.f32 %v1556, %v1716
    %v1826 = vadd.f32 %v1557, %v1720
    %v1827 = vadd.f32 %v1558, %v1719
    %v1828 = vadd.f32 %v1559, %v1723
    %v1829 = vadd.f32 %v1560, %v1722
    %v1830 = vadd.f32 %v1561, %v1726
    %v1831 = vadd.f32 %v1562, %v1725
    %v1832 = vadd.f32 %v1563, %v1729
    %v1833 = vadd.f32 %v1564, %v1728
    %v1834 = vadd.f32 %v1565, %v1732
    %v1835 = vadd.f32 %v1566, %v1731
    %v1836 = vadd.f32 %v1567, %v1735
    %v1837 = vadd.f32 %v1568, %v1734
    %v1838 = vadd.f32 %v1569, %v1738
    %v1839 = vadd.f32 %v1570, %v1737
    %v1840 = vadd.f32 %v1571, %v1741
    %v1841 = vadd.f32 %v1572, %v1740
    %v1842 = vadd.f32 %v1573, %v1744
    %v1843 = vadd.f32 %v1574, %v1743
    %v1844 = vadd.f32 %v1575, %v1747
    %v1845 = vadd.f32 %v1576, %v1746
    %v1846 = vadd.f32 %v1577, %v1750
    %v1847 = vadd.f32 %v1578, %v1749
    %v1848 = vadd.f32 %v1579, %v1753
    %v1849 = vadd.f32 %v1580, %v1752
    %v1850 = vld [vmem:[%s1 + $0x7] sm:$0x1]
    %v1851 = vlaneseq
    %v1852 = vshrl.u32 %v1851, 7
    %v1853 = vsub.s32 0, %v1852
    %v1854 = vrot.slane %v1850, %v1853
    %v1855 = vmul.f32 %v101, %v1854
    %v1856 = vmul.f32 %v106, %v1854
    %v1857 = vmul.f32 %v111, %v1854
    %v1858 = vmul.f32 %v116, %v1854
    %v1859 = vmul.f32 %v121, %v1854
    %v1860 = vmul.f32 %v126, %v1854
    %v1861 = vmul.f32 %v131, %v1854
    %v1862 = vmul.f32 %v136, %v1854
    %v1863 = vmul.f32 %v141, %v1854
    %v1864 = vmul.f32 %v146, %v1854
    %v1865 = vmul.f32 %v151, %v1854
    %v1866 = vmul.f32 %v156, %v1854
    %v1867 = vmul.f32 %v161, %v1854
    %v1868 = vmul.f32 %v166, %v1854
    %v1869 = vmul.f32 %v171, %v1854
    %v1870 = vmul.f32 %v176, %v1854
    %v1871 = vmul.f32 %v181, %v1854
    %v1872 = vmul.f32 %v186, %v1854
    %v1873 = vmul.f32 %v191, %v1854
    %v1874 = vmul.f32 %v196, %v1854
    %v1875 = vmul.f32 %v201, %v1854
    %v1876 = vmul.f32 %v206, %v1854
    %v1877 = vmul.f32 %v1464, %v1854
    %v1878 = vmul.f32 %v1469, %v1854
    %v1879 = vmul.f32 %v221, %v1854
    %v1880 = vmul.f32 %v226, %v1854
    %v1881 = vmul.f32 %v231, %v1854
    %v1882 = vmul.f32 %v236, %v1854
    %v1883 = vmul.f32 %v241, %v1854
    %v1884 = vmul.f32 %v246, %v1854
    %v1885 = vmul.f32 %v251, %v1854
    %v1886 = vmul.f32 %v256, %v1854
    %v1887 = vmul.f32 %v261, %v1854
    %v1888 = vmul.f32 %v266, %v1854
    %v1889 = vmul.f32 %v271, %v1854
    %v1890 = vmul.f32 %v276, %v1854
    %v1891 = vmul.f32 %v281, %v1854
    %v1892 = vmul.f32 %v286, %v1854
    %v1893 = vmul.f32 %v291, %v1854
    %v1894 = vmul.f32 %v296, %v1854
    %v1895 = vmul.f32 %v301, %v1854
    %v1896 = vmul.f32 %v306, %v1854
    %v1897 = vmul.f32 %v311, %v1854
    %v1898 = vmul.f32 %v316, %v1854
    %v1899 = vmul.f32 %v321, %v1854
    %v1900 = vmul.f32 %v326, %v1854
    %v1901 = vmul.f32 %v1474, %v1854
    %v1902 = vmul.f32 %v1479, %v1854
    %v1951 = vrot.slane %v1855, 2
    %v1952 = vrot.slane %v1856, 2
    %v1953 = vsel %vm751, %v1951, %v1952
    %v1954 = vrot.slane %v1857, 2
    %v1955 = vrot.slane %v1858, 2
    %v1956 = vsel %vm751, %v1954, %v1955
    %v1957 = vrot.slane %v1859, 2
    %v1958 = vrot.slane %v1860, 2
    %v1959 = vsel %vm751, %v1957, %v1958
    %v1960 = vrot.slane %v1861, 2
    %v1961 = vrot.slane %v1862, 2
    %v1962 = vsel %vm751, %v1960, %v1961
    %v1963 = vrot.slane %v1863, 2
    %v1964 = vrot.slane %v1864, 2
    %v1965 = vsel %vm751, %v1963, %v1964
    %v1966 = vrot.slane %v1865, 2
    %v1967 = vrot.slane %v1866, 2
    %v1968 = vsel %vm751, %v1966, %v1967
    %v1969 = vrot.slane %v1867, 2
    %v1970 = vrot.slane %v1868, 2
    %v1971 = vsel %vm751, %v1969, %v1970
    %v1972 = vrot.slane %v1869, 2
    %v1973 = vrot.slane %v1870, 2
    %v1974 = vsel %vm751, %v1972, %v1973
    %v1975 = vrot.slane %v1871, 2
    %v1976 = vrot.slane %v1872, 2
    %v1977 = vsel %vm751, %v1975, %v1976
    %v1978 = vrot.slane %v1873, 2
    %v1979 = vrot.slane %v1874, 2
    %v1980 = vsel %vm751, %v1978, %v1979
    %v1981 = vrot.slane %v1875, 2
    %v1982 = vrot.slane %v1876, 2
    %v1983 = vsel %vm751, %v1981, %v1982
    %v1984 = vrot.slane %v1877, 2
    %v1985 = vrot.slane %v1878, 2
    %v1986 = vsel %vm751, %v1984, %v1985
    %v1987 = vrot.slane %v1879, 2
    %v1988 = vrot.slane %v1880, 2
    %v1989 = vsel %vm751, %v1987, %v1988
    %v1990 = vrot.slane %v1881, 2
    %v1991 = vrot.slane %v1882, 2
    %v1992 = vsel %vm751, %v1990, %v1991
    %v1993 = vrot.slane %v1883, 2
    %v1994 = vrot.slane %v1884, 2
    %v1995 = vsel %vm751, %v1993, %v1994
    %v1996 = vrot.slane %v1885, 2
    %v1997 = vrot.slane %v1886, 2
    %v1998 = vsel %vm751, %v1996, %v1997
    %v1999 = vrot.slane %v1887, 2
    %v2000 = vrot.slane %v1888, 2
    %v2001 = vsel %vm751, %v1999, %v2000
    %v2002 = vrot.slane %v1889, 2
    %v2003 = vrot.slane %v1890, 2
    %v2004 = vsel %vm751, %v2002, %v2003
    %v2005 = vrot.slane %v1891, 2
    %v2006 = vrot.slane %v1892, 2
    %v2007 = vsel %vm751, %v2005, %v2006
    %v2008 = vrot.slane %v1893, 2
    %v2009 = vrot.slane %v1894, 2
    %v2010 = vsel %vm751, %v2008, %v2009
    %v2011 = vrot.slane %v1895, 2
    %v2012 = vrot.slane %v1896, 2
    %v2013 = vsel %vm751, %v2011, %v2012
    %v2014 = vrot.slane %v1897, 2
    %v2015 = vrot.slane %v1898, 2
    %v2016 = vsel %vm751, %v2014, %v2015
    %v2017 = vrot.slane %v1899, 2
    %v2018 = vrot.slane %v1900, 2
    %v2019 = vsel %vm751, %v2017, %v2018
    %v2020 = vrot.slane %v1901, 2
    %v2021 = vrot.slane %v1902, 2
    %v2022 = vsel %vm751, %v2020, %v2021
    %v2071 = vadd.f32 %v1802, %v1953
    %v2072 = vadd.f32 %v1803, %v1952
    %v2073 = vadd.f32 %v1804, %v1956
    %v2074 = vadd.f32 %v1805, %v1955
    %v2075 = vadd.f32 %v1806, %v1959
    %v2076 = vadd.f32 %v1807, %v1958
    %v2077 = vadd.f32 %v1808, %v1962
    %v2078 = vadd.f32 %v1809, %v1961
    %v2079 = vadd.f32 %v1810, %v1965
    %v2080 = vadd.f32 %v1811, %v1964
    %v2081 = vadd.f32 %v1812, %v1968
    %v2082 = vadd.f32 %v1813, %v1967
    %v2083 = vadd.f32 %v1814, %v1971
    %v2084 = vadd.f32 %v1815, %v1970
    %v2085 = vadd.f32 %v1816, %v1974
    %v2086 = vadd.f32 %v1817, %v1973
    %v2087 = vadd.f32 %v1818, %v1977
    %v2088 = vadd.f32 %v1819, %v1976
    %v2089 = vadd.f32 %v1820, %v1980
    %v2090 = vadd.f32 %v1821, %v1979
    %v2091 = vadd.f32 %v1822, %v1983
    %v2092 = vadd.f32 %v1823, %v1982
    %v2093 = vadd.f32 %v1824, %v1986
    %v2094 = vadd.f32 %v1825, %v1985
    %v2095 = vadd.f32 %v1826, %v1989
    %v2096 = vadd.f32 %v1827, %v1988
    %v2097 = vadd.f32 %v1828, %v1992
    %v2098 = vadd.f32 %v1829, %v1991
    %v2099 = vadd.f32 %v1830, %v1995
    %v2100 = vadd.f32 %v1831, %v1994
    %v2101 = vadd.f32 %v1832, %v1998
    %v2102 = vadd.f32 %v1833, %v1997
    %v2103 = vadd.f32 %v1834, %v2001
    %v2104 = vadd.f32 %v1835, %v2000
    %v2105 = vadd.f32 %v1836, %v2004
    %v2106 = vadd.f32 %v1837, %v2003
    %v2107 = vadd.f32 %v1838, %v2007
    %v2108 = vadd.f32 %v1839, %v2006
    %v2109 = vadd.f32 %v1840, %v2010
    %v2110 = vadd.f32 %v1841, %v2009
    %v2111 = vadd.f32 %v1842, %v2013
    %v2112 = vadd.f32 %v1843, %v2012
    %v2113 = vadd.f32 %v1844, %v2016
    %v2114 = vadd.f32 %v1845, %v2015
    %v2115 = vadd.f32 %v1846, %v2019
    %v2116 = vadd.f32 %v1847, %v2018
    %v2117 = vadd.f32 %v1848, %v2022
    %v2118 = vadd.f32 %v1849, %v2021
    %v2119 = vld [vmem:[%s1 + $0x8] sm:$0x1]
    %v2120 = vlaneseq
    %v2121 = vshrl.u32 %v2120, 7
    %v2122 = vsub.s32 0, %v2121
    %v2123 = vrot.slane %v2119, %v2122
    %v2124 = vmul.f32 %v101, %v2123
    %v2125 = vmul.f32 %v106, %v2123
    %v2126 = vmul.f32 %v111, %v2123
    %v2127 = vmul.f32 %v116, %v2123
    %v2128 = vmul.f32 %v121, %v2123
    %v2129 = vmul.f32 %v126, %v2123
    %v2130 = vmul.f32 %v131, %v2123
    %v2131 = vmul.f32 %v136, %v2123
    %v2132 = vmul.f32 %v141, %v2123
    %v2133 = vmul.f32 %v146, %v2123
    %v2134 = vmul.f32 %v151, %v2123
    %v2135 = vmul.f32 %v156, %v2123
    %v2136 = vmul.f32 %v161, %v2123
    %v2137 = vmul.f32 %v166, %v2123
    %v2138 = vmul.f32 %v171, %v2123
    %v2139 = vmul.f32 %v176, %v2123
    %v2140 = vmul.f32 %v181, %v2123
    %v2141 = vmul.f32 %v186, %v2123
    %v2142 = vmul.f32 %v191, %v2123
    %v2143 = vmul.f32 %v196, %v2123
    %v2144 = vmul.f32 %v201, %v2123
    %v2145 = vmul.f32 %v206, %v2123
    %v2146 = vmul.f32 %v1464, %v2123
    %v2147 = vmul.f32 %v1469, %v2123
    %v2148 = vmul.f32 %v221, %v2123
    %v2149 = vmul.f32 %v226, %v2123
    %v2150 = vmul.f32 %v231, %v2123
    %v2151 = vmul.f32 %v236, %v2123
    %v2152 = vmul.f32 %v241, %v2123
    %v2153 = vmul.f32 %v246, %v2123
    %v2154 = vmul.f32 %v251, %v2123
    %v2155 = vmul.f32 %v256, %v2123
    %v2156 = vmul.f32 %v261, %v2123
    %v2157 = vmul.f32 %v266, %v2123
    %v2158 = vmul.f32 %v271, %v2123
    %v2159 = vmul.f32 %v276, %v2123
    %v2160 = vmul.f32 %v281, %v2123
    %v2161 = vmul.f32 %v286, %v2123
    %v2162 = vmul.f32 %v291, %v2123
    %v2163 = vmul.f32 %v296, %v2123
    %v2164 = vmul.f32 %v301, %v2123
    %v2165 = vmul.f32 %v306, %v2123
    %v2166 = vmul.f32 %v311, %v2123
    %v2167 = vmul.f32 %v316, %v2123
    %v2168 = vmul.f32 %v321, %v2123
    %v2169 = vmul.f32 %v326, %v2123
    %v2170 = vmul.f32 %v1474, %v2123
    %v2171 = vmul.f32 %v1479, %v2123
    %v2220 = vrot.slane %v2124, 3
    %v2221 = vrot.slane %v2125, 3
    %v2222 = vsel %vm1021, %v2220, %v2221
    %v2223 = vrot.slane %v2126, 3
    %v2224 = vrot.slane %v2127, 3
    %v2225 = vsel %vm1021, %v2223, %v2224
    %v2226 = vrot.slane %v2128, 3
    %v2227 = vrot.slane %v2129, 3
    %v2228 = vsel %vm1021, %v2226, %v2227
    %v2229 = vrot.slane %v2130, 3
    %v2230 = vrot.slane %v2131, 3
    %v2231 = vsel %vm1021, %v2229, %v2230
    %v2232 = vrot.slane %v2132, 3
    %v2233 = vrot.slane %v2133, 3
    %v2234 = vsel %vm1021, %v2232, %v2233
    %v2235 = vrot.slane %v2134, 3
    %v2236 = vrot.slane %v2135, 3
    %v2237 = vsel %vm1021, %v2235, %v2236
    %v2238 = vrot.slane %v2136, 3
    %v2239 = vrot.slane %v2137, 3
    %v2240 = vsel %vm1021, %v2238, %v2239
    %v2241 = vrot.slane %v2138, 3
    %v2242 = vrot.slane %v2139, 3
    %v2243 = vsel %vm1021, %v2241, %v2242
    %v2244 = vrot.slane %v2140, 3
    %v2245 = vrot.slane %v2141, 3
    %v2246 = vsel %vm1021, %v2244, %v2245
    %v2247 = vrot.slane %v2142, 3
    %v2248 = vrot.slane %v2143, 3
    %v2249 = vsel %vm1021, %v2247, %v2248
    %v2250 = vrot.slane %v2144, 3
    %v2251 = vrot.slane %v2145, 3
    %v2252 = vsel %vm1021, %v2250, %v2251
    %v2253 = vrot.slane %v2146, 3
    %v2254 = vrot.slane %v2147, 3
    %v2255 = vsel %vm1021, %v2253, %v2254
    %v2256 = vrot.slane %v2148, 3
    %v2257 = vrot.slane %v2149, 3
    %v2258 = vsel %vm1021, %v2256, %v2257
    %v2259 = vrot.slane %v2150, 3
    %v2260 = vrot.slane %v2151, 3
    %v2261 = vsel %vm1021, %v2259, %v2260
    %v2262 = vrot.slane %v2152, 3
    %v2263 = vrot.slane %v2153, 3
    %v2264 = vsel %vm1021, %v2262, %v2263
    %v2265 = vrot.slane %v2154, 3
    %v2266 = vrot.slane %v2155, 3
    %v2267 = vsel %vm1021, %v2265, %v2266
    %v2268 = vrot.slane %v2156, 3
    %v2269 = vrot.slane %v2157, 3
    %v2270 = vsel %vm1021, %v2268, %v2269
    %v2271 = vrot.slane %v2158, 3
    %v2272 = vrot.slane %v2159, 3
    %v2273 = vsel %vm1021, %v2271, %v2272
    %v2274 = vrot.slane %v2160, 3
    %v2275 = vrot.slane %v2161, 3
    %v2276 = vsel %vm1021, %v2274, %v2275
    %v2277 = vrot.slane %v2162, 3
    %v2278 = vrot.slane %v2163, 3
    %v2279 = vsel %vm1021, %v2277, %v2278
    %v2280 = vrot.slane %v2164, 3
    %v2281 = vrot.slane %v2165, 3
    %v2282 = vsel %vm1021, %v2280, %v2281
    %v2283 = vrot.slane %v2166, 3
    %v2284 = vrot.slane %v2167, 3
    %v2285 = vsel %vm1021, %v2283, %v2284
    %v2286 = vrot.slane %v2168, 3
    %v2287 = vrot.slane %v2169, 3
    %v2288 = vsel %vm1021, %v2286, %v2287
    %v2289 = vrot.slane %v2170, 3
    %v2290 = vrot.slane %v2171, 3
    %v2291 = vsel %vm1021, %v2289, %v2290
    %v2340 = vadd.f32 %v2071, %v2222
    %v2341 = vadd.f32 %v2072, %v2221
    %v2342 = vadd.f32 %v2073, %v2225
    %v2343 = vadd.f32 %v2074, %v2224
    %v2344 = vadd.f32 %v2075, %v2228
    %v2345 = vadd.f32 %v2076, %v2227
    %v2346 = vadd.f32 %v2077, %v2231
    %v2347 = vadd.f32 %v2078, %v2230
    %v2348 = vadd.f32 %v2079, %v2234
    %v2349 = vadd.f32 %v2080, %v2233
    %v2350 = vadd.f32 %v2081, %v2237
    %v2351 = vadd.f32 %v2082, %v2236
    %v2352 = vadd.f32 %v2083, %v2240
    %v2353 = vadd.f32 %v2084, %v2239
    %v2354 = vadd.f32 %v2085, %v2243
    %v2355 = vadd.f32 %v2086, %v2242
    %v2356 = vadd.f32 %v2087, %v2246
    %v2357 = vadd.f32 %v2088, %v2245
    %v2358 = vadd.f32 %v2089, %v2249
    %v2359 = vadd.f32 %v2090, %v2248
    %v2360 = vadd.f32 %v2091, %v2252
    %v2361 = vadd.f32 %v2092, %v2251
    %v2362 = vadd.f32 %v2093, %v2255
    %v2363 = vadd.f32 %v2094, %v2254
    %v2364 = vadd.f32 %v2095, %v2258
    %v2365 = vadd.f32 %v2096, %v2257
    %v2366 = vadd.f32 %v2097, %v2261
    %v2367 = vadd.f32 %v2098, %v2260
    %v2368 = vadd.f32 %v2099, %v2264
    %v2369 = vadd.f32 %v2100, %v2263
    %v2370 = vadd.f32 %v2101, %v2267
    %v2371 = vadd.f32 %v2102, %v2266
    %v2372 = vadd.f32 %v2103, %v2270
    %v2373 = vadd.f32 %v2104, %v2269
    %v2374 = vadd.f32 %v2105, %v2273
    %v2375 = vadd.f32 %v2106, %v2272
    %v2376 = vadd.f32 %v2107, %v2276
    %v2377 = vadd.f32 %v2108, %v2275
    %v2378 = vadd.f32 %v2109, %v2279
    %v2379 = vadd.f32 %v2110, %v2278
    %v2380 = vadd.f32 %v2111, %v2282
    %v2381 = vadd.f32 %v2112, %v2281
    %v2382 = vadd.f32 %v2113, %v2285
    %v2383 = vadd.f32 %v2114, %v2284
    %v2384 = vadd.f32 %v2115, %v2288
    %v2385 = vadd.f32 %v2116, %v2287
    %v2386 = vadd.f32 %v2117, %v2291
    %v2387 = vadd.f32 %v2118, %v2290
    %v2388 = vld [vmem:[%s1 + $0x9] sm:$0x1]
    %v2389 = vlaneseq
    %v2390 = vshrl.u32 %v2389, 7
    %v2391 = vsub.s32 0, %v2390
    %v2392 = vrot.slane %v2388, %v2391
    %v2393 = vmul.f32 %v101, %v2392
    %v2394 = vmul.f32 %v106, %v2392
    %v2395 = vmul.f32 %v111, %v2392
    %v2396 = vmul.f32 %v116, %v2392
    %v2397 = vmul.f32 %v121, %v2392
    %v2398 = vmul.f32 %v126, %v2392
    %v2399 = vmul.f32 %v131, %v2392
    %v2400 = vmul.f32 %v136, %v2392
    %v2401 = vmul.f32 %v141, %v2392
    %v2402 = vmul.f32 %v146, %v2392
    %v2403 = vmul.f32 %v151, %v2392
    %v2404 = vmul.f32 %v156, %v2392
    %v2405 = vmul.f32 %v161, %v2392
    %v2406 = vmul.f32 %v166, %v2392
    %v2407 = vmul.f32 %v171, %v2392
    %v2408 = vmul.f32 %v176, %v2392
    %v2409 = vmul.f32 %v181, %v2392
    %v2410 = vmul.f32 %v186, %v2392
    %v2411 = vmul.f32 %v191, %v2392
    %v2412 = vmul.f32 %v196, %v2392
    %v2413 = vmul.f32 %v201, %v2392
    %v2414 = vmul.f32 %v206, %v2392
    %v2415 = vmul.f32 %v1464, %v2392
    %v2416 = vmul.f32 %v1469, %v2392
    %v2417 = vmul.f32 %v221, %v2392
    %v2418 = vmul.f32 %v226, %v2392
    %v2419 = vmul.f32 %v231, %v2392
    %v2420 = vmul.f32 %v236, %v2392
    %v2421 = vmul.f32 %v241, %v2392
    %v2422 = vmul.f32 %v246, %v2392
    %v2423 = vmul.f32 %v251, %v2392
    %v2424 = vmul.f32 %v256, %v2392
    %v2425 = vmul.f32 %v261, %v2392
    %v2426 = vmul.f32 %v266, %v2392
    %v2427 = vmul.f32 %v271, %v2392
    %v2428 = vmul.f32 %v276, %v2392
    %v2429 = vmul.f32 %v281, %v2392
    %v2430 = vmul.f32 %v286, %v2392
    %v2431 = vmul.f32 %v291, %v2392
    %v2432 = vmul.f32 %v296, %v2392
    %v2433 = vmul.f32 %v301, %v2392
    %v2434 = vmul.f32 %v306, %v2392
    %v2435 = vmul.f32 %v311, %v2392
    %v2436 = vmul.f32 %v316, %v2392
    %v2437 = vmul.f32 %v321, %v2392
    %v2438 = vmul.f32 %v326, %v2392
    %v2439 = vmul.f32 %v1474, %v2392
    %v2440 = vmul.f32 %v1479, %v2392
    %v2489 = vrot.slane %v2393, 4
    %v2490 = vrot.slane %v2394, 4
    %v2491 = vsel %vm1291, %v2489, %v2490
    %v2492 = vrot.slane %v2395, 4
    %v2493 = vrot.slane %v2396, 4
    %v2494 = vsel %vm1291, %v2492, %v2493
    %v2495 = vrot.slane %v2397, 4
    %v2496 = vrot.slane %v2398, 4
    %v2497 = vsel %vm1291, %v2495, %v2496
    %v2498 = vrot.slane %v2399, 4
    %v2499 = vrot.slane %v2400, 4
    %v2500 = vsel %vm1291, %v2498, %v2499
    %v2501 = vrot.slane %v2401, 4
    %v2502 = vrot.slane %v2402, 4
    %v2503 = vsel %vm1291, %v2501, %v2502
    %v2504 = vrot.slane %v2403, 4
    %v2505 = vrot.slane %v2404, 4
    %v2506 = vsel %vm1291, %v2504, %v2505
    %v2507 = vrot.slane %v2405, 4
    %v2508 = vrot.slane %v2406, 4
    %v2509 = vsel %vm1291, %v2507, %v2508
    %v2510 = vrot.slane %v2407, 4
    %v2511 = vrot.slane %v2408, 4
    %v2512 = vsel %vm1291, %v2510, %v2511
    %v2513 = vrot.slane %v2409, 4
    %v2514 = vrot.slane %v2410, 4
    %v2515 = vsel %vm1291, %v2513, %v2514
    %v2516 = vrot.slane %v2411, 4
    %v2517 = vrot.slane %v2412, 4
    %v2518 = vsel %vm1291, %v2516, %v2517
    %v2519 = vrot.slane %v2413, 4
    %v2520 = vrot.slane %v2414, 4
    %v2521 = vsel %vm1291, %v2519, %v2520
    %v2522 = vrot.slane %v2415, 4
    %v2523 = vrot.slane %v2416, 4
    %v2524 = vsel %vm1291, %v2522, %v2523
    %v2525 = vrot.slane %v2417, 4
    %v2526 = vrot.slane %v2418, 4
    %v2527 = vsel %vm1291, %v2525, %v2526
    %v2528 = vrot.slane %v2419, 4
    %v2529 = vrot.slane %v2420, 4
    %v2530 = vsel %vm1291, %v2528, %v2529
    %v2531 = vrot.slane %v2421, 4
    %v2532 = vrot.slane %v2422, 4
    %v2533 = vsel %vm1291, %v2531, %v2532
    %v2534 = vrot.slane %v2423, 4
    %v2535 = vrot.slane %v2424, 4
    %v2536 = vsel %vm1291, %v2534, %v2535
    %v2537 = vrot.slane %v2425, 4
    %v2538 = vrot.slane %v2426, 4
    %v2539 = vsel %vm1291, %v2537, %v2538
    %v2540 = vrot.slane %v2427, 4
    %v2541 = vrot.slane %v2428, 4
    %v2542 = vsel %vm1291, %v2540, %v2541
    %v2543 = vrot.slane %v2429, 4
    %v2544 = vrot.slane %v2430, 4
    %v2545 = vsel %vm1291, %v2543, %v2544
    %v2546 = vrot.slane %v2431, 4
    %v2547 = vrot.slane %v2432, 4
    %v2548 = vsel %vm1291, %v2546, %v2547
    %v2549 = vrot.slane %v2433, 4
    %v2550 = vrot.slane %v2434, 4
    %v2551 = vsel %vm1291, %v2549, %v2550
    %v2552 = vrot.slane %v2435, 4
    %v2553 = vrot.slane %v2436, 4
    %v2554 = vsel %vm1291, %v2552, %v2553
    %v2555 = vrot.slane %v2437, 4
    %v2556 = vrot.slane %v2438, 4
    %v2557 = vsel %vm1291, %v2555, %v2556
    %v2558 = vrot.slane %v2439, 4
    %v2559 = vrot.slane %v2440, 4
    %v2560 = vsel %vm1291, %v2558, %v2559
    %v2609 = vadd.f32 %v2340, %v2491
    %v2610 = vadd.f32 %v2341, %v2490
    %v2611 = vadd.f32 %v2342, %v2494
    %v2612 = vadd.f32 %v2343, %v2493
    %v2613 = vadd.f32 %v2344, %v2497
    %v2614 = vadd.f32 %v2345, %v2496
    %v2615 = vadd.f32 %v2346, %v2500
    %v2616 = vadd.f32 %v2347, %v2499
    %v2617 = vadd.f32 %v2348, %v2503
    %v2618 = vadd.f32 %v2349, %v2502
    %v2619 = vadd.f32 %v2350, %v2506
    %v2620 = vadd.f32 %v2351, %v2505
    %v2621 = vadd.f32 %v2352, %v2509
    %v2622 = vadd.f32 %v2353, %v2508
    %v2623 = vadd.f32 %v2354, %v2512
    %v2624 = vadd.f32 %v2355, %v2511
    %v2625 = vadd.f32 %v2356, %v2515
    %v2626 = vadd.f32 %v2357, %v2514
    %v2627 = vadd.f32 %v2358, %v2518
    %v2628 = vadd.f32 %v2359, %v2517
    %v2629 = vadd.f32 %v2360, %v2521
    %v2630 = vadd.f32 %v2361, %v2520
    %v2631 = vadd.f32 %v2362, %v2524
    %v2632 = vadd.f32 %v2363, %v2523
    %v2633 = vadd.f32 %v2364, %v2527
    %v2634 = vadd.f32 %v2365, %v2526
    %v2635 = vadd.f32 %v2366, %v2530
    %v2636 = vadd.f32 %v2367, %v2529
    %v2637 = vadd.f32 %v2368, %v2533
    %v2638 = vadd.f32 %v2369, %v2532
    %v2639 = vadd.f32 %v2370, %v2536
    %v2640 = vadd.f32 %v2371, %v2535
    %v2641 = vadd.f32 %v2372, %v2539
    %v2642 = vadd.f32 %v2373, %v2538
    %v2643 = vadd.f32 %v2374, %v2542
    %v2644 = vadd.f32 %v2375, %v2541
    %v2645 = vadd.f32 %v2376, %v2545
    %v2646 = vadd.f32 %v2377, %v2544
    %v2647 = vadd.f32 %v2378, %v2548
    %v2648 = vadd.f32 %v2379, %v2547
    %v2649 = vadd.f32 %v2380, %v2551
    %v2650 = vadd.f32 %v2381, %v2550
    %v2651 = vadd.f32 %v2382, %v2554
    %v2652 = vadd.f32 %v2383, %v2553
    %v2653 = vadd.f32 %v2384, %v2557
    %v2654 = vadd.f32 %v2385, %v2556
    %v2655 = vadd.f32 %v2386, %v2560
    %v2656 = vadd.f32 %v2387, %v2559
    %v2657 = vld [vmem:[%s1 + $0xa] sm:$0x1]
    %2659 = vset.pattern.permute.xlu0 0
    %2660 = vperm.xlu0 %2659, %v49
    %v2661 = vpop.permute.xlu0 %2660
    %2664 = vset.pattern.permute.xlu0 0
    %2665 = vperm.xlu0 %2664, %v50
    %v2666 = vpop.permute.xlu0 %2665
    %2669 = vset.pattern.permute.xlu0 0
    %2670 = vperm.xlu0 %2669, %v81
    %v2671 = vpop.permute.xlu0 %2670
    %2674 = vset.pattern.permute.xlu0 0
    %2675 = vperm.xlu0 %2674, %v82
    %v2676 = vpop.permute.xlu0 %2675
    %v2678 = vlaneseq
    %v2679 = vshrl.u32 %v2678, 7
    %v2680 = vsub.s32 0, %v2679
    %v2681 = vrot.slane %v2657, %v2680
    %v2682 = vmul.f32 %v111, %v2681
    %v2683 = vmul.f32 %v116, %v2681
    %v2684 = vmul.f32 %v121, %v2681
    %v2685 = vmul.f32 %v126, %v2681
    %v2686 = vmul.f32 %v131, %v2681
    %v2687 = vmul.f32 %v136, %v2681
    %v2688 = vmul.f32 %v141, %v2681
    %v2689 = vmul.f32 %v146, %v2681
    %v2690 = vmul.f32 %v151, %v2681
    %v2691 = vmul.f32 %v156, %v2681
    %v2692 = vmul.f32 %v161, %v2681
    %v2693 = vmul.f32 %v166, %v2681
    %v2694 = vmul.f32 %v171, %v2681
    %v2695 = vmul.f32 %v176, %v2681
    %v2696 = vmul.f32 %v181, %v2681
    %v2697 = vmul.f32 %v186, %v2681
    %v2698 = vmul.f32 %v191, %v2681
    %v2699 = vmul.f32 %v196, %v2681
    %v2700 = vmul.f32 %v201, %v2681
    %v2701 = vmul.f32 %v206, %v2681
    %v2702 = vmul.f32 %v1464, %v2681
    %v2703 = vmul.f32 %v1469, %v2681
    %v2704 = vmul.f32 %v2661, %v2681
    %v2705 = vmul.f32 %v2666, %v2681
    %v2706 = vmul.f32 %v231, %v2681
    %v2707 = vmul.f32 %v236, %v2681
    %v2708 = vmul.f32 %v241, %v2681
    %v2709 = vmul.f32 %v246, %v2681
    %v2710 = vmul.f32 %v251, %v2681
    %v2711 = vmul.f32 %v256, %v2681
    %v2712 = vmul.f32 %v261, %v2681
    %v2713 = vmul.f32 %v266, %v2681
    %v2714 = vmul.f32 %v271, %v2681
    %v2715 = vmul.f32 %v276, %v2681
    %v2716 = vmul.f32 %v281, %v2681
    %v2717 = vmul.f32 %v286, %v2681
    %v2718 = vmul.f32 %v291, %v2681
    %v2719 = vmul.f32 %v296, %v2681
    %v2720 = vmul.f32 %v301, %v2681
    %v2721 = vmul.f32 %v306, %v2681
    %v2722 = vmul.f32 %v311, %v2681
    %v2723 = vmul.f32 %v316, %v2681
    %v2724 = vmul.f32 %v321, %v2681
    %v2725 = vmul.f32 %v326, %v2681
    %v2726 = vmul.f32 %v1474, %v2681
    %v2727 = vmul.f32 %v1479, %v2681
    %v2728 = vmul.f32 %v2671, %v2681
    %v2729 = vmul.f32 %v2676, %v2681
    %v2730 = vadd.f32 %v2609, %v2682
    %v2731 = vadd.f32 %v2610, %v2683
    %v2732 = vadd.f32 %v2611, %v2684
    %v2733 = vadd.f32 %v2612, %v2685
    %v2734 = vadd.f32 %v2613, %v2686
    %v2735 = vadd.f32 %v2614, %v2687
    %v2736 = vadd.f32 %v2615, %v2688
    %v2737 = vadd.f32 %v2616, %v2689
    %v2738 = vadd.f32 %v2617, %v2690
    %v2739 = vadd.f32 %v2618, %v2691
    %v2740 = vadd.f32 %v2619, %v2692
    %v2741 = vadd.f32 %v2620, %v2693
    %v2742 = vadd.f32 %v2621, %v2694
    %v2743 = vadd.f32 %v2622, %v2695
    %v2744 = vadd.f32 %v2623, %v2696
    %v2745 = vadd.f32 %v2624, %v2697
    %v2746 = vadd.f32 %v2625, %v2698
    %v2747 = vadd.f32 %v2626, %v2699
    %v2748 = vadd.f32 %v2627, %v2700
    %v2749 = vadd.f32 %v2628, %v2701
    %v2750 = vadd.f32 %v2629, %v2702
    %v2751 = vadd.f32 %v2630, %v2703
    %v2752 = vadd.f32 %v2631, %v2704
    %v2753 = vadd.f32 %v2632, %v2705
    %v2754 = vadd.f32 %v2633, %v2706
    %v2755 = vadd.f32 %v2634, %v2707
    %v2756 = vadd.f32 %v2635, %v2708
    %v2757 = vadd.f32 %v2636, %v2709
    %v2758 = vadd.f32 %v2637, %v2710
    %v2759 = vadd.f32 %v2638, %v2711
    %v2760 = vadd.f32 %v2639, %v2712
    %v2761 = vadd.f32 %v2640, %v2713
    %v2762 = vadd.f32 %v2641, %v2714
    %v2763 = vadd.f32 %v2642, %v2715
    %v2764 = vadd.f32 %v2643, %v2716
    %v2765 = vadd.f32 %v2644, %v2717
    %v2766 = vadd.f32 %v2645, %v2718
    %v2767 = vadd.f32 %v2646, %v2719
    %v2768 = vadd.f32 %v2647, %v2720
    %v2769 = vadd.f32 %v2648, %v2721
    %v2770 = vadd.f32 %v2649, %v2722
    %v2771 = vadd.f32 %v2650, %v2723
    %v2772 = vadd.f32 %v2651, %v2724
    %v2773 = vadd.f32 %v2652, %v2725
    %v2774 = vadd.f32 %v2653, %v2726
    %v2775 = vadd.f32 %v2654, %v2727
    %v2776 = vadd.f32 %v2655, %v2728
    %v2777 = vadd.f32 %v2656, %v2729
    %v2778 = vld [vmem:[%s1 + $0xb] sm:$0x1]
    %v2779 = vlaneseq
    %v2780 = vshrl.u32 %v2779, 7
    %v2781 = vsub.s32 0, %v2780
    %v2782 = vrot.slane %v2778, %v2781
    %v2783 = vmul.f32 %v111, %v2782
    %v2784 = vmul.f32 %v116, %v2782
    %v2785 = vmul.f32 %v121, %v2782
    %v2786 = vmul.f32 %v126, %v2782
    %v2787 = vmul.f32 %v131, %v2782
    %v2788 = vmul.f32 %v136, %v2782
    %v2789 = vmul.f32 %v141, %v2782
    %v2790 = vmul.f32 %v146, %v2782
    %v2791 = vmul.f32 %v151, %v2782
    %v2792 = vmul.f32 %v156, %v2782
    %v2793 = vmul.f32 %v161, %v2782
    %v2794 = vmul.f32 %v166, %v2782
    %v2795 = vmul.f32 %v171, %v2782
    %v2796 = vmul.f32 %v176, %v2782
    %v2797 = vmul.f32 %v181, %v2782
    %v2798 = vmul.f32 %v186, %v2782
    %v2799 = vmul.f32 %v191, %v2782
    %v2800 = vmul.f32 %v196, %v2782
    %v2801 = vmul.f32 %v201, %v2782
    %v2802 = vmul.f32 %v206, %v2782
    %v2803 = vmul.f32 %v1464, %v2782
    %v2804 = vmul.f32 %v1469, %v2782
    %v2805 = vmul.f32 %v2661, %v2782
    %v2806 = vmul.f32 %v2666, %v2782
    %v2807 = vmul.f32 %v231, %v2782
    %v2808 = vmul.f32 %v236, %v2782
    %v2809 = vmul.f32 %v241, %v2782
    %v2810 = vmul.f32 %v246, %v2782
    %v2811 = vmul.f32 %v251, %v2782
    %v2812 = vmul.f32 %v256, %v2782
    %v2813 = vmul.f32 %v261, %v2782
    %v2814 = vmul.f32 %v266, %v2782
    %v2815 = vmul.f32 %v271, %v2782
    %v2816 = vmul.f32 %v276, %v2782
    %v2817 = vmul.f32 %v281, %v2782
    %v2818 = vmul.f32 %v286, %v2782
    %v2819 = vmul.f32 %v291, %v2782
    %v2820 = vmul.f32 %v296, %v2782
    %v2821 = vmul.f32 %v301, %v2782
    %v2822 = vmul.f32 %v306, %v2782
    %v2823 = vmul.f32 %v311, %v2782
    %v2824 = vmul.f32 %v316, %v2782
    %v2825 = vmul.f32 %v321, %v2782
    %v2826 = vmul.f32 %v326, %v2782
    %v2827 = vmul.f32 %v1474, %v2782
    %v2828 = vmul.f32 %v1479, %v2782
    %v2829 = vmul.f32 %v2671, %v2782
    %v2830 = vmul.f32 %v2676, %v2782
    %v2879 = vrot.slane %v2783, 1
    %v2880 = vrot.slane %v2784, 1
    %v2881 = vsel %vm481, %v2879, %v2880
    %v2882 = vrot.slane %v2785, 1
    %v2883 = vrot.slane %v2786, 1
    %v2884 = vsel %vm481, %v2882, %v2883
    %v2885 = vrot.slane %v2787, 1
    %v2886 = vrot.slane %v2788, 1
    %v2887 = vsel %vm481, %v2885, %v2886
    %v2888 = vrot.slane %v2789, 1
    %v2889 = vrot.slane %v2790, 1
    %v2890 = vsel %vm481, %v2888, %v2889
    %v2891 = vrot.slane %v2791, 1
    %v2892 = vrot.slane %v2792, 1
    %v2893 = vsel %vm481, %v2891, %v2892
    %v2894 = vrot.slane %v2793, 1
    %v2895 = vrot.slane %v2794, 1
    %v2896 = vsel %vm481, %v2894, %v2895
    %v2897 = vrot.slane %v2795, 1
    %v2898 = vrot.slane %v2796, 1
    %v2899 = vsel %vm481, %v2897, %v2898
    %v2900 = vrot.slane %v2797, 1
    %v2901 = vrot.slane %v2798, 1
    %v2902 = vsel %vm481, %v2900, %v2901
    %v2903 = vrot.slane %v2799, 1
    %v2904 = vrot.slane %v2800, 1
    %v2905 = vsel %vm481, %v2903, %v2904
    %v2906 = vrot.slane %v2801, 1
    %v2907 = vrot.slane %v2802, 1
    %v2908 = vsel %vm481, %v2906, %v2907
    %v2909 = vrot.slane %v2803, 1
    %v2910 = vrot.slane %v2804, 1
    %v2911 = vsel %vm481, %v2909, %v2910
    %v2912 = vrot.slane %v2805, 1
    %v2913 = vrot.slane %v2806, 1
    %v2914 = vsel %vm481, %v2912, %v2913
    %v2915 = vrot.slane %v2807, 1
    %v2916 = vrot.slane %v2808, 1
    %v2917 = vsel %vm481, %v2915, %v2916
    %v2918 = vrot.slane %v2809, 1
    %v2919 = vrot.slane %v2810, 1
    %v2920 = vsel %vm481, %v2918, %v2919
    %v2921 = vrot.slane %v2811, 1
    %v2922 = vrot.slane %v2812, 1
    %v2923 = vsel %vm481, %v2921, %v2922
    %v2924 = vrot.slane %v2813, 1
    %v2925 = vrot.slane %v2814, 1
    %v2926 = vsel %vm481, %v2924, %v2925
    %v2927 = vrot.slane %v2815, 1
    %v2928 = vrot.slane %v2816, 1
    %v2929 = vsel %vm481, %v2927, %v2928
    %v2930 = vrot.slane %v2817, 1
    %v2931 = vrot.slane %v2818, 1
    %v2932 = vsel %vm481, %v2930, %v2931
    %v2933 = vrot.slane %v2819, 1
    %v2934 = vrot.slane %v2820, 1
    %v2935 = vsel %vm481, %v2933, %v2934
    %v2936 = vrot.slane %v2821, 1
    %v2937 = vrot.slane %v2822, 1
    %v2938 = vsel %vm481, %v2936, %v2937
    %v2939 = vrot.slane %v2823, 1
    %v2940 = vrot.slane %v2824, 1
    %v2941 = vsel %vm481, %v2939, %v2940
    %v2942 = vrot.slane %v2825, 1
    %v2943 = vrot.slane %v2826, 1
    %v2944 = vsel %vm481, %v2942, %v2943
    %v2945 = vrot.slane %v2827, 1
    %v2946 = vrot.slane %v2828, 1
    %v2947 = vsel %vm481, %v2945, %v2946
    %v2948 = vrot.slane %v2829, 1
    %v2949 = vrot.slane %v2830, 1
    %v2950 = vsel %vm481, %v2948, %v2949
    %v2999 = vadd.f32 %v2730, %v2881
    %v3000 = vadd.f32 %v2731, %v2880
    %v3001 = vadd.f32 %v2732, %v2884
    %v3002 = vadd.f32 %v2733, %v2883
    %v3003 = vadd.f32 %v2734, %v2887
    %v3004 = vadd.f32 %v2735, %v2886
    %v3005 = vadd.f32 %v2736, %v2890
    %v3006 = vadd.f32 %v2737, %v2889
    %v3007 = vadd.f32 %v2738, %v2893
    %v3008 = vadd.f32 %v2739, %v2892
    %v3009 = vadd.f32 %v2740, %v2896
    %v3010 = vadd.f32 %v2741, %v2895
    %v3011 = vadd.f32 %v2742, %v2899
    %v3012 = vadd.f32 %v2743, %v2898
    %v3013 = vadd.f32 %v2744, %v2902
    %v3014 = vadd.f32 %v2745, %v2901
    %v3015 = vadd.f32 %v2746, %v2905
    %v3016 = vadd.f32 %v2747, %v2904
    %v3017 = vadd.f32 %v2748, %v2908
    %v3018 = vadd.f32 %v2749, %v2907
    %v3019 = vadd.f32 %v2750, %v2911
    %v3020 = vadd.f32 %v2751, %v2910
    %v3021 = vadd.f32 %v2752, %v2914
    %v3022 = vadd.f32 %v2753, %v2913
    %v3023 = vadd.f32 %v2754, %v2917
    %v3024 = vadd.f32 %v2755, %v2916
    %v3025 = vadd.f32 %v2756, %v2920
    %v3026 = vadd.f32 %v2757, %v2919
    %v3027 = vadd.f32 %v2758, %v2923
    %v3028 = vadd.f32 %v2759, %v2922
    %v3029 = vadd.f32 %v2760, %v2926
    %v3030 = vadd.f32 %v2761, %v2925
    %v3031 = vadd.f32 %v2762, %v2929
    %v3032 = vadd.f32 %v2763, %v2928
    %v3033 = vadd.f32 %v2764, %v2932
    %v3034 = vadd.f32 %v2765, %v2931
    %v3035 = vadd.f32 %v2766, %v2935
    %v3036 = vadd.f32 %v2767, %v2934
    %v3037 = vadd.f32 %v2768, %v2938
    %v3038 = vadd.f32 %v2769, %v2937
    %v3039 = vadd.f32 %v2770, %v2941
    %v3040 = vadd.f32 %v2771, %v2940
    %v3041 = vadd.f32 %v2772, %v2944
    %v3042 = vadd.f32 %v2773, %v2943
    %v3043 = vadd.f32 %v2774, %v2947
    %v3044 = vadd.f32 %v2775, %v2946
    %v3045 = vadd.f32 %v2776, %v2950
    %v3046 = vadd.f32 %v2777, %v2949
    %v3047 = vld [vmem:[%s1 + $0xc] sm:$0x1]
    %v3048 = vlaneseq
    %v3049 = vshrl.u32 %v3048, 7
    %v3050 = vsub.s32 0, %v3049
    %v3051 = vrot.slane %v3047, %v3050
    %v3052 = vmul.f32 %v111, %v3051
    %v3053 = vmul.f32 %v116, %v3051
    %v3054 = vmul.f32 %v121, %v3051
    %v3055 = vmul.f32 %v126, %v3051
    %v3056 = vmul.f32 %v131, %v3051
    %v3057 = vmul.f32 %v136, %v3051
    %v3058 = vmul.f32 %v141, %v3051
    %v3059 = vmul.f32 %v146, %v3051
    %v3060 = vmul.f32 %v151, %v3051
    %v3061 = vmul.f32 %v156, %v3051
    %v3062 = vmul.f32 %v161, %v3051
    %v3063 = vmul.f32 %v166, %v3051
    %v3064 = vmul.f32 %v171, %v3051
    %v3065 = vmul.f32 %v176, %v3051
    %v3066 = vmul.f32 %v181, %v3051
    %v3067 = vmul.f32 %v186, %v3051
    %v3068 = vmul.f32 %v191, %v3051
    %v3069 = vmul.f32 %v196, %v3051
    %v3070 = vmul.f32 %v201, %v3051
    %v3071 = vmul.f32 %v206, %v3051
    %v3072 = vmul.f32 %v1464, %v3051
    %v3073 = vmul.f32 %v1469, %v3051
    %v3074 = vmul.f32 %v2661, %v3051
    %v3075 = vmul.f32 %v2666, %v3051
    %v3076 = vmul.f32 %v231, %v3051
    %v3077 = vmul.f32 %v236, %v3051
    %v3078 = vmul.f32 %v241, %v3051
    %v3079 = vmul.f32 %v246, %v3051
    %v3080 = vmul.f32 %v251, %v3051
    %v3081 = vmul.f32 %v256, %v3051
    %v3082 = vmul.f32 %v261, %v3051
    %v3083 = vmul.f32 %v266, %v3051
    %v3084 = vmul.f32 %v271, %v3051
    %v3085 = vmul.f32 %v276, %v3051
    %v3086 = vmul.f32 %v281, %v3051
    %v3087 = vmul.f32 %v286, %v3051
    %v3088 = vmul.f32 %v291, %v3051
    %v3089 = vmul.f32 %v296, %v3051
    %v3090 = vmul.f32 %v301, %v3051
    %v3091 = vmul.f32 %v306, %v3051
    %v3092 = vmul.f32 %v311, %v3051
    %v3093 = vmul.f32 %v316, %v3051
    %v3094 = vmul.f32 %v321, %v3051
    %v3095 = vmul.f32 %v326, %v3051
    %v3096 = vmul.f32 %v1474, %v3051
    %v3097 = vmul.f32 %v1479, %v3051
    %v3098 = vmul.f32 %v2671, %v3051
    %v3099 = vmul.f32 %v2676, %v3051
    %v3148 = vrot.slane %v3052, 2
    %v3149 = vrot.slane %v3053, 2
    %v3150 = vsel %vm751, %v3148, %v3149
    %v3151 = vrot.slane %v3054, 2
    %v3152 = vrot.slane %v3055, 2
    %v3153 = vsel %vm751, %v3151, %v3152
    %v3154 = vrot.slane %v3056, 2
    %v3155 = vrot.slane %v3057, 2
    %v3156 = vsel %vm751, %v3154, %v3155
    %v3157 = vrot.slane %v3058, 2
    %v3158 = vrot.slane %v3059, 2
    %v3159 = vsel %vm751, %v3157, %v3158
    %v3160 = vrot.slane %v3060, 2
    %v3161 = vrot.slane %v3061, 2
    %v3162 = vsel %vm751, %v3160, %v3161
    %v3163 = vrot.slane %v3062, 2
    %v3164 = vrot.slane %v3063, 2
    %v3165 = vsel %vm751, %v3163, %v3164
    %v3166 = vrot.slane %v3064, 2
    %v3167 = vrot.slane %v3065, 2
    %v3168 = vsel %vm751, %v3166, %v3167
    %v3169 = vrot.slane %v3066, 2
    %v3170 = vrot.slane %v3067, 2
    %v3171 = vsel %vm751, %v3169, %v3170
    %v3172 = vrot.slane %v3068, 2
    %v3173 = vrot.slane %v3069, 2
    %v3174 = vsel %vm751, %v3172, %v3173
    %v3175 = vrot.slane %v3070, 2
    %v3176 = vrot.slane %v3071, 2
    %v3177 = vsel %vm751, %v3175, %v3176
    %v3178 = vrot.slane %v3072, 2
    %v3179 = vrot.slane %v3073, 2
    %v3180 = vsel %vm751, %v3178, %v3179
    %v3181 = vrot.slane %v3074, 2
    %v3182 = vrot.slane %v3075, 2
    %v3183 = vsel %vm751, %v3181, %v3182
    %v3184 = vrot.slane %v3076, 2
    %v3185 = vrot.slane %v3077, 2
    %v3186 = vsel %vm751, %v3184, %v3185
    %v3187 = vrot.slane %v3078, 2
    %v3188 = vrot.slane %v3079, 2
    %v3189 = vsel %vm751, %v3187, %v3188
    %v3190 = vrot.slane %v3080, 2
    %v3191 = vrot.slane %v3081, 2
    %v3192 = vsel %vm751, %v3190, %v3191
    %v3193 = vrot.slane %v3082, 2
    %v3194 = vrot.slane %v3083, 2
    %v3195 = vsel %vm751, %v3193, %v3194
    %v3196 = vrot.slane %v3084, 2
    %v3197 = vrot.slane %v3085, 2
    %v3198 = vsel %vm751, %v3196, %v3197
    %v3199 = vrot.slane %v3086, 2
    %v3200 = vrot.slane %v3087, 2
    %v3201 = vsel %vm751, %v3199, %v3200
    %v3202 = vrot.slane %v3088, 2
    %v3203 = vrot.slane %v3089, 2
    %v3204 = vsel %vm751, %v3202, %v3203
    %v3205 = vrot.slane %v3090, 2
    %v3206 = vrot.slane %v3091, 2
    %v3207 = vsel %vm751, %v3205, %v3206
    %v3208 = vrot.slane %v3092, 2
    %v3209 = vrot.slane %v3093, 2
    %v3210 = vsel %vm751, %v3208, %v3209
    %v3211 = vrot.slane %v3094, 2
    %v3212 = vrot.slane %v3095, 2
    %v3213 = vsel %vm751, %v3211, %v3212
    %v3214 = vrot.slane %v3096, 2
    %v3215 = vrot.slane %v3097, 2
    %v3216 = vsel %vm751, %v3214, %v3215
    %v3217 = vrot.slane %v3098, 2
    %v3218 = vrot.slane %v3099, 2
    %v3219 = vsel %vm751, %v3217, %v3218
    %v3268 = vadd.f32 %v2999, %v3150
    %v3269 = vadd.f32 %v3000, %v3149
    %v3270 = vadd.f32 %v3001, %v3153
    %v3271 = vadd.f32 %v3002, %v3152
    %v3272 = vadd.f32 %v3003, %v3156
    %v3273 = vadd.f32 %v3004, %v3155
    %v3274 = vadd.f32 %v3005, %v3159
    %v3275 = vadd.f32 %v3006, %v3158
    %v3276 = vadd.f32 %v3007, %v3162
    %v3277 = vadd.f32 %v3008, %v3161
    %v3278 = vadd.f32 %v3009, %v3165
    %v3279 = vadd.f32 %v3010, %v3164
    %v3280 = vadd.f32 %v3011, %v3168
    %v3281 = vadd.f32 %v3012, %v3167
    %v3282 = vadd.f32 %v3013, %v3171
    %v3283 = vadd.f32 %v3014, %v3170
    %v3284 = vadd.f32 %v3015, %v3174
    %v3285 = vadd.f32 %v3016, %v3173
    %v3286 = vadd.f32 %v3017, %v3177
    %v3287 = vadd.f32 %v3018, %v3176
    %v3288 = vadd.f32 %v3019, %v3180
    %v3289 = vadd.f32 %v3020, %v3179
    %v3290 = vadd.f32 %v3021, %v3183
    %v3291 = vadd.f32 %v3022, %v3182
    %v3292 = vadd.f32 %v3023, %v3186
    %v3293 = vadd.f32 %v3024, %v3185
    %v3294 = vadd.f32 %v3025, %v3189
    %v3295 = vadd.f32 %v3026, %v3188
    %v3296 = vadd.f32 %v3027, %v3192
    %v3297 = vadd.f32 %v3028, %v3191
    %v3298 = vadd.f32 %v3029, %v3195
    %v3299 = vadd.f32 %v3030, %v3194
    %v3300 = vadd.f32 %v3031, %v3198
    %v3301 = vadd.f32 %v3032, %v3197
    %v3302 = vadd.f32 %v3033, %v3201
    %v3303 = vadd.f32 %v3034, %v3200
    %v3304 = vadd.f32 %v3035, %v3204
    %v3305 = vadd.f32 %v3036, %v3203
    %v3306 = vadd.f32 %v3037, %v3207
    %v3307 = vadd.f32 %v3038, %v3206
    %v3308 = vadd.f32 %v3039, %v3210
    %v3309 = vadd.f32 %v3040, %v3209
    %v3310 = vadd.f32 %v3041, %v3213
    %v3311 = vadd.f32 %v3042, %v3212
    %v3312 = vadd.f32 %v3043, %v3216
    %v3313 = vadd.f32 %v3044, %v3215
    %v3314 = vadd.f32 %v3045, %v3219
    %v3315 = vadd.f32 %v3046, %v3218
    %v3316 = vld [vmem:[%s1 + $0xd] sm:$0x1]
    %v3317 = vlaneseq
    %v3318 = vshrl.u32 %v3317, 7
    %v3319 = vsub.s32 0, %v3318
    %v3320 = vrot.slane %v3316, %v3319
    %v3321 = vmul.f32 %v111, %v3320
    %v3322 = vmul.f32 %v116, %v3320
    %v3323 = vmul.f32 %v121, %v3320
    %v3324 = vmul.f32 %v126, %v3320
    %v3325 = vmul.f32 %v131, %v3320
    %v3326 = vmul.f32 %v136, %v3320
    %v3327 = vmul.f32 %v141, %v3320
    %v3328 = vmul.f32 %v146, %v3320
    %v3329 = vmul.f32 %v151, %v3320
    %v3330 = vmul.f32 %v156, %v3320
    %v3331 = vmul.f32 %v161, %v3320
    %v3332 = vmul.f32 %v166, %v3320
    %v3333 = vmul.f32 %v171, %v3320
    %v3334 = vmul.f32 %v176, %v3320
    %v3335 = vmul.f32 %v181, %v3320
    %v3336 = vmul.f32 %v186, %v3320
    %v3337 = vmul.f32 %v191, %v3320
    %v3338 = vmul.f32 %v196, %v3320
    %v3339 = vmul.f32 %v201, %v3320
    %v3340 = vmul.f32 %v206, %v3320
    %v3341 = vmul.f32 %v1464, %v3320
    %v3342 = vmul.f32 %v1469, %v3320
    %v3343 = vmul.f32 %v2661, %v3320
    %v3344 = vmul.f32 %v2666, %v3320
    %v3345 = vmul.f32 %v231, %v3320
    %v3346 = vmul.f32 %v236, %v3320
    %v3347 = vmul.f32 %v241, %v3320
    %v3348 = vmul.f32 %v246, %v3320
    %v3349 = vmul.f32 %v251, %v3320
    %v3350 = vmul.f32 %v256, %v3320
    %v3351 = vmul.f32 %v261, %v3320
    %v3352 = vmul.f32 %v266, %v3320
    %v3353 = vmul.f32 %v271, %v3320
    %v3354 = vmul.f32 %v276, %v3320
    %v3355 = vmul.f32 %v281, %v3320
    %v3356 = vmul.f32 %v286, %v3320
    %v3357 = vmul.f32 %v291, %v3320
    %v3358 = vmul.f32 %v296, %v3320
    %v3359 = vmul.f32 %v301, %v3320
    %v3360 = vmul.f32 %v306, %v3320
    %v3361 = vmul.f32 %v311, %v3320
    %v3362 = vmul.f32 %v316, %v3320
    %v3363 = vmul.f32 %v321, %v3320
    %v3364 = vmul.f32 %v326, %v3320
    %v3365 = vmul.f32 %v1474, %v3320
    %v3366 = vmul.f32 %v1479, %v3320
    %v3367 = vmul.f32 %v2671, %v3320
    %v3368 = vmul.f32 %v2676, %v3320
    %v3417 = vrot.slane %v3321, 3
    %v3418 = vrot.slane %v3322, 3
    %v3419 = vsel %vm1021, %v3417, %v3418
    %v3420 = vrot.slane %v3323, 3
    %v3421 = vrot.slane %v3324, 3
    %v3422 = vsel %vm1021, %v3420, %v3421
    %v3423 = vrot.slane %v3325, 3
    %v3424 = vrot.slane %v3326, 3
    %v3425 = vsel %vm1021, %v3423, %v3424
    %v3426 = vrot.slane %v3327, 3
    %v3427 = vrot.slane %v3328, 3
    %v3428 = vsel %vm1021, %v3426, %v3427
    %v3429 = vrot.slane %v3329, 3
    %v3430 = vrot.slane %v3330, 3
    %v3431 = vsel %vm1021, %v3429, %v3430
    %v3432 = vrot.slane %v3331, 3
    %v3433 = vrot.slane %v3332, 3
    %v3434 = vsel %vm1021, %v3432, %v3433
    %v3435 = vrot.slane %v3333, 3
    %v3436 = vrot.slane %v3334, 3
    %v3437 = vsel %vm1021, %v3435, %v3436
    %v3438 = vrot.slane %v3335, 3
    %v3439 = vrot.slane %v3336, 3
    %v3440 = vsel %vm1021, %v3438, %v3439
    %v3441 = vrot.slane %v3337, 3
    %v3442 = vrot.slane %v3338, 3
    %v3443 = vsel %vm1021, %v3441, %v3442
    %v3444 = vrot.slane %v3339, 3
    %v3445 = vrot.slane %v3340, 3
    %v3446 = vsel %vm1021, %v3444, %v3445
    %v3447 = vrot.slane %v3341, 3
    %v3448 = vrot.slane %v3342, 3
    %v3449 = vsel %vm1021, %v3447, %v3448
    %v3450 = vrot.slane %v3343, 3
    %v3451 = vrot.slane %v3344, 3
    %v3452 = vsel %vm1021, %v3450, %v3451
    %v3453 = vrot.slane %v3345, 3
    %v3454 = vrot.slane %v3346, 3
    %v3455 = vsel %vm1021, %v3453, %v3454
    %v3456 = vrot.slane %v3347, 3
    %v3457 = vrot.slane %v3348, 3
    %v3458 = vsel %vm1021, %v3456, %v3457
    %v3459 = vrot.slane %v3349, 3
    %v3460 = vrot.slane %v3350, 3
    %v3461 = vsel %vm1021, %v3459, %v3460
    %v3462 = vrot.slane %v3351, 3
    %v3463 = vrot.slane %v3352, 3
    %v3464 = vsel %vm1021, %v3462, %v3463
    %v3465 = vrot.slane %v3353, 3
    %v3466 = vrot.slane %v3354, 3
    %v3467 = vsel %vm1021, %v3465, %v3466
    %v3468 = vrot.slane %v3355, 3
    %v3469 = vrot.slane %v3356, 3
    %v3470 = vsel %vm1021, %v3468, %v3469
    %v3471 = vrot.slane %v3357, 3
    %v3472 = vrot.slane %v3358, 3
    %v3473 = vsel %vm1021, %v3471, %v3472
    %v3474 = vrot.slane %v3359, 3
    %v3475 = vrot.slane %v3360, 3
    %v3476 = vsel %vm1021, %v3474, %v3475
    %v3477 = vrot.slane %v3361, 3
    %v3478 = vrot.slane %v3362, 3
    %v3479 = vsel %vm1021, %v3477, %v3478
    %v3480 = vrot.slane %v3363, 3
    %v3481 = vrot.slane %v3364, 3
    %v3482 = vsel %vm1021, %v3480, %v3481
    %v3483 = vrot.slane %v3365, 3
    %v3484 = vrot.slane %v3366, 3
    %v3485 = vsel %vm1021, %v3483, %v3484
    %v3486 = vrot.slane %v3367, 3
    %v3487 = vrot.slane %v3368, 3
    %v3488 = vsel %vm1021, %v3486, %v3487
    %v3537 = vadd.f32 %v3268, %v3419
    %v3538 = vadd.f32 %v3269, %v3418
    %v3539 = vadd.f32 %v3270, %v3422
    %v3540 = vadd.f32 %v3271, %v3421
    %v3541 = vadd.f32 %v3272, %v3425
    %v3542 = vadd.f32 %v3273, %v3424
    %v3543 = vadd.f32 %v3274, %v3428
    %v3544 = vadd.f32 %v3275, %v3427
    %v3545 = vadd.f32 %v3276, %v3431
    %v3546 = vadd.f32 %v3277, %v3430
    %v3547 = vadd.f32 %v3278, %v3434
    %v3548 = vadd.f32 %v3279, %v3433
    %v3549 = vadd.f32 %v3280, %v3437
    %v3550 = vadd.f32 %v3281, %v3436
    %v3551 = vadd.f32 %v3282, %v3440
    %v3552 = vadd.f32 %v3283, %v3439
    %v3553 = vadd.f32 %v3284, %v3443
    %v3554 = vadd.f32 %v3285, %v3442
    %v3555 = vadd.f32 %v3286, %v3446
    %v3556 = vadd.f32 %v3287, %v3445
    %v3557 = vadd.f32 %v3288, %v3449
    %v3558 = vadd.f32 %v3289, %v3448
    %v3559 = vadd.f32 %v3290, %v3452
    %v3560 = vadd.f32 %v3291, %v3451
    %v3561 = vadd.f32 %v3292, %v3455
    %v3562 = vadd.f32 %v3293, %v3454
    %v3563 = vadd.f32 %v3294, %v3458
    %v3564 = vadd.f32 %v3295, %v3457
    %v3565 = vadd.f32 %v3296, %v3461
    %v3566 = vadd.f32 %v3297, %v3460
    %v3567 = vadd.f32 %v3298, %v3464
    %v3568 = vadd.f32 %v3299, %v3463
    %v3569 = vadd.f32 %v3300, %v3467
    %v3570 = vadd.f32 %v3301, %v3466
    %v3571 = vadd.f32 %v3302, %v3470
    %v3572 = vadd.f32 %v3303, %v3469
    %v3573 = vadd.f32 %v3304, %v3473
    %v3574 = vadd.f32 %v3305, %v3472
    %v3575 = vadd.f32 %v3306, %v3476
    %v3576 = vadd.f32 %v3307, %v3475
    %v3577 = vadd.f32 %v3308, %v3479
    %v3578 = vadd.f32 %v3309, %v3478
    %v3579 = vadd.f32 %v3310, %v3482
    %v3580 = vadd.f32 %v3311, %v3481
    %v3581 = vadd.f32 %v3312, %v3485
    %v3582 = vadd.f32 %v3313, %v3484
    %v3583 = vadd.f32 %v3314, %v3488
    %v3584 = vadd.f32 %v3315, %v3487
    %v3585 = vld [vmem:[%s1 + $0xe] sm:$0x1]
    %v3586 = vlaneseq
    %v3587 = vshrl.u32 %v3586, 7
    %v3588 = vsub.s32 0, %v3587
    %v3589 = vrot.slane %v3585, %v3588
    %v3590 = vmul.f32 %v111, %v3589
    %v3591 = vmul.f32 %v116, %v3589
    %v3592 = vmul.f32 %v121, %v3589
    %v3593 = vmul.f32 %v126, %v3589
    %v3594 = vmul.f32 %v131, %v3589
    %v3595 = vmul.f32 %v136, %v3589
    %v3596 = vmul.f32 %v141, %v3589
    %v3597 = vmul.f32 %v146, %v3589
    %v3598 = vmul.f32 %v151, %v3589
    %v3599 = vmul.f32 %v156, %v3589
    %v3600 = vmul.f32 %v161, %v3589
    %v3601 = vmul.f32 %v166, %v3589
    %v3602 = vmul.f32 %v171, %v3589
    %v3603 = vmul.f32 %v176, %v3589
    %v3604 = vmul.f32 %v181, %v3589
    %v3605 = vmul.f32 %v186, %v3589
    %v3606 = vmul.f32 %v191, %v3589
    %v3607 = vmul.f32 %v196, %v3589
    %v3608 = vmul.f32 %v201, %v3589
    %v3609 = vmul.f32 %v206, %v3589
    %v3610 = vmul.f32 %v1464, %v3589
    %v3611 = vmul.f32 %v1469, %v3589
    %v3612 = vmul.f32 %v2661, %v3589
    %v3613 = vmul.f32 %v2666, %v3589
    %v3614 = vmul.f32 %v231, %v3589
    %v3615 = vmul.f32 %v236, %v3589
    %v3616 = vmul.f32 %v241, %v3589
    %v3617 = vmul.f32 %v246, %v3589
    %v3618 = vmul.f32 %v251, %v3589
    %v3619 = vmul.f32 %v256, %v3589
    %v3620 = vmul.f32 %v261, %v3589
    %v3621 = vmul.f32 %v266, %v3589
    %v3622 = vmul.f32 %v271, %v3589
    %v3623 = vmul.f32 %v276, %v3589
    %v3624 = vmul.f32 %v281, %v3589
    %v3625 = vmul.f32 %v286, %v3589
    %v3626 = vmul.f32 %v291, %v3589
    %v3627 = vmul.f32 %v296, %v3589
    %v3628 = vmul.f32 %v301, %v3589
    %v3629 = vmul.f32 %v306, %v3589
    %v3630 = vmul.f32 %v311, %v3589
    %v3631 = vmul.f32 %v316, %v3589
    %v3632 = vmul.f32 %v321, %v3589
    %v3633 = vmul.f32 %v326, %v3589
    %v3634 = vmul.f32 %v1474, %v3589
    %v3635 = vmul.f32 %v1479, %v3589
    %v3636 = vmul.f32 %v2671, %v3589
    %v3637 = vmul.f32 %v2676, %v3589
    %v3686 = vrot.slane %v3590, 4
    %v3687 = vrot.slane %v3591, 4
    %v3688 = vsel %vm1291, %v3686, %v3687
    %v3689 = vrot.slane %v3592, 4
    %v3690 = vrot.slane %v3593, 4
    %v3691 = vsel %vm1291, %v3689, %v3690
    %v3692 = vrot.slane %v3594, 4
    %v3693 = vrot.slane %v3595, 4
    %v3694 = vsel %vm1291, %v3692, %v3693
    %v3695 = vrot.slane %v3596, 4
    %v3696 = vrot.slane %v3597, 4
    %v3697 = vsel %vm1291, %v3695, %v3696
    %v3698 = vrot.slane %v3598, 4
    %v3699 = vrot.slane %v3599, 4
    %v3700 = vsel %vm1291, %v3698, %v3699
    %v3701 = vrot.slane %v3600, 4
    %v3702 = vrot.slane %v3601, 4
    %v3703 = vsel %vm1291, %v3701, %v3702
    %v3704 = vrot.slane %v3602, 4
    %v3705 = vrot.slane %v3603, 4
    %v3706 = vsel %vm1291, %v3704, %v3705
    %v3707 = vrot.slane %v3604, 4
    %v3708 = vrot.slane %v3605, 4
    %v3709 = vsel %vm1291, %v3707, %v3708
    %v3710 = vrot.slane %v3606, 4
    %v3711 = vrot.slane %v3607, 4
    %v3712 = vsel %vm1291, %v3710, %v3711
    %v3713 = vrot.slane %v3608, 4
    %v3714 = vrot.slane %v3609, 4
    %v3715 = vsel %vm1291, %v3713, %v3714
    %v3716 = vrot.slane %v3610, 4
    %v3717 = vrot.slane %v3611, 4
    %v3718 = vsel %vm1291, %v3716, %v3717
    %v3719 = vrot.slane %v3612, 4
    %v3720 = vrot.slane %v3613, 4
    %v3721 = vsel %vm1291, %v3719, %v3720
    %v3722 = vrot.slane %v3614, 4
    %v3723 = vrot.slane %v3615, 4
    %v3724 = vsel %vm1291, %v3722, %v3723
    %v3725 = vrot.slane %v3616, 4
    %v3726 = vrot.slane %v3617, 4
    %v3727 = vsel %vm1291, %v3725, %v3726
    %v3728 = vrot.slane %v3618, 4
    %v3729 = vrot.slane %v3619, 4
    %v3730 = vsel %vm1291, %v3728, %v3729
    %v3731 = vrot.slane %v3620, 4
    %v3732 = vrot.slane %v3621, 4
    %v3733 = vsel %vm1291, %v3731, %v3732
    %v3734 = vrot.slane %v3622, 4
    %v3735 = vrot.slane %v3623, 4
    %v3736 = vsel %vm1291, %v3734, %v3735
    %v3737 = vrot.slane %v3624, 4
    %v3738 = vrot.slane %v3625, 4
    %v3739 = vsel %vm1291, %v3737, %v3738
    %v3740 = vrot.slane %v3626, 4
    %v3741 = vrot.slane %v3627, 4
    %v3742 = vsel %vm1291, %v3740, %v3741
    %v3743 = vrot.slane %v3628, 4
    %v3744 = vrot.slane %v3629, 4
    %v3745 = vsel %vm1291, %v3743, %v3744
    %v3746 = vrot.slane %v3630, 4
    %v3747 = vrot.slane %v3631, 4
    %v3748 = vsel %vm1291, %v3746, %v3747
    %v3749 = vrot.slane %v3632, 4
    %v3750 = vrot.slane %v3633, 4
    %v3751 = vsel %vm1291, %v3749, %v3750
    %v3752 = vrot.slane %v3634, 4
    %v3753 = vrot.slane %v3635, 4
    %v3754 = vsel %vm1291, %v3752, %v3753
    %v3755 = vrot.slane %v3636, 4
    %v3756 = vrot.slane %v3637, 4
    %v3757 = vsel %vm1291, %v3755, %v3756
    %v3806 = vadd.f32 %v3537, %v3688
    %v3807 = vadd.f32 %v3538, %v3687
    %v3808 = vadd.f32 %v3539, %v3691
    %v3809 = vadd.f32 %v3540, %v3690
    %v3810 = vadd.f32 %v3541, %v3694
    %v3811 = vadd.f32 %v3542, %v3693
    %v3812 = vadd.f32 %v3543, %v3697
    %v3813 = vadd.f32 %v3544, %v3696
    %v3814 = vadd.f32 %v3545, %v3700
    %v3815 = vadd.f32 %v3546, %v3699
    %v3816 = vadd.f32 %v3547, %v3703
    %v3817 = vadd.f32 %v3548, %v3702
    %v3818 = vadd.f32 %v3549, %v3706
    %v3819 = vadd.f32 %v3550, %v3705
    %v3820 = vadd.f32 %v3551, %v3709
    %v3821 = vadd.f32 %v3552, %v3708
    %v3822 = vadd.f32 %v3553, %v3712
    %v3823 = vadd.f32 %v3554, %v3711
    %v3824 = vadd.f32 %v3555, %v3715
    %v3825 = vadd.f32 %v3556, %v3714
    %v3826 = vadd.f32 %v3557, %v3718
    %v3827 = vadd.f32 %v3558, %v3717
    %v3828 = vadd.f32 %v3559, %v3721
    %v3829 = vadd.f32 %v3560, %v3720
    %v3830 = vadd.f32 %v3561, %v3724
    %v3831 = vadd.f32 %v3562, %v3723
    %v3832 = vadd.f32 %v3563, %v3727
    %v3833 = vadd.f32 %v3564, %v3726
    %v3834 = vadd.f32 %v3565, %v3730
    %v3835 = vadd.f32 %v3566, %v3729
    %v3836 = vadd.f32 %v3567, %v3733
    %v3837 = vadd.f32 %v3568, %v3732
    %v3838 = vadd.f32 %v3569, %v3736
    %v3839 = vadd.f32 %v3570, %v3735
    %v3840 = vadd.f32 %v3571, %v3739
    %v3841 = vadd.f32 %v3572, %v3738
    %v3842 = vadd.f32 %v3573, %v3742
    %v3843 = vadd.f32 %v3574, %v3741
    %v3844 = vadd.f32 %v3575, %v3745
    %v3845 = vadd.f32 %v3576, %v3744
    %v3846 = vadd.f32 %v3577, %v3748
    %v3847 = vadd.f32 %v3578, %v3747
    %v3848 = vadd.f32 %v3579, %v3751
    %v3849 = vadd.f32 %v3580, %v3750
    %v3850 = vadd.f32 %v3581, %v3754
    %v3851 = vadd.f32 %v3582, %v3753
    %v3852 = vadd.f32 %v3583, %v3757
    %v3853 = vadd.f32 %v3584, %v3756
    %v3854 = vld [vmem:[%s1 + $0xf] sm:$0x1]
    %3856 = vset.pattern.permute.xlu0 0
    %3857 = vperm.xlu0 %3856, %v51
    %v3858 = vpop.permute.xlu0 %3857
    %3861 = vset.pattern.permute.xlu0 0
    %3862 = vperm.xlu0 %3861, %v52
    %v3863 = vpop.permute.xlu0 %3862
    %3866 = vset.pattern.permute.xlu0 0
    %3867 = vperm.xlu0 %3866, %v83
    %v3868 = vpop.permute.xlu0 %3867
    %3871 = vset.pattern.permute.xlu0 0
    %3872 = vperm.xlu0 %3871, %v84
    %v3873 = vpop.permute.xlu0 %3872
    %v3875 = vlaneseq
    %v3876 = vshrl.u32 %v3875, 7
    %v3877 = vsub.s32 0, %v3876
    %v3878 = vrot.slane %v3854, %v3877
    %v3879 = vmul.f32 %v121, %v3878
    %v3880 = vmul.f32 %v126, %v3878
    %v3881 = vmul.f32 %v131, %v3878
    %v3882 = vmul.f32 %v136, %v3878
    %v3883 = vmul.f32 %v141, %v3878
    %v3884 = vmul.f32 %v146, %v3878
    %v3885 = vmul.f32 %v151, %v3878
    %v3886 = vmul.f32 %v156, %v3878
    %v3887 = vmul.f32 %v161, %v3878
    %v3888 = vmul.f32 %v166, %v3878
    %v3889 = vmul.f32 %v171, %v3878
    %v3890 = vmul.f32 %v176, %v3878
    %v3891 = vmul.f32 %v181, %v3878
    %v3892 = vmul.f32 %v186, %v3878
    %v3893 = vmul.f32 %v191, %v3878
    %v3894 = vmul.f32 %v196, %v3878
    %v3895 = vmul.f32 %v201, %v3878
    %v3896 = vmul.f32 %v206, %v3878
    %v3897 = vmul.f32 %v1464, %v3878
    %v3898 = vmul.f32 %v1469, %v3878
    %v3899 = vmul.f32 %v2661, %v3878
    %v3900 = vmul.f32 %v2666, %v3878
    %v3901 = vmul.f32 %v3858, %v3878
    %v3902 = vmul.f32 %v3863, %v3878
    %v3903 = vmul.f32 %v241, %v3878
    %v3904 = vmul.f32 %v246, %v3878
    %v3905 = vmul.f32 %v251, %v3878
    %v3906 = vmul.f32 %v256, %v3878
    %v3907 = vmul.f32 %v261, %v3878
    %v3908 = vmul.f32 %v266, %v3878
    %v3909 = vmul.f32 %v271, %v3878
    %v3910 = vmul.f32 %v276, %v3878
    %v3911 = vmul.f32 %v281, %v3878
    %v3912 = vmul.f32 %v286, %v3878
    %v3913 = vmul.f32 %v291, %v3878
    %v3914 = vmul.f32 %v296, %v3878
    %v3915 = vmul.f32 %v301, %v3878
    %v3916 = vmul.f32 %v306, %v3878
    %v3917 = vmul.f32 %v311, %v3878
    %v3918 = vmul.f32 %v316, %v3878
    %v3919 = vmul.f32 %v321, %v3878
    %v3920 = vmul.f32 %v326, %v3878
    %v3921 = vmul.f32 %v1474, %v3878
    %v3922 = vmul.f32 %v1479, %v3878
    %v3923 = vmul.f32 %v2671, %v3878
    %v3924 = vmul.f32 %v2676, %v3878
    %v3925 = vmul.f32 %v3868, %v3878
    %v3926 = vmul.f32 %v3873, %v3878
    %v3927 = vadd.f32 %v3806, %v3879
    %v3928 = vadd.f32 %v3807, %v3880
    %v3929 = vadd.f32 %v3808, %v3881
    %v3930 = vadd.f32 %v3809, %v3882
    %v3931 = vadd.f32 %v3810, %v3883
    %v3932 = vadd.f32 %v3811, %v3884
    %v3933 = vadd.f32 %v3812, %v3885
    %v3934 = vadd.f32 %v3813, %v3886
    %v3935 = vadd.f32 %v3814, %v3887
    %v3936 = vadd.f32 %v3815, %v3888
    %v3937 = vadd.f32 %v3816, %v3889
    %v3938 = vadd.f32 %v3817, %v3890
    %v3939 = vadd.f32 %v3818, %v3891
    %v3940 = vadd.f32 %v3819, %v3892
    %v3941 = vadd.f32 %v3820, %v3893
    %v3942 = vadd.f32 %v3821, %v3894
    %v3943 = vadd.f32 %v3822, %v3895
    %v3944 = vadd.f32 %v3823, %v3896
    %v3945 = vadd.f32 %v3824, %v3897
    %v3946 = vadd.f32 %v3825, %v3898
    %v3947 = vadd.f32 %v3826, %v3899
    %v3948 = vadd.f32 %v3827, %v3900
    %v3949 = vadd.f32 %v3828, %v3901
    %v3950 = vadd.f32 %v3829, %v3902
    %v3951 = vadd.f32 %v3830, %v3903
    %v3952 = vadd.f32 %v3831, %v3904
    %v3953 = vadd.f32 %v3832, %v3905
    %v3954 = vadd.f32 %v3833, %v3906
    %v3955 = vadd.f32 %v3834, %v3907
    %v3956 = vadd.f32 %v3835, %v3908
    %v3957 = vadd.f32 %v3836, %v3909
    %v3958 = vadd.f32 %v3837, %v3910
    %v3959 = vadd.f32 %v3838, %v3911
    %v3960 = vadd.f32 %v3839, %v3912
    %v3961 = vadd.f32 %v3840, %v3913
    %v3962 = vadd.f32 %v3841, %v3914
    %v3963 = vadd.f32 %v3842, %v3915
    %v3964 = vadd.f32 %v3843, %v3916
    %v3965 = vadd.f32 %v3844, %v3917
    %v3966 = vadd.f32 %v3845, %v3918
    %v3967 = vadd.f32 %v3846, %v3919
    %v3968 = vadd.f32 %v3847, %v3920
    %v3969 = vadd.f32 %v3848, %v3921
    %v3970 = vadd.f32 %v3849, %v3922
    %v3971 = vadd.f32 %v3850, %v3923
    %v3972 = vadd.f32 %v3851, %v3924
    %v3973 = vadd.f32 %v3852, %v3925
    %v3974 = vadd.f32 %v3853, %v3926
    %v3975 = vld [vmem:[%s1 + $0x10] sm:$0x1]
    %v3976 = vlaneseq
    %v3977 = vshrl.u32 %v3976, 7
    %v3978 = vsub.s32 0, %v3977
    %v3979 = vrot.slane %v3975, %v3978
    %v3980 = vmul.f32 %v121, %v3979
    %v3981 = vmul.f32 %v126, %v3979
    %v3982 = vmul.f32 %v131, %v3979
    %v3983 = vmul.f32 %v136, %v3979
    %v3984 = vmul.f32 %v141, %v3979
    %v3985 = vmul.f32 %v146, %v3979
    %v3986 = vmul.f32 %v151, %v3979
    %v3987 = vmul.f32 %v156, %v3979
    %v3988 = vmul.f32 %v161, %v3979
    %v3989 = vmul.f32 %v166, %v3979
    %v3990 = vmul.f32 %v171, %v3979
    %v3991 = vmul.f32 %v176, %v3979
    %v3992 = vmul.f32 %v181, %v3979
    %v3993 = vmul.f32 %v186, %v3979
    %v3994 = vmul.f32 %v191, %v3979
    %v3995 = vmul.f32 %v196, %v3979
    %v3996 = vmul.f32 %v201, %v3979
    %v3997 = vmul.f32 %v206, %v3979
    %v3998 = vmul.f32 %v1464, %v3979
    %v3999 = vmul.f32 %v1469, %v3979
    %v4000 = vmul.f32 %v2661, %v3979
    %v4001 = vmul.f32 %v2666, %v3979
    %v4002 = vmul.f32 %v3858, %v3979
    %v4003 = vmul.f32 %v3863, %v3979
    %v4004 = vmul.f32 %v241, %v3979
    %v4005 = vmul.f32 %v246, %v3979
    %v4006 = vmul.f32 %v251, %v3979
    %v4007 = vmul.f32 %v256, %v3979
    %v4008 = vmul.f32 %v261, %v3979
    %v4009 = vmul.f32 %v266, %v3979
    %v4010 = vmul.f32 %v271, %v3979
    %v4011 = vmul.f32 %v276, %v3979
    %v4012 = vmul.f32 %v281, %v3979
    %v4013 = vmul.f32 %v286, %v3979
    %v4014 = vmul.f32 %v291, %v3979
    %v4015 = vmul.f32 %v296, %v3979
    %v4016 = vmul.f32 %v301, %v3979
    %v4017 = vmul.f32 %v306, %v3979
    %v4018 = vmul.f32 %v311, %v3979
    %v4019 = vmul.f32 %v316, %v3979
    %v4020 = vmul.f32 %v321, %v3979
    %v4021 = vmul.f32 %v326, %v3979
    %v4022 = vmul.f32 %v1474, %v3979
    %v4023 = vmul.f32 %v1479, %v3979
    %v4024 = vmul.f32 %v2671, %v3979
    %v4025 = vmul.f32 %v2676, %v3979
    %v4026 = vmul.f32 %v3868, %v3979
    %v4027 = vmul.f32 %v3873, %v3979
    %v4076 = vrot.slane %v3980, 1
    %v4077 = vrot.slane %v3981, 1
    %v4078 = vsel %vm481, %v4076, %v4077
    %v4079 = vrot.slane %v3982, 1
    %v4080 = vrot.slane %v3983, 1
    %v4081 = vsel %vm481, %v4079, %v4080
    %v4082 = vrot.slane %v3984, 1
    %v4083 = vrot.slane %v3985, 1
    %v4084 = vsel %vm481, %v4082, %v4083
    %v4085 = vrot.slane %v3986, 1
    %v4086 = vrot.slane %v3987, 1
    %v4087 = vsel %vm481, %v4085, %v4086
    %v4088 = vrot.slane %v3988, 1
    %v4089 = vrot.slane %v3989, 1
    %v4090 = vsel %vm481, %v4088, %v4089
    %v4091 = vrot.slane %v3990, 1
    %v4092 = vrot.slane %v3991, 1
    %v4093 = vsel %vm481, %v4091, %v4092
    %v4094 = vrot.slane %v3992, 1
    %v4095 = vrot.slane %v3993, 1
    %v4096 = vsel %vm481, %v4094, %v4095
    %v4097 = vrot.slane %v3994, 1
    %v4098 = vrot.slane %v3995, 1
    %v4099 = vsel %vm481, %v4097, %v4098
    %v4100 = vrot.slane %v3996, 1
    %v4101 = vrot.slane %v3997, 1
    %v4102 = vsel %vm481, %v4100, %v4101
    %v4103 = vrot.slane %v3998, 1
    %v4104 = vrot.slane %v3999, 1
    %v4105 = vsel %vm481, %v4103, %v4104
    %v4106 = vrot.slane %v4000, 1
    %v4107 = vrot.slane %v4001, 1
    %v4108 = vsel %vm481, %v4106, %v4107
    %v4109 = vrot.slane %v4002, 1
    %v4110 = vrot.slane %v4003, 1
    %v4111 = vsel %vm481, %v4109, %v4110
    %v4112 = vrot.slane %v4004, 1
    %v4113 = vrot.slane %v4005, 1
    %v4114 = vsel %vm481, %v4112, %v4113
    %v4115 = vrot.slane %v4006, 1
    %v4116 = vrot.slane %v4007, 1
    %v4117 = vsel %vm481, %v4115, %v4116
    %v4118 = vrot.slane %v4008, 1
    %v4119 = vrot.slane %v4009, 1
    %v4120 = vsel %vm481, %v4118, %v4119
    %v4121 = vrot.slane %v4010, 1
    %v4122 = vrot.slane %v4011, 1
    %v4123 = vsel %vm481, %v4121, %v4122
    %v4124 = vrot.slane %v4012, 1
    %v4125 = vrot.slane %v4013, 1
    %v4126 = vsel %vm481, %v4124, %v4125
    %v4127 = vrot.slane %v4014, 1
    %v4128 = vrot.slane %v4015, 1
    %v4129 = vsel %vm481, %v4127, %v4128
    %v4130 = vrot.slane %v4016, 1
    %v4131 = vrot.slane %v4017, 1
    %v4132 = vsel %vm481, %v4130, %v4131
    %v4133 = vrot.slane %v4018, 1
    %v4134 = vrot.slane %v4019, 1
    %v4135 = vsel %vm481, %v4133, %v4134
    %v4136 = vrot.slane %v4020, 1
    %v4137 = vrot.slane %v4021, 1
    %v4138 = vsel %vm481, %v4136, %v4137
    %v4139 = vrot.slane %v4022, 1
    %v4140 = vrot.slane %v4023, 1
    %v4141 = vsel %vm481, %v4139, %v4140
    %v4142 = vrot.slane %v4024, 1
    %v4143 = vrot.slane %v4025, 1
    %v4144 = vsel %vm481, %v4142, %v4143
    %v4145 = vrot.slane %v4026, 1
    %v4146 = vrot.slane %v4027, 1
    %v4147 = vsel %vm481, %v4145, %v4146
    %v4196 = vadd.f32 %v3927, %v4078
    %v4197 = vadd.f32 %v3928, %v4077
    %v4198 = vadd.f32 %v3929, %v4081
    %v4199 = vadd.f32 %v3930, %v4080
    %v4200 = vadd.f32 %v3931, %v4084
    %v4201 = vadd.f32 %v3932, %v4083
    %v4202 = vadd.f32 %v3933, %v4087
    %v4203 = vadd.f32 %v3934, %v4086
    %v4204 = vadd.f32 %v3935, %v4090
    %v4205 = vadd.f32 %v3936, %v4089
    %v4206 = vadd.f32 %v3937, %v4093
    %v4207 = vadd.f32 %v3938, %v4092
    %v4208 = vadd.f32 %v3939, %v4096
    %v4209 = vadd.f32 %v3940, %v4095
    %v4210 = vadd.f32 %v3941, %v4099
    %v4211 = vadd.f32 %v3942, %v4098
    %v4212 = vadd.f32 %v3943, %v4102
    %v4213 = vadd.f32 %v3944, %v4101
    %v4214 = vadd.f32 %v3945, %v4105
    %v4215 = vadd.f32 %v3946, %v4104
    %v4216 = vadd.f32 %v3947, %v4108
    %v4217 = vadd.f32 %v3948, %v4107
    %v4218 = vadd.f32 %v3949, %v4111
    %v4219 = vadd.f32 %v3950, %v4110
    %v4220 = vadd.f32 %v3951, %v4114
    %v4221 = vadd.f32 %v3952, %v4113
    %v4222 = vadd.f32 %v3953, %v4117
    %v4223 = vadd.f32 %v3954, %v4116
    %v4224 = vadd.f32 %v3955, %v4120
    %v4225 = vadd.f32 %v3956, %v4119
    %v4226 = vadd.f32 %v3957, %v4123
    %v4227 = vadd.f32 %v3958, %v4122
    %v4228 = vadd.f32 %v3959, %v4126
    %v4229 = vadd.f32 %v3960, %v4125
    %v4230 = vadd.f32 %v3961, %v4129
    %v4231 = vadd.f32 %v3962, %v4128
    %v4232 = vadd.f32 %v3963, %v4132
    %v4233 = vadd.f32 %v3964, %v4131
    %v4234 = vadd.f32 %v3965, %v4135
    %v4235 = vadd.f32 %v3966, %v4134
    %v4236 = vadd.f32 %v3967, %v4138
    %v4237 = vadd.f32 %v3968, %v4137
    %v4238 = vadd.f32 %v3969, %v4141
    %v4239 = vadd.f32 %v3970, %v4140
    %v4240 = vadd.f32 %v3971, %v4144
    %v4241 = vadd.f32 %v3972, %v4143
    %v4242 = vadd.f32 %v3973, %v4147
    %v4243 = vadd.f32 %v3974, %v4146
    %v4244 = vld [vmem:[%s1 + $0x11] sm:$0x1]
    %v4245 = vlaneseq
    %v4246 = vshrl.u32 %v4245, 7
    %v4247 = vsub.s32 0, %v4246
    %v4248 = vrot.slane %v4244, %v4247
    %v4249 = vmul.f32 %v121, %v4248
    %v4250 = vmul.f32 %v126, %v4248
    %v4251 = vmul.f32 %v131, %v4248
    %v4252 = vmul.f32 %v136, %v4248
    %v4253 = vmul.f32 %v141, %v4248
    %v4254 = vmul.f32 %v146, %v4248
    %v4255 = vmul.f32 %v151, %v4248
    %v4256 = vmul.f32 %v156, %v4248
    %v4257 = vmul.f32 %v161, %v4248
    %v4258 = vmul.f32 %v166, %v4248
    %v4259 = vmul.f32 %v171, %v4248
    %v4260 = vmul.f32 %v176, %v4248
    %v4261 = vmul.f32 %v181, %v4248
    %v4262 = vmul.f32 %v186, %v4248
    %v4263 = vmul.f32 %v191, %v4248
    %v4264 = vmul.f32 %v196, %v4248
    %v4265 = vmul.f32 %v201, %v4248
    %v4266 = vmul.f32 %v206, %v4248
    %v4267 = vmul.f32 %v1464, %v4248
    %v4268 = vmul.f32 %v1469, %v4248
    %v4269 = vmul.f32 %v2661, %v4248
    %v4270 = vmul.f32 %v2666, %v4248
    %v4271 = vmul.f32 %v3858, %v4248
    %v4272 = vmul.f32 %v3863, %v4248
    %v4273 = vmul.f32 %v241, %v4248
    %v4274 = vmul.f32 %v246, %v4248
    %v4275 = vmul.f32 %v251, %v4248
    %v4276 = vmul.f32 %v256, %v4248
    %v4277 = vmul.f32 %v261, %v4248
    %v4278 = vmul.f32 %v266, %v4248
    %v4279 = vmul.f32 %v271, %v4248
    %v4280 = vmul.f32 %v276, %v4248
    %v4281 = vmul.f32 %v281, %v4248
    %v4282 = vmul.f32 %v286, %v4248
    %v4283 = vmul.f32 %v291, %v4248
    %v4284 = vmul.f32 %v296, %v4248
    %v4285 = vmul.f32 %v301, %v4248
    %v4286 = vmul.f32 %v306, %v4248
    %v4287 = vmul.f32 %v311, %v4248
    %v4288 = vmul.f32 %v316, %v4248
    %v4289 = vmul.f32 %v321, %v4248
    %v4290 = vmul.f32 %v326, %v4248
    %v4291 = vmul.f32 %v1474, %v4248
    %v4292 = vmul.f32 %v1479, %v4248
    %v4293 = vmul.f32 %v2671, %v4248
    %v4294 = vmul.f32 %v2676, %v4248
    %v4295 = vmul.f32 %v3868, %v4248
    %v4296 = vmul.f32 %v3873, %v4248
    %v4345 = vrot.slane %v4249, 2
    %v4346 = vrot.slane %v4250, 2
    %v4347 = vsel %vm751, %v4345, %v4346
    %v4348 = vrot.slane %v4251, 2
    %v4349 = vrot.slane %v4252, 2
    %v4350 = vsel %vm751, %v4348, %v4349
    %v4351 = vrot.slane %v4253, 2
    %v4352 = vrot.slane %v4254, 2
    %v4353 = vsel %vm751, %v4351, %v4352
    %v4354 = vrot.slane %v4255, 2
    %v4355 = vrot.slane %v4256, 2
    %v4356 = vsel %vm751, %v4354, %v4355
    %v4357 = vrot.slane %v4257, 2
    %v4358 = vrot.slane %v4258, 2
    %v4359 = vsel %vm751, %v4357, %v4358
    %v4360 = vrot.slane %v4259, 2
    %v4361 = vrot.slane %v4260, 2
    %v4362 = vsel %vm751, %v4360, %v4361
    %v4363 = vrot.slane %v4261, 2
    %v4364 = vrot.slane %v4262, 2
    %v4365 = vsel %vm751, %v4363, %v4364
    %v4366 = vrot.slane %v4263, 2
    %v4367 = vrot.slane %v4264, 2
    %v4368 = vsel %vm751, %v4366, %v4367
    %v4369 = vrot.slane %v4265, 2
    %v4370 = vrot.slane %v4266, 2
    %v4371 = vsel %vm751, %v4369, %v4370
    %v4372 = vrot.slane %v4267, 2
    %v4373 = vrot.slane %v4268, 2
    %v4374 = vsel %vm751, %v4372, %v4373
    %v4375 = vrot.slane %v4269, 2
    %v4376 = vrot.slane %v4270, 2
    %v4377 = vsel %vm751, %v4375, %v4376
    %v4378 = vrot.slane %v4271, 2
    %v4379 = vrot.slane %v4272, 2
    %v4380 = vsel %vm751, %v4378, %v4379
    %v4381 = vrot.slane %v4273, 2
    %v4382 = vrot.slane %v4274, 2
    %v4383 = vsel %vm751, %v4381, %v4382
    %v4384 = vrot.slane %v4275, 2
    %v4385 = vrot.slane %v4276, 2
    %v4386 = vsel %vm751, %v4384, %v4385
    %v4387 = vrot.slane %v4277, 2
    %v4388 = vrot.slane %v4278, 2
    %v4389 = vsel %vm751, %v4387, %v4388
    %v4390 = vrot.slane %v4279, 2
    %v4391 = vrot.slane %v4280, 2
    %v4392 = vsel %vm751, %v4390, %v4391
    %v4393 = vrot.slane %v4281, 2
    %v4394 = vrot.slane %v4282, 2
    %v4395 = vsel %vm751, %v4393, %v4394
    %v4396 = vrot.slane %v4283, 2
    %v4397 = vrot.slane %v4284, 2
    %v4398 = vsel %vm751, %v4396, %v4397
    %v4399 = vrot.slane %v4285, 2
    %v4400 = vrot.slane %v4286, 2
    %v4401 = vsel %vm751, %v4399, %v4400
    %v4402 = vrot.slane %v4287, 2
    %v4403 = vrot.slane %v4288, 2
    %v4404 = vsel %vm751, %v4402, %v4403
    %v4405 = vrot.slane %v4289, 2
    %v4406 = vrot.slane %v4290, 2
    %v4407 = vsel %vm751, %v4405, %v4406
    %v4408 = vrot.slane %v4291, 2
    %v4409 = vrot.slane %v4292, 2
    %v4410 = vsel %vm751, %v4408, %v4409
    %v4411 = vrot.slane %v4293, 2
    %v4412 = vrot.slane %v4294, 2
    %v4413 = vsel %vm751, %v4411, %v4412
    %v4414 = vrot.slane %v4295, 2
    %v4415 = vrot.slane %v4296, 2
    %v4416 = vsel %vm751, %v4414, %v4415
    %v4465 = vadd.f32 %v4196, %v4347
    %v4466 = vadd.f32 %v4197, %v4346
    %v4467 = vadd.f32 %v4198, %v4350
    %v4468 = vadd.f32 %v4199, %v4349
    %v4469 = vadd.f32 %v4200, %v4353
    %v4470 = vadd.f32 %v4201, %v4352
    %v4471 = vadd.f32 %v4202, %v4356
    %v4472 = vadd.f32 %v4203, %v4355
    %v4473 = vadd.f32 %v4204, %v4359
    %v4474 = vadd.f32 %v4205, %v4358
    %v4475 = vadd.f32 %v4206, %v4362
    %v4476 = vadd.f32 %v4207, %v4361
    %v4477 = vadd.f32 %v4208, %v4365
    %v4478 = vadd.f32 %v4209, %v4364
    %v4479 = vadd.f32 %v4210, %v4368
    %v4480 = vadd.f32 %v4211, %v4367
    %v4481 = vadd.f32 %v4212, %v4371
    %v4482 = vadd.f32 %v4213, %v4370
    %v4483 = vadd.f32 %v4214, %v4374
    %v4484 = vadd.f32 %v4215, %v4373
    %v4485 = vadd.f32 %v4216, %v4377
    %v4486 = vadd.f32 %v4217, %v4376
    %v4487 = vadd.f32 %v4218, %v4380
    %v4488 = vadd.f32 %v4219, %v4379
    %v4489 = vadd.f32 %v4220, %v4383
    %v4490 = vadd.f32 %v4221, %v4382
    %v4491 = vadd.f32 %v4222, %v4386
    %v4492 = vadd.f32 %v4223, %v4385
    %v4493 = vadd.f32 %v4224, %v4389
    %v4494 = vadd.f32 %v4225, %v4388
    %v4495 = vadd.f32 %v4226, %v4392
    %v4496 = vadd.f32 %v4227, %v4391
    %v4497 = vadd.f32 %v4228, %v4395
    %v4498 = vadd.f32 %v4229, %v4394
    %v4499 = vadd.f32 %v4230, %v4398
    %v4500 = vadd.f32 %v4231, %v4397
    %v4501 = vadd.f32 %v4232, %v4401
    %v4502 = vadd.f32 %v4233, %v4400
    %v4503 = vadd.f32 %v4234, %v4404
    %v4504 = vadd.f32 %v4235, %v4403
    %v4505 = vadd.f32 %v4236, %v4407
    %v4506 = vadd.f32 %v4237, %v4406
    %v4507 = vadd.f32 %v4238, %v4410
    %v4508 = vadd.f32 %v4239, %v4409
    %v4509 = vadd.f32 %v4240, %v4413
    %v4510 = vadd.f32 %v4241, %v4412
    %v4511 = vadd.f32 %v4242, %v4416
    %v4512 = vadd.f32 %v4243, %v4415
    %v4513 = vld [vmem:[%s1 + $0x12] sm:$0x1]
    %v4514 = vlaneseq
    %v4515 = vshrl.u32 %v4514, 7
    %v4516 = vsub.s32 0, %v4515
    %v4517 = vrot.slane %v4513, %v4516
    %v4518 = vmul.f32 %v121, %v4517
    %v4519 = vmul.f32 %v126, %v4517
    %v4520 = vmul.f32 %v131, %v4517
    %v4521 = vmul.f32 %v136, %v4517
    %v4522 = vmul.f32 %v141, %v4517
    %v4523 = vmul.f32 %v146, %v4517
    %v4524 = vmul.f32 %v151, %v4517
    %v4525 = vmul.f32 %v156, %v4517
    %v4526 = vmul.f32 %v161, %v4517
    %v4527 = vmul.f32 %v166, %v4517
    %v4528 = vmul.f32 %v171, %v4517
    %v4529 = vmul.f32 %v176, %v4517
    %v4530 = vmul.f32 %v181, %v4517
    %v4531 = vmul.f32 %v186, %v4517
    %v4532 = vmul.f32 %v191, %v4517
    %v4533 = vmul.f32 %v196, %v4517
    %v4534 = vmul.f32 %v201, %v4517
    %v4535 = vmul.f32 %v206, %v4517
    %v4536 = vmul.f32 %v1464, %v4517
    %v4537 = vmul.f32 %v1469, %v4517
    %v4538 = vmul.f32 %v2661, %v4517
    %v4539 = vmul.f32 %v2666, %v4517
    %v4540 = vmul.f32 %v3858, %v4517
    %v4541 = vmul.f32 %v3863, %v4517
    %v4542 = vmul.f32 %v241, %v4517
    %v4543 = vmul.f32 %v246, %v4517
    %v4544 = vmul.f32 %v251, %v4517
    %v4545 = vmul.f32 %v256, %v4517
    %v4546 = vmul.f32 %v261, %v4517
    %v4547 = vmul.f32 %v266, %v4517
    %v4548 = vmul.f32 %v271, %v4517
    %v4549 = vmul.f32 %v276, %v4517
    %v4550 = vmul.f32 %v281, %v4517
    %v4551 = vmul.f32 %v286, %v4517
    %v4552 = vmul.f32 %v291, %v4517
    %v4553 = vmul.f32 %v296, %v4517
    %v4554 = vmul.f32 %v301, %v4517
    %v4555 = vmul.f32 %v306, %v4517
    %v4556 = vmul.f32 %v311, %v4517
    %v4557 = vmul.f32 %v316, %v4517
    %v4558 = vmul.f32 %v321, %v4517
    %v4559 = vmul.f32 %v326, %v4517
    %v4560 = vmul.f32 %v1474, %v4517
    %v4561 = vmul.f32 %v1479, %v4517
    %v4562 = vmul.f32 %v2671, %v4517
    %v4563 = vmul.f32 %v2676, %v4517
    %v4564 = vmul.f32 %v3868, %v4517
    %v4565 = vmul.f32 %v3873, %v4517
    %v4614 = vrot.slane %v4518, 3
    %v4615 = vrot.slane %v4519, 3
    %v4616 = vsel %vm1021, %v4614, %v4615
    %v4617 = vrot.slane %v4520, 3
    %v4618 = vrot.slane %v4521, 3
    %v4619 = vsel %vm1021, %v4617, %v4618
    %v4620 = vrot.slane %v4522, 3
    %v4621 = vrot.slane %v4523, 3
    %v4622 = vsel %vm1021, %v4620, %v4621
    %v4623 = vrot.slane %v4524, 3
    %v4624 = vrot.slane %v4525, 3
    %v4625 = vsel %vm1021, %v4623, %v4624
    %v4626 = vrot.slane %v4526, 3
    %v4627 = vrot.slane %v4527, 3
    %v4628 = vsel %vm1021, %v4626, %v4627
    %v4629 = vrot.slane %v4528, 3
    %v4630 = vrot.slane %v4529, 3
    %v4631 = vsel %vm1021, %v4629, %v4630
    %v4632 = vrot.slane %v4530, 3
    %v4633 = vrot.slane %v4531, 3
    %v4634 = vsel %vm1021, %v4632, %v4633
    %v4635 = vrot.slane %v4532, 3
    %v4636 = vrot.slane %v4533, 3
    %v4637 = vsel %vm1021, %v4635, %v4636
    %v4638 = vrot.slane %v4534, 3
    %v4639 = vrot.slane %v4535, 3
    %v4640 = vsel %vm1021, %v4638, %v4639
    %v4641 = vrot.slane %v4536, 3
    %v4642 = vrot.slane %v4537, 3
    %v4643 = vsel %vm1021, %v4641, %v4642
    %v4644 = vrot.slane %v4538, 3
    %v4645 = vrot.slane %v4539, 3
    %v4646 = vsel %vm1021, %v4644, %v4645
    %v4647 = vrot.slane %v4540, 3
    %v4648 = vrot.slane %v4541, 3
    %v4649 = vsel %vm1021, %v4647, %v4648
    %v4650 = vrot.slane %v4542, 3
    %v4651 = vrot.slane %v4543, 3
    %v4652 = vsel %vm1021, %v4650, %v4651
    %v4653 = vrot.slane %v4544, 3
    %v4654 = vrot.slane %v4545, 3
    %v4655 = vsel %vm1021, %v4653, %v4654
    %v4656 = vrot.slane %v4546, 3
    %v4657 = vrot.slane %v4547, 3
    %v4658 = vsel %vm1021, %v4656, %v4657
    %v4659 = vrot.slane %v4548, 3
    %v4660 = vrot.slane %v4549, 3
    %v4661 = vsel %vm1021, %v4659, %v4660
    %v4662 = vrot.slane %v4550, 3
    %v4663 = vrot.slane %v4551, 3
    %v4664 = vsel %vm1021, %v4662, %v4663
    %v4665 = vrot.slane %v4552, 3
    %v4666 = vrot.slane %v4553, 3
    %v4667 = vsel %vm1021, %v4665, %v4666
    %v4668 = vrot.slane %v4554, 3
    %v4669 = vrot.slane %v4555, 3
    %v4670 = vsel %vm1021, %v4668, %v4669
    %v4671 = vrot.slane %v4556, 3
    %v4672 = vrot.slane %v4557, 3
    %v4673 = vsel %vm1021, %v4671, %v4672
    %v4674 = vrot.slane %v4558, 3
    %v4675 = vrot.slane %v4559, 3
    %v4676 = vsel %vm1021, %v4674, %v4675
    %v4677 = vrot.slane %v4560, 3
    %v4678 = vrot.slane %v4561, 3
    %v4679 = vsel %vm1021, %v4677, %v4678
    %v4680 = vrot.slane %v4562, 3
    %v4681 = vrot.slane %v4563, 3
    %v4682 = vsel %vm1021, %v4680, %v4681
    %v4683 = vrot.slane %v4564, 3
    %v4684 = vrot.slane %v4565, 3
    %v4685 = vsel %vm1021, %v4683, %v4684
    %v4734 = vadd.f32 %v4465, %v4616
    %v4735 = vadd.f32 %v4466, %v4615
    %v4736 = vadd.f32 %v4467, %v4619
    %v4737 = vadd.f32 %v4468, %v4618
    %v4738 = vadd.f32 %v4469, %v4622
    %v4739 = vadd.f32 %v4470, %v4621
    %v4740 = vadd.f32 %v4471, %v4625
    %v4741 = vadd.f32 %v4472, %v4624
    %v4742 = vadd.f32 %v4473, %v4628
    %v4743 = vadd.f32 %v4474, %v4627
    %v4744 = vadd.f32 %v4475, %v4631
    %v4745 = vadd.f32 %v4476, %v4630
    %v4746 = vadd.f32 %v4477, %v4634
    %v4747 = vadd.f32 %v4478, %v4633
    %v4748 = vadd.f32 %v4479, %v4637
    %v4749 = vadd.f32 %v4480, %v4636
    %v4750 = vadd.f32 %v4481, %v4640
    %v4751 = vadd.f32 %v4482, %v4639
    %v4752 = vadd.f32 %v4483, %v4643
    %v4753 = vadd.f32 %v4484, %v4642
    %v4754 = vadd.f32 %v4485, %v4646
    %v4755 = vadd.f32 %v4486, %v4645
    %v4756 = vadd.f32 %v4487, %v4649
    %v4757 = vadd.f32 %v4488, %v4648
    %v4758 = vadd.f32 %v4489, %v4652
    %v4759 = vadd.f32 %v4490, %v4651
    %v4760 = vadd.f32 %v4491, %v4655
    %v4761 = vadd.f32 %v4492, %v4654
    %v4762 = vadd.f32 %v4493, %v4658
    %v4763 = vadd.f32 %v4494, %v4657
    %v4764 = vadd.f32 %v4495, %v4661
    %v4765 = vadd.f32 %v4496, %v4660
    %v4766 = vadd.f32 %v4497, %v4664
    %v4767 = vadd.f32 %v4498, %v4663
    %v4768 = vadd.f32 %v4499, %v4667
    %v4769 = vadd.f32 %v4500, %v4666
    %v4770 = vadd.f32 %v4501, %v4670
    %v4771 = vadd.f32 %v4502, %v4669
    %v4772 = vadd.f32 %v4503, %v4673
    %v4773 = vadd.f32 %v4504, %v4672
    %v4774 = vadd.f32 %v4505, %v4676
    %v4775 = vadd.f32 %v4506, %v4675
    %v4776 = vadd.f32 %v4507, %v4679
    %v4777 = vadd.f32 %v4508, %v4678
    %v4778 = vadd.f32 %v4509, %v4682
    %v4779 = vadd.f32 %v4510, %v4681
    %v4780 = vadd.f32 %v4511, %v4685
    %v4781 = vadd.f32 %v4512, %v4684
    %v4782 = vld [vmem:[%s1 + $0x13] sm:$0x1]
    %v4783 = vlaneseq
    %v4784 = vshrl.u32 %v4783, 7
    %v4785 = vsub.s32 0, %v4784
    %v4786 = vrot.slane %v4782, %v4785
    %v4787 = vmul.f32 %v121, %v4786
    %v4788 = vmul.f32 %v126, %v4786
    %v4789 = vmul.f32 %v131, %v4786
    %v4790 = vmul.f32 %v136, %v4786
    %v4791 = vmul.f32 %v141, %v4786
    %v4792 = vmul.f32 %v146, %v4786
    %v4793 = vmul.f32 %v151, %v4786
    %v4794 = vmul.f32 %v156, %v4786
    %v4795 = vmul.f32 %v161, %v4786
    %v4796 = vmul.f32 %v166, %v4786
    %v4797 = vmul.f32 %v171, %v4786
    %v4798 = vmul.f32 %v176, %v4786
    %v4799 = vmul.f32 %v181, %v4786
    %v4800 = vmul.f32 %v186, %v4786
    %v4801 = vmul.f32 %v191, %v4786
    %v4802 = vmul.f32 %v196, %v4786
    %v4803 = vmul.f32 %v201, %v4786
    %v4804 = vmul.f32 %v206, %v4786
    %v4805 = vmul.f32 %v1464, %v4786
    %v4806 = vmul.f32 %v1469, %v4786
    %v4807 = vmul.f32 %v2661, %v4786
    %v4808 = vmul.f32 %v2666, %v4786
    %v4809 = vmul.f32 %v3858, %v4786
    %v4810 = vmul.f32 %v3863, %v4786
    %v4811 = vmul.f32 %v241, %v4786
    %v4812 = vmul.f32 %v246, %v4786
    %v4813 = vmul.f32 %v251, %v4786
    %v4814 = vmul.f32 %v256, %v4786
    %v4815 = vmul.f32 %v261, %v4786
    %v4816 = vmul.f32 %v266, %v4786
    %v4817 = vmul.f32 %v271, %v4786
    %v4818 = vmul.f32 %v276, %v4786
    %v4819 = vmul.f32 %v281, %v4786
    %v4820 = vmul.f32 %v286, %v4786
    %v4821 = vmul.f32 %v291, %v4786
    %v4822 = vmul.f32 %v296, %v4786
    %v4823 = vmul.f32 %v301, %v4786
    %v4824 = vmul.f32 %v306, %v4786
    %v4825 = vmul.f32 %v311, %v4786
    %v4826 = vmul.f32 %v316, %v4786
    %v4827 = vmul.f32 %v321, %v4786
    %v4828 = vmul.f32 %v326, %v4786
    %v4829 = vmul.f32 %v1474, %v4786
    %v4830 = vmul.f32 %v1479, %v4786
    %v4831 = vmul.f32 %v2671, %v4786
    %v4832 = vmul.f32 %v2676, %v4786
    %v4833 = vmul.f32 %v3868, %v4786
    %v4834 = vmul.f32 %v3873, %v4786
    %v4883 = vrot.slane %v4787, 4
    %v4884 = vrot.slane %v4788, 4
    %v4885 = vsel %vm1291, %v4883, %v4884
    %v4886 = vrot.slane %v4789, 4
    %v4887 = vrot.slane %v4790, 4
    %v4888 = vsel %vm1291, %v4886, %v4887
    %v4889 = vrot.slane %v4791, 4
    %v4890 = vrot.slane %v4792, 4
    %v4891 = vsel %vm1291, %v4889, %v4890
    %v4892 = vrot.slane %v4793, 4
    %v4893 = vrot.slane %v4794, 4
    %v4894 = vsel %vm1291, %v4892, %v4893
    %v4895 = vrot.slane %v4795, 4
    %v4896 = vrot.slane %v4796, 4
    %v4897 = vsel %vm1291, %v4895, %v4896
    %v4898 = vrot.slane %v4797, 4
    %v4899 = vrot.slane %v4798, 4
    %v4900 = vsel %vm1291, %v4898, %v4899
    %v4901 = vrot.slane %v4799, 4
    %v4902 = vrot.slane %v4800, 4
    %v4903 = vsel %vm1291, %v4901, %v4902
    %v4904 = vrot.slane %v4801, 4
    %v4905 = vrot.slane %v4802, 4
    %v4906 = vsel %vm1291, %v4904, %v4905
    %v4907 = vrot.slane %v4803, 4
    %v4908 = vrot.slane %v4804, 4
    %v4909 = vsel %vm1291, %v4907, %v4908
    %v4910 = vrot.slane %v4805, 4
    %v4911 = vrot.slane %v4806, 4
    %v4912 = vsel %vm1291, %v4910, %v4911
    %v4913 = vrot.slane %v4807, 4
    %v4914 = vrot.slane %v4808, 4
    %v4915 = vsel %vm1291, %v4913, %v4914
    %v4916 = vrot.slane %v4809, 4
    %v4917 = vrot.slane %v4810, 4
    %v4918 = vsel %vm1291, %v4916, %v4917
    %v4919 = vrot.slane %v4811, 4
    %v4920 = vrot.slane %v4812, 4
    %v4921 = vsel %vm1291, %v4919, %v4920
    %v4922 = vrot.slane %v4813, 4
    %v4923 = vrot.slane %v4814, 4
    %v4924 = vsel %vm1291, %v4922, %v4923
    %v4925 = vrot.slane %v4815, 4
    %v4926 = vrot.slane %v4816, 4
    %v4927 = vsel %vm1291, %v4925, %v4926
    %v4928 = vrot.slane %v4817, 4
    %v4929 = vrot.slane %v4818, 4
    %v4930 = vsel %vm1291, %v4928, %v4929
    %v4931 = vrot.slane %v4819, 4
    %v4932 = vrot.slane %v4820, 4
    %v4933 = vsel %vm1291, %v4931, %v4932
    %v4934 = vrot.slane %v4821, 4
    %v4935 = vrot.slane %v4822, 4
    %v4936 = vsel %vm1291, %v4934, %v4935
    %v4937 = vrot.slane %v4823, 4
    %v4938 = vrot.slane %v4824, 4
    %v4939 = vsel %vm1291, %v4937, %v4938
    %v4940 = vrot.slane %v4825, 4
    %v4941 = vrot.slane %v4826, 4
    %v4942 = vsel %vm1291, %v4940, %v4941
    %v4943 = vrot.slane %v4827, 4
    %v4944 = vrot.slane %v4828, 4
    %v4945 = vsel %vm1291, %v4943, %v4944
    %v4946 = vrot.slane %v4829, 4
    %v4947 = vrot.slane %v4830, 4
    %v4948 = vsel %vm1291, %v4946, %v4947
    %v4949 = vrot.slane %v4831, 4
    %v4950 = vrot.slane %v4832, 4
    %v4951 = vsel %vm1291, %v4949, %v4950
    %v4952 = vrot.slane %v4833, 4
    %v4953 = vrot.slane %v4834, 4
    %v4954 = vsel %vm1291, %v4952, %v4953
    %v5003 = vadd.f32 %v4734, %v4885
    %v5004 = vadd.f32 %v4735, %v4884
    %v5005 = vadd.f32 %v4736, %v4888
    %v5006 = vadd.f32 %v4737, %v4887
    %v5007 = vadd.f32 %v4738, %v4891
    %v5008 = vadd.f32 %v4739, %v4890
    %v5009 = vadd.f32 %v4740, %v4894
    %v5010 = vadd.f32 %v4741, %v4893
    %v5011 = vadd.f32 %v4742, %v4897
    %v5012 = vadd.f32 %v4743, %v4896
    %v5013 = vadd.f32 %v4744, %v4900
    %v5014 = vadd.f32 %v4745, %v4899
    %v5015 = vadd.f32 %v4746, %v4903
    %v5016 = vadd.f32 %v4747, %v4902
    %v5017 = vadd.f32 %v4748, %v4906
    %v5018 = vadd.f32 %v4749, %v4905
    %v5019 = vadd.f32 %v4750, %v4909
    %v5020 = vadd.f32 %v4751, %v4908
    %v5021 = vadd.f32 %v4752, %v4912
    %v5022 = vadd.f32 %v4753, %v4911
    %v5023 = vadd.f32 %v4754, %v4915
    %v5024 = vadd.f32 %v4755, %v4914
    %v5025 = vadd.f32 %v4756, %v4918
    %v5026 = vadd.f32 %v4757, %v4917
    %v5027 = vadd.f32 %v4758, %v4921
    %v5028 = vadd.f32 %v4759, %v4920
    %v5029 = vadd.f32 %v4760, %v4924
    %v5030 = vadd.f32 %v4761, %v4923
    %v5031 = vadd.f32 %v4762, %v4927
    %v5032 = vadd.f32 %v4763, %v4926
    %v5033 = vadd.f32 %v4764, %v4930
    %v5034 = vadd.f32 %v4765, %v4929
    %v5035 = vadd.f32 %v4766, %v4933
    %v5036 = vadd.f32 %v4767, %v4932
    %v5037 = vadd.f32 %v4768, %v4936
    %v5038 = vadd.f32 %v4769, %v4935
    %v5039 = vadd.f32 %v4770, %v4939
    %v5040 = vadd.f32 %v4771, %v4938
    %v5041 = vadd.f32 %v4772, %v4942
    %v5042 = vadd.f32 %v4773, %v4941
    %v5043 = vadd.f32 %v4774, %v4945
    %v5044 = vadd.f32 %v4775, %v4944
    %v5045 = vadd.f32 %v4776, %v4948
    %v5046 = vadd.f32 %v4777, %v4947
    %v5047 = vadd.f32 %v4778, %v4951
    %v5048 = vadd.f32 %v4779, %v4950
    %v5049 = vadd.f32 %v4780, %v4954
    %v5050 = vadd.f32 %v4781, %v4953
    %v5051 = vld [vmem:[%s1 + $0x14] sm:$0x1]
    %5053 = vset.pattern.permute.xlu0 0
    %5054 = vperm.xlu0 %5053, %v53
    %v5055 = vpop.permute.xlu0 %5054
    %5058 = vset.pattern.permute.xlu0 0
    %5059 = vperm.xlu0 %5058, %v54
    %v5060 = vpop.permute.xlu0 %5059
    %5063 = vset.pattern.permute.xlu0 0
    %5064 = vperm.xlu0 %5063, %v85
    %v5065 = vpop.permute.xlu0 %5064
    %5068 = vset.pattern.permute.xlu0 0
    %5069 = vperm.xlu0 %5068, %v86
    %v5070 = vpop.permute.xlu0 %5069
    %v5072 = vlaneseq
    %v5073 = vshrl.u32 %v5072, 7
    %v5074 = vsub.s32 0, %v5073
    %v5075 = vrot.slane %v5051, %v5074
    %v5076 = vmul.f32 %v131, %v5075
    %v5077 = vmul.f32 %v136, %v5075
    %v5078 = vmul.f32 %v141, %v5075
    %v5079 = vmul.f32 %v146, %v5075
    %v5080 = vmul.f32 %v151, %v5075
    %v5081 = vmul.f32 %v156, %v5075
    %v5082 = vmul.f32 %v161, %v5075
    %v5083 = vmul.f32 %v166, %v5075
    %v5084 = vmul.f32 %v171, %v5075
    %v5085 = vmul.f32 %v176, %v5075
    %v5086 = vmul.f32 %v181, %v5075
    %v5087 = vmul.f32 %v186, %v5075
    %v5088 = vmul.f32 %v191, %v5075
    %v5089 = vmul.f32 %v196, %v5075
    %v5090 = vmul.f32 %v201, %v5075
    %v5091 = vmul.f32 %v206, %v5075
    %v5092 = vmul.f32 %v1464, %v5075
    %v5093 = vmul.f32 %v1469, %v5075
    %v5094 = vmul.f32 %v2661, %v5075
    %v5095 = vmul.f32 %v2666, %v5075
    %v5096 = vmul.f32 %v3858, %v5075
    %v5097 = vmul.f32 %v3863, %v5075
    %v5098 = vmul.f32 %v5055, %v5075
    %v5099 = vmul.f32 %v5060, %v5075
    %v5100 = vmul.f32 %v251, %v5075
    %v5101 = vmul.f32 %v256, %v5075
    %v5102 = vmul.f32 %v261, %v5075
    %v5103 = vmul.f32 %v266, %v5075
    %v5104 = vmul.f32 %v271, %v5075
    %v5105 = vmul.f32 %v276, %v5075
    %v5106 = vmul.f32 %v281, %v5075
    %v5107 = vmul.f32 %v286, %v5075
    %v5108 = vmul.f32 %v291, %v5075
    %v5109 = vmul.f32 %v296, %v5075
    %v5110 = vmul.f32 %v301, %v5075
    %v5111 = vmul.f32 %v306, %v5075
    %v5112 = vmul.f32 %v311, %v5075
    %v5113 = vmul.f32 %v316, %v5075
    %v5114 = vmul.f32 %v321, %v5075
    %v5115 = vmul.f32 %v326, %v5075
    %v5116 = vmul.f32 %v1474, %v5075
    %v5117 = vmul.f32 %v1479, %v5075
    %v5118 = vmul.f32 %v2671, %v5075
    %v5119 = vmul.f32 %v2676, %v5075
    %v5120 = vmul.f32 %v3868, %v5075
    %v5121 = vmul.f32 %v3873, %v5075
    %v5122 = vmul.f32 %v5065, %v5075
    %v5123 = vmul.f32 %v5070, %v5075
    %v5124 = vadd.f32 %v5003, %v5076
    %v5125 = vadd.f32 %v5004, %v5077
    %v5126 = vadd.f32 %v5005, %v5078
    %v5127 = vadd.f32 %v5006, %v5079
    %v5128 = vadd.f32 %v5007, %v5080
    %v5129 = vadd.f32 %v5008, %v5081
    %v5130 = vadd.f32 %v5009, %v5082
    %v5131 = vadd.f32 %v5010, %v5083
    %v5132 = vadd.f32 %v5011, %v5084
    %v5133 = vadd.f32 %v5012, %v5085
    %v5134 = vadd.f32 %v5013, %v5086
    %v5135 = vadd.f32 %v5014, %v5087
    %v5136 = vadd.f32 %v5015, %v5088
    %v5137 = vadd.f32 %v5016, %v5089
    %v5138 = vadd.f32 %v5017, %v5090
    %v5139 = vadd.f32 %v5018, %v5091
    %v5140 = vadd.f32 %v5019, %v5092
    %v5141 = vadd.f32 %v5020, %v5093
    %v5142 = vadd.f32 %v5021, %v5094
    %v5143 = vadd.f32 %v5022, %v5095
    %v5144 = vadd.f32 %v5023, %v5096
    %v5145 = vadd.f32 %v5024, %v5097
    %v5146 = vadd.f32 %v5025, %v5098
    %v5147 = vadd.f32 %v5026, %v5099
    %v5148 = vadd.f32 %v5027, %v5100
    %v5149 = vadd.f32 %v5028, %v5101
    %v5150 = vadd.f32 %v5029, %v5102
    %v5151 = vadd.f32 %v5030, %v5103
    %v5152 = vadd.f32 %v5031, %v5104
    %v5153 = vadd.f32 %v5032, %v5105
    %v5154 = vadd.f32 %v5033, %v5106
    %v5155 = vadd.f32 %v5034, %v5107
    %v5156 = vadd.f32 %v5035, %v5108
    %v5157 = vadd.f32 %v5036, %v5109
    %v5158 = vadd.f32 %v5037, %v5110
    %v5159 = vadd.f32 %v5038, %v5111
    %v5160 = vadd.f32 %v5039, %v5112
    %v5161 = vadd.f32 %v5040, %v5113
    %v5162 = vadd.f32 %v5041, %v5114
    %v5163 = vadd.f32 %v5042, %v5115
    %v5164 = vadd.f32 %v5043, %v5116
    %v5165 = vadd.f32 %v5044, %v5117
    %v5166 = vadd.f32 %v5045, %v5118
    %v5167 = vadd.f32 %v5046, %v5119
    %v5168 = vadd.f32 %v5047, %v5120
    %v5169 = vadd.f32 %v5048, %v5121
    %v5170 = vadd.f32 %v5049, %v5122
    %v5171 = vadd.f32 %v5050, %v5123
    %v5172 = vld [vmem:[%s1 + $0x15] sm:$0x1]
    %v5173 = vlaneseq
    %v5174 = vshrl.u32 %v5173, 7
    %v5175 = vsub.s32 0, %v5174
    %v5176 = vrot.slane %v5172, %v5175
    %v5177 = vmul.f32 %v131, %v5176
    %v5178 = vmul.f32 %v136, %v5176
    %v5179 = vmul.f32 %v141, %v5176
    %v5180 = vmul.f32 %v146, %v5176
    %v5181 = vmul.f32 %v151, %v5176
    %v5182 = vmul.f32 %v156, %v5176
    %v5183 = vmul.f32 %v161, %v5176
    %v5184 = vmul.f32 %v166, %v5176
    %v5185 = vmul.f32 %v171, %v5176
    %v5186 = vmul.f32 %v176, %v5176
    %v5187 = vmul.f32 %v181, %v5176
    %v5188 = vmul.f32 %v186, %v5176
    %v5189 = vmul.f32 %v191, %v5176
    %v5190 = vmul.f32 %v196, %v5176
    %v5191 = vmul.f32 %v201, %v5176
    %v5192 = vmul.f32 %v206, %v5176
    %v5193 = vmul.f32 %v1464, %v5176
    %v5194 = vmul.f32 %v1469, %v5176
    %v5195 = vmul.f32 %v2661, %v5176
    %v5196 = vmul.f32 %v2666, %v5176
    %v5197 = vmul.f32 %v3858, %v5176
    %v5198 = vmul.f32 %v3863, %v5176
    %v5199 = vmul.f32 %v5055, %v5176
    %v5200 = vmul.f32 %v5060, %v5176
    %v5201 = vmul.f32 %v251, %v5176
    %v5202 = vmul.f32 %v256, %v5176
    %v5203 = vmul.f32 %v261, %v5176
    %v5204 = vmul.f32 %v266, %v5176
    %v5205 = vmul.f32 %v271, %v5176
    %v5206 = vmul.f32 %v276, %v5176
    %v5207 = vmul.f32 %v281, %v5176
    %v5208 = vmul.f32 %v286, %v5176
    %v5209 = vmul.f32 %v291, %v5176
    %v5210 = vmul.f32 %v296, %v5176
    %v5211 = vmul.f32 %v301, %v5176
    %v5212 = vmul.f32 %v306, %v5176
    %v5213 = vmul.f32 %v311, %v5176
    %v5214 = vmul.f32 %v316, %v5176
    %v5215 = vmul.f32 %v321, %v5176
    %v5216 = vmul.f32 %v326, %v5176
    %v5217 = vmul.f32 %v1474, %v5176
    %v5218 = vmul.f32 %v1479, %v5176
    %v5219 = vmul.f32 %v2671, %v5176
    %v5220 = vmul.f32 %v2676, %v5176
    %v5221 = vmul.f32 %v3868, %v5176
    %v5222 = vmul.f32 %v3873, %v5176
    %v5223 = vmul.f32 %v5065, %v5176
    %v5224 = vmul.f32 %v5070, %v5176
    %v5273 = vrot.slane %v5177, 1
    %v5274 = vrot.slane %v5178, 1
    %v5275 = vsel %vm481, %v5273, %v5274
    %v5276 = vrot.slane %v5179, 1
    %v5277 = vrot.slane %v5180, 1
    %v5278 = vsel %vm481, %v5276, %v5277
    %v5279 = vrot.slane %v5181, 1
    %v5280 = vrot.slane %v5182, 1
    %v5281 = vsel %vm481, %v5279, %v5280
    %v5282 = vrot.slane %v5183, 1
    %v5283 = vrot.slane %v5184, 1
    %v5284 = vsel %vm481, %v5282, %v5283
    %v5285 = vrot.slane %v5185, 1
    %v5286 = vrot.slane %v5186, 1
    %v5287 = vsel %vm481, %v5285, %v5286
    %v5288 = vrot.slane %v5187, 1
    %v5289 = vrot.slane %v5188, 1
    %v5290 = vsel %vm481, %v5288, %v5289
    %v5291 = vrot.slane %v5189, 1
    %v5292 = vrot.slane %v5190, 1
    %v5293 = vsel %vm481, %v5291, %v5292
    %v5294 = vrot.slane %v5191, 1
    %v5295 = vrot.slane %v5192, 1
    %v5296 = vsel %vm481, %v5294, %v5295
    %v5297 = vrot.slane %v5193, 1
    %v5298 = vrot.slane %v5194, 1
    %v5299 = vsel %vm481, %v5297, %v5298
    %v5300 = vrot.slane %v5195, 1
    %v5301 = vrot.slane %v5196, 1
    %v5302 = vsel %vm481, %v5300, %v5301
    %v5303 = vrot.slane %v5197, 1
    %v5304 = vrot.slane %v5198, 1
    %v5305 = vsel %vm481, %v5303, %v5304
    %v5306 = vrot.slane %v5199, 1
    %v5307 = vrot.slane %v5200, 1
    %v5308 = vsel %vm481, %v5306, %v5307
    %v5309 = vrot.slane %v5201, 1
    %v5310 = vrot.slane %v5202, 1
    %v5311 = vsel %vm481, %v5309, %v5310
    %v5312 = vrot.slane %v5203, 1
    %v5313 = vrot.slane %v5204, 1
    %v5314 = vsel %vm481, %v5312, %v5313
    %v5315 = vrot.slane %v5205, 1
    %v5316 = vrot.slane %v5206, 1
    %v5317 = vsel %vm481, %v5315, %v5316
    %v5318 = vrot.slane %v5207, 1
    %v5319 = vrot.slane %v5208, 1
    %v5320 = vsel %vm481, %v5318, %v5319
    %v5321 = vrot.slane %v5209, 1
    %v5322 = vrot.slane %v5210, 1
    %v5323 = vsel %vm481, %v5321, %v5322
    %v5324 = vrot.slane %v5211, 1
    %v5325 = vrot.slane %v5212, 1
    %v5326 = vsel %vm481, %v5324, %v5325
    %v5327 = vrot.slane %v5213, 1
    %v5328 = vrot.slane %v5214, 1
    %v5329 = vsel %vm481, %v5327, %v5328
    %v5330 = vrot.slane %v5215, 1
    %v5331 = vrot.slane %v5216, 1
    %v5332 = vsel %vm481, %v5330, %v5331
    %v5333 = vrot.slane %v5217, 1
    %v5334 = vrot.slane %v5218, 1
    %v5335 = vsel %vm481, %v5333, %v5334
    %v5336 = vrot.slane %v5219, 1
    %v5337 = vrot.slane %v5220, 1
    %v5338 = vsel %vm481, %v5336, %v5337
    %v5339 = vrot.slane %v5221, 1
    %v5340 = vrot.slane %v5222, 1
    %v5341 = vsel %vm481, %v5339, %v5340
    %v5342 = vrot.slane %v5223, 1
    %v5343 = vrot.slane %v5224, 1
    %v5344 = vsel %vm481, %v5342, %v5343
    %v5393 = vadd.f32 %v5124, %v5275
    %v5394 = vadd.f32 %v5125, %v5274
    %v5395 = vadd.f32 %v5126, %v5278
    %v5396 = vadd.f32 %v5127, %v5277
    %v5397 = vadd.f32 %v5128, %v5281
    %v5398 = vadd.f32 %v5129, %v5280
    %v5399 = vadd.f32 %v5130, %v5284
    %v5400 = vadd.f32 %v5131, %v5283
    %v5401 = vadd.f32 %v5132, %v5287
    %v5402 = vadd.f32 %v5133, %v5286
    %v5403 = vadd.f32 %v5134, %v5290
    %v5404 = vadd.f32 %v5135, %v5289
    %v5405 = vadd.f32 %v5136, %v5293
    %v5406 = vadd.f32 %v5137, %v5292
    %v5407 = vadd.f32 %v5138, %v5296
    %v5408 = vadd.f32 %v5139, %v5295
    %v5409 = vadd.f32 %v5140, %v5299
    %v5410 = vadd.f32 %v5141, %v5298
    %v5411 = vadd.f32 %v5142, %v5302
    %v5412 = vadd.f32 %v5143, %v5301
    %v5413 = vadd.f32 %v5144, %v5305
    %v5414 = vadd.f32 %v5145, %v5304
    %v5415 = vadd.f32 %v5146, %v5308
    %v5416 = vadd.f32 %v5147, %v5307
    %v5417 = vadd.f32 %v5148, %v5311
    %v5418 = vadd.f32 %v5149, %v5310
    %v5419 = vadd.f32 %v5150, %v5314
    %v5420 = vadd.f32 %v5151, %v5313
    %v5421 = vadd.f32 %v5152, %v5317
    %v5422 = vadd.f32 %v5153, %v5316
    %v5423 = vadd.f32 %v5154, %v5320
    %v5424 = vadd.f32 %v5155, %v5319
    %v5425 = vadd.f32 %v5156, %v5323
    %v5426 = vadd.f32 %v5157, %v5322
    %v5427 = vadd.f32 %v5158, %v5326
    %v5428 = vadd.f32 %v5159, %v5325
    %v5429 = vadd.f32 %v5160, %v5329
    %v5430 = vadd.f32 %v5161, %v5328
    %v5431 = vadd.f32 %v5162, %v5332
    %v5432 = vadd.f32 %v5163, %v5331
    %v5433 = vadd.f32 %v5164, %v5335
    %v5434 = vadd.f32 %v5165, %v5334
    %v5435 = vadd.f32 %v5166, %v5338
    %v5436 = vadd.f32 %v5167, %v5337
    %v5437 = vadd.f32 %v5168, %v5341
    %v5438 = vadd.f32 %v5169, %v5340
    %v5439 = vadd.f32 %v5170, %v5344
    %v5440 = vadd.f32 %v5171, %v5343
    %v5441 = vld [vmem:[%s1 + $0x16] sm:$0x1]
    %v5442 = vlaneseq
    %v5443 = vshrl.u32 %v5442, 7
    %v5444 = vsub.s32 0, %v5443
    %v5445 = vrot.slane %v5441, %v5444
    %v5446 = vmul.f32 %v131, %v5445
    %v5447 = vmul.f32 %v136, %v5445
    %v5448 = vmul.f32 %v141, %v5445
    %v5449 = vmul.f32 %v146, %v5445
    %v5450 = vmul.f32 %v151, %v5445
    %v5451 = vmul.f32 %v156, %v5445
    %v5452 = vmul.f32 %v161, %v5445
    %v5453 = vmul.f32 %v166, %v5445
    %v5454 = vmul.f32 %v171, %v5445
    %v5455 = vmul.f32 %v176, %v5445
    %v5456 = vmul.f32 %v181, %v5445
    %v5457 = vmul.f32 %v186, %v5445
    %v5458 = vmul.f32 %v191, %v5445
    %v5459 = vmul.f32 %v196, %v5445
    %v5460 = vmul.f32 %v201, %v5445
    %v5461 = vmul.f32 %v206, %v5445
    %v5462 = vmul.f32 %v1464, %v5445
    %v5463 = vmul.f32 %v1469, %v5445
    %v5464 = vmul.f32 %v2661, %v5445
    %v5465 = vmul.f32 %v2666, %v5445
    %v5466 = vmul.f32 %v3858, %v5445
    %v5467 = vmul.f32 %v3863, %v5445
    %v5468 = vmul.f32 %v5055, %v5445
    %v5469 = vmul.f32 %v5060, %v5445
    %v5470 = vmul.f32 %v251, %v5445
    %v5471 = vmul.f32 %v256, %v5445
    %v5472 = vmul.f32 %v261, %v5445
    %v5473 = vmul.f32 %v266, %v5445
    %v5474 = vmul.f32 %v271, %v5445
    %v5475 = vmul.f32 %v276, %v5445
    %v5476 = vmul.f32 %v281, %v5445
    %v5477 = vmul.f32 %v286, %v5445
    %v5478 = vmul.f32 %v291, %v5445
    %v5479 = vmul.f32 %v296, %v5445
    %v5480 = vmul.f32 %v301, %v5445
    %v5481 = vmul.f32 %v306, %v5445
    %v5482 = vmul.f32 %v311, %v5445
    %v5483 = vmul.f32 %v316, %v5445
    %v5484 = vmul.f32 %v321, %v5445
    %v5485 = vmul.f32 %v326, %v5445
    %v5486 = vmul.f32 %v1474, %v5445
    %v5487 = vmul.f32 %v1479, %v5445
    %v5488 = vmul.f32 %v2671, %v5445
    %v5489 = vmul.f32 %v2676, %v5445
    %v5490 = vmul.f32 %v3868, %v5445
    %v5491 = vmul.f32 %v3873, %v5445
    %v5492 = vmul.f32 %v5065, %v5445
    %v5493 = vmul.f32 %v5070, %v5445
    %v5542 = vrot.slane %v5446, 2
    %v5543 = vrot.slane %v5447, 2
    %v5544 = vsel %vm751, %v5542, %v5543
    %v5545 = vrot.slane %v5448, 2
    %v5546 = vrot.slane %v5449, 2
    %v5547 = vsel %vm751, %v5545, %v5546
    %v5548 = vrot.slane %v5450, 2
    %v5549 = vrot.slane %v5451, 2
    %v5550 = vsel %vm751, %v5548, %v5549
    %v5551 = vrot.slane %v5452, 2
    %v5552 = vrot.slane %v5453, 2
    %v5553 = vsel %vm751, %v5551, %v5552
    %v5554 = vrot.slane %v5454, 2
    %v5555 = vrot.slane %v5455, 2
    %v5556 = vsel %vm751, %v5554, %v5555
    %v5557 = vrot.slane %v5456, 2
    %v5558 = vrot.slane %v5457, 2
    %v5559 = vsel %vm751, %v5557, %v5558
    %v5560 = vrot.slane %v5458, 2
    %v5561 = vrot.slane %v5459, 2
    %v5562 = vsel %vm751, %v5560, %v5561
    %v5563 = vrot.slane %v5460, 2
    %v5564 = vrot.slane %v5461, 2
    %v5565 = vsel %vm751, %v5563, %v5564
    %v5566 = vrot.slane %v5462, 2
    %v5567 = vrot.slane %v5463, 2
    %v5568 = vsel %vm751, %v5566, %v5567
    %v5569 = vrot.slane %v5464, 2
    %v5570 = vrot.slane %v5465, 2
    %v5571 = vsel %vm751, %v5569, %v5570
    %v5572 = vrot.slane %v5466, 2
    %v5573 = vrot.slane %v5467, 2
    %v5574 = vsel %vm751, %v5572, %v5573
    %v5575 = vrot.slane %v5468, 2
    %v5576 = vrot.slane %v5469, 2
    %v5577 = vsel %vm751, %v5575, %v5576
    %v5578 = vrot.slane %v5470, 2
    %v5579 = vrot.slane %v5471, 2
    %v5580 = vsel %vm751, %v5578, %v5579
    %v5581 = vrot.slane %v5472, 2
    %v5582 = vrot.slane %v5473, 2
    %v5583 = vsel %vm751, %v5581, %v5582
    %v5584 = vrot.slane %v5474, 2
    %v5585 = vrot.slane %v5475, 2
    %v5586 = vsel %vm751, %v5584, %v5585
    %v5587 = vrot.slane %v5476, 2
    %v5588 = vrot.slane %v5477, 2
    %v5589 = vsel %vm751, %v5587, %v5588
    %v5590 = vrot.slane %v5478, 2
    %v5591 = vrot.slane %v5479, 2
    %v5592 = vsel %vm751, %v5590, %v5591
    %v5593 = vrot.slane %v5480, 2
    %v5594 = vrot.slane %v5481, 2
    %v5595 = vsel %vm751, %v5593, %v5594
    %v5596 = vrot.slane %v5482, 2
    %v5597 = vrot.slane %v5483, 2
    %v5598 = vsel %vm751, %v5596, %v5597
    %v5599 = vrot.slane %v5484, 2
    %v5600 = vrot.slane %v5485, 2
    %v5601 = vsel %vm751, %v5599, %v5600
    %v5602 = vrot.slane %v5486, 2
    %v5603 = vrot.slane %v5487, 2
    %v5604 = vsel %vm751, %v5602, %v5603
    %v5605 = vrot.slane %v5488, 2
    %v5606 = vrot.slane %v5489, 2
    %v5607 = vsel %vm751, %v5605, %v5606
    %v5608 = vrot.slane %v5490, 2
    %v5609 = vrot.slane %v5491, 2
    %v5610 = vsel %vm751, %v5608, %v5609
    %v5611 = vrot.slane %v5492, 2
    %v5612 = vrot.slane %v5493, 2
    %v5613 = vsel %vm751, %v5611, %v5612
    %v5662 = vadd.f32 %v5393, %v5544
    %v5663 = vadd.f32 %v5394, %v5543
    %v5664 = vadd.f32 %v5395, %v5547
    %v5665 = vadd.f32 %v5396, %v5546
    %v5666 = vadd.f32 %v5397, %v5550
    %v5667 = vadd.f32 %v5398, %v5549
    %v5668 = vadd.f32 %v5399, %v5553
    %v5669 = vadd.f32 %v5400, %v5552
    %v5670 = vadd.f32 %v5401, %v5556
    %v5671 = vadd.f32 %v5402, %v5555
    %v5672 = vadd.f32 %v5403, %v5559
    %v5673 = vadd.f32 %v5404, %v5558
    %v5674 = vadd.f32 %v5405, %v5562
    %v5675 = vadd.f32 %v5406, %v5561
    %v5676 = vadd.f32 %v5407, %v5565
    %v5677 = vadd.f32 %v5408, %v5564
    %v5678 = vadd.f32 %v5409, %v5568
    %v5679 = vadd.f32 %v5410, %v5567
    %v5680 = vadd.f32 %v5411, %v5571
    %v5681 = vadd.f32 %v5412, %v5570
    %v5682 = vadd.f32 %v5413, %v5574
    %v5683 = vadd.f32 %v5414, %v5573
    %v5684 = vadd.f32 %v5415, %v5577
    %v5685 = vadd.f32 %v5416, %v5576
    %v5686 = vadd.f32 %v5417, %v5580
    %v5687 = vadd.f32 %v5418, %v5579
    %v5688 = vadd.f32 %v5419, %v5583
    %v5689 = vadd.f32 %v5420, %v5582
    %v5690 = vadd.f32 %v5421, %v5586
    %v5691 = vadd.f32 %v5422, %v5585
    %v5692 = vadd.f32 %v5423, %v5589
    %v5693 = vadd.f32 %v5424, %v5588
    %v5694 = vadd.f32 %v5425, %v5592
    %v5695 = vadd.f32 %v5426, %v5591
    %v5696 = vadd.f32 %v5427, %v5595
    %v5697 = vadd.f32 %v5428, %v5594
    %v5698 = vadd.f32 %v5429, %v5598
    %v5699 = vadd.f32 %v5430, %v5597
    %v5700 = vadd.f32 %v5431, %v5601
    %v5701 = vadd.f32 %v5432, %v5600
    %v5702 = vadd.f32 %v5433, %v5604
    %v5703 = vadd.f32 %v5434, %v5603
    %v5704 = vadd.f32 %v5435, %v5607
    %v5705 = vadd.f32 %v5436, %v5606
    %v5706 = vadd.f32 %v5437, %v5610
    %v5707 = vadd.f32 %v5438, %v5609
    %v5708 = vadd.f32 %v5439, %v5613
    %v5709 = vadd.f32 %v5440, %v5612
    %v5710 = vld [vmem:[%s1 + $0x17] sm:$0x1]
    %v5711 = vlaneseq
    %v5712 = vshrl.u32 %v5711, 7
    %v5713 = vsub.s32 0, %v5712
    %v5714 = vrot.slane %v5710, %v5713
    %v5715 = vmul.f32 %v131, %v5714
    %v5716 = vmul.f32 %v136, %v5714
    %v5717 = vmul.f32 %v141, %v5714
    %v5718 = vmul.f32 %v146, %v5714
    %v5719 = vmul.f32 %v151, %v5714
    %v5720 = vmul.f32 %v156, %v5714
    %v5721 = vmul.f32 %v161, %v5714
    %v5722 = vmul.f32 %v166, %v5714
    %v5723 = vmul.f32 %v171, %v5714
    %v5724 = vmul.f32 %v176, %v5714
    %v5725 = vmul.f32 %v181, %v5714
    %v5726 = vmul.f32 %v186, %v5714
    %v5727 = vmul.f32 %v191, %v5714
    %v5728 = vmul.f32 %v196, %v5714
    %v5729 = vmul.f32 %v201, %v5714
    %v5730 = vmul.f32 %v206, %v5714
    %v5731 = vmul.f32 %v1464, %v5714
    %v5732 = vmul.f32 %v1469, %v5714
    %v5733 = vmul.f32 %v2661, %v5714
    %v5734 = vmul.f32 %v2666, %v5714
    %v5735 = vmul.f32 %v3858, %v5714
    %v5736 = vmul.f32 %v3863, %v5714
    %v5737 = vmul.f32 %v5055, %v5714
    %v5738 = vmul.f32 %v5060, %v5714
    %v5739 = vmul.f32 %v251, %v5714
    %v5740 = vmul.f32 %v256, %v5714
    %v5741 = vmul.f32 %v261, %v5714
    %v5742 = vmul.f32 %v266, %v5714
    %v5743 = vmul.f32 %v271, %v5714
    %v5744 = vmul.f32 %v276, %v5714
    %v5745 = vmul.f32 %v281, %v5714
    %v5746 = vmul.f32 %v286, %v5714
    %v5747 = vmul.f32 %v291, %v5714
    %v5748 = vmul.f32 %v296, %v5714
    %v5749 = vmul.f32 %v301, %v5714
    %v5750 = vmul.f32 %v306, %v5714
    %v5751 = vmul.f32 %v311, %v5714
    %v5752 = vmul.f32 %v316, %v5714
    %v5753 = vmul.f32 %v321, %v5714
    %v5754 = vmul.f32 %v326, %v5714
    %v5755 = vmul.f32 %v1474, %v5714
    %v5756 = vmul.f32 %v1479, %v5714
    %v5757 = vmul.f32 %v2671, %v5714
    %v5758 = vmul.f32 %v2676, %v5714
    %v5759 = vmul.f32 %v3868, %v5714
    %v5760 = vmul.f32 %v3873, %v5714
    %v5761 = vmul.f32 %v5065, %v5714
    %v5762 = vmul.f32 %v5070, %v5714
    %v5811 = vrot.slane %v5715, 3
    %v5812 = vrot.slane %v5716, 3
    %v5813 = vsel %vm1021, %v5811, %v5812
    %v5814 = vrot.slane %v5717, 3
    %v5815 = vrot.slane %v5718, 3
    %v5816 = vsel %vm1021, %v5814, %v5815
    %v5817 = vrot.slane %v5719, 3
    %v5818 = vrot.slane %v5720, 3
    %v5819 = vsel %vm1021, %v5817, %v5818
    %v5820 = vrot.slane %v5721, 3
    %v5821 = vrot.slane %v5722, 3
    %v5822 = vsel %vm1021, %v5820, %v5821
    %v5823 = vrot.slane %v5723, 3
    %v5824 = vrot.slane %v5724, 3
    %v5825 = vsel %vm1021, %v5823, %v5824
    %v5826 = vrot.slane %v5725, 3
    %v5827 = vrot.slane %v5726, 3
    %v5828 = vsel %vm1021, %v5826, %v5827
    %v5829 = vrot.slane %v5727, 3
    %v5830 = vrot.slane %v5728, 3
    %v5831 = vsel %vm1021, %v5829, %v5830
    %v5832 = vrot.slane %v5729, 3
    %v5833 = vrot.slane %v5730, 3
    %v5834 = vsel %vm1021, %v5832, %v5833
    %v5835 = vrot.slane %v5731, 3
    %v5836 = vrot.slane %v5732, 3
    %v5837 = vsel %vm1021, %v5835, %v5836
    %v5838 = vrot.slane %v5733, 3
    %v5839 = vrot.slane %v5734, 3
    %v5840 = vsel %vm1021, %v5838, %v5839
    %v5841 = vrot.slane %v5735, 3
    %v5842 = vrot.slane %v5736, 3
    %v5843 = vsel %vm1021, %v5841, %v5842
    %v5844 = vrot.slane %v5737, 3
    %v5845 = vrot.slane %v5738, 3
    %v5846 = vsel %vm1021, %v5844, %v5845
    %v5847 = vrot.slane %v5739, 3
    %v5848 = vrot.slane %v5740, 3
    %v5849 = vsel %vm1021, %v5847, %v5848
    %v5850 = vrot.slane %v5741, 3
    %v5851 = vrot.slane %v5742, 3
    %v5852 = vsel %vm1021, %v5850, %v5851
    %v5853 = vrot.slane %v5743, 3
    %v5854 = vrot.slane %v5744, 3
    %v5855 = vsel %vm1021, %v5853, %v5854
    %v5856 = vrot.slane %v5745, 3
    %v5857 = vrot.slane %v5746, 3
    %v5858 = vsel %vm1021, %v5856, %v5857
    %v5859 = vrot.slane %v5747, 3
    %v5860 = vrot.slane %v5748, 3
    %v5861 = vsel %vm1021, %v5859, %v5860
    %v5862 = vrot.slane %v5749, 3
    %v5863 = vrot.slane %v5750, 3
    %v5864 = vsel %vm1021, %v5862, %v5863
    %v5865 = vrot.slane %v5751, 3
    %v5866 = vrot.slane %v5752, 3
    %v5867 = vsel %vm1021, %v5865, %v5866
    %v5868 = vrot.slane %v5753, 3
    %v5869 = vrot.slane %v5754, 3
    %v5870 = vsel %vm1021, %v5868, %v5869
    %v5871 = vrot.slane %v5755, 3
    %v5872 = vrot.slane %v5756, 3
    %v5873 = vsel %vm1021, %v5871, %v5872
    %v5874 = vrot.slane %v5757, 3
    %v5875 = vrot.slane %v5758, 3
    %v5876 = vsel %vm1021, %v5874, %v5875
    %v5877 = vrot.slane %v5759, 3
    %v5878 = vrot.slane %v5760, 3
    %v5879 = vsel %vm1021, %v5877, %v5878
    %v5880 = vrot.slane %v5761, 3
    %v5881 = vrot.slane %v5762, 3
    %v5882 = vsel %vm1021, %v5880, %v5881
    %v5931 = vadd.f32 %v5662, %v5813
    %v5932 = vadd.f32 %v5663, %v5812
    %v5933 = vadd.f32 %v5664, %v5816
    %v5934 = vadd.f32 %v5665, %v5815
    %v5935 = vadd.f32 %v5666, %v5819
    %v5936 = vadd.f32 %v5667, %v5818
    %v5937 = vadd.f32 %v5668, %v5822
    %v5938 = vadd.f32 %v5669, %v5821
    %v5939 = vadd.f32 %v5670, %v5825
    %v5940 = vadd.f32 %v5671, %v5824
    %v5941 = vadd.f32 %v5672, %v5828
    %v5942 = vadd.f32 %v5673, %v5827
    %v5943 = vadd.f32 %v5674, %v5831
    %v5944 = vadd.f32 %v5675, %v5830
    %v5945 = vadd.f32 %v5676, %v5834
    %v5946 = vadd.f32 %v5677, %v5833
    %v5947 = vadd.f32 %v5678, %v5837
    %v5948 = vadd.f32 %v5679, %v5836
    %v5949 = vadd.f32 %v5680, %v5840
    %v5950 = vadd.f32 %v5681, %v5839
    %v5951 = vadd.f32 %v5682, %v5843
    %v5952 = vadd.f32 %v5683, %v5842
    %v5953 = vadd.f32 %v5684, %v5846
    %v5954 = vadd.f32 %v5685, %v5845
    %v5955 = vadd.f32 %v5686, %v5849
    %v5956 = vadd.f32 %v5687, %v5848
    %v5957 = vadd.f32 %v5688, %v5852
    %v5958 = vadd.f32 %v5689, %v5851
    %v5959 = vadd.f32 %v5690, %v5855
    %v5960 = vadd.f32 %v5691, %v5854
    %v5961 = vadd.f32 %v5692, %v5858
    %v5962 = vadd.f32 %v5693, %v5857
    %v5963 = vadd.f32 %v5694, %v5861
    %v5964 = vadd.f32 %v5695, %v5860
    %v5965 = vadd.f32 %v5696, %v5864
    %v5966 = vadd.f32 %v5697, %v5863
    %v5967 = vadd.f32 %v5698, %v5867
    %v5968 = vadd.f32 %v5699, %v5866
    %v5969 = vadd.f32 %v5700, %v5870
    %v5970 = vadd.f32 %v5701, %v5869
    %v5971 = vadd.f32 %v5702, %v5873
    %v5972 = vadd.f32 %v5703, %v5872
    %v5973 = vadd.f32 %v5704, %v5876
    %v5974 = vadd.f32 %v5705, %v5875
    %v5975 = vadd.f32 %v5706, %v5879
    %v5976 = vadd.f32 %v5707, %v5878
    %v5977 = vadd.f32 %v5708, %v5882
    %v5978 = vadd.f32 %v5709, %v5881
    %v5979 = vld [vmem:[%s1 + $0x18] sm:$0x1]
    %v5980 = vlaneseq
    %v5981 = vshrl.u32 %v5980, 7
    %v5982 = vsub.s32 0, %v5981
    %v5983 = vrot.slane %v5979, %v5982
    %v5984 = vmul.f32 %v131, %v5983
    %v5985 = vmul.f32 %v136, %v5983
    %v5986 = vmul.f32 %v141, %v5983
    %v5987 = vmul.f32 %v146, %v5983
    %v5988 = vmul.f32 %v151, %v5983
    %v5989 = vmul.f32 %v156, %v5983
    %v5990 = vmul.f32 %v161, %v5983
    %v5991 = vmul.f32 %v166, %v5983
    %v5992 = vmul.f32 %v171, %v5983
    %v5993 = vmul.f32 %v176, %v5983
    %v5994 = vmul.f32 %v181, %v5983
    %v5995 = vmul.f32 %v186, %v5983
    %v5996 = vmul.f32 %v191, %v5983
    %v5997 = vmul.f32 %v196, %v5983
    %v5998 = vmul.f32 %v201, %v5983
    %v5999 = vmul.f32 %v206, %v5983
    %v6000 = vmul.f32 %v1464, %v5983
    %v6001 = vmul.f32 %v1469, %v5983
    %v6002 = vmul.f32 %v2661, %v5983
    %v6003 = vmul.f32 %v2666, %v5983
    %v6004 = vmul.f32 %v3858, %v5983
    %v6005 = vmul.f32 %v3863, %v5983
    %v6006 = vmul.f32 %v5055, %v5983
    %v6007 = vmul.f32 %v5060, %v5983
    %v6008 = vmul.f32 %v251, %v5983
    %v6009 = vmul.f32 %v256, %v5983
    %v6010 = vmul.f32 %v261, %v5983
    %v6011 = vmul.f32 %v266, %v5983
    %v6012 = vmul.f32 %v271, %v5983
    %v6013 = vmul.f32 %v276, %v5983
    %v6014 = vmul.f32 %v281, %v5983
    %v6015 = vmul.f32 %v286, %v5983
    %v6016 = vmul.f32 %v291, %v5983
    %v6017 = vmul.f32 %v296, %v5983
    %v6018 = vmul.f32 %v301, %v5983
    %v6019 = vmul.f32 %v306, %v5983
    %v6020 = vmul.f32 %v311, %v5983
    %v6021 = vmul.f32 %v316, %v5983
    %v6022 = vmul.f32 %v321, %v5983
    %v6023 = vmul.f32 %v326, %v5983
    %v6024 = vmul.f32 %v1474, %v5983
    %v6025 = vmul.f32 %v1479, %v5983
    %v6026 = vmul.f32 %v2671, %v5983
    %v6027 = vmul.f32 %v2676, %v5983
    %v6028 = vmul.f32 %v3868, %v5983
    %v6029 = vmul.f32 %v3873, %v5983
    %v6030 = vmul.f32 %v5065, %v5983
    %v6031 = vmul.f32 %v5070, %v5983
    %v6080 = vrot.slane %v5984, 4
    %v6081 = vrot.slane %v5985, 4
    %v6082 = vsel %vm1291, %v6080, %v6081
    %v6083 = vrot.slane %v5986, 4
    %v6084 = vrot.slane %v5987, 4
    %v6085 = vsel %vm1291, %v6083, %v6084
    %v6086 = vrot.slane %v5988, 4
    %v6087 = vrot.slane %v5989, 4
    %v6088 = vsel %vm1291, %v6086, %v6087
    %v6089 = vrot.slane %v5990, 4
    %v6090 = vrot.slane %v5991, 4
    %v6091 = vsel %vm1291, %v6089, %v6090
    %v6092 = vrot.slane %v5992, 4
    %v6093 = vrot.slane %v5993, 4
    %v6094 = vsel %vm1291, %v6092, %v6093
    %v6095 = vrot.slane %v5994, 4
    %v6096 = vrot.slane %v5995, 4
    %v6097 = vsel %vm1291, %v6095, %v6096
    %v6098 = vrot.slane %v5996, 4
    %v6099 = vrot.slane %v5997, 4
    %v6100 = vsel %vm1291, %v6098, %v6099
    %v6101 = vrot.slane %v5998, 4
    %v6102 = vrot.slane %v5999, 4
    %v6103 = vsel %vm1291, %v6101, %v6102
    %v6104 = vrot.slane %v6000, 4
    %v6105 = vrot.slane %v6001, 4
    %v6106 = vsel %vm1291, %v6104, %v6105
    %v6107 = vrot.slane %v6002, 4
    %v6108 = vrot.slane %v6003, 4
    %v6109 = vsel %vm1291, %v6107, %v6108
    %v6110 = vrot.slane %v6004, 4
    %v6111 = vrot.slane %v6005, 4
    %v6112 = vsel %vm1291, %v6110, %v6111
    %v6113 = vrot.slane %v6006, 4
    %v6114 = vrot.slane %v6007, 4
    %v6115 = vsel %vm1291, %v6113, %v6114
    %v6116 = vrot.slane %v6008, 4
    %v6117 = vrot.slane %v6009, 4
    %v6118 = vsel %vm1291, %v6116, %v6117
    %v6119 = vrot.slane %v6010, 4
    %v6120 = vrot.slane %v6011, 4
    %v6121 = vsel %vm1291, %v6119, %v6120
    %v6122 = vrot.slane %v6012, 4
    %v6123 = vrot.slane %v6013, 4
    %v6124 = vsel %vm1291, %v6122, %v6123
    %v6125 = vrot.slane %v6014, 4
    %v6126 = vrot.slane %v6015, 4
    %v6127 = vsel %vm1291, %v6125, %v6126
    %v6128 = vrot.slane %v6016, 4
    %v6129 = vrot.slane %v6017, 4
    %v6130 = vsel %vm1291, %v6128, %v6129
    %v6131 = vrot.slane %v6018, 4
    %v6132 = vrot.slane %v6019, 4
    %v6133 = vsel %vm1291, %v6131, %v6132
    %v6134 = vrot.slane %v6020, 4
    %v6135 = vrot.slane %v6021, 4
    %v6136 = vsel %vm1291, %v6134, %v6135
    %v6137 = vrot.slane %v6022, 4
    %v6138 = vrot.slane %v6023, 4
    %v6139 = vsel %vm1291, %v6137, %v6138
    %v6140 = vrot.slane %v6024, 4
    %v6141 = vrot.slane %v6025, 4
    %v6142 = vsel %vm1291, %v6140, %v6141
    %v6143 = vrot.slane %v6026, 4
    %v6144 = vrot.slane %v6027, 4
    %v6145 = vsel %vm1291, %v6143, %v6144
    %v6146 = vrot.slane %v6028, 4
    %v6147 = vrot.slane %v6029, 4
    %v6148 = vsel %vm1291, %v6146, %v6147
    %v6149 = vrot.slane %v6030, 4
    %v6150 = vrot.slane %v6031, 4
    %v6151 = vsel %vm1291, %v6149, %v6150
    %v6200 = vadd.f32 %v5931, %v6082
    %v6201 = vadd.f32 %v5932, %v6081
    %v6202 = vadd.f32 %v5933, %v6085
    %v6203 = vadd.f32 %v5934, %v6084
    %v6204 = vadd.f32 %v5935, %v6088
    %v6205 = vadd.f32 %v5936, %v6087
    %v6206 = vadd.f32 %v5937, %v6091
    %v6207 = vadd.f32 %v5938, %v6090
    %v6208 = vadd.f32 %v5939, %v6094
    %v6209 = vadd.f32 %v5940, %v6093
    %v6210 = vadd.f32 %v5941, %v6097
    %v6211 = vadd.f32 %v5942, %v6096
    %v6212 = vadd.f32 %v5943, %v6100
    %v6213 = vadd.f32 %v5944, %v6099
    %v6214 = vadd.f32 %v5945, %v6103
    %v6215 = vadd.f32 %v5946, %v6102
    %v6216 = vadd.f32 %v5947, %v6106
    %v6217 = vadd.f32 %v5948, %v6105
    %v6218 = vadd.f32 %v5949, %v6109
    %v6219 = vadd.f32 %v5950, %v6108
    %v6220 = vadd.f32 %v5951, %v6112
    %v6221 = vadd.f32 %v5952, %v6111
    %v6222 = vadd.f32 %v5953, %v6115
    %v6223 = vadd.f32 %v5954, %v6114
    %v6224 = vadd.f32 %v5955, %v6118
    %v6225 = vadd.f32 %v5956, %v6117
    %v6226 = vadd.f32 %v5957, %v6121
    %v6227 = vadd.f32 %v5958, %v6120
    %v6228 = vadd.f32 %v5959, %v6124
    %v6229 = vadd.f32 %v5960, %v6123
    %v6230 = vadd.f32 %v5961, %v6127
    %v6231 = vadd.f32 %v5962, %v6126
    %v6232 = vadd.f32 %v5963, %v6130
    %v6233 = vadd.f32 %v5964, %v6129
    %v6234 = vadd.f32 %v5965, %v6133
    %v6235 = vadd.f32 %v5966, %v6132
    %v6236 = vadd.f32 %v5967, %v6136
    %v6237 = vadd.f32 %v5968, %v6135
    %v6238 = vadd.f32 %v5969, %v6139
    %v6239 = vadd.f32 %v5970, %v6138
    %v6240 = vadd.f32 %v5971, %v6142
    %v6241 = vadd.f32 %v5972, %v6141
    %v6242 = vadd.f32 %v5973, %v6145
    %v6243 = vadd.f32 %v5974, %v6144
    %v6244 = vadd.f32 %v5975, %v6148
    %v6245 = vadd.f32 %v5976, %v6147
    %v6246 = vadd.f32 %v5977, %v6151
    %v6247 = vadd.f32 %v5978, %v6150
    %v6248 = vld [vmem:[%s2] sm:$0x1]
    %v6250 = vlaneseq
    %v6251 = vshrl.u32 %v6250, 7
    %v6252 = vsub.s32 0, %v6251
    %v6253 = vrot.slane %v6248, %v6252
    %v6255 = vadd.f32 %v6200, %v6253
    %v6256 = vadd.f32 %v6201, %v6253
    %v6257 = vadd.f32 %v6202, %v6253
    %v6258 = vadd.f32 %v6203, %v6253
    %v6259 = vadd.f32 %v6204, %v6253
    %v6260 = vadd.f32 %v6205, %v6253
    %v6261 = vadd.f32 %v6206, %v6253
    %v6262 = vadd.f32 %v6207, %v6253
    %v6263 = vadd.f32 %v6208, %v6253
    %v6264 = vadd.f32 %v6209, %v6253
    %v6265 = vadd.f32 %v6210, %v6253
    %v6266 = vadd.f32 %v6211, %v6253
    %v6267 = vadd.f32 %v6212, %v6253
    %v6268 = vadd.f32 %v6213, %v6253
    %v6269 = vadd.f32 %v6214, %v6253
    %v6270 = vadd.f32 %v6215, %v6253
    %v6271 = vadd.f32 %v6216, %v6253
    %v6272 = vadd.f32 %v6217, %v6253
    %v6273 = vadd.f32 %v6218, %v6253
    %v6274 = vadd.f32 %v6219, %v6253
    %v6275 = vadd.f32 %v6220, %v6253
    %v6276 = vadd.f32 %v6221, %v6253
    %v6277 = vadd.f32 %v6222, %v6253
    %v6278 = vadd.f32 %v6223, %v6253
    %v6279 = vadd.f32 %v6224, %v6253
    %v6280 = vadd.f32 %v6225, %v6253
    %v6281 = vadd.f32 %v6226, %v6253
    %v6282 = vadd.f32 %v6227, %v6253
    %v6283 = vadd.f32 %v6228, %v6253
    %v6284 = vadd.f32 %v6229, %v6253
    %v6285 = vadd.f32 %v6230, %v6253
    %v6286 = vadd.f32 %v6231, %v6253
    %v6287 = vadd.f32 %v6232, %v6253
    %v6288 = vadd.f32 %v6233, %v6253
    %v6289 = vadd.f32 %v6234, %v6253
    %v6290 = vadd.f32 %v6235, %v6253
    %v6291 = vadd.f32 %v6236, %v6253
    %v6292 = vadd.f32 %v6237, %v6253
    %v6293 = vadd.f32 %v6238, %v6253
    %v6294 = vadd.f32 %v6239, %v6253
    %v6295 = vadd.f32 %v6240, %v6253
    %v6296 = vadd.f32 %v6241, %v6253
    %v6297 = vadd.f32 %v6242, %v6253
    %v6298 = vadd.f32 %v6243, %v6253
    %v6299 = vadd.f32 %v6244, %v6253
    %v6300 = vadd.f32 %v6245, %v6253
    %v6301 = vadd.f32 %v6246, %v6253
    %v6302 = vadd.f32 %v6247, %v6253
    %v6303 = vmax.f32 %v6255, 0.0
    %v6304 = vmax.f32 %v6256, 0.0
    %v6305 = vmax.f32 %v6257, 0.0
    %v6306 = vmax.f32 %v6258, 0.0
    %v6307 = vmax.f32 %v6259, 0.0
    %v6308 = vmax.f32 %v6260, 0.0
    %v6309 = vmax.f32 %v6261, 0.0
    %v6310 = vmax.f32 %v6262, 0.0
    %v6311 = vmax.f32 %v6263, 0.0
    %v6312 = vmax.f32 %v6264, 0.0
    %v6313 = vmax.f32 %v6265, 0.0
    %v6314 = vmax.f32 %v6266, 0.0
    %v6315 = vmax.f32 %v6267, 0.0
    %v6316 = vmax.f32 %v6268, 0.0
    %v6317 = vmax.f32 %v6269, 0.0
    %v6318 = vmax.f32 %v6270, 0.0
    %v6319 = vmax.f32 %v6271, 0.0
    %v6320 = vmax.f32 %v6272, 0.0
    %v6321 = vmax.f32 %v6273, 0.0
    %v6322 = vmax.f32 %v6274, 0.0
    %v6323 = vmax.f32 %v6275, 0.0
    %v6324 = vmax.f32 %v6276, 0.0
    %v6325 = vmax.f32 %v6277, 0.0
    %v6326 = vmax.f32 %v6278, 0.0
    %v6327 = vmax.f32 %v6279, 0.0
    %v6328 = vmax.f32 %v6280, 0.0
    %v6329 = vmax.f32 %v6281, 0.0
    %v6330 = vmax.f32 %v6282, 0.0
    %v6331 = vmax.f32 %v6283, 0.0
    %v6332 = vmax.f32 %v6284, 0.0
    %v6333 = vmax.f32 %v6285, 0.0
    %v6334 = vmax.f32 %v6286, 0.0
    %v6335 = vmax.f32 %v6287, 0.0
    %v6336 = vmax.f32 %v6288, 0.0
    %v6337 = vmax.f32 %v6289, 0.0
    %v6338 = vmax.f32 %v6290, 0.0
    %v6339 = vmax.f32 %v6291, 0.0
    %v6340 = vmax.f32 %v6292, 0.0
    %v6341 = vmax.f32 %v6293, 0.0
    %v6342 = vmax.f32 %v6294, 0.0
    %v6343 = vmax.f32 %v6295, 0.0
    %v6344 = vmax.f32 %v6296, 0.0
    %v6345 = vmax.f32 %v6297, 0.0
    %v6346 = vmax.f32 %v6298, 0.0
    %v6347 = vmax.f32 %v6299, 0.0
    %v6348 = vmax.f32 %v6300, 0.0
    %v6349 = vmax.f32 %v6301, 0.0
    %v6350 = vmax.f32 %v6302, 0.0
    %v6351 = vld [vmem:[%s3] sm:$0x1]
    %v6352 = vlaneseq
    %v6353 = vshrl.u32 %v6352, 7
    %v6354 = vsub.s32 0, %v6353
    %v6355 = vrot.slane %v6351, %v6354
    %v6356 = vmul.f32 %v6303, %v6355
    %v6357 = vmul.f32 %v6305, %v6355
    %v6358 = vmul.f32 %v6307, %v6355
    %v6359 = vmul.f32 %v6309, %v6355
    %v6360 = vmul.f32 %v6311, %v6355
    %v6361 = vmul.f32 %v6313, %v6355
    %v6362 = vmul.f32 %v6315, %v6355
    %v6363 = vmul.f32 %v6317, %v6355
    %v6364 = vmul.f32 %v6327, %v6355
    %v6365 = vmul.f32 %v6329, %v6355
    %v6366 = vmul.f32 %v6331, %v6355
    %v6367 = vmul.f32 %v6333, %v6355
    %v6368 = vmul.f32 %v6335, %v6355
    %v6369 = vmul.f32 %v6337, %v6355
    %v6370 = vmul.f32 %v6339, %v6355
    %v6371 = vmul.f32 %v6341, %v6355
    %v6372 = vld [vmem:[%s3 + $0x1] sm:$0x1]
    %v6373 = vlaneseq
    %v6374 = vshrl.u32 %v6373, 7
    %v6375 = vsub.s32 0, %v6374
    %v6376 = vrot.slane %v6372, %v6375
    %v6377 = vmul.f32 %v6303, %v6376
    %v6378 = vmul.f32 %v6304, %v6376
    %v6379 = vmul.f32 %v6305, %v6376
    %v6380 = vmul.f32 %v6306, %v6376
    %v6381 = vmul.f32 %v6307, %v6376
    %v6382 = vmul.f32 %v6308, %v6376
    %v6383 = vmul.f32 %v6309, %v6376
    %v6384 = vmul.f32 %v6310, %v6376
    %v6385 = vmul.f32 %v6311, %v6376
    %v6386 = vmul.f32 %v6312, %v6376
    %v6387 = vmul.f32 %v6313, %v6376
    %v6388 = vmul.f32 %v6314, %v6376
    %v6389 = vmul.f32 %v6315, %v6376
    %v6390 = vmul.f32 %v6316, %v6376
    %v6391 = vmul.f32 %v6317, %v6376
    %v6392 = vmul.f32 %v6318, %v6376
    %v6393 = vmul.f32 %v6327, %v6376
    %v6394 = vmul.f32 %v6328, %v6376
    %v6395 = vmul.f32 %v6329, %v6376
    %v6396 = vmul.f32 %v6330, %v6376
    %v6397 = vmul.f32 %v6331, %v6376
    %v6398 = vmul.f32 %v6332, %v6376
    %v6399 = vmul.f32 %v6333, %v6376
    %v6400 = vmul.f32 %v6334, %v6376
    %v6401 = vmul.f32 %v6335, %v6376
    %v6402 = vmul.f32 %v6336, %v6376
    %v6403 = vmul.f32 %v6337, %v6376
    %v6404 = vmul.f32 %v6338, %v6376
    %v6405 = vmul.f32 %v6339, %v6376
    %v6406 = vmul.f32 %v6340, %v6376
    %v6407 = vmul.f32 %v6341, %v6376
    %v6408 = vmul.f32 %v6342, %v6376
    %v6441 = vrot.slane %v6377, 1
    %v6442 = vrot.slane %v6378, 1
    %v6443 = vsel %vm481, %v6441, %v6442
    %v6444 = vrot.slane %v6379, 1
    %v6445 = vrot.slane %v6380, 1
    %v6446 = vsel %vm481, %v6444, %v6445
    %v6447 = vrot.slane %v6381, 1
    %v6448 = vrot.slane %v6382, 1
    %v6449 = vsel %vm481, %v6447, %v6448
    %v6450 = vrot.slane %v6383, 1
    %v6451 = vrot.slane %v6384, 1
    %v6452 = vsel %vm481, %v6450, %v6451
    %v6453 = vrot.slane %v6385, 1
    %v6454 = vrot.slane %v6386, 1
    %v6455 = vsel %vm481, %v6453, %v6454
    %v6456 = vrot.slane %v6387, 1
    %v6457 = vrot.slane %v6388, 1
    %v6458 = vsel %vm481, %v6456, %v6457
    %v6459 = vrot.slane %v6389, 1
    %v6460 = vrot.slane %v6390, 1
    %v6461 = vsel %vm481, %v6459, %v6460
    %v6462 = vrot.slane %v6391, 1
    %v6463 = vrot.slane %v6392, 1
    %v6464 = vsel %vm481, %v6462, %v6463
    %v6465 = vrot.slane %v6393, 1
    %v6466 = vrot.slane %v6394, 1
    %v6467 = vsel %vm481, %v6465, %v6466
    %v6468 = vrot.slane %v6395, 1
    %v6469 = vrot.slane %v6396, 1
    %v6470 = vsel %vm481, %v6468, %v6469
    %v6471 = vrot.slane %v6397, 1
    %v6472 = vrot.slane %v6398, 1
    %v6473 = vsel %vm481, %v6471, %v6472
    %v6474 = vrot.slane %v6399, 1
    %v6475 = vrot.slane %v6400, 1
    %v6476 = vsel %vm481, %v6474, %v6475
    %v6477 = vrot.slane %v6401, 1
    %v6478 = vrot.slane %v6402, 1
    %v6479 = vsel %vm481, %v6477, %v6478
    %v6480 = vrot.slane %v6403, 1
    %v6481 = vrot.slane %v6404, 1
    %v6482 = vsel %vm481, %v6480, %v6481
    %v6483 = vrot.slane %v6405, 1
    %v6484 = vrot.slane %v6406, 1
    %v6485 = vsel %vm481, %v6483, %v6484
    %v6486 = vrot.slane %v6407, 1
    %v6487 = vrot.slane %v6408, 1
    %v6488 = vsel %vm481, %v6486, %v6487
    %v6505 = vadd.f32 %v6356, %v6443
    %v6506 = vadd.f32 %v6357, %v6446
    %v6507 = vadd.f32 %v6358, %v6449
    %v6508 = vadd.f32 %v6359, %v6452
    %v6509 = vadd.f32 %v6360, %v6455
    %v6510 = vadd.f32 %v6361, %v6458
    %v6511 = vadd.f32 %v6362, %v6461
    %v6512 = vadd.f32 %v6363, %v6464
    %v6513 = vadd.f32 %v6364, %v6467
    %v6514 = vadd.f32 %v6365, %v6470
    %v6515 = vadd.f32 %v6366, %v6473
    %v6516 = vadd.f32 %v6367, %v6476
    %v6517 = vadd.f32 %v6368, %v6479
    %v6518 = vadd.f32 %v6369, %v6482
    %v6519 = vadd.f32 %v6370, %v6485
    %v6520 = vadd.f32 %v6371, %v6488
    %v6521 = vld [vmem:[%s3 + $0x2] sm:$0x1]
    %v6522 = vlaneseq
    %v6523 = vshrl.u32 %v6522, 7
    %v6524 = vsub.s32 0, %v6523
    %v6525 = vrot.slane %v6521, %v6524
    %v6526 = vmul.f32 %v6303, %v6525
    %v6527 = vmul.f32 %v6304, %v6525
    %v6528 = vmul.f32 %v6305, %v6525
    %v6529 = vmul.f32 %v6306, %v6525
    %v6530 = vmul.f32 %v6307, %v6525
    %v6531 = vmul.f32 %v6308, %v6525
    %v6532 = vmul.f32 %v6309, %v6525
    %v6533 = vmul.f32 %v6310, %v6525
    %v6534 = vmul.f32 %v6311, %v6525
    %v6535 = vmul.f32 %v6312, %v6525
    %v6536 = vmul.f32 %v6313, %v6525
    %v6537 = vmul.f32 %v6314, %v6525
    %v6538 = vmul.f32 %v6315, %v6525
    %v6539 = vmul.f32 %v6316, %v6525
    %v6540 = vmul.f32 %v6317, %v6525
    %v6541 = vmul.f32 %v6318, %v6525
    %v6542 = vmul.f32 %v6327, %v6525
    %v6543 = vmul.f32 %v6328, %v6525
    %v6544 = vmul.f32 %v6329, %v6525
    %v6545 = vmul.f32 %v6330, %v6525
    %v6546 = vmul.f32 %v6331, %v6525
    %v6547 = vmul.f32 %v6332, %v6525
    %v6548 = vmul.f32 %v6333, %v6525
    %v6549 = vmul.f32 %v6334, %v6525
    %v6550 = vmul.f32 %v6335, %v6525
    %v6551 = vmul.f32 %v6336, %v6525
    %v6552 = vmul.f32 %v6337, %v6525
    %v6553 = vmul.f32 %v6338, %v6525
    %v6554 = vmul.f32 %v6339, %v6525
    %v6555 = vmul.f32 %v6340, %v6525
    %v6556 = vmul.f32 %v6341, %v6525
    %v6557 = vmul.f32 %v6342, %v6525
    %v6590 = vrot.slane %v6526, 2
    %v6591 = vrot.slane %v6527, 2
    %v6592 = vsel %vm751, %v6590, %v6591
    %v6593 = vrot.slane %v6528, 2
    %v6594 = vrot.slane %v6529, 2
    %v6595 = vsel %vm751, %v6593, %v6594
    %v6596 = vrot.slane %v6530, 2
    %v6597 = vrot.slane %v6531, 2
    %v6598 = vsel %vm751, %v6596, %v6597
    %v6599 = vrot.slane %v6532, 2
    %v6600 = vrot.slane %v6533, 2
    %v6601 = vsel %vm751, %v6599, %v6600
    %v6602 = vrot.slane %v6534, 2
    %v6603 = vrot.slane %v6535, 2
    %v6604 = vsel %vm751, %v6602, %v6603
    %v6605 = vrot.slane %v6536, 2
    %v6606 = vrot.slane %v6537, 2
    %v6607 = vsel %vm751, %v6605, %v6606
    %v6608 = vrot.slane %v6538, 2
    %v6609 = vrot.slane %v6539, 2
    %v6610 = vsel %vm751, %v6608, %v6609
    %v6611 = vrot.slane %v6540, 2
    %v6612 = vrot.slane %v6541, 2
    %v6613 = vsel %vm751, %v6611, %v6612
    %v6614 = vrot.slane %v6542, 2
    %v6615 = vrot.slane %v6543, 2
    %v6616 = vsel %vm751, %v6614, %v6615
    %v6617 = vrot.slane %v6544, 2
    %v6618 = vrot.slane %v6545, 2
    %v6619 = vsel %vm751, %v6617, %v6618
    %v6620 = vrot.slane %v6546, 2
    %v6621 = vrot.slane %v6547, 2
    %v6622 = vsel %vm751, %v6620, %v6621
    %v6623 = vrot.slane %v6548, 2
    %v6624 = vrot.slane %v6549, 2
    %v6625 = vsel %vm751, %v6623, %v6624
    %v6626 = vrot.slane %v6550, 2
    %v6627 = vrot.slane %v6551, 2
    %v6628 = vsel %vm751, %v6626, %v6627
    %v6629 = vrot.slane %v6552, 2
    %v6630 = vrot.slane %v6553, 2
    %v6631 = vsel %vm751, %v6629, %v6630
    %v6632 = vrot.slane %v6554, 2
    %v6633 = vrot.slane %v6555, 2
    %v6634 = vsel %vm751, %v6632, %v6633
    %v6635 = vrot.slane %v6556, 2
    %v6636 = vrot.slane %v6557, 2
    %v6637 = vsel %vm751, %v6635, %v6636
    %v6654 = vadd.f32 %v6505, %v6592
    %v6655 = vadd.f32 %v6506, %v6595
    %v6656 = vadd.f32 %v6507, %v6598
    %v6657 = vadd.f32 %v6508, %v6601
    %v6658 = vadd.f32 %v6509, %v6604
    %v6659 = vadd.f32 %v6510, %v6607
    %v6660 = vadd.f32 %v6511, %v6610
    %v6661 = vadd.f32 %v6512, %v6613
    %v6662 = vadd.f32 %v6513, %v6616
    %v6663 = vadd.f32 %v6514, %v6619
    %v6664 = vadd.f32 %v6515, %v6622
    %v6665 = vadd.f32 %v6516, %v6625
    %v6666 = vadd.f32 %v6517, %v6628
    %v6667 = vadd.f32 %v6518, %v6631
    %v6668 = vadd.f32 %v6519, %v6634
    %v6669 = vadd.f32 %v6520, %v6637
    %v6670 = vld [vmem:[%s3 + $0x3] sm:$0x1]
    %v6671 = vlaneseq
    %v6672 = vshrl.u32 %v6671, 7
    %v6673 = vsub.s32 0, %v6672
    %v6674 = vrot.slane %v6670, %v6673
    %v6675 = vmul.f32 %v6303, %v6674
    %v6676 = vmul.f32 %v6304, %v6674
    %v6677 = vmul.f32 %v6305, %v6674
    %v6678 = vmul.f32 %v6306, %v6674
    %v6679 = vmul.f32 %v6307, %v6674
    %v6680 = vmul.f32 %v6308, %v6674
    %v6681 = vmul.f32 %v6309, %v6674
    %v6682 = vmul.f32 %v6310, %v6674
    %v6683 = vmul.f32 %v6311, %v6674
    %v6684 = vmul.f32 %v6312, %v6674
    %v6685 = vmul.f32 %v6313, %v6674
    %v6686 = vmul.f32 %v6314, %v6674
    %v6687 = vmul.f32 %v6315, %v6674
    %v6688 = vmul.f32 %v6316, %v6674
    %v6689 = vmul.f32 %v6317, %v6674
    %v6690 = vmul.f32 %v6318, %v6674
    %v6691 = vmul.f32 %v6327, %v6674
    %v6692 = vmul.f32 %v6328, %v6674
    %v6693 = vmul.f32 %v6329, %v6674
    %v6694 = vmul.f32 %v6330, %v6674
    %v6695 = vmul.f32 %v6331, %v6674
    %v6696 = vmul.f32 %v6332, %v6674
    %v6697 = vmul.f32 %v6333, %v6674
    %v6698 = vmul.f32 %v6334, %v6674
    %v6699 = vmul.f32 %v6335, %v6674
    %v6700 = vmul.f32 %v6336, %v6674
    %v6701 = vmul.f32 %v6337, %v6674
    %v6702 = vmul.f32 %v6338, %v6674
    %v6703 = vmul.f32 %v6339, %v6674
    %v6704 = vmul.f32 %v6340, %v6674
    %v6705 = vmul.f32 %v6341, %v6674
    %v6706 = vmul.f32 %v6342, %v6674
    %v6739 = vrot.slane %v6675, 3
    %v6740 = vrot.slane %v6676, 3
    %v6741 = vsel %vm1021, %v6739, %v6740
    %v6742 = vrot.slane %v6677, 3
    %v6743 = vrot.slane %v6678, 3
    %v6744 = vsel %vm1021, %v6742, %v6743
    %v6745 = vrot.slane %v6679, 3
    %v6746 = vrot.slane %v6680, 3
    %v6747 = vsel %vm1021, %v6745, %v6746
    %v6748 = vrot.slane %v6681, 3
    %v6749 = vrot.slane %v6682, 3
    %v6750 = vsel %vm1021, %v6748, %v6749
    %v6751 = vrot.slane %v6683, 3
    %v6752 = vrot.slane %v6684, 3
    %v6753 = vsel %vm1021, %v6751, %v6752
    %v6754 = vrot.slane %v6685, 3
    %v6755 = vrot.slane %v6686, 3
    %v6756 = vsel %vm1021, %v6754, %v6755
    %v6757 = vrot.slane %v6687, 3
    %v6758 = vrot.slane %v6688, 3
    %v6759 = vsel %vm1021, %v6757, %v6758
    %v6760 = vrot.slane %v6689, 3
    %v6761 = vrot.slane %v6690, 3
    %v6762 = vsel %vm1021, %v6760, %v6761
    %v6763 = vrot.slane %v6691, 3
    %v6764 = vrot.slane %v6692, 3
    %v6765 = vsel %vm1021, %v6763, %v6764
    %v6766 = vrot.slane %v6693, 3
    %v6767 = vrot.slane %v6694, 3
    %v6768 = vsel %vm1021, %v6766, %v6767
    %v6769 = vrot.slane %v6695, 3
    %v6770 = vrot.slane %v6696, 3
    %v6771 = vsel %vm1021, %v6769, %v6770
    %v6772 = vrot.slane %v6697, 3
    %v6773 = vrot.slane %v6698, 3
    %v6774 = vsel %vm1021, %v6772, %v6773
    %v6775 = vrot.slane %v6699, 3
    %v6776 = vrot.slane %v6700, 3
    %v6777 = vsel %vm1021, %v6775, %v6776
    %v6778 = vrot.slane %v6701, 3
    %v6779 = vrot.slane %v6702, 3
    %v6780 = vsel %vm1021, %v6778, %v6779
    %v6781 = vrot.slane %v6703, 3
    %v6782 = vrot.slane %v6704, 3
    %v6783 = vsel %vm1021, %v6781, %v6782
    %v6784 = vrot.slane %v6705, 3
    %v6785 = vrot.slane %v6706, 3
    %v6786 = vsel %vm1021, %v6784, %v6785
    %v6803 = vadd.f32 %v6654, %v6741
    %v6804 = vadd.f32 %v6655, %v6744
    %v6805 = vadd.f32 %v6656, %v6747
    %v6806 = vadd.f32 %v6657, %v6750
    %v6807 = vadd.f32 %v6658, %v6753
    %v6808 = vadd.f32 %v6659, %v6756
    %v6809 = vadd.f32 %v6660, %v6759
    %v6810 = vadd.f32 %v6661, %v6762
    %v6811 = vadd.f32 %v6662, %v6765
    %v6812 = vadd.f32 %v6663, %v6768
    %v6813 = vadd.f32 %v6664, %v6771
    %v6814 = vadd.f32 %v6665, %v6774
    %v6815 = vadd.f32 %v6666, %v6777
    %v6816 = vadd.f32 %v6667, %v6780
    %v6817 = vadd.f32 %v6668, %v6783
    %v6818 = vadd.f32 %v6669, %v6786
    %v6819 = vld [vmem:[%s3 + $0x4] sm:$0x1]
    %v6820 = vlaneseq
    %v6821 = vshrl.u32 %v6820, 7
    %v6822 = vsub.s32 0, %v6821
    %v6823 = vrot.slane %v6819, %v6822
    %v6824 = vmul.f32 %v6303, %v6823
    %v6825 = vmul.f32 %v6304, %v6823
    %v6826 = vmul.f32 %v6305, %v6823
    %v6827 = vmul.f32 %v6306, %v6823
    %v6828 = vmul.f32 %v6307, %v6823
    %v6829 = vmul.f32 %v6308, %v6823
    %v6830 = vmul.f32 %v6309, %v6823
    %v6831 = vmul.f32 %v6310, %v6823
    %v6832 = vmul.f32 %v6311, %v6823
    %v6833 = vmul.f32 %v6312, %v6823
    %v6834 = vmul.f32 %v6313, %v6823
    %v6835 = vmul.f32 %v6314, %v6823
    %v6836 = vmul.f32 %v6315, %v6823
    %v6837 = vmul.f32 %v6316, %v6823
    %v6838 = vmul.f32 %v6317, %v6823
    %v6839 = vmul.f32 %v6318, %v6823
    %v6840 = vmul.f32 %v6327, %v6823
    %v6841 = vmul.f32 %v6328, %v6823
    %v6842 = vmul.f32 %v6329, %v6823
    %v6843 = vmul.f32 %v6330, %v6823
    %v6844 = vmul.f32 %v6331, %v6823
    %v6845 = vmul.f32 %v6332, %v6823
    %v6846 = vmul.f32 %v6333, %v6823
    %v6847 = vmul.f32 %v6334, %v6823
    %v6848 = vmul.f32 %v6335, %v6823
    %v6849 = vmul.f32 %v6336, %v6823
    %v6850 = vmul.f32 %v6337, %v6823
    %v6851 = vmul.f32 %v6338, %v6823
    %v6852 = vmul.f32 %v6339, %v6823
    %v6853 = vmul.f32 %v6340, %v6823
    %v6854 = vmul.f32 %v6341, %v6823
    %v6855 = vmul.f32 %v6342, %v6823
    %v6888 = vrot.slane %v6824, 4
    %v6889 = vrot.slane %v6825, 4
    %v6890 = vsel %vm1291, %v6888, %v6889
    %v6891 = vrot.slane %v6826, 4
    %v6892 = vrot.slane %v6827, 4
    %v6893 = vsel %vm1291, %v6891, %v6892
    %v6894 = vrot.slane %v6828, 4
    %v6895 = vrot.slane %v6829, 4
    %v6896 = vsel %vm1291, %v6894, %v6895
    %v6897 = vrot.slane %v6830, 4
    %v6898 = vrot.slane %v6831, 4
    %v6899 = vsel %vm1291, %v6897, %v6898
    %v6900 = vrot.slane %v6832, 4
    %v6901 = vrot.slane %v6833, 4
    %v6902 = vsel %vm1291, %v6900, %v6901
    %v6903 = vrot.slane %v6834, 4
    %v6904 = vrot.slane %v6835, 4
    %v6905 = vsel %vm1291, %v6903, %v6904
    %v6906 = vrot.slane %v6836, 4
    %v6907 = vrot.slane %v6837, 4
    %v6908 = vsel %vm1291, %v6906, %v6907
    %v6909 = vrot.slane %v6838, 4
    %v6910 = vrot.slane %v6839, 4
    %v6911 = vsel %vm1291, %v6909, %v6910
    %v6912 = vrot.slane %v6840, 4
    %v6913 = vrot.slane %v6841, 4
    %v6914 = vsel %vm1291, %v6912, %v6913
    %v6915 = vrot.slane %v6842, 4
    %v6916 = vrot.slane %v6843, 4
    %v6917 = vsel %vm1291, %v6915, %v6916
    %v6918 = vrot.slane %v6844, 4
    %v6919 = vrot.slane %v6845, 4
    %v6920 = vsel %vm1291, %v6918, %v6919
    %v6921 = vrot.slane %v6846, 4
    %v6922 = vrot.slane %v6847, 4
    %v6923 = vsel %vm1291, %v6921, %v6922
    %v6924 = vrot.slane %v6848, 4
    %v6925 = vrot.slane %v6849, 4
    %v6926 = vsel %vm1291, %v6924, %v6925
    %v6927 = vrot.slane %v6850, 4
    %v6928 = vrot.slane %v6851, 4
    %v6929 = vsel %vm1291, %v6927, %v6928
    %v6930 = vrot.slane %v6852, 4
    %v6931 = vrot.slane %v6853, 4
    %v6932 = vsel %vm1291, %v6930, %v6931
    %v6933 = vrot.slane %v6854, 4
    %v6934 = vrot.slane %v6855, 4
    %v6935 = vsel %vm1291, %v6933, %v6934
    %v6952 = vadd.f32 %v6803, %v6890
    %v6953 = vadd.f32 %v6804, %v6893
    %v6954 = vadd.f32 %v6805, %v6896
    %v6955 = vadd.f32 %v6806, %v6899
    %v6956 = vadd.f32 %v6807, %v6902
    %v6957 = vadd.f32 %v6808, %v6905
    %v6958 = vadd.f32 %v6809, %v6908
    %v6959 = vadd.f32 %v6810, %v6911
    %v6960 = vadd.f32 %v6811, %v6914
    %v6961 = vadd.f32 %v6812, %v6917
    %v6962 = vadd.f32 %v6813, %v6920
    %v6963 = vadd.f32 %v6814, %v6923
    %v6964 = vadd.f32 %v6815, %v6926
    %v6965 = vadd.f32 %v6816, %v6929
    %v6966 = vadd.f32 %v6817, %v6932
    %v6967 = vadd.f32 %v6818, %v6935
    %v6968 = vld [vmem:[%s3 + $0x5] sm:$0x1]
    %v6969 = vlaneseq
    %v6970 = vshrl.u32 %v6969, 7
    %v6971 = vsub.s32 0, %v6970
    %v6972 = vrot.slane %v6968, %v6971
    %v6973 = vmul.f32 %v6305, %v6972
    %v6974 = vmul.f32 %v6307, %v6972
    %v6975 = vmul.f32 %v6309, %v6972
    %v6976 = vmul.f32 %v6311, %v6972
    %v6977 = vmul.f32 %v6313, %v6972
    %v6978 = vmul.f32 %v6315, %v6972
    %v6979 = vmul.f32 %v6317, %v6972
    %v6980 = vmul.f32 %v6319, %v6972
    %v6981 = vmul.f32 %v6329, %v6972
    %v6982 = vmul.f32 %v6331, %v6972
    %v6983 = vmul.f32 %v6333, %v6972
    %v6984 = vmul.f32 %v6335, %v6972
    %v6985 = vmul.f32 %v6337, %v6972
    %v6986 = vmul.f32 %v6339, %v6972
    %v6987 = vmul.f32 %v6341, %v6972
    %v6988 = vmul.f32 %v6343, %v6972
    %v6989 = vadd.f32 %v6952, %v6973
    %v6990 = vadd.f32 %v6953, %v6974
    %v6991 = vadd.f32 %v6954, %v6975
    %v6992 = vadd.f32 %v6955, %v6976
    %v6993 = vadd.f32 %v6956, %v6977
    %v6994 = vadd.f32 %v6957, %v6978
    %v6995 = vadd.f32 %v6958, %v6979
    %v6996 = vadd.f32 %v6959, %v6980
    %v6997 = vadd.f32 %v6960, %v6981
    %v6998 = vadd.f32 %v6961, %v6982
    %v6999 = vadd.f32 %v6962, %v6983
    %v7000 = vadd.f32 %v6963, %v6984
    %v7001 = vadd.f32 %v6964, %v6985
    %v7002 = vadd.f32 %v6965, %v6986
    %v7003 = vadd.f32 %v6966, %v6987
    %v7004 = vadd.f32 %v6967, %v6988
    %v7005 = vld [vmem:[%s3 + $0x6] sm:$0x1]
    %v7006 = vlaneseq
    %v7007 = vshrl.u32 %v7006, 7
    %v7008 = vsub.s32 0, %v7007
    %v7009 = vrot.slane %v7005, %v7008
    %v7010 = vmul.f32 %v6305, %v7009
    %v7011 = vmul.f32 %v6306, %v7009
    %v7012 = vmul.f32 %v6307, %v7009
    %v7013 = vmul.f32 %v6308, %v7009
    %v7014 = vmul.f32 %v6309, %v7009
    %v7015 = vmul.f32 %v6310, %v7009
    %v7016 = vmul.f32 %v6311, %v7009
    %v7017 = vmul.f32 %v6312, %v7009
    %v7018 = vmul.f32 %v6313, %v7009
    %v7019 = vmul.f32 %v6314, %v7009
    %v7020 = vmul.f32 %v6315, %v7009
    %v7021 = vmul.f32 %v6316, %v7009
    %v7022 = vmul.f32 %v6317, %v7009
    %v7023 = vmul.f32 %v6318, %v7009
    %v7024 = vmul.f32 %v6319, %v7009
    %v7025 = vmul.f32 %v6320, %v7009
    %v7026 = vmul.f32 %v6329, %v7009
    %v7027 = vmul.f32 %v6330, %v7009
    %v7028 = vmul.f32 %v6331, %v7009
    %v7029 = vmul.f32 %v6332, %v7009
    %v7030 = vmul.f32 %v6333, %v7009
    %v7031 = vmul.f32 %v6334, %v7009
    %v7032 = vmul.f32 %v6335, %v7009
    %v7033 = vmul.f32 %v6336, %v7009
    %v7034 = vmul.f32 %v6337, %v7009
    %v7035 = vmul.f32 %v6338, %v7009
    %v7036 = vmul.f32 %v6339, %v7009
    %v7037 = vmul.f32 %v6340, %v7009
    %v7038 = vmul.f32 %v6341, %v7009
    %v7039 = vmul.f32 %v6342, %v7009
    %v7040 = vmul.f32 %v6343, %v7009
    %v7041 = vmul.f32 %v6344, %v7009
    %v7074 = vrot.slane %v7010, 1
    %v7075 = vrot.slane %v7011, 1
    %v7076 = vsel %vm481, %v7074, %v7075
    %v7077 = vrot.slane %v7012, 1
    %v7078 = vrot.slane %v7013, 1
    %v7079 = vsel %vm481, %v7077, %v7078
    %v7080 = vrot.slane %v7014, 1
    %v7081 = vrot.slane %v7015, 1
    %v7082 = vsel %vm481, %v7080, %v7081
    %v7083 = vrot.slane %v7016, 1
    %v7084 = vrot.slane %v7017, 1
    %v7085 = vsel %vm481, %v7083, %v7084
    %v7086 = vrot.slane %v7018, 1
    %v7087 = vrot.slane %v7019, 1
    %v7088 = vsel %vm481, %v7086, %v7087
    %v7089 = vrot.slane %v7020, 1
    %v7090 = vrot.slane %v7021, 1
    %v7091 = vsel %vm481, %v7089, %v7090
    %v7092 = vrot.slane %v7022, 1
    %v7093 = vrot.slane %v7023, 1
    %v7094 = vsel %vm481, %v7092, %v7093
    %v7095 = vrot.slane %v7024, 1
    %v7096 = vrot.slane %v7025, 1
    %v7097 = vsel %vm481, %v7095, %v7096
    %v7098 = vrot.slane %v7026, 1
    %v7099 = vrot.slane %v7027, 1
    %v7100 = vsel %vm481, %v7098, %v7099
    %v7101 = vrot.slane %v7028, 1
    %v7102 = vrot.slane %v7029, 1
    %v7103 = vsel %vm481, %v7101, %v7102
    %v7104 = vrot.slane %v7030, 1
    %v7105 = vrot.slane %v7031, 1
    %v7106 = vsel %vm481, %v7104, %v7105
    %v7107 = vrot.slane %v7032, 1
    %v7108 = vrot.slane %v7033, 1
    %v7109 = vsel %vm481, %v7107, %v7108
    %v7110 = vrot.slane %v7034, 1
    %v7111 = vrot.slane %v7035, 1
    %v7112 = vsel %vm481, %v7110, %v7111
    %v7113 = vrot.slane %v7036, 1
    %v7114 = vrot.slane %v7037, 1
    %v7115 = vsel %vm481, %v7113, %v7114
    %v7116 = vrot.slane %v7038, 1
    %v7117 = vrot.slane %v7039, 1
    %v7118 = vsel %vm481, %v7116, %v7117
    %v7119 = vrot.slane %v7040, 1
    %v7120 = vrot.slane %v7041, 1
    %v7121 = vsel %vm481, %v7119, %v7120
    %v7138 = vadd.f32 %v6989, %v7076
    %v7139 = vadd.f32 %v6990, %v7079
    %v7140 = vadd.f32 %v6991, %v7082
    %v7141 = vadd.f32 %v6992, %v7085
    %v7142 = vadd.f32 %v6993, %v7088
    %v7143 = vadd.f32 %v6994, %v7091
    %v7144 = vadd.f32 %v6995, %v7094
    %v7145 = vadd.f32 %v6996, %v7097
    %v7146 = vadd.f32 %v6997, %v7100
    %v7147 = vadd.f32 %v6998, %v7103
    %v7148 = vadd.f32 %v6999, %v7106
    %v7149 = vadd.f32 %v7000, %v7109
    %v7150 = vadd.f32 %v7001, %v7112
    %v7151 = vadd.f32 %v7002, %v7115
    %v7152 = vadd.f32 %v7003, %v7118
    %v7153 = vadd.f32 %v7004, %v7121
    %v7154 = vld [vmem:[%s3 + $0x7] sm:$0x1]
    %v7155 = vlaneseq
    %v7156 = vshrl.u32 %v7155, 7
    %v7157 = vsub.s32 0, %v7156
    %v7158 = vrot.slane %v7154, %v7157
    %v7159 = vmul.f32 %v6305, %v7158
    %v7160 = vmul.f32 %v6306, %v7158
    %v7161 = vmul.f32 %v6307, %v7158
    %v7162 = vmul.f32 %v6308, %v7158
    %v7163 = vmul.f32 %v6309, %v7158
    %v7164 = vmul.f32 %v6310, %v7158
    %v7165 = vmul.f32 %v6311, %v7158
    %v7166 = vmul.f32 %v6312, %v7158
    %v7167 = vmul.f32 %v6313, %v7158
    %v7168 = vmul.f32 %v6314, %v7158
    %v7169 = vmul.f32 %v6315, %v7158
    %v7170 = vmul.f32 %v6316, %v7158
    %v7171 = vmul.f32 %v6317, %v7158
    %v7172 = vmul.f32 %v6318, %v7158
    %v7173 = vmul.f32 %v6319, %v7158
    %v7174 = vmul.f32 %v6320, %v7158
    %v7175 = vmul.f32 %v6329, %v7158
    %v7176 = vmul.f32 %v6330, %v7158
    %v7177 = vmul.f32 %v6331, %v7158
    %v7178 = vmul.f32 %v6332, %v7158
    %v7179 = vmul.f32 %v6333, %v7158
    %v7180 = vmul.f32 %v6334, %v7158
    %v7181 = vmul.f32 %v6335, %v7158
    %v7182 = vmul.f32 %v6336, %v7158
    %v7183 = vmul.f32 %v6337, %v7158
    %v7184 = vmul.f32 %v6338, %v7158
    %v7185 = vmul.f32 %v6339, %v7158
    %v7186 = vmul.f32 %v6340, %v7158
    %v7187 = vmul.f32 %v6341, %v7158
    %v7188 = vmul.f32 %v6342, %v7158
    %v7189 = vmul.f32 %v6343, %v7158
    %v7190 = vmul.f32 %v6344, %v7158
    %v7223 = vrot.slane %v7159, 2
    %v7224 = vrot.slane %v7160, 2
    %v7225 = vsel %vm751, %v7223, %v7224
    %v7226 = vrot.slane %v7161, 2
    %v7227 = vrot.slane %v7162, 2
    %v7228 = vsel %vm751, %v7226, %v7227
    %v7229 = vrot.slane %v7163, 2
    %v7230 = vrot.slane %v7164, 2
    %v7231 = vsel %vm751, %v7229, %v7230
    %v7232 = vrot.slane %v7165, 2
    %v7233 = vrot.slane %v7166, 2
    %v7234 = vsel %vm751, %v7232, %v7233
    %v7235 = vrot.slane %v7167, 2
    %v7236 = vrot.slane %v7168, 2
    %v7237 = vsel %vm751, %v7235, %v7236
    %v7238 = vrot.slane %v7169, 2
    %v7239 = vrot.slane %v7170, 2
    %v7240 = vsel %vm751, %v7238, %v7239
    %v7241 = vrot.slane %v7171, 2
    %v7242 = vrot.slane %v7172, 2
    %v7243 = vsel %vm751, %v7241, %v7242
    %v7244 = vrot.slane %v7173, 2
    %v7245 = vrot.slane %v7174, 2
    %v7246 = vsel %vm751, %v7244, %v7245
    %v7247 = vrot.slane %v7175, 2
    %v7248 = vrot.slane %v7176, 2
    %v7249 = vsel %vm751, %v7247, %v7248
    %v7250 = vrot.slane %v7177, 2
    %v7251 = vrot.slane %v7178, 2
    %v7252 = vsel %vm751, %v7250, %v7251
    %v7253 = vrot.slane %v7179, 2
    %v7254 = vrot.slane %v7180, 2
    %v7255 = vsel %vm751, %v7253, %v7254
    %v7256 = vrot.slane %v7181, 2
    %v7257 = vrot.slane %v7182, 2
    %v7258 = vsel %vm751, %v7256, %v7257
    %v7259 = vrot.slane %v7183, 2
    %v7260 = vrot.slane %v7184, 2
    %v7261 = vsel %vm751, %v7259, %v7260
    %v7262 = vrot.slane %v7185, 2
    %v7263 = vrot.slane %v7186, 2
    %v7264 = vsel %vm751, %v7262, %v7263
    %v7265 = vrot.slane %v7187, 2
    %v7266 = vrot.slane %v7188, 2
    %v7267 = vsel %vm751, %v7265, %v7266
    %v7268 = vrot.slane %v7189, 2
    %v7269 = vrot.slane %v7190, 2
    %v7270 = vsel %vm751, %v7268, %v7269
    %v7287 = vadd.f32 %v7138, %v7225
    %v7288 = vadd.f32 %v7139, %v7228
    %v7289 = vadd.f32 %v7140, %v7231
    %v7290 = vadd.f32 %v7141, %v7234
    %v7291 = vadd.f32 %v7142, %v7237
    %v7292 = vadd.f32 %v7143, %v7240
    %v7293 = vadd.f32 %v7144, %v7243
    %v7294 = vadd.f32 %v7145, %v7246
    %v7295 = vadd.f32 %v7146, %v7249
    %v7296 = vadd.f32 %v7147, %v7252
    %v7297 = vadd.f32 %v7148, %v7255
    %v7298 = vadd.f32 %v7149, %v7258
    %v7299 = vadd.f32 %v7150, %v7261
    %v7300 = vadd.f32 %v7151, %v7264
    %v7301 = vadd.f32 %v7152, %v7267
    %v7302 = vadd.f32 %v7153, %v7270
    %v7303 = vld [vmem:[%s3 + $0x8] sm:$0x1]
    %v7304 = vlaneseq
    %v7305 = vshrl.u32 %v7304, 7
    %v7306 = vsub.s32 0, %v7305
    %v7307 = vrot.slane %v7303, %v7306
    %v7308 = vmul.f32 %v6305, %v7307
    %v7309 = vmul.f32 %v6306, %v7307
    %v7310 = vmul.f32 %v6307, %v7307
    %v7311 = vmul.f32 %v6308, %v7307
    %v7312 = vmul.f32 %v6309, %v7307
    %v7313 = vmul.f32 %v6310, %v7307
    %v7314 = vmul.f32 %v6311, %v7307
    %v7315 = vmul.f32 %v6312, %v7307
    %v7316 = vmul.f32 %v6313, %v7307
    %v7317 = vmul.f32 %v6314, %v7307
    %v7318 = vmul.f32 %v6315, %v7307
    %v7319 = vmul.f32 %v6316, %v7307
    %v7320 = vmul.f32 %v6317, %v7307
    %v7321 = vmul.f32 %v6318, %v7307
    %v7322 = vmul.f32 %v6319, %v7307
    %v7323 = vmul.f32 %v6320, %v7307
    %v7324 = vmul.f32 %v6329, %v7307
    %v7325 = vmul.f32 %v6330, %v7307
    %v7326 = vmul.f32 %v6331, %v7307
    %v7327 = vmul.f32 %v6332, %v7307
    %v7328 = vmul.f32 %v6333, %v7307
    %v7329 = vmul.f32 %v6334, %v7307
    %v7330 = vmul.f32 %v6335, %v7307
    %v7331 = vmul.f32 %v6336, %v7307
    %v7332 = vmul.f32 %v6337, %v7307
    %v7333 = vmul.f32 %v6338, %v7307
    %v7334 = vmul.f32 %v6339, %v7307
    %v7335 = vmul.f32 %v6340, %v7307
    %v7336 = vmul.f32 %v6341, %v7307
    %v7337 = vmul.f32 %v6342, %v7307
    %v7338 = vmul.f32 %v6343, %v7307
    %v7339 = vmul.f32 %v6344, %v7307
    %v7372 = vrot.slane %v7308, 3
    %v7373 = vrot.slane %v7309, 3
    %v7374 = vsel %vm1021, %v7372, %v7373
    %v7375 = vrot.slane %v7310, 3
    %v7376 = vrot.slane %v7311, 3
    %v7377 = vsel %vm1021, %v7375, %v7376
    %v7378 = vrot.slane %v7312, 3
    %v7379 = vrot.slane %v7313, 3
    %v7380 = vsel %vm1021, %v7378, %v7379
    %v7381 = vrot.slane %v7314, 3
    %v7382 = vrot.slane %v7315, 3
    %v7383 = vsel %vm1021, %v7381, %v7382
    %v7384 = vrot.slane %v7316, 3
    %v7385 = vrot.slane %v7317, 3
    %v7386 = vsel %vm1021, %v7384, %v7385
    %v7387 = vrot.slane %v7318, 3
    %v7388 = vrot.slane %v7319, 3
    %v7389 = vsel %vm1021, %v7387, %v7388
    %v7390 = vrot.slane %v7320, 3
    %v7391 = vrot.slane %v7321, 3
    %v7392 = vsel %vm1021, %v7390, %v7391
    %v7393 = vrot.slane %v7322, 3
    %v7394 = vrot.slane %v7323, 3
    %v7395 = vsel %vm1021, %v7393, %v7394
    %v7396 = vrot.slane %v7324, 3
    %v7397 = vrot.slane %v7325, 3
    %v7398 = vsel %vm1021, %v7396, %v7397
    %v7399 = vrot.slane %v7326, 3
    %v7400 = vrot.slane %v7327, 3
    %v7401 = vsel %vm1021, %v7399, %v7400
    %v7402 = vrot.slane %v7328, 3
    %v7403 = vrot.slane %v7329, 3
    %v7404 = vsel %vm1021, %v7402, %v7403
    %v7405 = vrot.slane %v7330, 3
    %v7406 = vrot.slane %v7331, 3
    %v7407 = vsel %vm1021, %v7405, %v7406
    %v7408 = vrot.slane %v7332, 3
    %v7409 = vrot.slane %v7333, 3
    %v7410 = vsel %vm1021, %v7408, %v7409
    %v7411 = vrot.slane %v7334, 3
    %v7412 = vrot.slane %v7335, 3
    %v7413 = vsel %vm1021, %v7411, %v7412
    %v7414 = vrot.slane %v7336, 3
    %v7415 = vrot.slane %v7337, 3
    %v7416 = vsel %vm1021, %v7414, %v7415
    %v7417 = vrot.slane %v7338, 3
    %v7418 = vrot.slane %v7339, 3
    %v7419 = vsel %vm1021, %v7417, %v7418
    %v7436 = vadd.f32 %v7287, %v7374
    %v7437 = vadd.f32 %v7288, %v7377
    %v7438 = vadd.f32 %v7289, %v7380
    %v7439 = vadd.f32 %v7290, %v7383
    %v7440 = vadd.f32 %v7291, %v7386
    %v7441 = vadd.f32 %v7292, %v7389
    %v7442 = vadd.f32 %v7293, %v7392
    %v7443 = vadd.f32 %v7294, %v7395
    %v7444 = vadd.f32 %v7295, %v7398
    %v7445 = vadd.f32 %v7296, %v7401
    %v7446 = vadd.f32 %v7297, %v7404
    %v7447 = vadd.f32 %v7298, %v7407
    %v7448 = vadd.f32 %v7299, %v7410
    %v7449 = vadd.f32 %v7300, %v7413
    %v7450 = vadd.f32 %v7301, %v7416
    %v7451 = vadd.f32 %v7302, %v7419
    %v7452 = vld [vmem:[%s3 + $0x9] sm:$0x1]
    %v7453 = vlaneseq
    %v7454 = vshrl.u32 %v7453, 7
    %v7455 = vsub.s32 0, %v7454
    %v7456 = vrot.slane %v7452, %v7455
    %v7457 = vmul.f32 %v6305, %v7456
    %v7458 = vmul.f32 %v6306, %v7456
    %v7459 = vmul.f32 %v6307, %v7456
    %v7460 = vmul.f32 %v6308, %v7456
    %v7461 = vmul.f32 %v6309, %v7456
    %v7462 = vmul.f32 %v6310, %v7456
    %v7463 = vmul.f32 %v6311, %v7456
    %v7464 = vmul.f32 %v6312, %v7456
    %v7465 = vmul.f32 %v6313, %v7456
    %v7466 = vmul.f32 %v6314, %v7456
    %v7467 = vmul.f32 %v6315, %v7456
    %v7468 = vmul.f32 %v6316, %v7456
    %v7469 = vmul.f32 %v6317, %v7456
    %v7470 = vmul.f32 %v6318, %v7456
    %v7471 = vmul.f32 %v6319, %v7456
    %v7472 = vmul.f32 %v6320, %v7456
    %v7473 = vmul.f32 %v6329, %v7456
    %v7474 = vmul.f32 %v6330, %v7456
    %v7475 = vmul.f32 %v6331, %v7456
    %v7476 = vmul.f32 %v6332, %v7456
    %v7477 = vmul.f32 %v6333, %v7456
    %v7478 = vmul.f32 %v6334, %v7456
    %v7479 = vmul.f32 %v6335, %v7456
    %v7480 = vmul.f32 %v6336, %v7456
    %v7481 = vmul.f32 %v6337, %v7456
    %v7482 = vmul.f32 %v6338, %v7456
    %v7483 = vmul.f32 %v6339, %v7456
    %v7484 = vmul.f32 %v6340, %v7456
    %v7485 = vmul.f32 %v6341, %v7456
    %v7486 = vmul.f32 %v6342, %v7456
    %v7487 = vmul.f32 %v6343, %v7456
    %v7488 = vmul.f32 %v6344, %v7456
    %v7521 = vrot.slane %v7457, 4
    %v7522 = vrot.slane %v7458, 4
    %v7523 = vsel %vm1291, %v7521, %v7522
    %v7524 = vrot.slane %v7459, 4
    %v7525 = vrot.slane %v7460, 4
    %v7526 = vsel %vm1291, %v7524, %v7525
    %v7527 = vrot.slane %v7461, 4
    %v7528 = vrot.slane %v7462, 4
    %v7529 = vsel %vm1291, %v7527, %v7528
    %v7530 = vrot.slane %v7463, 4
    %v7531 = vrot.slane %v7464, 4
    %v7532 = vsel %vm1291, %v7530, %v7531
    %v7533 = vrot.slane %v7465, 4
    %v7534 = vrot.slane %v7466, 4
    %v7535 = vsel %vm1291, %v7533, %v7534
    %v7536 = vrot.slane %v7467, 4
    %v7537 = vrot.slane %v7468, 4
    %v7538 = vsel %vm1291, %v7536, %v7537
    %v7539 = vrot.slane %v7469, 4
    %v7540 = vrot.slane %v7470, 4
    %v7541 = vsel %vm1291, %v7539, %v7540
    %v7542 = vrot.slane %v7471, 4
    %v7543 = vrot.slane %v7472, 4
    %v7544 = vsel %vm1291, %v7542, %v7543
    %v7545 = vrot.slane %v7473, 4
    %v7546 = vrot.slane %v7474, 4
    %v7547 = vsel %vm1291, %v7545, %v7546
    %v7548 = vrot.slane %v7475, 4
    %v7549 = vrot.slane %v7476, 4
    %v7550 = vsel %vm1291, %v7548, %v7549
    %v7551 = vrot.slane %v7477, 4
    %v7552 = vrot.slane %v7478, 4
    %v7553 = vsel %vm1291, %v7551, %v7552
    %v7554 = vrot.slane %v7479, 4
    %v7555 = vrot.slane %v7480, 4
    %v7556 = vsel %vm1291, %v7554, %v7555
    %v7557 = vrot.slane %v7481, 4
    %v7558 = vrot.slane %v7482, 4
    %v7559 = vsel %vm1291, %v7557, %v7558
    %v7560 = vrot.slane %v7483, 4
    %v7561 = vrot.slane %v7484, 4
    %v7562 = vsel %vm1291, %v7560, %v7561
    %v7563 = vrot.slane %v7485, 4
    %v7564 = vrot.slane %v7486, 4
    %v7565 = vsel %vm1291, %v7563, %v7564
    %v7566 = vrot.slane %v7487, 4
    %v7567 = vrot.slane %v7488, 4
    %v7568 = vsel %vm1291, %v7566, %v7567
    %v7585 = vadd.f32 %v7436, %v7523
    %v7586 = vadd.f32 %v7437, %v7526
    %v7587 = vadd.f32 %v7438, %v7529
    %v7588 = vadd.f32 %v7439, %v7532
    %v7589 = vadd.f32 %v7440, %v7535
    %v7590 = vadd.f32 %v7441, %v7538
    %v7591 = vadd.f32 %v7442, %v7541
    %v7592 = vadd.f32 %v7443, %v7544
    %v7593 = vadd.f32 %v7444, %v7547
    %v7594 = vadd.f32 %v7445, %v7550
    %v7595 = vadd.f32 %v7446, %v7553
    %v7596 = vadd.f32 %v7447, %v7556
    %v7597 = vadd.f32 %v7448, %v7559
    %v7598 = vadd.f32 %v7449, %v7562
    %v7599 = vadd.f32 %v7450, %v7565
    %v7600 = vadd.f32 %v7451, %v7568
    %v7601 = vld [vmem:[%s3 + $0xa] sm:$0x1]
    %v7602 = vlaneseq
    %v7603 = vshrl.u32 %v7602, 7
    %v7604 = vsub.s32 0, %v7603
    %v7605 = vrot.slane %v7601, %v7604
    %v7606 = vmul.f32 %v6307, %v7605
    %v7607 = vmul.f32 %v6309, %v7605
    %v7608 = vmul.f32 %v6311, %v7605
    %v7609 = vmul.f32 %v6313, %v7605
    %v7610 = vmul.f32 %v6315, %v7605
    %v7611 = vmul.f32 %v6317, %v7605
    %v7612 = vmul.f32 %v6319, %v7605
    %v7613 = vmul.f32 %v6321, %v7605
    %v7614 = vmul.f32 %v6331, %v7605
    %v7615 = vmul.f32 %v6333, %v7605
    %v7616 = vmul.f32 %v6335, %v7605
    %v7617 = vmul.f32 %v6337, %v7605
    %v7618 = vmul.f32 %v6339, %v7605
    %v7619 = vmul.f32 %v6341, %v7605
    %v7620 = vmul.f32 %v6343, %v7605
    %v7621 = vmul.f32 %v6345, %v7605
    %v7622 = vadd.f32 %v7585, %v7606
    %v7623 = vadd.f32 %v7586, %v7607
    %v7624 = vadd.f32 %v7587, %v7608
    %v7625 = vadd.f32 %v7588, %v7609
    %v7626 = vadd.f32 %v7589, %v7610
    %v7627 = vadd.f32 %v7590, %v7611
    %v7628 = vadd.f32 %v7591, %v7612
    %v7629 = vadd.f32 %v7592, %v7613
    %v7630 = vadd.f32 %v7593, %v7614
    %v7631 = vadd.f32 %v7594, %v7615
    %v7632 = vadd.f32 %v7595, %v7616
    %v7633 = vadd.f32 %v7596, %v7617
    %v7634 = vadd.f32 %v7597, %v7618
    %v7635 = vadd.f32 %v7598, %v7619
    %v7636 = vadd.f32 %v7599, %v7620
    %v7637 = vadd.f32 %v7600, %v7621
    %v7638 = vld [vmem:[%s3 + $0xb] sm:$0x1]
    %v7639 = vlaneseq
    %v7640 = vshrl.u32 %v7639, 7
    %v7641 = vsub.s32 0, %v7640
    %v7642 = vrot.slane %v7638, %v7641
    %v7643 = vmul.f32 %v6307, %v7642
    %v7644 = vmul.f32 %v6308, %v7642
    %v7645 = vmul.f32 %v6309, %v7642
    %v7646 = vmul.f32 %v6310, %v7642
    %v7647 = vmul.f32 %v6311, %v7642
    %v7648 = vmul.f32 %v6312, %v7642
    %v7649 = vmul.f32 %v6313, %v7642
    %v7650 = vmul.f32 %v6314, %v7642
    %v7651 = vmul.f32 %v6315, %v7642
    %v7652 = vmul.f32 %v6316, %v7642
    %v7653 = vmul.f32 %v6317, %v7642
    %v7654 = vmul.f32 %v6318, %v7642
    %v7655 = vmul.f32 %v6319, %v7642
    %v7656 = vmul.f32 %v6320, %v7642
    %v7657 = vmul.f32 %v6321, %v7642
    %v7658 = vmul.f32 %v6322, %v7642
    %v7659 = vmul.f32 %v6331, %v7642
    %v7660 = vmul.f32 %v6332, %v7642
    %v7661 = vmul.f32 %v6333, %v7642
    %v7662 = vmul.f32 %v6334, %v7642
    %v7663 = vmul.f32 %v6335, %v7642
    %v7664 = vmul.f32 %v6336, %v7642
    %v7665 = vmul.f32 %v6337, %v7642
    %v7666 = vmul.f32 %v6338, %v7642
    %v7667 = vmul.f32 %v6339, %v7642
    %v7668 = vmul.f32 %v6340, %v7642
    %v7669 = vmul.f32 %v6341, %v7642
    %v7670 = vmul.f32 %v6342, %v7642
    %v7671 = vmul.f32 %v6343, %v7642
    %v7672 = vmul.f32 %v6344, %v7642
    %v7673 = vmul.f32 %v6345, %v7642
    %v7674 = vmul.f32 %v6346, %v7642
    %v7707 = vrot.slane %v7643, 1
    %v7708 = vrot.slane %v7644, 1
    %v7709 = vsel %vm481, %v7707, %v7708
    %v7710 = vrot.slane %v7645, 1
    %v7711 = vrot.slane %v7646, 1
    %v7712 = vsel %vm481, %v7710, %v7711
    %v7713 = vrot.slane %v7647, 1
    %v7714 = vrot.slane %v7648, 1
    %v7715 = vsel %vm481, %v7713, %v7714
    %v7716 = vrot.slane %v7649, 1
    %v7717 = vrot.slane %v7650, 1
    %v7718 = vsel %vm481, %v7716, %v7717
    %v7719 = vrot.slane %v7651, 1
    %v7720 = vrot.slane %v7652, 1
    %v7721 = vsel %vm481, %v7719, %v7720
    %v7722 = vrot.slane %v7653, 1
    %v7723 = vrot.slane %v7654, 1
    %v7724 = vsel %vm481, %v7722, %v7723
    %v7725 = vrot.slane %v7655, 1
    %v7726 = vrot.slane %v7656, 1
    %v7727 = vsel %vm481, %v7725, %v7726
    %v7728 = vrot.slane %v7657, 1
    %v7729 = vrot.slane %v7658, 1
    %v7730 = vsel %vm481, %v7728, %v7729
    %v7731 = vrot.slane %v7659, 1
    %v7732 = vrot.slane %v7660, 1
    %v7733 = vsel %vm481, %v7731, %v7732
    %v7734 = vrot.slane %v7661, 1
    %v7735 = vrot.slane %v7662, 1
    %v7736 = vsel %vm481, %v7734, %v7735
    %v7737 = vrot.slane %v7663, 1
    %v7738 = vrot.slane %v7664, 1
    %v7739 = vsel %vm481, %v7737, %v7738
    %v7740 = vrot.slane %v7665, 1
    %v7741 = vrot.slane %v7666, 1
    %v7742 = vsel %vm481, %v7740, %v7741
    %v7743 = vrot.slane %v7667, 1
    %v7744 = vrot.slane %v7668, 1
    %v7745 = vsel %vm481, %v7743, %v7744
    %v7746 = vrot.slane %v7669, 1
    %v7747 = vrot.slane %v7670, 1
    %v7748 = vsel %vm481, %v7746, %v7747
    %v7749 = vrot.slane %v7671, 1
    %v7750 = vrot.slane %v7672, 1
    %v7751 = vsel %vm481, %v7749, %v7750
    %v7752 = vrot.slane %v7673, 1
    %v7753 = vrot.slane %v7674, 1
    %v7754 = vsel %vm481, %v7752, %v7753
    %v7771 = vadd.f32 %v7622, %v7709
    %v7772 = vadd.f32 %v7623, %v7712
    %v7773 = vadd.f32 %v7624, %v7715
    %v7774 = vadd.f32 %v7625, %v7718
    %v7775 = vadd.f32 %v7626, %v7721
    %v7776 = vadd.f32 %v7627, %v7724
    %v7777 = vadd.f32 %v7628, %v7727
    %v7778 = vadd.f32 %v7629, %v7730
    %v7779 = vadd.f32 %v7630, %v7733
    %v7780 = vadd.f32 %v7631, %v7736
    %v7781 = vadd.f32 %v7632, %v7739
    %v7782 = vadd.f32 %v7633, %v7742
    %v7783 = vadd.f32 %v7634, %v7745
    %v7784 = vadd.f32 %v7635, %v7748
    %v7785 = vadd.f32 %v7636, %v7751
    %v7786 = vadd.f32 %v7637, %v7754
    %v7787 = vld [vmem:[%s3 + $0xc] sm:$0x1]
    %v7788 = vlaneseq
    %v7789 = vshrl.u32 %v7788, 7
    %v7790 = vsub.s32 0, %v7789
    %v7791 = vrot.slane %v7787, %v7790
    %v7792 = vmul.f32 %v6307, %v7791
    %v7793 = vmul.f32 %v6308, %v7791
    %v7794 = vmul.f32 %v6309, %v7791
    %v7795 = vmul.f32 %v6310, %v7791
    %v7796 = vmul.f32 %v6311, %v7791
    %v7797 = vmul.f32 %v6312, %v7791
    %v7798 = vmul.f32 %v6313, %v7791
    %v7799 = vmul.f32 %v6314, %v7791
    %v7800 = vmul.f32 %v6315, %v7791
    %v7801 = vmul.f32 %v6316, %v7791
    %v7802 = vmul.f32 %v6317, %v7791
    %v7803 = vmul.f32 %v6318, %v7791
    %v7804 = vmul.f32 %v6319, %v7791
    %v7805 = vmul.f32 %v6320, %v7791
    %v7806 = vmul.f32 %v6321, %v7791
    %v7807 = vmul.f32 %v6322, %v7791
    %v7808 = vmul.f32 %v6331, %v7791
    %v7809 = vmul.f32 %v6332, %v7791
    %v7810 = vmul.f32 %v6333, %v7791
    %v7811 = vmul.f32 %v6334, %v7791
    %v7812 = vmul.f32 %v6335, %v7791
    %v7813 = vmul.f32 %v6336, %v7791
    %v7814 = vmul.f32 %v6337, %v7791
    %v7815 = vmul.f32 %v6338, %v7791
    %v7816 = vmul.f32 %v6339, %v7791
    %v7817 = vmul.f32 %v6340, %v7791
    %v7818 = vmul.f32 %v6341, %v7791
    %v7819 = vmul.f32 %v6342, %v7791
    %v7820 = vmul.f32 %v6343, %v7791
    %v7821 = vmul.f32 %v6344, %v7791
    %v7822 = vmul.f32 %v6345, %v7791
    %v7823 = vmul.f32 %v6346, %v7791
    %v7856 = vrot.slane %v7792, 2
    %v7857 = vrot.slane %v7793, 2
    %v7858 = vsel %vm751, %v7856, %v7857
    %v7859 = vrot.slane %v7794, 2
    %v7860 = vrot.slane %v7795, 2
    %v7861 = vsel %vm751, %v7859, %v7860
    %v7862 = vrot.slane %v7796, 2
    %v7863 = vrot.slane %v7797, 2
    %v7864 = vsel %vm751, %v7862, %v7863
    %v7865 = vrot.slane %v7798, 2
    %v7866 = vrot.slane %v7799, 2
    %v7867 = vsel %vm751, %v7865, %v7866
    %v7868 = vrot.slane %v7800, 2
    %v7869 = vrot.slane %v7801, 2
    %v7870 = vsel %vm751, %v7868, %v7869
    %v7871 = vrot.slane %v7802, 2
    %v7872 = vrot.slane %v7803, 2
    %v7873 = vsel %vm751, %v7871, %v7872
    %v7874 = vrot.slane %v7804, 2
    %v7875 = vrot.slane %v7805, 2
    %v7876 = vsel %vm751, %v7874, %v7875
    %v7877 = vrot.slane %v7806, 2
    %v7878 = vrot.slane %v7807, 2
    %v7879 = vsel %vm751, %v7877, %v7878
    %v7880 = vrot.slane %v7808, 2
    %v7881 = vrot.slane %v7809, 2
    %v7882 = vsel %vm751, %v7880, %v7881
    %v7883 = vrot.slane %v7810, 2
    %v7884 = vrot.slane %v7811, 2
    %v7885 = vsel %vm751, %v7883, %v7884
    %v7886 = vrot.slane %v7812, 2
    %v7887 = vrot.slane %v7813, 2
    %v7888 = vsel %vm751, %v7886, %v7887
    %v7889 = vrot.slane %v7814, 2
    %v7890 = vrot.slane %v7815, 2
    %v7891 = vsel %vm751, %v7889, %v7890
    %v7892 = vrot.slane %v7816, 2
    %v7893 = vrot.slane %v7817, 2
    %v7894 = vsel %vm751, %v7892, %v7893
    %v7895 = vrot.slane %v7818, 2
    %v7896 = vrot.slane %v7819, 2
    %v7897 = vsel %vm751, %v7895, %v7896
    %v7898 = vrot.slane %v7820, 2
    %v7899 = vrot.slane %v7821, 2
    %v7900 = vsel %vm751, %v7898, %v7899
    %v7901 = vrot.slane %v7822, 2
    %v7902 = vrot.slane %v7823, 2
    %v7903 = vsel %vm751, %v7901, %v7902
    %v7920 = vadd.f32 %v7771, %v7858
    %v7921 = vadd.f32 %v7772, %v7861
    %v7922 = vadd.f32 %v7773, %v7864
    %v7923 = vadd.f32 %v7774, %v7867
    %v7924 = vadd.f32 %v7775, %v7870
    %v7925 = vadd.f32 %v7776, %v7873
    %v7926 = vadd.f32 %v7777, %v7876
    %v7927 = vadd.f32 %v7778, %v7879
    %v7928 = vadd.f32 %v7779, %v7882
    %v7929 = vadd.f32 %v7780, %v7885
    %v7930 = vadd.f32 %v7781, %v7888
    %v7931 = vadd.f32 %v7782, %v7891
    %v7932 = vadd.f32 %v7783, %v7894
    %v7933 = vadd.f32 %v7784, %v7897
    %v7934 = vadd.f32 %v7785, %v7900
    %v7935 = vadd.f32 %v7786, %v7903
    %v7936 = vld [vmem:[%s3 + $0xd] sm:$0x1]
    %v7937 = vlaneseq
    %v7938 = vshrl.u32 %v7937, 7
    %v7939 = vsub.s32 0, %v7938
    %v7940 = vrot.slane %v7936, %v7939
    %v7941 = vmul.f32 %v6307, %v7940
    %v7942 = vmul.f32 %v6308, %v7940
    %v7943 = vmul.f32 %v6309, %v7940
    %v7944 = vmul.f32 %v6310, %v7940
    %v7945 = vmul.f32 %v6311, %v7940
    %v7946 = vmul.f32 %v6312, %v7940
    %v7947 = vmul.f32 %v6313, %v7940
    %v7948 = vmul.f32 %v6314, %v7940
    %v7949 = vmul.f32 %v6315, %v7940
    %v7950 = vmul.f32 %v6316, %v7940
    %v7951 = vmul.f32 %v6317, %v7940
    %v7952 = vmul.f32 %v6318, %v7940
    %v7953 = vmul.f32 %v6319, %v7940
    %v7954 = vmul.f32 %v6320, %v7940
    %v7955 = vmul.f32 %v6321, %v7940
    %v7956 = vmul.f32 %v6322, %v7940
    %v7957 = vmul.f32 %v6331, %v7940
    %v7958 = vmul.f32 %v6332, %v7940
    %v7959 = vmul.f32 %v6333, %v7940
    %v7960 = vmul.f32 %v6334, %v7940
    %v7961 = vmul.f32 %v6335, %v7940
    %v7962 = vmul.f32 %v6336, %v7940
    %v7963 = vmul.f32 %v6337, %v7940
    %v7964 = vmul.f32 %v6338, %v7940
    %v7965 = vmul.f32 %v6339, %v7940
    %v7966 = vmul.f32 %v6340, %v7940
    %v7967 = vmul.f32 %v6341, %v7940
    %v7968 = vmul.f32 %v6342, %v7940
    %v7969 = vmul.f32 %v6343, %v7940
    %v7970 = vmul.f32 %v6344, %v7940
    %v7971 = vmul.f32 %v6345, %v7940
    %v7972 = vmul.f32 %v6346, %v7940
    %v8005 = vrot.slane %v7941, 3
    %v8006 = vrot.slane %v7942, 3
    %v8007 = vsel %vm1021, %v8005, %v8006
    %v8008 = vrot.slane %v7943, 3
    %v8009 = vrot.slane %v7944, 3
    %v8010 = vsel %vm1021, %v8008, %v8009
    %v8011 = vrot.slane %v7945, 3
    %v8012 = vrot.slane %v7946, 3
    %v8013 = vsel %vm1021, %v8011, %v8012
    %v8014 = vrot.slane %v7947, 3
    %v8015 = vrot.slane %v7948, 3
    %v8016 = vsel %vm1021, %v8014, %v8015
    %v8017 = vrot.slane %v7949, 3
    %v8018 = vrot.slane %v7950, 3
    %v8019 = vsel %vm1021, %v8017, %v8018
    %v8020 = vrot.slane %v7951, 3
    %v8021 = vrot.slane %v7952, 3
    %v8022 = vsel %vm1021, %v8020, %v8021
    %v8023 = vrot.slane %v7953, 3
    %v8024 = vrot.slane %v7954, 3
    %v8025 = vsel %vm1021, %v8023, %v8024
    %v8026 = vrot.slane %v7955, 3
    %v8027 = vrot.slane %v7956, 3
    %v8028 = vsel %vm1021, %v8026, %v8027
    %v8029 = vrot.slane %v7957, 3
    %v8030 = vrot.slane %v7958, 3
    %v8031 = vsel %vm1021, %v8029, %v8030
    %v8032 = vrot.slane %v7959, 3
    %v8033 = vrot.slane %v7960, 3
    %v8034 = vsel %vm1021, %v8032, %v8033
    %v8035 = vrot.slane %v7961, 3
    %v8036 = vrot.slane %v7962, 3
    %v8037 = vsel %vm1021, %v8035, %v8036
    %v8038 = vrot.slane %v7963, 3
    %v8039 = vrot.slane %v7964, 3
    %v8040 = vsel %vm1021, %v8038, %v8039
    %v8041 = vrot.slane %v7965, 3
    %v8042 = vrot.slane %v7966, 3
    %v8043 = vsel %vm1021, %v8041, %v8042
    %v8044 = vrot.slane %v7967, 3
    %v8045 = vrot.slane %v7968, 3
    %v8046 = vsel %vm1021, %v8044, %v8045
    %v8047 = vrot.slane %v7969, 3
    %v8048 = vrot.slane %v7970, 3
    %v8049 = vsel %vm1021, %v8047, %v8048
    %v8050 = vrot.slane %v7971, 3
    %v8051 = vrot.slane %v7972, 3
    %v8052 = vsel %vm1021, %v8050, %v8051
    %v8069 = vadd.f32 %v7920, %v8007
    %v8070 = vadd.f32 %v7921, %v8010
    %v8071 = vadd.f32 %v7922, %v8013
    %v8072 = vadd.f32 %v7923, %v8016
    %v8073 = vadd.f32 %v7924, %v8019
    %v8074 = vadd.f32 %v7925, %v8022
    %v8075 = vadd.f32 %v7926, %v8025
    %v8076 = vadd.f32 %v7927, %v8028
    %v8077 = vadd.f32 %v7928, %v8031
    %v8078 = vadd.f32 %v7929, %v8034
    %v8079 = vadd.f32 %v7930, %v8037
    %v8080 = vadd.f32 %v7931, %v8040
    %v8081 = vadd.f32 %v7932, %v8043
    %v8082 = vadd.f32 %v7933, %v8046
    %v8083 = vadd.f32 %v7934, %v8049
    %v8084 = vadd.f32 %v7935, %v8052
    %v8085 = vld [vmem:[%s3 + $0xe] sm:$0x1]
    %v8086 = vlaneseq
    %v8087 = vshrl.u32 %v8086, 7
    %v8088 = vsub.s32 0, %v8087
    %v8089 = vrot.slane %v8085, %v8088
    %v8090 = vmul.f32 %v6307, %v8089
    %v8091 = vmul.f32 %v6308, %v8089
    %v8092 = vmul.f32 %v6309, %v8089
    %v8093 = vmul.f32 %v6310, %v8089
    %v8094 = vmul.f32 %v6311, %v8089
    %v8095 = vmul.f32 %v6312, %v8089
    %v8096 = vmul.f32 %v6313, %v8089
    %v8097 = vmul.f32 %v6314, %v8089
    %v8098 = vmul.f32 %v6315, %v8089
    %v8099 = vmul.f32 %v6316, %v8089
    %v8100 = vmul.f32 %v6317, %v8089
    %v8101 = vmul.f32 %v6318, %v8089
    %v8102 = vmul.f32 %v6319, %v8089
    %v8103 = vmul.f32 %v6320, %v8089
    %v8104 = vmul.f32 %v6321, %v8089
    %v8105 = vmul.f32 %v6322, %v8089
    %v8106 = vmul.f32 %v6331, %v8089
    %v8107 = vmul.f32 %v6332, %v8089
    %v8108 = vmul.f32 %v6333, %v8089
    %v8109 = vmul.f32 %v6334, %v8089
    %v8110 = vmul.f32 %v6335, %v8089
    %v8111 = vmul.f32 %v6336, %v8089
    %v8112 = vmul.f32 %v6337, %v8089
    %v8113 = vmul.f32 %v6338, %v8089
    %v8114 = vmul.f32 %v6339, %v8089
    %v8115 = vmul.f32 %v6340, %v8089
    %v8116 = vmul.f32 %v6341, %v8089
    %v8117 = vmul.f32 %v6342, %v8089
    %v8118 = vmul.f32 %v6343, %v8089
    %v8119 = vmul.f32 %v6344, %v8089
    %v8120 = vmul.f32 %v6345, %v8089
    %v8121 = vmul.f32 %v6346, %v8089
    %v8154 = vrot.slane %v8090, 4
    %v8155 = vrot.slane %v8091, 4
    %v8156 = vsel %vm1291, %v8154, %v8155
    %v8157 = vrot.slane %v8092, 4
    %v8158 = vrot.slane %v8093, 4
    %v8159 = vsel %vm1291, %v8157, %v8158
    %v8160 = vrot.slane %v8094, 4
    %v8161 = vrot.slane %v8095, 4
    %v8162 = vsel %vm1291, %v8160, %v8161
    %v8163 = vrot.slane %v8096, 4
    %v8164 = vrot.slane %v8097, 4
    %v8165 = vsel %vm1291, %v8163, %v8164
    %v8166 = vrot.slane %v8098, 4
    %v8167 = vrot.slane %v8099, 4
    %v8168 = vsel %vm1291, %v8166, %v8167
    %v8169 = vrot.slane %v8100, 4
    %v8170 = vrot.slane %v8101, 4
    %v8171 = vsel %vm1291, %v8169, %v8170
    %v8172 = vrot.slane %v8102, 4
    %v8173 = vrot.slane %v8103, 4
    %v8174 = vsel %vm1291, %v8172, %v8173
    %v8175 = vrot.slane %v8104, 4
    %v8176 = vrot.slane %v8105, 4
    %v8177 = vsel %vm1291, %v8175, %v8176
    %v8178 = vrot.slane %v8106, 4
    %v8179 = vrot.slane %v8107, 4
    %v8180 = vsel %vm1291, %v8178, %v8179
    %v8181 = vrot.slane %v8108, 4
    %v8182 = vrot.slane %v8109, 4
    %v8183 = vsel %vm1291, %v8181, %v8182
    %v8184 = vrot.slane %v8110, 4
    %v8185 = vrot.slane %v8111, 4
    %v8186 = vsel %vm1291, %v8184, %v8185
    %v8187 = vrot.slane %v8112, 4
    %v8188 = vrot.slane %v8113, 4
    %v8189 = vsel %vm1291, %v8187, %v8188
    %v8190 = vrot.slane %v8114, 4
    %v8191 = vrot.slane %v8115, 4
    %v8192 = vsel %vm1291, %v8190, %v8191
    %v8193 = vrot.slane %v8116, 4
    %v8194 = vrot.slane %v8117, 4
    %v8195 = vsel %vm1291, %v8193, %v8194
    %v8196 = vrot.slane %v8118, 4
    %v8197 = vrot.slane %v8119, 4
    %v8198 = vsel %vm1291, %v8196, %v8197
    %v8199 = vrot.slane %v8120, 4
    %v8200 = vrot.slane %v8121, 4
    %v8201 = vsel %vm1291, %v8199, %v8200
    %v8218 = vadd.f32 %v8069, %v8156
    %v8219 = vadd.f32 %v8070, %v8159
    %v8220 = vadd.f32 %v8071, %v8162
    %v8221 = vadd.f32 %v8072, %v8165
    %v8222 = vadd.f32 %v8073, %v8168
    %v8223 = vadd.f32 %v8074, %v8171
    %v8224 = vadd.f32 %v8075, %v8174
    %v8225 = vadd.f32 %v8076, %v8177
    %v8226 = vadd.f32 %v8077, %v8180
    %v8227 = vadd.f32 %v8078, %v8183
    %v8228 = vadd.f32 %v8079, %v8186
    %v8229 = vadd.f32 %v8080, %v8189
    %v8230 = vadd.f32 %v8081, %v8192
    %v8231 = vadd.f32 %v8082, %v8195
    %v8232 = vadd.f32 %v8083, %v8198
    %v8233 = vadd.f32 %v8084, %v8201
    %v8234 = vld [vmem:[%s3 + $0xf] sm:$0x1]
    %v8235 = vlaneseq
    %v8236 = vshrl.u32 %v8235, 7
    %v8237 = vsub.s32 0, %v8236
    %v8238 = vrot.slane %v8234, %v8237
    %v8239 = vmul.f32 %v6309, %v8238
    %v8240 = vmul.f32 %v6311, %v8238
    %v8241 = vmul.f32 %v6313, %v8238
    %v8242 = vmul.f32 %v6315, %v8238
    %v8243 = vmul.f32 %v6317, %v8238
    %v8244 = vmul.f32 %v6319, %v8238
    %v8245 = vmul.f32 %v6321, %v8238
    %v8246 = vmul.f32 %v6323, %v8238
    %v8247 = vmul.f32 %v6333, %v8238
    %v8248 = vmul.f32 %v6335, %v8238
    %v8249 = vmul.f32 %v6337, %v8238
    %v8250 = vmul.f32 %v6339, %v8238
    %v8251 = vmul.f32 %v6341, %v8238
    %v8252 = vmul.f32 %v6343, %v8238
    %v8253 = vmul.f32 %v6345, %v8238
    %v8254 = vmul.f32 %v6347, %v8238
    %v8255 = vadd.f32 %v8218, %v8239
    %v8256 = vadd.f32 %v8219, %v8240
    %v8257 = vadd.f32 %v8220, %v8241
    %v8258 = vadd.f32 %v8221, %v8242
    %v8259 = vadd.f32 %v8222, %v8243
    %v8260 = vadd.f32 %v8223, %v8244
    %v8261 = vadd.f32 %v8224, %v8245
    %v8262 = vadd.f32 %v8225, %v8246
    %v8263 = vadd.f32 %v8226, %v8247
    %v8264 = vadd.f32 %v8227, %v8248
    %v8265 = vadd.f32 %v8228, %v8249
    %v8266 = vadd.f32 %v8229, %v8250
    %v8267 = vadd.f32 %v8230, %v8251
    %v8268 = vadd.f32 %v8231, %v8252
    %v8269 = vadd.f32 %v8232, %v8253
    %v8270 = vadd.f32 %v8233, %v8254
    %v8271 = vld [vmem:[%s3 + $0x10] sm:$0x1]
    %v8272 = vlaneseq
    %v8273 = vshrl.u32 %v8272, 7
    %v8274 = vsub.s32 0, %v8273
    %v8275 = vrot.slane %v8271, %v8274
    %v8276 = vmul.f32 %v6309, %v8275
    %v8277 = vmul.f32 %v6310, %v8275
    %v8278 = vmul.f32 %v6311, %v8275
    %v8279 = vmul.f32 %v6312, %v8275
    %v8280 = vmul.f32 %v6313, %v8275
    %v8281 = vmul.f32 %v6314, %v8275
    %v8282 = vmul.f32 %v6315, %v8275
    %v8283 = vmul.f32 %v6316, %v8275
    %v8284 = vmul.f32 %v6317, %v8275
    %v8285 = vmul.f32 %v6318, %v8275
    %v8286 = vmul.f32 %v6319, %v8275
    %v8287 = vmul.f32 %v6320, %v8275
    %v8288 = vmul.f32 %v6321, %v8275
    %v8289 = vmul.f32 %v6322, %v8275
    %v8290 = vmul.f32 %v6323, %v8275
    %v8291 = vmul.f32 %v6324, %v8275
    %v8292 = vmul.f32 %v6333, %v8275
    %v8293 = vmul.f32 %v6334, %v8275
    %v8294 = vmul.f32 %v6335, %v8275
    %v8295 = vmul.f32 %v6336, %v8275
    %v8296 = vmul.f32 %v6337, %v8275
    %v8297 = vmul.f32 %v6338, %v8275
    %v8298 = vmul.f32 %v6339, %v8275
    %v8299 = vmul.f32 %v6340, %v8275
    %v8300 = vmul.f32 %v6341, %v8275
    %v8301 = vmul.f32 %v6342, %v8275
    %v8302 = vmul.f32 %v6343, %v8275
    %v8303 = vmul.f32 %v6344, %v8275
    %v8304 = vmul.f32 %v6345, %v8275
    %v8305 = vmul.f32 %v6346, %v8275
    %v8306 = vmul.f32 %v6347, %v8275
    %v8307 = vmul.f32 %v6348, %v8275
    %v8340 = vrot.slane %v8276, 1
    %v8341 = vrot.slane %v8277, 1
    %v8342 = vsel %vm481, %v8340, %v8341
    %v8343 = vrot.slane %v8278, 1
    %v8344 = vrot.slane %v8279, 1
    %v8345 = vsel %vm481, %v8343, %v8344
    %v8346 = vrot.slane %v8280, 1
    %v8347 = vrot.slane %v8281, 1
    %v8348 = vsel %vm481, %v8346, %v8347
    %v8349 = vrot.slane %v8282, 1
    %v8350 = vrot.slane %v8283, 1
    %v8351 = vsel %vm481, %v8349, %v8350
    %v8352 = vrot.slane %v8284, 1
    %v8353 = vrot.slane %v8285, 1
    %v8354 = vsel %vm481, %v8352, %v8353
    %v8355 = vrot.slane %v8286, 1
    %v8356 = vrot.slane %v8287, 1
    %v8357 = vsel %vm481, %v8355, %v8356
    %v8358 = vrot.slane %v8288, 1
    %v8359 = vrot.slane %v8289, 1
    %v8360 = vsel %vm481, %v8358, %v8359
    %v8361 = vrot.slane %v8290, 1
    %v8362 = vrot.slane %v8291, 1
    %v8363 = vsel %vm481, %v8361, %v8362
    %v8364 = vrot.slane %v8292, 1
    %v8365 = vrot.slane %v8293, 1
    %v8366 = vsel %vm481, %v8364, %v8365
    %v8367 = vrot.slane %v8294, 1
    %v8368 = vrot.slane %v8295, 1
    %v8369 = vsel %vm481, %v8367, %v8368
    %v8370 = vrot.slane %v8296, 1
    %v8371 = vrot.slane %v8297, 1
    %v8372 = vsel %vm481, %v8370, %v8371
    %v8373 = vrot.slane %v8298, 1
    %v8374 = vrot.slane %v8299, 1
    %v8375 = vsel %vm481, %v8373, %v8374
    %v8376 = vrot.slane %v8300, 1
    %v8377 = vrot.slane %v8301, 1
    %v8378 = vsel %vm481, %v8376, %v8377
    %v8379 = vrot.slane %v8302, 1
    %v8380 = vrot.slane %v8303, 1
    %v8381 = vsel %vm481, %v8379, %v8380
    %v8382 = vrot.slane %v8304, 1
    %v8383 = vrot.slane %v8305, 1
    %v8384 = vsel %vm481, %v8382, %v8383
    %v8385 = vrot.slane %v8306, 1
    %v8386 = vrot.slane %v8307, 1
    %v8387 = vsel %vm481, %v8385, %v8386
    %v8404 = vadd.f32 %v8255, %v8342
    %v8405 = vadd.f32 %v8256, %v8345
    %v8406 = vadd.f32 %v8257, %v8348
    %v8407 = vadd.f32 %v8258, %v8351
    %v8408 = vadd.f32 %v8259, %v8354
    %v8409 = vadd.f32 %v8260, %v8357
    %v8410 = vadd.f32 %v8261, %v8360
    %v8411 = vadd.f32 %v8262, %v8363
    %v8412 = vadd.f32 %v8263, %v8366
    %v8413 = vadd.f32 %v8264, %v8369
    %v8414 = vadd.f32 %v8265, %v8372
    %v8415 = vadd.f32 %v8266, %v8375
    %v8416 = vadd.f32 %v8267, %v8378
    %v8417 = vadd.f32 %v8268, %v8381
    %v8418 = vadd.f32 %v8269, %v8384
    %v8419 = vadd.f32 %v8270, %v8387
    %v8420 = vld [vmem:[%s3 + $0x11] sm:$0x1]
    %v8421 = vlaneseq
    %v8422 = vshrl.u32 %v8421, 7
    %v8423 = vsub.s32 0, %v8422
    %v8424 = vrot.slane %v8420, %v8423
    %v8425 = vmul.f32 %v6309, %v8424
    %v8426 = vmul.f32 %v6310, %v8424
    %v8427 = vmul.f32 %v6311, %v8424
    %v8428 = vmul.f32 %v6312, %v8424
    %v8429 = vmul.f32 %v6313, %v8424
    %v8430 = vmul.f32 %v6314, %v8424
    %v8431 = vmul.f32 %v6315, %v8424
    %v8432 = vmul.f32 %v6316, %v8424
    %v8433 = vmul.f32 %v6317, %v8424
    %v8434 = vmul.f32 %v6318, %v8424
    %v8435 = vmul.f32 %v6319, %v8424
    %v8436 = vmul.f32 %v6320, %v8424
    %v8437 = vmul.f32 %v6321, %v8424
    %v8438 = vmul.f32 %v6322, %v8424
    %v8439 = vmul.f32 %v6323, %v8424
    %v8440 = vmul.f32 %v6324, %v8424
    %v8441 = vmul.f32 %v6333, %v8424
    %v8442 = vmul.f32 %v6334, %v8424
    %v8443 = vmul.f32 %v6335, %v8424
    %v8444 = vmul.f32 %v6336, %v8424
    %v8445 = vmul.f32 %v6337, %v8424
    %v8446 = vmul.f32 %v6338, %v8424
    %v8447 = vmul.f32 %v6339, %v8424
    %v8448 = vmul.f32 %v6340, %v8424
    %v8449 = vmul.f32 %v6341, %v8424
    %v8450 = vmul.f32 %v6342, %v8424
    %v8451 = vmul.f32 %v6343, %v8424
    %v8452 = vmul.f32 %v6344, %v8424
    %v8453 = vmul.f32 %v6345, %v8424
    %v8454 = vmul.f32 %v6346, %v8424
    %v8455 = vmul.f32 %v6347, %v8424
    %v8456 = vmul.f32 %v6348, %v8424
    %v8489 = vrot.slane %v8425, 2
    %v8490 = vrot.slane %v8426, 2
    %v8491 = vsel %vm751, %v8489, %v8490
    %v8492 = vrot.slane %v8427, 2
    %v8493 = vrot.slane %v8428, 2
    %v8494 = vsel %vm751, %v8492, %v8493
    %v8495 = vrot.slane %v8429, 2
    %v8496 = vrot.slane %v8430, 2
    %v8497 = vsel %vm751, %v8495, %v8496
    %v8498 = vrot.slane %v8431, 2
    %v8499 = vrot.slane %v8432, 2
    %v8500 = vsel %vm751, %v8498, %v8499
    %v8501 = vrot.slane %v8433, 2
    %v8502 = vrot.slane %v8434, 2
    %v8503 = vsel %vm751, %v8501, %v8502
    %v8504 = vrot.slane %v8435, 2
    %v8505 = vrot.slane %v8436, 2
    %v8506 = vsel %vm751, %v8504, %v8505
    %v8507 = vrot.slane %v8437, 2
    %v8508 = vrot.slane %v8438, 2
    %v8509 = vsel %vm751, %v8507, %v8508
    %v8510 = vrot.slane %v8439, 2
    %v8511 = vrot.slane %v8440, 2
    %v8512 = vsel %vm751, %v8510, %v8511
    %v8513 = vrot.slane %v8441, 2
    %v8514 = vrot.slane %v8442, 2
    %v8515 = vsel %vm751, %v8513, %v8514
    %v8516 = vrot.slane %v8443, 2
    %v8517 = vrot.slane %v8444, 2
    %v8518 = vsel %vm751, %v8516, %v8517
    %v8519 = vrot.slane %v8445, 2
    %v8520 = vrot.slane %v8446, 2
    %v8521 = vsel %vm751, %v8519, %v8520
    %v8522 = vrot.slane %v8447, 2
    %v8523 = vrot.slane %v8448, 2
    %v8524 = vsel %vm751, %v8522, %v8523
    %v8525 = vrot.slane %v8449, 2
    %v8526 = vrot.slane %v8450, 2
    %v8527 = vsel %vm751, %v8525, %v8526
    %v8528 = vrot.slane %v8451, 2
    %v8529 = vrot.slane %v8452, 2
    %v8530 = vsel %vm751, %v8528, %v8529
    %v8531 = vrot.slane %v8453, 2
    %v8532 = vrot.slane %v8454, 2
    %v8533 = vsel %vm751, %v8531, %v8532
    %v8534 = vrot.slane %v8455, 2
    %v8535 = vrot.slane %v8456, 2
    %v8536 = vsel %vm751, %v8534, %v8535
    %v8553 = vadd.f32 %v8404, %v8491
    %v8554 = vadd.f32 %v8405, %v8494
    %v8555 = vadd.f32 %v8406, %v8497
    %v8556 = vadd.f32 %v8407, %v8500
    %v8557 = vadd.f32 %v8408, %v8503
    %v8558 = vadd.f32 %v8409, %v8506
    %v8559 = vadd.f32 %v8410, %v8509
    %v8560 = vadd.f32 %v8411, %v8512
    %v8561 = vadd.f32 %v8412, %v8515
    %v8562 = vadd.f32 %v8413, %v8518
    %v8563 = vadd.f32 %v8414, %v8521
    %v8564 = vadd.f32 %v8415, %v8524
    %v8565 = vadd.f32 %v8416, %v8527
    %v8566 = vadd.f32 %v8417, %v8530
    %v8567 = vadd.f32 %v8418, %v8533
    %v8568 = vadd.f32 %v8419, %v8536
    %v8569 = vld [vmem:[%s3 + $0x12] sm:$0x1]
    %v8570 = vlaneseq
    %v8571 = vshrl.u32 %v8570, 7
    %v8572 = vsub.s32 0, %v8571
    %v8573 = vrot.slane %v8569, %v8572
    %v8574 = vmul.f32 %v6309, %v8573
    %v8575 = vmul.f32 %v6310, %v8573
    %v8576 = vmul.f32 %v6311, %v8573
    %v8577 = vmul.f32 %v6312, %v8573
    %v8578 = vmul.f32 %v6313, %v8573
    %v8579 = vmul.f32 %v6314, %v8573
    %v8580 = vmul.f32 %v6315, %v8573
    %v8581 = vmul.f32 %v6316, %v8573
    %v8582 = vmul.f32 %v6317, %v8573
    %v8583 = vmul.f32 %v6318, %v8573
    %v8584 = vmul.f32 %v6319, %v8573
    %v8585 = vmul.f32 %v6320, %v8573
    %v8586 = vmul.f32 %v6321, %v8573
    %v8587 = vmul.f32 %v6322, %v8573
    %v8588 = vmul.f32 %v6323, %v8573
    %v8589 = vmul.f32 %v6324, %v8573
    %v8590 = vmul.f32 %v6333, %v8573
    %v8591 = vmul.f32 %v6334, %v8573
    %v8592 = vmul.f32 %v6335, %v8573
    %v8593 = vmul.f32 %v6336, %v8573
    %v8594 = vmul.f32 %v6337, %v8573
    %v8595 = vmul.f32 %v6338, %v8573
    %v8596 = vmul.f32 %v6339, %v8573
    %v8597 = vmul.f32 %v6340, %v8573
    %v8598 = vmul.f32 %v6341, %v8573
    %v8599 = vmul.f32 %v6342, %v8573
    %v8600 = vmul.f32 %v6343, %v8573
    %v8601 = vmul.f32 %v6344, %v8573
    %v8602 = vmul.f32 %v6345, %v8573
    %v8603 = vmul.f32 %v6346, %v8573
    %v8604 = vmul.f32 %v6347, %v8573
    %v8605 = vmul.f32 %v6348, %v8573
    %v8638 = vrot.slane %v8574, 3
    %v8639 = vrot.slane %v8575, 3
    %v8640 = vsel %vm1021, %v8638, %v8639
    %v8641 = vrot.slane %v8576, 3
    %v8642 = vrot.slane %v8577, 3
    %v8643 = vsel %vm1021, %v8641, %v8642
    %v8644 = vrot.slane %v8578, 3
    %v8645 = vrot.slane %v8579, 3
    %v8646 = vsel %vm1021, %v8644, %v8645
    %v8647 = vrot.slane %v8580, 3
    %v8648 = vrot.slane %v8581, 3
    %v8649 = vsel %vm1021, %v8647, %v8648
    %v8650 = vrot.slane %v8582, 3
    %v8651 = vrot.slane %v8583, 3
    %v8652 = vsel %vm1021, %v8650, %v8651
    %v8653 = vrot.slane %v8584, 3
    %v8654 = vrot.slane %v8585, 3
    %v8655 = vsel %vm1021, %v8653, %v8654
    %v8656 = vrot.slane %v8586, 3
    %v8657 = vrot.slane %v8587, 3
    %v8658 = vsel %vm1021, %v8656, %v8657
    %v8659 = vrot.slane %v8588, 3
    %v8660 = vrot.slane %v8589, 3
    %v8661 = vsel %vm1021, %v8659, %v8660
    %v8662 = vrot.slane %v8590, 3
    %v8663 = vrot.slane %v8591, 3
    %v8664 = vsel %vm1021, %v8662, %v8663
    %v8665 = vrot.slane %v8592, 3
    %v8666 = vrot.slane %v8593, 3
    %v8667 = vsel %vm1021, %v8665, %v8666
    %v8668 = vrot.slane %v8594, 3
    %v8669 = vrot.slane %v8595, 3
    %v8670 = vsel %vm1021, %v8668, %v8669
    %v8671 = vrot.slane %v8596, 3
    %v8672 = vrot.slane %v8597, 3
    %v8673 = vsel %vm1021, %v8671, %v8672
    %v8674 = vrot.slane %v8598, 3
    %v8675 = vrot.slane %v8599, 3
    %v8676 = vsel %vm1021, %v8674, %v8675
    %v8677 = vrot.slane %v8600, 3
    %v8678 = vrot.slane %v8601, 3
    %v8679 = vsel %vm1021, %v8677, %v8678
    %v8680 = vrot.slane %v8602, 3
    %v8681 = vrot.slane %v8603, 3
    %v8682 = vsel %vm1021, %v8680, %v8681
    %v8683 = vrot.slane %v8604, 3
    %v8684 = vrot.slane %v8605, 3
    %v8685 = vsel %vm1021, %v8683, %v8684
    %v8702 = vadd.f32 %v8553, %v8640
    %v8703 = vadd.f32 %v8554, %v8643
    %v8704 = vadd.f32 %v8555, %v8646
    %v8705 = vadd.f32 %v8556, %v8649
    %v8706 = vadd.f32 %v8557, %v8652
    %v8707 = vadd.f32 %v8558, %v8655
    %v8708 = vadd.f32 %v8559, %v8658
    %v8709 = vadd.f32 %v8560, %v8661
    %v8710 = vadd.f32 %v8561, %v8664
    %v8711 = vadd.f32 %v8562, %v8667
    %v8712 = vadd.f32 %v8563, %v8670
    %v8713 = vadd.f32 %v8564, %v8673
    %v8714 = vadd.f32 %v8565, %v8676
    %v8715 = vadd.f32 %v8566, %v8679
    %v8716 = vadd.f32 %v8567, %v8682
    %v8717 = vadd.f32 %v8568, %v8685
    %v8718 = vld [vmem:[%s3 + $0x13] sm:$0x1]
    %v8719 = vlaneseq
    %v8720 = vshrl.u32 %v8719, 7
    %v8721 = vsub.s32 0, %v8720
    %v8722 = vrot.slane %v8718, %v8721
    %v8723 = vmul.f32 %v6309, %v8722
    %v8724 = vmul.f32 %v6310, %v8722
    %v8725 = vmul.f32 %v6311, %v8722
    %v8726 = vmul.f32 %v6312, %v8722
    %v8727 = vmul.f32 %v6313, %v8722
    %v8728 = vmul.f32 %v6314, %v8722
    %v8729 = vmul.f32 %v6315, %v8722
    %v8730 = vmul.f32 %v6316, %v8722
    %v8731 = vmul.f32 %v6317, %v8722
    %v8732 = vmul.f32 %v6318, %v8722
    %v8733 = vmul.f32 %v6319, %v8722
    %v8734 = vmul.f32 %v6320, %v8722
    %v8735 = vmul.f32 %v6321, %v8722
    %v8736 = vmul.f32 %v6322, %v8722
    %v8737 = vmul.f32 %v6323, %v8722
    %v8738 = vmul.f32 %v6324, %v8722
    %v8739 = vmul.f32 %v6333, %v8722
    %v8740 = vmul.f32 %v6334, %v8722
    %v8741 = vmul.f32 %v6335, %v8722
    %v8742 = vmul.f32 %v6336, %v8722
    %v8743 = vmul.f32 %v6337, %v8722
    %v8744 = vmul.f32 %v6338, %v8722
    %v8745 = vmul.f32 %v6339, %v8722
    %v8746 = vmul.f32 %v6340, %v8722
    %v8747 = vmul.f32 %v6341, %v8722
    %v8748 = vmul.f32 %v6342, %v8722
    %v8749 = vmul.f32 %v6343, %v8722
    %v8750 = vmul.f32 %v6344, %v8722
    %v8751 = vmul.f32 %v6345, %v8722
    %v8752 = vmul.f32 %v6346, %v8722
    %v8753 = vmul.f32 %v6347, %v8722
    %v8754 = vmul.f32 %v6348, %v8722
    %v8787 = vrot.slane %v8723, 4
    %v8788 = vrot.slane %v8724, 4
    %v8789 = vsel %vm1291, %v8787, %v8788
    %v8790 = vrot.slane %v8725, 4
    %v8791 = vrot.slane %v8726, 4
    %v8792 = vsel %vm1291, %v8790, %v8791
    %v8793 = vrot.slane %v8727, 4
    %v8794 = vrot.slane %v8728, 4
    %v8795 = vsel %vm1291, %v8793, %v8794
    %v8796 = vrot.slane %v8729, 4
    %v8797 = vrot.slane %v8730, 4
    %v8798 = vsel %vm1291, %v8796, %v8797
    %v8799 = vrot.slane %v8731, 4
    %v8800 = vrot.slane %v8732, 4
    %v8801 = vsel %vm1291, %v8799, %v8800
    %v8802 = vrot.slane %v8733, 4
    %v8803 = vrot.slane %v8734, 4
    %v8804 = vsel %vm1291, %v8802, %v8803
    %v8805 = vrot.slane %v8735, 4
    %v8806 = vrot.slane %v8736, 4
    %v8807 = vsel %vm1291, %v8805, %v8806
    %v8808 = vrot.slane %v8737, 4
    %v8809 = vrot.slane %v8738, 4
    %v8810 = vsel %vm1291, %v8808, %v8809
    %v8811 = vrot.slane %v8739, 4
    %v8812 = vrot.slane %v8740, 4
    %v8813 = vsel %vm1291, %v8811, %v8812
    %v8814 = vrot.slane %v8741, 4
    %v8815 = vrot.slane %v8742, 4
    %v8816 = vsel %vm1291, %v8814, %v8815
    %v8817 = vrot.slane %v8743, 4
    %v8818 = vrot.slane %v8744, 4
    %v8819 = vsel %vm1291, %v8817, %v8818
    %v8820 = vrot.slane %v8745, 4
    %v8821 = vrot.slane %v8746, 4
    %v8822 = vsel %vm1291, %v8820, %v8821
    %v8823 = vrot.slane %v8747, 4
    %v8824 = vrot.slane %v8748, 4
    %v8825 = vsel %vm1291, %v8823, %v8824
    %v8826 = vrot.slane %v8749, 4
    %v8827 = vrot.slane %v8750, 4
    %v8828 = vsel %vm1291, %v8826, %v8827
    %v8829 = vrot.slane %v8751, 4
    %v8830 = vrot.slane %v8752, 4
    %v8831 = vsel %vm1291, %v8829, %v8830
    %v8832 = vrot.slane %v8753, 4
    %v8833 = vrot.slane %v8754, 4
    %v8834 = vsel %vm1291, %v8832, %v8833
    %v8851 = vadd.f32 %v8702, %v8789
    %v8852 = vadd.f32 %v8703, %v8792
    %v8853 = vadd.f32 %v8704, %v8795
    %v8854 = vadd.f32 %v8705, %v8798
    %v8855 = vadd.f32 %v8706, %v8801
    %v8856 = vadd.f32 %v8707, %v8804
    %v8857 = vadd.f32 %v8708, %v8807
    %v8858 = vadd.f32 %v8709, %v8810
    %v8859 = vadd.f32 %v8710, %v8813
    %v8860 = vadd.f32 %v8711, %v8816
    %v8861 = vadd.f32 %v8712, %v8819
    %v8862 = vadd.f32 %v8713, %v8822
    %v8863 = vadd.f32 %v8714, %v8825
    %v8864 = vadd.f32 %v8715, %v8828
    %v8865 = vadd.f32 %v8716, %v8831
    %v8866 = vadd.f32 %v8717, %v8834
    %v8867 = vld [vmem:[%s3 + $0x14] sm:$0x1]
    %v8868 = vlaneseq
    %v8869 = vshrl.u32 %v8868, 7
    %v8870 = vsub.s32 0, %v8869
    %v8871 = vrot.slane %v8867, %v8870
    %v8872 = vmul.f32 %v6311, %v8871
    %v8873 = vmul.f32 %v6313, %v8871
    %v8874 = vmul.f32 %v6315, %v8871
    %v8875 = vmul.f32 %v6317, %v8871
    %v8876 = vmul.f32 %v6319, %v8871
    %v8877 = vmul.f32 %v6321, %v8871
    %v8878 = vmul.f32 %v6323, %v8871
    %v8879 = vmul.f32 %v6325, %v8871
    %v8880 = vmul.f32 %v6335, %v8871
    %v8881 = vmul.f32 %v6337, %v8871
    %v8882 = vmul.f32 %v6339, %v8871
    %v8883 = vmul.f32 %v6341, %v8871
    %v8884 = vmul.f32 %v6343, %v8871
    %v8885 = vmul.f32 %v6345, %v8871
    %v8886 = vmul.f32 %v6347, %v8871
    %v8887 = vmul.f32 %v6349, %v8871
    %v8888 = vadd.f32 %v8851, %v8872
    %v8889 = vadd.f32 %v8852, %v8873
    %v8890 = vadd.f32 %v8853, %v8874
    %v8891 = vadd.f32 %v8854, %v8875
    %v8892 = vadd.f32 %v8855, %v8876
    %v8893 = vadd.f32 %v8856, %v8877
    %v8894 = vadd.f32 %v8857, %v8878
    %v8895 = vadd.f32 %v8858, %v8879
    %v8896 = vadd.f32 %v8859, %v8880
    %v8897 = vadd.f32 %v8860, %v8881
    %v8898 = vadd.f32 %v8861, %v8882
    %v8899 = vadd.f32 %v8862, %v8883
    %v8900 = vadd.f32 %v8863, %v8884
    %v8901 = vadd.f32 %v8864, %v8885
    %v8902 = vadd.f32 %v8865, %v8886
    %v8903 = vadd.f32 %v8866, %v8887
    %v8904 = vld [vmem:[%s3 + $0x15] sm:$0x1]
    %v8905 = vlaneseq
    %v8906 = vshrl.u32 %v8905, 7
    %v8907 = vsub.s32 0, %v8906
    %v8908 = vrot.slane %v8904, %v8907
    %v8909 = vmul.f32 %v6311, %v8908
    %v8910 = vmul.f32 %v6312, %v8908
    %v8911 = vmul.f32 %v6313, %v8908
    %v8912 = vmul.f32 %v6314, %v8908
    %v8913 = vmul.f32 %v6315, %v8908
    %v8914 = vmul.f32 %v6316, %v8908
    %v8915 = vmul.f32 %v6317, %v8908
    %v8916 = vmul.f32 %v6318, %v8908
    %v8917 = vmul.f32 %v6319, %v8908
    %v8918 = vmul.f32 %v6320, %v8908
    %v8919 = vmul.f32 %v6321, %v8908
    %v8920 = vmul.f32 %v6322, %v8908
    %v8921 = vmul.f32 %v6323, %v8908
    %v8922 = vmul.f32 %v6324, %v8908
    %v8923 = vmul.f32 %v6325, %v8908
    %v8924 = vmul.f32 %v6326, %v8908
    %v8925 = vmul.f32 %v6335, %v8908
    %v8926 = vmul.f32 %v6336, %v8908
    %v8927 = vmul.f32 %v6337, %v8908
    %v8928 = vmul.f32 %v6338, %v8908
    %v8929 = vmul.f32 %v6339, %v8908
    %v8930 = vmul.f32 %v6340, %v8908
    %v8931 = vmul.f32 %v6341, %v8908
    %v8932 = vmul.f32 %v6342, %v8908
    %v8933 = vmul.f32 %v6343, %v8908
    %v8934 = vmul.f32 %v6344, %v8908
    %v8935 = vmul.f32 %v6345, %v8908
    %v8936 = vmul.f32 %v6346, %v8908
    %v8937 = vmul.f32 %v6347, %v8908
    %v8938 = vmul.f32 %v6348, %v8908
    %v8939 = vmul.f32 %v6349, %v8908
    %v8940 = vmul.f32 %v6350, %v8908
    %v8973 = vrot.slane %v8909, 1
    %v8974 = vrot.slane %v8910, 1
    %v8975 = vsel %vm481, %v8973, %v8974
    %v8976 = vrot.slane %v8911, 1
    %v8977 = vrot.slane %v8912, 1
    %v8978 = vsel %vm481, %v8976, %v8977
    %v8979 = vrot.slane %v8913, 1
    %v8980 = vrot.slane %v8914, 1
    %v8981 = vsel %vm481, %v8979, %v8980
    %v8982 = vrot.slane %v8915, 1
    %v8983 = vrot.slane %v8916, 1
    %v8984 = vsel %vm481, %v8982, %v8983
    %v8985 = vrot.slane %v8917, 1
    %v8986 = vrot.slane %v8918, 1
    %v8987 = vsel %vm481, %v8985, %v8986
    %v8988 = vrot.slane %v8919, 1
    %v8989 = vrot.slane %v8920, 1
    %v8990 = vsel %vm481, %v8988, %v8989
    %v8991 = vrot.slane %v8921, 1
    %v8992 = vrot.slane %v8922, 1
    %v8993 = vsel %vm481, %v8991, %v8992
    %v8994 = vrot.slane %v8923, 1
    %v8995 = vrot.slane %v8924, 1
    %v8996 = vsel %vm481, %v8994, %v8995
    %v8997 = vrot.slane %v8925, 1
    %v8998 = vrot.slane %v8926, 1
    %v8999 = vsel %vm481, %v8997, %v8998
    %v9000 = vrot.slane %v8927, 1
    %v9001 = vrot.slane %v8928, 1
    %v9002 = vsel %vm481, %v9000, %v9001
    %v9003 = vrot.slane %v8929, 1
    %v9004 = vrot.slane %v8930, 1
    %v9005 = vsel %vm481, %v9003, %v9004
    %v9006 = vrot.slane %v8931, 1
    %v9007 = vrot.slane %v8932, 1
    %v9008 = vsel %vm481, %v9006, %v9007
    %v9009 = vrot.slane %v8933, 1
    %v9010 = vrot.slane %v8934, 1
    %v9011 = vsel %vm481, %v9009, %v9010
    %v9012 = vrot.slane %v8935, 1
    %v9013 = vrot.slane %v8936, 1
    %v9014 = vsel %vm481, %v9012, %v9013
    %v9015 = vrot.slane %v8937, 1
    %v9016 = vrot.slane %v8938, 1
    %v9017 = vsel %vm481, %v9015, %v9016
    %v9018 = vrot.slane %v8939, 1
    %v9019 = vrot.slane %v8940, 1
    %v9020 = vsel %vm481, %v9018, %v9019
    %v9037 = vadd.f32 %v8888, %v8975
    %v9038 = vadd.f32 %v8889, %v8978
    %v9039 = vadd.f32 %v8890, %v8981
    %v9040 = vadd.f32 %v8891, %v8984
    %v9041 = vadd.f32 %v8892, %v8987
    %v9042 = vadd.f32 %v8893, %v8990
    %v9043 = vadd.f32 %v8894, %v8993
    %v9044 = vadd.f32 %v8895, %v8996
    %v9045 = vadd.f32 %v8896, %v8999
    %v9046 = vadd.f32 %v8897, %v9002
    %v9047 = vadd.f32 %v8898, %v9005
    %v9048 = vadd.f32 %v8899, %v9008
    %v9049 = vadd.f32 %v8900, %v9011
    %v9050 = vadd.f32 %v8901, %v9014
    %v9051 = vadd.f32 %v8902, %v9017
    %v9052 = vadd.f32 %v8903, %v9020
    %v9053 = vld [vmem:[%s3 + $0x16] sm:$0x1]
    %v9054 = vlaneseq
    %v9055 = vshrl.u32 %v9054, 7
    %v9056 = vsub.s32 0, %v9055
    %v9057 = vrot.slane %v9053, %v9056
    %v9058 = vmul.f32 %v6311, %v9057
    %v9059 = vmul.f32 %v6312, %v9057
    %v9060 = vmul.f32 %v6313, %v9057
    %v9061 = vmul.f32 %v6314, %v9057
    %v9062 = vmul.f32 %v6315, %v9057
    %v9063 = vmul.f32 %v6316, %v9057
    %v9064 = vmul.f32 %v6317, %v9057
    %v9065 = vmul.f32 %v6318, %v9057
    %v9066 = vmul.f32 %v6319, %v9057
    %v9067 = vmul.f32 %v6320, %v9057
    %v9068 = vmul.f32 %v6321, %v9057
    %v9069 = vmul.f32 %v6322, %v9057
    %v9070 = vmul.f32 %v6323, %v9057
    %v9071 = vmul.f32 %v6324, %v9057
    %v9072 = vmul.f32 %v6325, %v9057
    %v9073 = vmul.f32 %v6326, %v9057
    %v9074 = vmul.f32 %v6335, %v9057
    %v9075 = vmul.f32 %v6336, %v9057
    %v9076 = vmul.f32 %v6337, %v9057
    %v9077 = vmul.f32 %v6338, %v9057
    %v9078 = vmul.f32 %v6339, %v9057
    %v9079 = vmul.f32 %v6340, %v9057
    %v9080 = vmul.f32 %v6341, %v9057
    %v9081 = vmul.f32 %v6342, %v9057
    %v9082 = vmul.f32 %v6343, %v9057
    %v9083 = vmul.f32 %v6344, %v9057
    %v9084 = vmul.f32 %v6345, %v9057
    %v9085 = vmul.f32 %v6346, %v9057
    %v9086 = vmul.f32 %v6347, %v9057
    %v9087 = vmul.f32 %v6348, %v9057
    %v9088 = vmul.f32 %v6349, %v9057
    %v9089 = vmul.f32 %v6350, %v9057
    %v9122 = vrot.slane %v9058, 2
    %v9123 = vrot.slane %v9059, 2
    %v9124 = vsel %vm751, %v9122, %v9123
    %v9125 = vrot.slane %v9060, 2
    %v9126 = vrot.slane %v9061, 2
    %v9127 = vsel %vm751, %v9125, %v9126
    %v9128 = vrot.slane %v9062, 2
    %v9129 = vrot.slane %v9063, 2
    %v9130 = vsel %vm751, %v9128, %v9129
    %v9131 = vrot.slane %v9064, 2
    %v9132 = vrot.slane %v9065, 2
    %v9133 = vsel %vm751, %v9131, %v9132
    %v9134 = vrot.slane %v9066, 2
    %v9135 = vrot.slane %v9067, 2
    %v9136 = vsel %vm751, %v9134, %v9135
    %v9137 = vrot.slane %v9068, 2
    %v9138 = vrot.slane %v9069, 2
    %v9139 = vsel %vm751, %v9137, %v9138
    %v9140 = vrot.slane %v9070, 2
    %v9141 = vrot.slane %v9071, 2
    %v9142 = vsel %vm751, %v9140, %v9141
    %v9143 = vrot.slane %v9072, 2
    %v9144 = vrot.slane %v9073, 2
    %v9145 = vsel %vm751, %v9143, %v9144
    %v9146 = vrot.slane %v9074, 2
    %v9147 = vrot.slane %v9075, 2
    %v9148 = vsel %vm751, %v9146, %v9147
    %v9149 = vrot.slane %v9076, 2
    %v9150 = vrot.slane %v9077, 2
    %v9151 = vsel %vm751, %v9149, %v9150
    %v9152 = vrot.slane %v9078, 2
    %v9153 = vrot.slane %v9079, 2
    %v9154 = vsel %vm751, %v9152, %v9153
    %v9155 = vrot.slane %v9080, 2
    %v9156 = vrot.slane %v9081, 2
    %v9157 = vsel %vm751, %v9155, %v9156
    %v9158 = vrot.slane %v9082, 2
    %v9159 = vrot.slane %v9083, 2
    %v9160 = vsel %vm751, %v9158, %v9159
    %v9161 = vrot.slane %v9084, 2
    %v9162 = vrot.slane %v9085, 2
    %v9163 = vsel %vm751, %v9161, %v9162
    %v9164 = vrot.slane %v9086, 2
    %v9165 = vrot.slane %v9087, 2
    %v9166 = vsel %vm751, %v9164, %v9165
    %v9167 = vrot.slane %v9088, 2
    %v9168 = vrot.slane %v9089, 2
    %v9169 = vsel %vm751, %v9167, %v9168
    %v9186 = vadd.f32 %v9037, %v9124
    %v9187 = vadd.f32 %v9038, %v9127
    %v9188 = vadd.f32 %v9039, %v9130
    %v9189 = vadd.f32 %v9040, %v9133
    %v9190 = vadd.f32 %v9041, %v9136
    %v9191 = vadd.f32 %v9042, %v9139
    %v9192 = vadd.f32 %v9043, %v9142
    %v9193 = vadd.f32 %v9044, %v9145
    %v9194 = vadd.f32 %v9045, %v9148
    %v9195 = vadd.f32 %v9046, %v9151
    %v9196 = vadd.f32 %v9047, %v9154
    %v9197 = vadd.f32 %v9048, %v9157
    %v9198 = vadd.f32 %v9049, %v9160
    %v9199 = vadd.f32 %v9050, %v9163
    %v9200 = vadd.f32 %v9051, %v9166
    %v9201 = vadd.f32 %v9052, %v9169
    %v9202 = vld [vmem:[%s3 + $0x17] sm:$0x1]
    %v9203 = vlaneseq
    %v9204 = vshrl.u32 %v9203, 7
    %v9205 = vsub.s32 0, %v9204
    %v9206 = vrot.slane %v9202, %v9205
    %v9207 = vmul.f32 %v6311, %v9206
    %v9208 = vmul.f32 %v6312, %v9206
    %v9209 = vmul.f32 %v6313, %v9206
    %v9210 = vmul.f32 %v6314, %v9206
    %v9211 = vmul.f32 %v6315, %v9206
    %v9212 = vmul.f32 %v6316, %v9206
    %v9213 = vmul.f32 %v6317, %v9206
    %v9214 = vmul.f32 %v6318, %v9206
    %v9215 = vmul.f32 %v6319, %v9206
    %v9216 = vmul.f32 %v6320, %v9206
    %v9217 = vmul.f32 %v6321, %v9206
    %v9218 = vmul.f32 %v6322, %v9206
    %v9219 = vmul.f32 %v6323, %v9206
    %v9220 = vmul.f32 %v6324, %v9206
    %v9221 = vmul.f32 %v6325, %v9206
    %v9222 = vmul.f32 %v6326, %v9206
    %v9223 = vmul.f32 %v6335, %v9206
    %v9224 = vmul.f32 %v6336, %v9206
    %v9225 = vmul.f32 %v6337, %v9206
    %v9226 = vmul.f32 %v6338, %v9206
    %v9227 = vmul.f32 %v6339, %v9206
    %v9228 = vmul.f32 %v6340, %v9206
    %v9229 = vmul.f32 %v6341, %v9206
    %v9230 = vmul.f32 %v6342, %v9206
    %v9231 = vmul.f32 %v6343, %v9206
    %v9232 = vmul.f32 %v6344, %v9206
    %v9233 = vmul.f32 %v6345, %v9206
    %v9234 = vmul.f32 %v6346, %v9206
    %v9235 = vmul.f32 %v6347, %v9206
    %v9236 = vmul.f32 %v6348, %v9206
    %v9237 = vmul.f32 %v6349, %v9206
    %v9238 = vmul.f32 %v6350, %v9206
    %v9271 = vrot.slane %v9207, 3
    %v9272 = vrot.slane %v9208, 3
    %v9273 = vsel %vm1021, %v9271, %v9272
    %v9274 = vrot.slane %v9209, 3
    %v9275 = vrot.slane %v9210, 3
    %v9276 = vsel %vm1021, %v9274, %v9275
    %v9277 = vrot.slane %v9211, 3
    %v9278 = vrot.slane %v9212, 3
    %v9279 = vsel %vm1021, %v9277, %v9278
    %v9280 = vrot.slane %v9213, 3
    %v9281 = vrot.slane %v9214, 3
    %v9282 = vsel %vm1021, %v9280, %v9281
    %v9283 = vrot.slane %v9215, 3
    %v9284 = vrot.slane %v9216, 3
    %v9285 = vsel %vm1021, %v9283, %v9284
    %v9286 = vrot.slane %v9217, 3
    %v9287 = vrot.slane %v9218, 3
    %v9288 = vsel %vm1021, %v9286, %v9287
    %v9289 = vrot.slane %v9219, 3
    %v9290 = vrot.slane %v9220, 3
    %v9291 = vsel %vm1021, %v9289, %v9290
    %v9292 = vrot.slane %v9221, 3
    %v9293 = vrot.slane %v9222, 3
    %v9294 = vsel %vm1021, %v9292, %v9293
    %v9295 = vrot.slane %v9223, 3
    %v9296 = vrot.slane %v9224, 3
    %v9297 = vsel %vm1021, %v9295, %v9296
    %v9298 = vrot.slane %v9225, 3
    %v9299 = vrot.slane %v9226, 3
    %v9300 = vsel %vm1021, %v9298, %v9299
    %v9301 = vrot.slane %v9227, 3
    %v9302 = vrot.slane %v9228, 3
    %v9303 = vsel %vm1021, %v9301, %v9302
    %v9304 = vrot.slane %v9229, 3
    %v9305 = vrot.slane %v9230, 3
    %v9306 = vsel %vm1021, %v9304, %v9305
    %v9307 = vrot.slane %v9231, 3
    %v9308 = vrot.slane %v9232, 3
    %v9309 = vsel %vm1021, %v9307, %v9308
    %v9310 = vrot.slane %v9233, 3
    %v9311 = vrot.slane %v9234, 3
    %v9312 = vsel %vm1021, %v9310, %v9311
    %v9313 = vrot.slane %v9235, 3
    %v9314 = vrot.slane %v9236, 3
    %v9315 = vsel %vm1021, %v9313, %v9314
    %v9316 = vrot.slane %v9237, 3
    %v9317 = vrot.slane %v9238, 3
    %v9318 = vsel %vm1021, %v9316, %v9317
    %v9335 = vadd.f32 %v9186, %v9273
    %v9336 = vadd.f32 %v9187, %v9276
    %v9337 = vadd.f32 %v9188, %v9279
    %v9338 = vadd.f32 %v9189, %v9282
    %v9339 = vadd.f32 %v9190, %v9285
    %v9340 = vadd.f32 %v9191, %v9288
    %v9341 = vadd.f32 %v9192, %v9291
    %v9342 = vadd.f32 %v9193, %v9294
    %v9343 = vadd.f32 %v9194, %v9297
    %v9344 = vadd.f32 %v9195, %v9300
    %v9345 = vadd.f32 %v9196, %v9303
    %v9346 = vadd.f32 %v9197, %v9306
    %v9347 = vadd.f32 %v9198, %v9309
    %v9348 = vadd.f32 %v9199, %v9312
    %v9349 = vadd.f32 %v9200, %v9315
    %v9350 = vadd.f32 %v9201, %v9318
    %v9351 = vld [vmem:[%s3 + $0x18] sm:$0x1]
    %v9352 = vlaneseq
    %v9353 = vshrl.u32 %v9352, 7
    %v9354 = vsub.s32 0, %v9353
    %v9355 = vrot.slane %v9351, %v9354
    %v9356 = vmul.f32 %v6311, %v9355
    %v9357 = vmul.f32 %v6312, %v9355
    %v9358 = vmul.f32 %v6313, %v9355
    %v9359 = vmul.f32 %v6314, %v9355
    %v9360 = vmul.f32 %v6315, %v9355
    %v9361 = vmul.f32 %v6316, %v9355
    %v9362 = vmul.f32 %v6317, %v9355
    %v9363 = vmul.f32 %v6318, %v9355
    %v9364 = vmul.f32 %v6319, %v9355
    %v9365 = vmul.f32 %v6320, %v9355
    %v9366 = vmul.f32 %v6321, %v9355
    %v9367 = vmul.f32 %v6322, %v9355
    %v9368 = vmul.f32 %v6323, %v9355
    %v9369 = vmul.f32 %v6324, %v9355
    %v9370 = vmul.f32 %v6325, %v9355
    %v9371 = vmul.f32 %v6326, %v9355
    %v9372 = vmul.f32 %v6335, %v9355
    %v9373 = vmul.f32 %v6336, %v9355
    %v9374 = vmul.f32 %v6337, %v9355
    %v9375 = vmul.f32 %v6338, %v9355
    %v9376 = vmul.f32 %v6339, %v9355
    %v9377 = vmul.f32 %v6340, %v9355
    %v9378 = vmul.f32 %v6341, %v9355
    %v9379 = vmul.f32 %v6342, %v9355
    %v9380 = vmul.f32 %v6343, %v9355
    %v9381 = vmul.f32 %v6344, %v9355
    %v9382 = vmul.f32 %v6345, %v9355
    %v9383 = vmul.f32 %v6346, %v9355
    %v9384 = vmul.f32 %v6347, %v9355
    %v9385 = vmul.f32 %v6348, %v9355
    %v9386 = vmul.f32 %v6349, %v9355
    %v9387 = vmul.f32 %v6350, %v9355
    %v9420 = vrot.slane %v9356, 4
    %v9421 = vrot.slane %v9357, 4
    %v9422 = vsel %vm1291, %v9420, %v9421
    %v9423 = vrot.slane %v9358, 4
    %v9424 = vrot.slane %v9359, 4
    %v9425 = vsel %vm1291, %v9423, %v9424
    %v9426 = vrot.slane %v9360, 4
    %v9427 = vrot.slane %v9361, 4
    %v9428 = vsel %vm1291, %v9426, %v9427
    %v9429 = vrot.slane %v9362, 4
    %v9430 = vrot.slane %v9363, 4
    %v9431 = vsel %vm1291, %v9429, %v9430
    %v9432 = vrot.slane %v9364, 4
    %v9433 = vrot.slane %v9365, 4
    %v9434 = vsel %vm1291, %v9432, %v9433
    %v9435 = vrot.slane %v9366, 4
    %v9436 = vrot.slane %v9367, 4
    %v9437 = vsel %vm1291, %v9435, %v9436
    %v9438 = vrot.slane %v9368, 4
    %v9439 = vrot.slane %v9369, 4
    %v9440 = vsel %vm1291, %v9438, %v9439
    %v9441 = vrot.slane %v9370, 4
    %v9442 = vrot.slane %v9371, 4
    %v9443 = vsel %vm1291, %v9441, %v9442
    %v9444 = vrot.slane %v9372, 4
    %v9445 = vrot.slane %v9373, 4
    %v9446 = vsel %vm1291, %v9444, %v9445
    %v9447 = vrot.slane %v9374, 4
    %v9448 = vrot.slane %v9375, 4
    %v9449 = vsel %vm1291, %v9447, %v9448
    %v9450 = vrot.slane %v9376, 4
    %v9451 = vrot.slane %v9377, 4
    %v9452 = vsel %vm1291, %v9450, %v9451
    %v9453 = vrot.slane %v9378, 4
    %v9454 = vrot.slane %v9379, 4
    %v9455 = vsel %vm1291, %v9453, %v9454
    %v9456 = vrot.slane %v9380, 4
    %v9457 = vrot.slane %v9381, 4
    %v9458 = vsel %vm1291, %v9456, %v9457
    %v9459 = vrot.slane %v9382, 4
    %v9460 = vrot.slane %v9383, 4
    %v9461 = vsel %vm1291, %v9459, %v9460
    %v9462 = vrot.slane %v9384, 4
    %v9463 = vrot.slane %v9385, 4
    %v9464 = vsel %vm1291, %v9462, %v9463
    %v9465 = vrot.slane %v9386, 4
    %v9466 = vrot.slane %v9387, 4
    %v9467 = vsel %vm1291, %v9465, %v9466
    %v9484 = vadd.f32 %v9335, %v9422
    %v9485 = vadd.f32 %v9336, %v9425
    %v9486 = vadd.f32 %v9337, %v9428
    %v9487 = vadd.f32 %v9338, %v9431
    %v9488 = vadd.f32 %v9339, %v9434
    %v9489 = vadd.f32 %v9340, %v9437
    %v9490 = vadd.f32 %v9341, %v9440
    %v9491 = vadd.f32 %v9342, %v9443
    %v9492 = vadd.f32 %v9343, %v9446
    %v9493 = vadd.f32 %v9344, %v9449
    %v9494 = vadd.f32 %v9345, %v9452
    %v9495 = vadd.f32 %v9346, %v9455
    %v9496 = vadd.f32 %v9347, %v9458
    %v9497 = vadd.f32 %v9348, %v9461
    %v9498 = vadd.f32 %v9349, %v9464
    %v9499 = vadd.f32 %v9350, %v9467
    %vm9500 = vcmask 244736
    %v9501 = vsel %vm9500, %v9484, 0.0
    %9502 = vadd.xlane.f32.xlu0 %v9501
    %v9503 = vpop.xlane.xlu0 %9502
    %v9504 = vsel %vm9500, %v9485, 0.0
    %9505 = vadd.xlane.f32.xlu0 %v9504
    %v9506 = vpop.xlane.xlu0 %9505
    %v9507 = vsel %vm9500, %v9486, 0.0
    %9508 = vadd.xlane.f32.xlu0 %v9507
    %v9509 = vpop.xlane.xlu0 %9508
    %v9510 = vsel %vm9500, %v9487, 0.0
    %9511 = vadd.xlane.f32.xlu0 %v9510
    %v9512 = vpop.xlane.xlu0 %9511
    %v9513 = vsel %vm9500, %v9488, 0.0
    %9514 = vadd.xlane.f32.xlu0 %v9513
    %v9515 = vpop.xlane.xlu0 %9514
    %v9516 = vsel %vm9500, %v9489, 0.0
    %9517 = vadd.xlane.f32.xlu0 %v9516
    %v9518 = vpop.xlane.xlu0 %9517
    %v9519 = vsel %vm9500, %v9490, 0.0
    %9520 = vadd.xlane.f32.xlu0 %v9519
    %v9521 = vpop.xlane.xlu0 %9520
    %v9522 = vsel %vm9500, %v9491, 0.0
    %9523 = vadd.xlane.f32.xlu0 %v9522
    %v9524 = vpop.xlane.xlu0 %9523
    %v9525 = vsel %vm9500, %v9492, 0.0
    %9526 = vadd.xlane.f32.xlu0 %v9525
    %v9527 = vpop.xlane.xlu0 %9526
    %v9528 = vsel %vm9500, %v9493, 0.0
    %9529 = vadd.xlane.f32.xlu0 %v9528
    %v9530 = vpop.xlane.xlu0 %9529
    %v9531 = vsel %vm9500, %v9494, 0.0
    %9532 = vadd.xlane.f32.xlu0 %v9531
    %v9533 = vpop.xlane.xlu0 %9532
    %v9534 = vsel %vm9500, %v9495, 0.0
    %9535 = vadd.xlane.f32.xlu0 %v9534
    %v9536 = vpop.xlane.xlu0 %9535
    %v9537 = vsel %vm9500, %v9496, 0.0
    %9538 = vadd.xlane.f32.xlu0 %v9537
    %v9539 = vpop.xlane.xlu0 %9538
    %v9540 = vsel %vm9500, %v9497, 0.0
    %9541 = vadd.xlane.f32.xlu0 %v9540
    %v9542 = vpop.xlane.xlu0 %9541
    %v9543 = vsel %vm9500, %v9498, 0.0
    %9544 = vadd.xlane.f32.xlu0 %v9543
    %v9545 = vpop.xlane.xlu0 %9544
    %v9546 = vsel %vm9500, %v9499, 0.0
    %9547 = vadd.xlane.f32.xlu0 %v9546
    %v9548 = vpop.xlane.xlu0 %9547
    %v9549 = vld [vmem:[#allocation2] sm:$0x1]
    %v9551 = vlaneseq
    %v9552 = vshrl.u32 %v9551, 7
    %v9553 = vsub.s32 0, %v9552
    %v9554 = vrot.slane %v9549, %v9553
    %9555 = vset.pattern.permute.xlu0 0
    %9556 = vperm.xlu0 %9555, %v9554
    %v9557 = vpop.permute.xlu0 %9556
    %v9559 = vadd.f32 %v9503, %v9557
    %v9560 = vadd.f32 %v9506, %v9557
    %v9561 = vadd.f32 %v9509, %v9557
    %v9562 = vadd.f32 %v9512, %v9557
    %v9563 = vadd.f32 %v9515, %v9557
    %v9564 = vadd.f32 %v9518, %v9557
    %v9565 = vadd.f32 %v9521, %v9557
    %v9566 = vadd.f32 %v9524, %v9557
    %v9567 = vadd.f32 %v9527, %v9557
    %v9568 = vadd.f32 %v9530, %v9557
    %v9569 = vadd.f32 %v9533, %v9557
    %v9570 = vadd.f32 %v9536, %v9557
    %v9571 = vadd.f32 %v9539, %v9557
    %v9572 = vadd.f32 %v9542, %v9557
    %v9573 = vadd.f32 %v9545, %v9557
    %v9574 = vadd.f32 %v9548, %v9557
    %v9575 = vmax.f32 %v9559, 0.0
    %v9576 = vmax.f32 %v9560, 0.0
    %v9577 = vmax.f32 %v9561, 0.0
    %v9578 = vmax.f32 %v9562, 0.0
    %v9579 = vmax.f32 %v9563, 0.0
    %v9580 = vmax.f32 %v9564, 0.0
    %v9581 = vmax.f32 %v9565, 0.0
    %v9582 = vmax.f32 %v9566, 0.0
    %v9583 = vmax.f32 %v9567, 0.0
    %v9584 = vmax.f32 %v9568, 0.0
    %v9585 = vmax.f32 %v9569, 0.0
    %v9586 = vmax.f32 %v9570, 0.0
    %v9587 = vmax.f32 %v9571, 0.0
    %v9588 = vmax.f32 %v9572, 0.0
    %v9589 = vmax.f32 %v9573, 0.0
    %v9590 = vmax.f32 %v9574, 0.0
    %v9607 = vlaneseq
    %v9608 = vand.u32 %v9607, 127
    %v9609 = vlaneseq
    %v9610 = vshrl.u32 %v9609, 7
    %v9611 = vsub.s32 %v9608, %v9610
    %v9612 = vrot.slane %v9575, %v9611
    %v9613 = vlaneseq
    %v9614 = vshrl.u32 %v9613, 7
    %v9615 = vsub.s32 %v9608, %v9614
    %v9616 = vrot.slane %v9576, %v9615
    %v9617 = vlaneseq
    %v9618 = vshrl.u32 %v9617, 7
    %v9619 = vsub.s32 %v9608, %v9618
    %v9620 = vrot.slane %v9577, %v9619
    %v9621 = vlaneseq
    %v9622 = vshrl.u32 %v9621, 7
    %v9623 = vsub.s32 %v9608, %v9622
    %v9624 = vrot.slane %v9578, %v9623
    %v9625 = vlaneseq
    %v9626 = vshrl.u32 %v9625, 7
    %v9627 = vsub.s32 %v9608, %v9626
    %v9628 = vrot.slane %v9579, %v9627
    %v9629 = vlaneseq
    %v9630 = vshrl.u32 %v9629, 7
    %v9631 = vsub.s32 %v9608, %v9630
    %v9632 = vrot.slane %v9580, %v9631
    %v9633 = vlaneseq
    %v9634 = vshrl.u32 %v9633, 7
    %v9635 = vsub.s32 %v9608, %v9634
    %v9636 = vrot.slane %v9581, %v9635
    %v9637 = vlaneseq
    %v9638 = vshrl.u32 %v9637, 7
    %v9639 = vsub.s32 %v9608, %v9638
    %v9640 = vrot.slane %v9582, %v9639
    %v9641 = vlaneseq
    %v9642 = vshrl.u32 %v9641, 7
    %v9643 = vsub.s32 %v9608, %v9642
    %v9644 = vrot.slane %v9583, %v9643
    %v9645 = vlaneseq
    %v9646 = vshrl.u32 %v9645, 7
    %v9647 = vsub.s32 %v9608, %v9646
    %v9648 = vrot.slane %v9584, %v9647
    %v9649 = vlaneseq
    %v9650 = vshrl.u32 %v9649, 7
    %v9651 = vsub.s32 %v9608, %v9650
    %v9652 = vrot.slane %v9585, %v9651
    %v9653 = vlaneseq
    %v9654 = vshrl.u32 %v9653, 7
    %v9655 = vsub.s32 %v9608, %v9654
    %v9656 = vrot.slane %v9586, %v9655
    %v9657 = vlaneseq
    %v9658 = vshrl.u32 %v9657, 7
    %v9659 = vsub.s32 %v9608, %v9658
    %v9660 = vrot.slane %v9587, %v9659
    %v9661 = vlaneseq
    %v9662 = vshrl.u32 %v9661, 7
    %v9663 = vsub.s32 %v9608, %v9662
    %v9664 = vrot.slane %v9588, %v9663
    %v9665 = vlaneseq
    %v9666 = vshrl.u32 %v9665, 7
    %v9667 = vsub.s32 %v9608, %v9666
    %v9668 = vrot.slane %v9589, %v9667
    %v9669 = vlaneseq
    %v9670 = vshrl.u32 %v9669, 7
    %v9671 = vsub.s32 %v9608, %v9670
    %v9672 = vrot.slane %v9590, %v9671
    %vm9673 = vcmask 1041409
    %v9674 = vsel %vm9673, %v9616, %v9612
    %vm9675 = vcmask 1042434
    %v9676 = vsel %vm9675, %v9620, %v9674
    %vm9677 = vcmask 1043459
    %v9678 = vsel %vm9677, %v9624, %v9676
    %vm9679 = vcmask 1044484
    %v9680 = vsel %vm9679, %v9628, %v9678
    %vm9681 = vcmask 1045509
    %v9682 = vsel %vm9681, %v9632, %v9680
    %vm9683 = vcmask 1046534
    %v9684 = vsel %vm9683, %v9636, %v9682
    %vm9685 = vcmask 1047559
    %v9686 = vsel %vm9685, %v9640, %v9684
    %v9687 = vsel %vm9673, %v9648, %v9644
    %v9688 = vsel %vm9675, %v9652, %v9687
    %v9689 = vsel %vm9677, %v9656, %v9688
    %v9690 = vsel %vm9679, %v9660, %v9689
    %v9691 = vsel %vm9681, %v9664, %v9690
    %v9692 = vsel %vm9683, %v9668, %v9691
    %v9693 = vsel %vm9685, %v9672, %v9692
    %vm9696 = vcmask 64512
    %9697 = vst.msk [vmem:[#allocation3] sm:$0xff] %vm9696, %v9686
    %9698 = vst.msk [vmem:[#allocation3 + $0x8] sm:$0xff] %vm9696, %v9693
    // Predicated region
    $region22: #{model_forward.1} parent=1 // pred_check
      _
    $region23: #{model_forward.1} parent=1 // pred_check_branch
      %9700 = sbr.rel (0) target = $region25
    $region24: #{model_forward.1} parent=1 // pred_region
      %s9702 = ssub.s32 256, 256
      %9703 = vsyncadd [#allocation4], %s9702
      %s9704 = sshll.u32 [#allocation3], 4
      %s9705 = int_to_ptr.vmem [resolvable:$true] %s9704
      %9710 = dma.vmem_to_hbm [thread:$0]  %s9705, 256, %s5, [#allocation4], 128, 128, 8
    $region25: #{model_forward.1} parent=1 // pred_fallthru
      _
    // Predicated region
    $region26: #{model_forward.1} parent=1 // pred_check
      _
    $region27: #{model_forward.1} parent=1 // pred_check_branch
      %9712 = sbr.rel (0) target = $region29
    $region28: #{model_forward.1} parent=1 // pred_region
      %9713 = dma.done [#allocation4], 256
    $region29: #{model_forward.1} parent=1 // pred_fallthru
      _
    %9714 = vsyncpa [#allocation4], 1

</llo_original>
